<compile_context>
chip_gen: v5e
topology: v5e:2x2
jax: 0.10.0
libtpu: 0.0.40
codegen_flags: <defaults>
</compile_context>

<pallas_src>
import functools
import math

import jax
import jax.numpy as jnp
from jax.experimental import pallas as pl
from jax.experimental.pallas import tpu as pltpu

MATMUL_DTYPE = jnp.bfloat16   # MXU operand dtype (accumulation stays f32)
EPS = 1e-6                    # TODO(synk): confirm against reference nn.RMSNorm eps.


# ----------------------------------------------------------------------------
# In-kernel math helpers (traced inside Pallas kernels)
# ----------------------------------------------------------------------------
def _mm(a, w):
    """2-D a @ w; activation cast to bf16, weight already bf16, f32 accumulation."""
    return jnp.dot(a.astype(MATMUL_DTYPE), w, preferred_element_type=jnp.float32)


def _bmm(x3, w):
    """(R, L, K) @ (K, N) as a batched einsum with the weight broadcast over R.

    Keeps everything rank-3 (no in-kernel reshapes touching the second-minor
    dim).  TODO(synk): at production shapes collapse to one 2-D (R*L, K) GEMM."""
    R = x3.shape[0]
    wb = jnp.broadcast_to(w, (R,) + w.shape)
    return jnp.einsum('bld,bde->ble', x3.astype(MATMUL_DTYPE), wb,
                      preferred_element_type=jnp.float32)


def _rmsnorm(x, w, eps=EPS):
    ms = jnp.mean(x * x, axis=-1, keepdims=True)
    return x * jax.lax.rsqrt(ms + eps) * w


def _mha_batched(q2d, kv3, wq, bq, wk, bk, wv, bv, wo, bo, n_head):
    """Multi-head attention with one query sequence shared by R kv sequences.

    q2d: (Lq, D) f32, kv3: (R, Lk, D) f32  ->  (R, Lq, D) f32 (after out-proj).
    """
    Lq, D = q2d.shape
    R, Lk, _ = kv3.shape
    dh = D // n_head
    scale = 1.0 / math.sqrt(dh)

    qp = _mm(q2d, wq) + bq                         # (Lq, D)   bias added once
    kp = _bmm(kv3, wk) + bk                        # (R, Lk, D)
    vp = _bmm(kv3, wv) + bv                        # (R, Lk, D)
    qp_b = jnp.broadcast_to(qp, (R, Lq, D))        # hoisted once (not per head)

    heads = []
    for h in range(n_head):                        # short static loop over heads
        sl = slice(h * dh, (h + 1) * dh)
        s = jnp.einsum('bqd,bkd->bqk',
                       qp_b[:, :, sl].astype(MATMUL_DTYPE),
                       kp[:, :, sl].astype(MATMUL_DTYPE),
                       preferred_element_type=jnp.float32) * scale
        s = s - jnp.max(s, axis=-1, keepdims=True)
        p = jnp.exp(s)
        p = p / jnp.sum(p, axis=-1, keepdims=True)   # exact softmax (parity)
        heads.append(jnp.einsum('bqk,bkd->bqd',
                                p.astype(MATMUL_DTYPE),
                                vp[:, :, sl].astype(MATMUL_DTYPE),
                                preferred_element_type=jnp.float32))
    attn = jnp.concatenate(heads, axis=-1)         # (R, Lq, D): one concat
    return _bmm(attn, wo) + bo                     # single W_o GEMM + bias


def _ffn_swiglu(x3, w1, b1, w2, b2, wf, bf):
    """SwiGLU feed-forward (D -> d_ff -> D) with split w1/w2 (no lane slicing)."""
    h1 = _bmm(x3, w1) + b1
    h2 = _bmm(x3, w2) + b2
    u = jax.nn.silu(h1) * h2                       # f32 elementwise (v5e-friendly)
    return _bmm(u, wf) + bf


def _tlp_body(q2d, kv3, w, n_head, eps=EPS):
    """TransformerLayerPost on (query q2d, key/value kv3) -> (R, Lq, D).

    TODO(synk): TransformerLayerPost source not provided; implemented as
    post-RMSNorm cross-attention + SwiGLU feed-forward (ff_type == 'swiglu')."""
    (wq, bq, wk, bk, wv, bv, wo, bo, n1, w1, b1, w2, b2, wf, bf, n2) = w
    attn = _mha_batched(q2d, kv3, wq, bq, wk, bk, wv, bv, wo, bo, n_head)
    x = _rmsnorm(q2d[None, :, :] + attn, n1, eps)
    h = _ffn_swiglu(x, w1, b1, w2, b2, wf, bf)
    return _rmsnorm(x + h, n2, eps)


# ----------------------------------------------------------------------------
# Pallas kernels (one fused kernel per module stage)
# ----------------------------------------------------------------------------
def _queries_kernel(*refs):
    """query_1 (SwiGLU on slice token 0) and query_2 (SwiGLU on all tokens)."""
    x_ref = refs[0]
    w1a, b1a, w2a, b2a, w1b, b1b, w2b, b2b = (r[...] for r in refs[1:9])
    q1_ref, q2_ref = refs[9], refs[10]

    x = x_ref[0].astype(jnp.float32)               # (S_sl, D)
    h1 = _mm(x, w1b) + b1b
    h2 = _mm(x, w2b) + b2b
    q2_ref[0] = (jax.nn.silu(h1) * h2).astype(q2_ref.dtype)

    x0 = x[0:1, :]                                 # (1, D): first slice token
    g1 = _mm(x0, w1a) + b1a
    g2 = _mm(x0, w2a) + b2a
    q1_ref[0] = (jax.nn.silu(g1) * g2).astype(q1_ref.dtype)


def _t3d_stage1_kernel(*refs, n_head, eps):
    """rmsnorm(x + MHA(q1, x, x)) for all S patch-sequences of one batch row."""
    q_ref, kv_ref = refs[0], refs[1]
    wq, bq, wk, bk, wv, bv, wo, bo, nw = (r[...] for r in refs[2:11])
    o_ref = refs[11]
    q = q_ref[0].astype(jnp.float32)               # (P, D)
    kv = kv_ref[0].astype(jnp.float32)             # (S, P, D): R=S sequences
    attn = _mha_batched(q, kv, wq, bq, wk, bk, wv, bv, wo, bo, n_head)
    o_ref[0] = _rmsnorm(kv + attn, nw, eps).astype(o_ref.dtype)


def _tlp_cross_kernel(*refs, n_head, eps):
    """Fused TransformerLayerPost for all R kv sequences of one batch row."""
    q_ref, kv_ref = refs[0], refs[1]
    w = tuple(r[...] for r in refs[2:18])
    o_ref = refs[18]
    q = q_ref[0].astype(jnp.float32)               # (Lq, D)
    kv = kv_ref[0].astype(jnp.float32)             # (R, Lk, D)
    o_ref[0] = _tlp_body(q, kv, w, n_head, eps).astype(o_ref.dtype)


def _double_tlp_kernel(*refs, n_head, eps):
    """x_sl + x_obs[:, :, 0] residual, then t_sl_1 and t_sl_2 in one kernel."""
    x_ref, xobs_ref = refs[0], refs[1]
    w_l1 = tuple(r[...] for r in refs[2:18])
    w_l2 = tuple(r[...] for r in refs[18:34])
    o_ref = refs[34]
    x = x_ref[0].astype(jnp.float32) + xobs_ref[0, 0].astype(jnp.float32)   # (S_sl, D)
    for w in (w_l1, w_l2):                         # two fused self-attention layers
        x = _tlp_body(x, x[None], w, n_head, eps)[0]
    o_ref[0] = x.astype(o_ref.dtype)


# ----------------------------------------------------------------------------
# Wrapper plumbing (specs, cost estimates, vmem budget)
# ----------------------------------------------------------------------------
def _mha_weight_list(m):
    return [m["w_q"], m["b_q"], m["w_k"], m["b_k"],
            m["w_v"], m["b_v"], m["w_o"], m["b_o"]]


def _tlp_weight_list(p):
    ff = p["ff"]
    return (_mha_weight_list(p["mha"])
            + [p["norm1_w"], ff["w1"], ff["b1"], ff["w2"], ff["b2"],
               ff["wf"], ff["bf"], p["norm2_w"]])


def _full_spec(a):
    nd = a.ndim
    return pl.BlockSpec(a.shape, lambda b, nd=nd: (0,) * nd)


def _nbytes(*arrays):
    return sum(int(a.size) * jnp.dtype(a.dtype).itemsize for a in arrays)


def _compiler_params(resident_bytes):
    # Explicit VMEM budget from the per-step footprint (double-buffered blocks +
    # resident weights) with headroom, clamped to v7x's 64 MiB physical VMEM.
    limit = int(min(max(4 * resident_bytes + (8 << 20), 16 << 20), 64 << 20))
    return pltpu.CompilerParams(dimension_semantics=("parallel",),
                                vmem_limit_bytes=limit)


def _mha_flops(R, Lq, Lk, D):
    return 2 * Lq * D * D + 4 * R * Lk * D * D + 4 * R * Lq * Lk * D + 2 * R * Lq * D * D


def _tlp_flops(R, Lq, Lk, D, F):
    return _mha_flops(R, Lq, Lk, D) + 6 * R * Lq * D * F


# ----------------------------------------------------------------------------
# Fused module wrappers
# ----------------------------------------------------------------------------
def compute_queries(x_sl, p_q1, p_q2, n_patch):
    """query_1(x_sl[:, 0]) and query_2(x_sl) in one pallas_call."""
    B, S, D = x_sl.shape
    weights = [p_q1["w1"], p_q1["b1"], p_q1["w2"], p_q1["b2"],
               p_q2["w1"], p_q2["b1"], p_q2["w2"], p_q2["b2"]]
    out_bytes = B * n_patch * D * 4 + B * S * D * 4
    cost = pl.CostEstimate(
        flops=int(2 * B * (2 * S * D * D + 2 * D * (n_patch * D))),
        transcendentals=int(B * (S * D + n_patch * D)),
        bytes_accessed=int(_nbytes(x_sl, *weights) + out_bytes))
    q1, q2 = pl.pallas_call(
        _queries_kernel,
        grid=(B,),
        in_specs=[pl.BlockSpec((1, S, D), lambda b: (b, 0, 0))]
                 + [_full_spec(w) for w in weights],
        out_specs=(pl.BlockSpec((1, 1, n_patch * D), lambda b: (b, 0, 0)),
                   pl.BlockSpec((1, S, D), lambda b: (b, 0, 0))),
        out_shape=(jax.ShapeDtypeStruct((B, 1, n_patch * D), x_sl.dtype),
                   jax.ShapeDtypeStruct((B, S, D), x_sl.dtype)),
        compiler_params=_compiler_params(_nbytes(x_sl, *weights) + out_bytes),
        cost_estimate=cost,
    )(x_sl, *weights)
    return q1.reshape(B, n_patch, D), q2


def t3d_stage1(q1, x_obs, p, n_head):
    """rmsnorm(x + MHA(q1, x, x)); one grid step = one batch row (S sequences)."""
    B, S, P, D = x_obs.shape
    weights = _mha_weight_list(p["mha"]) + [p["rms_w"]]
    out_bytes = B * S * P * D * 4
    cost = pl.CostEstimate(
        flops=int(B * _mha_flops(S, P, P, D)),
        transcendentals=int(B * S * (n_head * P * P + P)),
        bytes_accessed=int(_nbytes(q1, x_obs, *weights) + out_bytes))
    return pl.pallas_call(
        functools.partial(_t3d_stage1_kernel, n_head=n_head, eps=EPS),
        grid=(B,),
        in_specs=[pl.BlockSpec((1, P, D), lambda b: (b, 0, 0)),
                  pl.BlockSpec((1, S, P, D), lambda b: (b, 0, 0, 0))]
                 + [_full_spec(w) for w in weights],
        out_specs=pl.BlockSpec((1, S, P, D), lambda b: (b, 0, 0, 0)),
        out_shape=jax.ShapeDtypeStruct((B, S, P, D), x_obs.dtype),
        compiler_params=_compiler_params(_nbytes(q1, x_obs, *weights) + out_bytes),
        cost_estimate=cost,
    )(q1, x_obs, *weights)


def tlp_cross(q, kv, p, n_head):
    """Fused TransformerLayerPost; q: (B, Lq, D), kv: (B, R, Lk, D) -> (B, R, Lq, D)."""
    B, R, Lk, D = kv.shape
    Lq = q.shape[1]
    F = p["ff"]["w1"].shape[1]
    weights = _tlp_weight_list(p)
    out_bytes = B * R * Lq * D * 4
    cost = pl.CostEstimate(
        flops=int(B * _tlp_flops(R, Lq, Lk, D, F)),
        transcendentals=int(B * R * (n_head * Lq * Lk + Lq * F)),
        bytes_accessed=int(_nbytes(q, kv, *weights) + out_bytes))
    return pl.pallas_call(
        functools.partial(_tlp_cross_kernel, n_head=n_head, eps=EPS),
        grid=(B,),
        in_specs=[pl.BlockSpec((1, Lq, D), lambda b: (b, 0, 0)),
                  pl.BlockSpec((1, R, Lk, D), lambda b: (b, 0, 0, 0))]
                 + [_full_spec(w) for w in weights],
        out_specs=pl.BlockSpec((1, R, Lq, D), lambda b: (b, 0, 0, 0)),
        out_shape=jax.ShapeDtypeStruct((B, R, Lq, D), kv.dtype),
        compiler_params=_compiler_params(_nbytes(q, kv, *weights) + out_bytes),
        cost_estimate=cost,
    )(q, kv, *weights)


def double_tlp_sl(x_sl, x_obs_pm, p1, p2, n_head):
    """t_sl_2(t_sl_1(x_sl + x_obs_pm[:, 0])) in one fused call (residual folded in)."""
    B, S, D = x_sl.shape
    F = p1["ff"]["w1"].shape[1]
    weights = _tlp_weight_list(p1) + _tlp_weight_list(p2)
    out_bytes = B * S * D * 4
    cost = pl.CostEstimate(
        flops=int(2 * B * _tlp_flops(1, S, S, D, F)),
        transcendentals=int(2 * B * (n_head * S * S + S * F)),
        bytes_accessed=int(_nbytes(x_sl, *weights) + B * S * D * 4 + out_bytes))
    return pl.pallas_call(
        functools.partial(_double_tlp_kernel, n_head=n_head, eps=EPS),
        grid=(B,),
        in_specs=[pl.BlockSpec((1, S, D), lambda b: (b, 0, 0)),
                  pl.BlockSpec((1, 1, S, D), lambda b: (b, 0, 0, 0))]
                 + [_full_spec(w) for w in weights],
        out_specs=pl.BlockSpec((1, S, D), lambda b: (b, 0, 0)),
        out_shape=jax.ShapeDtypeStruct((B, S, D), x_sl.dtype),
        compiler_params=_compiler_params(_nbytes(x_sl, *weights) + out_bytes),
        cost_estimate=cost,
    )(x_sl, x_obs_pm, *weights)


# ----------------------------------------------------------------------------
# Module forward (reshapes / transposes stay in plain JAX)
# ----------------------------------------------------------------------------
def transformer3d(x_obs, q1, q2, p, n_head, key_padding_mask=None):
    """Transformer3D forward; returns the patch-major layout (B, P, S_sl, D)."""
    # TODO(synk): key_padding_mask not implemented (reference example passes None).
    assert q1.shape[1] == x_obs.shape[2], "residual requires n_patch == patch_len"
    x1 = t3d_stage1(q1, x_obs, p, n_head)                      # (B, S, P, D)
    # TODO(synk): fold this transpose into the stage-2 BlockSpec (in-kernel (S,P)
    # transpose or a 2-D grid) to avoid one extra HBM pass at production shapes.
    x1t = jnp.transpose(x1, (0, 2, 1, 3))                      # (B, P, S, D)
    return tlp_cross(q2, x1t, p["tlp"], n_head)                # (B, P, S_sl, D)


def block_forward(x_sl, x_obs, params, n_head, n_patch, mask_sl=None, mask_obs=None):
    # TODO(synk): key_padding_mask not implemented (reference example passes None).
    q1, q2 = compute_queries(x_sl, params["query_1"], params["query_2"], n_patch)
    x_obs_pm = transformer3d(x_obs, q1, q2, params["t_obs"], n_head, mask_obs)
    x_sl_out = double_tlp_sl(x_sl, x_obs_pm, params["t_sl_1"], params["t_sl_2"], n_head)
    x_obs_out = jnp.transpose(x_obs_pm, (0, 2, 1, 3))          # (B, S_sl, P, D)
    return x_sl_out, x_obs_out


# ----------------------------------------------------------------------------
# Deterministic parameter init (matrices bf16, biases/norm weights f32)
# ----------------------------------------------------------------------------
def _linear_init(key, d_in, d_out, scale=0.05):
    kw, kb = jax.random.split(key)
    w = (jax.random.normal(kw, (d_in, d_out), jnp.float32) * scale).astype(MATMUL_DTYPE)
    b = (jax.random.normal(kb, (d_out,), jnp.float32) * scale).reshape(1, d_out)
    return w, b


def init_swiglu(key, d_in, d_out):
    k1, k2 = jax.random.split(key)
    w1, b1 = _linear_init(k1, d_in, d_out)
    w2, b2 = _linear_init(k2, d_in, d_out)
    return {"w1": w1, "b1": b1, "w2": w2, "b2": b2}


def init_mha(key, d):
    ks = jax.random.split(key, 4)
    wq, bq = _linear_init(ks[0], d, d)
    wk, bk = _linear_init(ks[1], d, d)
    wv, bv = _linear_init(ks[2], d, d)
    wo, bo = _linear_init(ks[3], d, d)
    return {"w_q": wq, "b_q": bq, "w_k": wk, "b_k": bk,
            "w_v": wv, "b_v": bv, "w_o": wo, "b_o": bo}


def init_tlp(key, d, d_ff):
    k1, k2, k3 = jax.random.split(key, 3)
    sw = init_swiglu(k2, d, d_ff)
    wf, bf = _linear_init(k3, d_ff, d)
    return {"mha": init_mha(k1, d),
            "norm1_w": jnp.ones((1, d), jnp.float32),
            "ff": {**sw, "wf": wf, "bf": bf},
            "norm2_w": jnp.ones((1, d), jnp.float32)}


def init_block(key, d, n_head, d_ff, n_patch):
    ks = jax.random.split(key, 6)
    return {"t_sl_1": init_tlp(ks[0], d, d_ff),
            "t_sl_2": init_tlp(ks[1], d, d_ff),
            "t_obs": {"mha": init_mha(ks[2], d),
                      "rms_w": jnp.ones((1, d), jnp.float32),
                      "tlp": init_tlp(ks[3], d, d_ff)},
            "query_1": init_swiglu(ks[4], d, n_patch * d),
            "query_2": init_swiglu(ks[5], d, d)}


# ----------------------------------------------------------------------------
if __name__ == "__main__":
    d_model, n_head, d_ff = 32, 4, 64
    n_patch = 4              # == patch_len (required by the Transformer3D residual)
    B, S_sl, S_obs = 2, 8, 6

    key = jax.random.PRNGKey(0)
    k_p, k_xsl, k_xobs = jax.random.split(key, 3)
    params = init_block(k_p, d_model, n_head, d_ff, n_patch)
    x_sl = jax.random.normal(k_xsl, (B, S_sl, d_model), jnp.float32)
    x_obs = jax.random.normal(k_xobs, (B, S_obs, n_patch, d_model), jnp.float32)

    fwd = jax.jit(functools.partial(block_forward, n_head=n_head, n_patch=n_patch))
    out_sl, out_obs = fwd(x_sl, x_obs, params)
    jax.block_until_ready((out_sl, out_obs))

    assert out_sl.shape == (B, S_sl, d_model)
    assert out_obs.shape == (B, S_sl, n_patch, d_model)
    assert bool(jnp.all(jnp.isfinite(out_sl))) and bool(jnp.all(jnp.isfinite(out_obs)))
    print("KERNEL_OK")
</pallas_src>

<mosaic_0001>
module attributes {stable_mosaic.version = 11 : i64} {
  func.func @_queries_kernel(%arg0: i32, %arg1: memref<1x8x32xf32, #tpu.memory_space<vmem>>, %arg2: memref<32x128xbf16, #tpu.memory_space<vmem>>, %arg3: memref<1x128xf32, #tpu.memory_space<vmem>>, %arg4: memref<32x128xbf16, #tpu.memory_space<vmem>>, %arg5: memref<1x128xf32, #tpu.memory_space<vmem>>, %arg6: memref<32x32xbf16, #tpu.memory_space<vmem>>, %arg7: memref<1x32xf32, #tpu.memory_space<vmem>>, %arg8: memref<32x32xbf16, #tpu.memory_space<vmem>>, %arg9: memref<1x32xf32, #tpu.memory_space<vmem>>, %arg10: memref<1x1x128xf32, #tpu.memory_space<vmem>>, %arg11: memref<1x8x32xf32, #tpu.memory_space<vmem>>) attributes {dimension_semantics = [#tpu.dimension_semantics<parallel>], iteration_bounds = array<i64: 2>, scalar_prefetch = 0 : i64, scratch_operands = 0 : i64, tpu.core_type = #tpu.core_type<tc>, window_params = [{transform_indices = @transform_0, window_bounds = array<i64: 1, 8, 32>}, {pipeline_mode = #tpu.pipeline_mode<synchronous>, transform_indices = @transform_1, window_bounds = array<i64: 32, 128>}, {pipeline_mode = #tpu.pipeline_mode<synchronous>, transform_indices = @transform_2, window_bounds = array<i64: 1, 128>}, {pipeline_mode = #tpu.pipeline_mode<synchronous>, transform_indices = @transform_3, window_bounds = array<i64: 32, 128>}, {pipeline_mode = #tpu.pipeline_mode<synchronous>, transform_indices = @transform_4, window_bounds = array<i64: 1, 128>}, {pipeline_mode = #tpu.pipeline_mode<synchronous>, transform_indices = @transform_5, window_bounds = array<i64: 32, 32>}, {pipeline_mode = #tpu.pipeline_mode<synchronous>, transform_indices = @transform_6, window_bounds = array<i64: 1, 32>}, {pipeline_mode = #tpu.pipeline_mode<synchronous>, transform_indices = @transform_7, window_bounds = array<i64: 32, 32>}, {pipeline_mode = #tpu.pipeline_mode<synchronous>, transform_indices = @transform_8, window_bounds = array<i64: 1, 32>}, {transform_indices = @transform_9, window_bounds = array<i64: 1, 1, 128>}, {transform_indices = @transform_10, window_bounds = array<i64: 1, 8, 32>}]} {
    %c0 = arith.constant 0 : index
    %c0_0 = arith.constant 0 : index
    %0 = vector.load %arg2[%c0, %c0_0] : memref<32x128xbf16, #tpu.memory_space<vmem>>, vector<32x128xbf16>
    %c0_1 = arith.constant 0 : index
    %c0_2 = arith.constant 0 : index
    %1 = vector.load %arg3[%c0_1, %c0_2] : memref<1x128xf32, #tpu.memory_space<vmem>>, vector<1x128xf32>
    %c0_3 = arith.constant 0 : index
    %c0_4 = arith.constant 0 : index
    %2 = vector.load %arg4[%c0_3, %c0_4] : memref<32x128xbf16, #tpu.memory_space<vmem>>, vector<32x128xbf16>
    %c0_5 = arith.constant 0 : index
    %c0_6 = arith.constant 0 : index
    %3 = vector.load %arg5[%c0_5, %c0_6] : memref<1x128xf32, #tpu.memory_space<vmem>>, vector<1x128xf32>
    %c0_7 = arith.constant 0 : index
    %c0_8 = arith.constant 0 : index
    %4 = vector.load %arg6[%c0_7, %c0_8] : memref<32x32xbf16, #tpu.memory_space<vmem>>, vector<32x32xbf16>
    %c0_9 = arith.constant 0 : index
    %c0_10 = arith.constant 0 : index
    %5 = vector.load %arg7[%c0_9, %c0_10] : memref<1x32xf32, #tpu.memory_space<vmem>>, vector<1x32xf32>
    %c0_11 = arith.constant 0 : index
    %c0_12 = arith.constant 0 : index
    %6 = vector.load %arg8[%c0_11, %c0_12] : memref<32x32xbf16, #tpu.memory_space<vmem>>, vector<32x32xbf16>
    %c0_13 = arith.constant 0 : index
    %c0_14 = arith.constant 0 : index
    %7 = vector.load %arg9[%c0_13, %c0_14] : memref<1x32xf32, #tpu.memory_space<vmem>>, vector<1x32xf32>
    %c0_15 = arith.constant 0 : index
    %c0_16 = arith.constant 0 : index
    %c0_17 = arith.constant 0 : index
    %8 = vector.load %arg1[%c0_15, %c0_16, %c0_17] : memref<1x8x32xf32, #tpu.memory_space<vmem>>, vector<1x8x32xf32>
    %9 = vector.shape_cast %8 : vector<1x8x32xf32> to vector<8x32xf32>
    %10 = arith.truncf %9 : vector<8x32xf32> to vector<8x32xbf16>
    %cst = arith.constant dense<0.000000e+00> : vector<8x32xf32>
    %11 = tpu.matmul %10, %4, %cst {dimension_numbers = #tpu.dot_dimension_numbers<[1], [0], [0], [1], [0, 0, 1, 1], [], []>} : vector<8x32xbf16>, vector<32x32xbf16>, vector<8x32xf32> -> vector<8x32xf32>
    %12 = vector.broadcast %5 : vector<1x32xf32> to vector<8x32xf32>
    %13 = arith.addf %11, %12 : vector<8x32xf32>
    %14 = arith.truncf %9 : vector<8x32xf32> to vector<8x32xbf16>
    %cst_18 = arith.constant dense<0.000000e+00> : vector<8x32xf32>
    %15 = tpu.matmul %14, %6, %cst_18 {dimension_numbers = #tpu.dot_dimension_numbers<[1], [0], [0], [1], [0, 0, 1, 1], [], []>} : vector<8x32xbf16>, vector<32x32xbf16>, vector<8x32xf32> -> vector<8x32xf32>
    %16 = vector.broadcast %7 : vector<1x32xf32> to vector<8x32xf32>
    %17 = arith.addf %15, %16 : vector<8x32xf32>
    %18 = arith.negf %13 : vector<8x32xf32>
    %19 = math.exp %18 : vector<8x32xf32>
    %cst_19 = arith.constant 1.000000e+00 : f32
    %20 = vector.broadcast %cst_19 : f32 to vector<8x32xf32>
    %21 = arith.addf %20, %19 : vector<8x32xf32>
    %22 = arith.divf %20, %21 : vector<8x32xf32>
    %23 = arith.mulf %13, %22 : vector<8x32xf32>
    %24 = arith.mulf %23, %17 : vector<8x32xf32>
    %c0_20 = arith.constant 0 : index
    %c0_21 = arith.constant 0 : index
    %c0_22 = arith.constant 0 : index
    %25 = vector.load %arg11[%c0_20, %c0_21, %c0_22] : memref<1x8x32xf32, #tpu.memory_space<vmem>>, vector<1x8x32xf32>
    %26 = vector.shape_cast %25 : vector<1x8x32xf32> to vector<8x32xf32>
    %27 = vector.shape_cast %24 : vector<8x32xf32> to vector<1x8x32xf32>
    tpu.vector_store %arg11[%c0_20, %c0_21, %c0_22], %27 {strides = array<i32>} : memref<1x8x32xf32, #tpu.memory_space<vmem>>, vector<1x8x32xf32>,
    %28 = vector.extract_strided_slice %9 {offsets = [0, 0], sizes = [1, 32], strides = [1, 1]} : vector<8x32xf32> to vector<1x32xf32>
    %29 = arith.truncf %28 : vector<1x32xf32> to vector<1x32xbf16>
    %cst_23 = arith.constant dense<0.000000e+00> : vector<1x128xf32>
    %30 = tpu.matmul %29, %0, %cst_23 {dimension_numbers = #tpu.dot_dimension_numbers<[1], [0], [0], [1], [0, 0, 1, 1], [], []>} : vector<1x32xbf16>, vector<32x128xbf16>, vector<1x128xf32> -> vector<1x128xf32>
    %31 = arith.addf %30, %1 : vector<1x128xf32>
    %32 = arith.truncf %28 : vector<1x32xf32> to vector<1x32xbf16>
    %cst_24 = arith.constant dense<0.000000e+00> : vector<1x128xf32>
    %33 = tpu.matmul %32, %2, %cst_24 {dimension_numbers = #tpu.dot_dimension_numbers<[1], [0], [0], [1], [0, 0, 1, 1], [], []>} : vector<1x32xbf16>, vector<32x128xbf16>, vector<1x128xf32> -> vector<1x128xf32>
    %34 = arith.addf %33, %3 : vector<1x128xf32>
    %35 = arith.negf %31 : vector<1x128xf32>
    %36 = math.exp %35 : vector<1x128xf32>
    %cst_25 = arith.constant 1.000000e+00 : f32
    %37 = vector.broadcast %cst_25 : f32 to vector<1x128xf32>
    %38 = arith.addf %37, %36 : vector<1x128xf32>
    %39 = arith.divf %37, %38 : vector<1x128xf32>
    %40 = arith.mulf %31, %39 : vector<1x128xf32>
    %41 = arith.mulf %40, %34 : vector<1x128xf32>
    %c0_26 = arith.constant 0 : index
    %c0_27 = arith.constant 0 : index
    %c0_28 = arith.constant 0 : index
    %42 = vector.load %arg10[%c0_26, %c0_27, %c0_28] : memref<1x1x128xf32, #tpu.memory_space<vmem>>, vector<1x1x128xf32>
    %43 = vector.shape_cast %42 : vector<1x1x128xf32> to vector<1x128xf32>
    %44 = vector.shape_cast %41 : vector<1x128xf32> to vector<1x1x128xf32>
    tpu.vector_store %arg10[%c0_26, %c0_27, %c0_28], %44 {strides = array<i32>} : memref<1x1x128xf32, #tpu.memory_space<vmem>>, vector<1x1x128xf32>,
    return
  }
  func.func @transform_0(%arg0: i32) -> (i32, i32, i32) {
    %c0_i32 = arith.constant 0 : i32
    %c0_i32_0 = arith.constant 0 : i32
    %c0_i32_1 = arith.constant 0 : i32
    return %arg0, %c0_i32, %c0_i32_0 : i32, i32, i32
  }
  func.func @transform_1(%arg0: i32) -> (i32, i32) {
    %c0_i32 = arith.constant 0 : i32
    %c0_i32_0 = arith.constant 0 : i32
    %c0_i32_1 = arith.constant 0 : i32
    return %c0_i32, %c0_i32_0 : i32, i32
  }
  func.func @transform_2(%arg0: i32) -> (i32, i32) {
    %c0_i32 = arith.constant 0 : i32
    %c0_i32_0 = arith.constant 0 : i32
    %c0_i32_1 = arith.constant 0 : i32
    return %c0_i32, %c0_i32_0 : i32, i32
  }
  func.func @transform_3(%arg0: i32) -> (i32, i32) {
    %c0_i32 = arith.constant 0 : i32
    %c0_i32_0 = arith.constant 0 : i32
    %c0_i32_1 = arith.constant 0 : i32
    return %c0_i32, %c0_i32_0 : i32, i32
  }
  func.func @transform_4(%arg0: i32) -> (i32, i32) {
    %c0_i32 = arith.constant 0 : i32
    %c0_i32_0 = arith.constant 0 : i32
    %c0_i32_1 = arith.constant 0 : i32
    return %c0_i32, %c0_i32_0 : i32, i32
  }
  func.func @transform_5(%arg0: i32) -> (i32, i32) {
    %c0_i32 = arith.constant 0 : i32
    %c0_i32_0 = arith.constant 0 : i32
    %c0_i32_1 = arith.constant 0 : i32
    return %c0_i32, %c0_i32_0 : i32, i32
  }
  func.func @transform_6(%arg0: i32) -> (i32, i32) {
    %c0_i32 = arith.constant 0 : i32
    %c0_i32_0 = arith.constant 0 : i32
    %c0_i32_1 = arith.constant 0 : i32
    return %c0_i32, %c0_i32_0 : i32, i32
  }
  func.func @transform_7(%arg0: i32) -> (i32, i32) {
    %c0_i32 = arith.constant 0 : i32
    %c0_i32_0 = arith.constant 0 : i32
    %c0_i32_1 = arith.constant 0 : i32
    return %c0_i32, %c0_i32_0 : i32, i32
  }
  func.func @transform_8(%arg0: i32) -> (i32, i32) {
    %c0_i32 = arith.constant 0 : i32
    %c0_i32_0 = arith.constant 0 : i32
    %c0_i32_1 = arith.constant 0 : i32
    return %c0_i32, %c0_i32_0 : i32, i32
  }
  func.func @transform_9(%arg0: i32) -> (i32, i32, i32) {
    %c0_i32 = arith.constant 0 : i32
    %c0_i32_0 = arith.constant 0 : i32
    %c0_i32_1 = arith.constant 0 : i32
    return %arg0, %c0_i32, %c0_i32_0 : i32, i32, i32
  }
  func.func @transform_10(%arg0: i32) -> (i32, i32, i32) {
    %c0_i32 = arith.constant 0 : i32
    %c0_i32_0 = arith.constant 0 : i32
    %c0_i32_1 = arith.constant 0 : i32
    return %arg0, %c0_i32, %c0_i32_0 : i32, i32, i32
  }
}

module attributes {stable_mosaic.version = 11 : i64} {
  func.func @_t3d_stage1_kernel(%arg0: i32, %arg1: memref<1x4x32xf32, #tpu.memory_space<vmem>>, %arg2: memref<1x6x4x32xf32, #tpu.memory_space<vmem>>, %arg3: memref<32x32xbf16, #tpu.memory_space<vmem>>, %arg4: memref<1x32xf32, #tpu.memory_space<vmem>>, %arg5: memref<32x32xbf16, #tpu.memory_space<vmem>>, %arg6: memref<1x32xf32, #tpu.memory_space<vmem>>, %arg7: memref<32x32xbf16, #tpu.memory_space<vmem>>, %arg8: memref<1x32xf32, #tpu.memory_space<vmem>>, %arg9: memref<32x32xbf16, #tpu.memory_space<vmem>>, %arg10: memref<1x32xf32, #tpu.memory_space<vmem>>, %arg11: memref<1x32xf32, #tpu.memory_space<vmem>>, %arg12: memref<1x6x4x32xf32, #tpu.memory_space<vmem>>) attributes {dimension_semantics = [#tpu.dimension_semantics<parallel>], iteration_bounds = array<i64: 2>, scalar_prefetch = 0 : i64, scratch_operands = 0 : i64, tpu.core_type = #tpu.core_type<tc>, window_params = [{transform_indices = @transform_0, window_bounds = array<i64: 1, 4, 32>}, {transform_indices = @transform_1, window_bounds = array<i64: 1, 6, 4, 32>}, {pipeline_mode = #tpu.pipeline_mode<synchronous>, transform_indices = @transform_2, window_bounds = array<i64: 32, 32>}, {pipeline_mode = #tpu.pipeline_mode<synchronous>, transform_indices = @transform_3, window_bounds = array<i64: 1, 32>}, {pipeline_mode = #tpu.pipeline_mode<synchronous>, transform_indices = @transform_4, window_bounds = array<i64: 32, 32>}, {pipeline_mode = #tpu.pipeline_mode<synchronous>, transform_indices = @transform_5, window_bounds = array<i64: 1, 32>}, {pipeline_mode = #tpu.pipeline_mode<synchronous>, transform_indices = @transform_6, window_bounds = array<i64: 32, 32>}, {pipeline_mode = #tpu.pipeline_mode<synchronous>, transform_indices = @transform_7, window_bounds = array<i64: 1, 32>}, {pipeline_mode = #tpu.pipeline_mode<synchronous>, transform_indices = @transform_8, window_bounds = array<i64: 32, 32>}, {pipeline_mode = #tpu.pipeline_mode<synchronous>, transform_indices = @transform_9, window_bounds = array<i64: 1, 32>}, {pipeline_mode = #tpu.pipeline_mode<synchronous>, transform_indices = @transform_10, window_bounds = array<i64: 1, 32>}, {transform_indices = @transform_11, window_bounds = array<i64: 1, 6, 4, 32>}]} {
    %c0 = arith.constant 0 : index
    %c0_0 = arith.constant 0 : index
    %0 = vector.load %arg3[%c0, %c0_0] : memref<32x32xbf16, #tpu.memory_space<vmem>>, vector<32x32xbf16>
    %c0_1 = arith.constant 0 : index
    %c0_2 = arith.constant 0 : index
    %1 = vector.load %arg4[%c0_1, %c0_2] : memref<1x32xf32, #tpu.memory_space<vmem>>, vector<1x32xf32>
    %c0_3 = arith.constant 0 : index
    %c0_4 = arith.constant 0 : index
    %2 = vector.load %arg5[%c0_3, %c0_4] : memref<32x32xbf16, #tpu.memory_space<vmem>>, vector<32x32xbf16>
    %c0_5 = arith.constant 0 : index
    %c0_6 = arith.constant 0 : index
    %3 = vector.load %arg6[%c0_5, %c0_6] : memref<1x32xf32, #tpu.memory_space<vmem>>, vector<1x32xf32>
    %c0_7 = arith.constant 0 : index
    %c0_8 = arith.constant 0 : index
    %4 = vector.load %arg7[%c0_7, %c0_8] : memref<32x32xbf16, #tpu.memory_space<vmem>>, vector<32x32xbf16>
    %c0_9 = arith.constant 0 : index
    %c0_10 = arith.constant 0 : index
    %5 = vector.load %arg8[%c0_9, %c0_10] : memref<1x32xf32, #tpu.memory_space<vmem>>, vector<1x32xf32>
    %c0_11 = arith.constant 0 : index
    %c0_12 = arith.constant 0 : index
    %6 = vector.load %arg9[%c0_11, %c0_12] : memref<32x32xbf16, #tpu.memory_space<vmem>>, vector<32x32xbf16>
    %c0_13 = arith.constant 0 : index
    %c0_14 = arith.constant 0 : index
    %7 = vector.load %arg10[%c0_13, %c0_14] : memref<1x32xf32, #tpu.memory_space<vmem>>, vector<1x32xf32>
    %c0_15 = arith.constant 0 : index
    %c0_16 = arith.constant 0 : index
    %8 = vector.load %arg11[%c0_15, %c0_16] : memref<1x32xf32, #tpu.memory_space<vmem>>, vector<1x32xf32>
    %c0_17 = arith.constant 0 : index
    %c0_18 = arith.constant 0 : index
    %c0_19 = arith.constant 0 : index
    %9 = vector.load %arg1[%c0_17, %c0_18, %c0_19] : memref<1x4x32xf32, #tpu.memory_space<vmem>>, vector<1x4x32xf32>
    %10 = vector.shape_cast %9 : vector<1x4x32xf32> to vector<4x32xf32>
    %c0_20 = arith.constant 0 : index
    %c0_21 = arith.constant 0 : index
    %c0_22 = arith.constant 0 : index
    %c0_23 = arith.constant 0 : index
    %11 = vector.load %arg2[%c0_20, %c0_21, %c0_22, %c0_23] : memref<1x6x4x32xf32, #tpu.memory_space<vmem>>, vector<1x6x4x32xf32>
    %12 = vector.shape_cast %11 : vector<1x6x4x32xf32> to vector<6x4x32xf32>
    %13 = arith.truncf %10 : vector<4x32xf32> to vector<4x32xbf16>
    %cst = arith.constant dense<0.000000e+00> : vector<4x32xf32>
    %14 = tpu.matmul %13, %0, %cst {dimension_numbers = #tpu.dot_dimension_numbers<[1], [0], [0], [1], [0, 0, 1, 1], [], []>} : vector<4x32xbf16>, vector<32x32xbf16>, vector<4x32xf32> -> vector<4x32xf32>
    %15 = vector.broadcast %1 : vector<1x32xf32> to vector<4x32xf32>
    %16 = arith.addf %14, %15 : vector<4x32xf32>
    %17 = vector.shape_cast %2 : vector<32x32xbf16> to vector<1x32x32xbf16>
    %18 = vector.broadcast %17 : vector<1x32x32xbf16> to vector<6x32x32xbf16>
    %19 = arith.truncf %12 : vector<6x4x32xf32> to vector<6x4x32xbf16>
    "tpu.trace_start"() <{level = 10 : i32, message = "bld,bde->ble"}> : () -> ()
    %cst_24 = arith.constant dense<0.000000e+00> : vector<6x4x32xf32>
    %20 = tpu.matmul %19, %18, %cst_24 {dimension_numbers = #tpu.dot_dimension_numbers<[2], [1], [1], [2], [0, 0, 0, 1, 1, 2], [0], [0]>} : vector<6x4x32xbf16>, vector<6x32x32xbf16>, vector<6x4x32xf32> -> vector<6x4x32xf32>
    "tpu.trace_stop"() : () -> ()
    %21 = vector.shape_cast %3 : vector<1x32xf32> to vector<1x1x32xf32>
    %22 = vector.broadcast %21 : vector<1x1x32xf32> to vector<6x4x32xf32>
    %23 = arith.addf %20, %22 : vector<6x4x32xf32>
    %24 = vector.shape_cast %4 : vector<32x32xbf16> to vector<1x32x32xbf16>
    %25 = vector.broadcast %24 : vector<1x32x32xbf16> to vector<6x32x32xbf16>
    %26 = arith.truncf %12 : vector<6x4x32xf32> to vector<6x4x32xbf16>
    "tpu.trace_start"() <{level = 10 : i32, message = "bld,bde->ble"}> : () -> ()
    %cst_25 = arith.constant dense<0.000000e+00> : vector<6x4x32xf32>
    %27 = tpu.matmul %26, %25, %cst_25 {dimension_numbers = #tpu.dot_dimension_numbers<[2], [1], [1], [2], [0, 0, 0, 1, 1, 2], [0], [0]>} : vector<6x4x32xbf16>, vector<6x32x32xbf16>, vector<6x4x32xf32> -> vector<6x4x32xf32>
    "tpu.trace_stop"() : () -> ()
    %28 = vector.shape_cast %5 : vector<1x32xf32> to vector<1x1x32xf32>
    %29 = vector.broadcast %28 : vector<1x1x32xf32> to vector<6x4x32xf32>
    %30 = arith.addf %27, %29 : vector<6x4x32xf32>
    %31 = vector.shape_cast %16 : vector<4x32xf32> to vector<1x4x32xf32>
    %32 = vector.broadcast %31 : vector<1x4x32xf32> to vector<6x4x32xf32>
    %33 = vector.extract_strided_slice %32 {offsets = [0, 0, 0], sizes = [6, 4, 8], strides = [1, 1, 1]} : vector<6x4x32xf32> to vector<6x4x8xf32>
    %34 = arith.truncf %33 : vector<6x4x8xf32> to vector<6x4x8xbf16>
    %35 = vector.extract_strided_slice %23 {offsets = [0, 0, 0], sizes = [6, 4, 8], strides = [1, 1, 1]} : vector<6x4x32xf32> to vector<6x4x8xf32>
    %36 = arith.truncf %35 : vector<6x4x8xf32> to vector<6x4x8xbf16>
    "tpu.trace_start"() <{level = 10 : i32, message = "bqd,bkd->bqk"}> : () -> ()
    %cst_26 = arith.constant dense<0.000000e+00> : vector<6x4x4xf32>
    %37 = tpu.matmul %34, %36, %cst_26 {dimension_numbers = #tpu.dot_dimension_numbers<[2], [2], [1], [1], [0, 0, 0, 1, 1, 1], [0], [0]>} : vector<6x4x8xbf16>, vector<6x4x8xbf16>, vector<6x4x4xf32> -> vector<6x4x4xf32>
    "tpu.trace_stop"() : () -> ()
    %cst_27 = arith.constant 0.353553385 : f32
    %38 = vector.broadcast %cst_27 : f32 to vector<6x4x4xf32>
    %39 = arith.mulf %37, %38 : vector<6x4x4xf32>
    %cst_28 = arith.constant dense<0xFF800000> : vector<6x4xf32>
    %40 = vector.multi_reduction <maximumf>, %39, %cst_28 [2] : vector<6x4x4xf32> to vector<6x4xf32>
    %41 = vector.shape_cast %40 : vector<6x4xf32> to vector<6x4x1xf32>
    %42 = vector.broadcast %41 : vector<6x4x1xf32> to vector<6x4x4xf32>
    %43 = arith.subf %39, %42 : vector<6x4x4xf32>
    %44 = math.exp %43 : vector<6x4x4xf32>
    %cst_29 = arith.constant dense<0.000000e+00> : vector<6x4xf32>
    %45 = vector.multi_reduction <add>, %44, %cst_29 [2] : vector<6x4x4xf32> to vector<6x4xf32>
    %46 = vector.shape_cast %45 : vector<6x4xf32> to vector<6x4x1xf32>
    %47 = vector.broadcast %46 : vector<6x4x1xf32> to vector<6x4x4xf32>
    %48 = arith.divf %44, %47 : vector<6x4x4xf32>
    %49 = arith.truncf %48 : vector<6x4x4xf32> to vector<6x4x4xbf16>
    %50 = vector.extract_strided_slice %30 {offsets = [0, 0, 0], sizes = [6, 4, 8], strides = [1, 1, 1]} : vector<6x4x32xf32> to vector<6x4x8xf32>
    %51 = arith.truncf %50 : vector<6x4x8xf32> to vector<6x4x8xbf16>
    "tpu.trace_start"() <{level = 10 : i32, message = "bqk,bkd->bqd"}> : () -> ()
    %cst_30 = arith.constant dense<0.000000e+00> : vector<6x4x8xf32>
    %52 = tpu.matmul %49, %51, %cst_30 {dimension_numbers = #tpu.dot_dimension_numbers<[2], [1], [1], [2], [0, 0, 0, 1, 1, 2], [0], [0]>} : vector<6x4x4xbf16>, vector<6x4x8xbf16>, vector<6x4x8xf32> -> vector<6x4x8xf32>
    "tpu.trace_stop"() : () -> ()
    %53 = vector.extract_strided_slice %32 {offsets = [0, 0, 8], sizes = [6, 4, 8], strides = [1, 1, 1]} : vector<6x4x32xf32> to vector<6x4x8xf32>
    %54 = arith.truncf %53 : vector<6x4x8xf32> to vector<6x4x8xbf16>
    %55 = vector.extract_strided_slice %23 {offsets = [0, 0, 8], sizes = [6, 4, 8], strides = [1, 1, 1]} : vector<6x4x32xf32> to vector<6x4x8xf32>
    %56 = arith.truncf %55 : vector<6x4x8xf32> to vector<6x4x8xbf16>
    "tpu.trace_start"() <{level = 10 : i32, message = "bqd,bkd->bqk"}> : () -> ()
    %cst_31 = arith.constant dense<0.000000e+00> : vector<6x4x4xf32>
    %57 = tpu.matmul %54, %56, %cst_31 {dimension_numbers = #tpu.dot_dimension_numbers<[2], [2], [1], [1], [0, 0, 0, 1, 1, 1], [0], [0]>} : vector<6x4x8xbf16>, vector<6x4x8xbf16>, vector<6x4x4xf32> -> vector<6x4x4xf32>
    "tpu.trace_stop"() : () -> ()
    %cst_32 = arith.constant 0.353553385 : f32
    %58 = vector.broadcast %cst_32 : f32 to vector<6x4x4xf32>
    %59 = arith.mulf %57, %58 : vector<6x4x4xf32>
    %cst_33 = arith.constant dense<0xFF800000> : vector<6x4xf32>
    %60 = vector.multi_reduction <maximumf>, %59, %cst_33 [2] : vector<6x4x4xf32> to vector<6x4xf32>
    %61 = vector.shape_cast %60 : vector<6x4xf32> to vector<6x4x1xf32>
    %62 = vector.broadcast %61 : vector<6x4x1xf32> to vector<6x4x4xf32>
    %63 = arith.subf %59, %62 : vector<6x4x4xf32>
    %64 = math.exp %63 : vector<6x4x4xf32>
    %cst_34 = arith.constant dense<0.000000e+00> : vector<6x4xf32>
    %65 = vector.multi_reduction <add>, %64, %cst_34 [2] : vector<6x4x4xf32> to vector<6x4xf32>
    %66 = vector.shape_cast %65 : vector<6x4xf32> to vector<6x4x1xf32>
    %67 = vector.broadcast %66 : vector<6x4x1xf32> to vector<6x4x4xf32>
    %68 = arith.divf %64, %67 : vector<6x4x4xf32>
    %69 = arith.truncf %68 : vector<6x4x4xf32> to vector<6x4x4xbf16>
    %70 = vector.extract_strided_slice %30 {offsets = [0, 0, 8], sizes = [6, 4, 8], strides = [1, 1, 1]} : vector<6x4x32xf32> to vector<6x4x8xf32>
    %71 = arith.truncf %70 : vector<6x4x8xf32> to vector<6x4x8xbf16>
    "tpu.trace_start"() <{level = 10 : i32, message = "bqk,bkd->bqd"}> : () -> ()
    %cst_35 = arith.constant dense<0.000000e+00> : vector<6x4x8xf32>
    %72 = tpu.matmul %69, %71, %cst_35 {dimension_numbers = #tpu.dot_dimension_numbers<[2], [1], [1], [2], [0, 0, 0, 1, 1, 2], [0], [0]>} : vector<6x4x4xbf16>, vector<6x4x8xbf16>, vector<6x4x8xf32> -> vector<6x4x8xf32>
    "tpu.trace_stop"() : () -> ()
    %73 = vector.extract_strided_slice %32 {offsets = [0, 0, 16], sizes = [6, 4, 8], strides = [1, 1, 1]} : vector<6x4x32xf32> to vector<6x4x8xf32>
    %74 = arith.truncf %73 : vector<6x4x8xf32> to vector<6x4x8xbf16>
    %75 = vector.extract_strided_slice %23 {offsets = [0, 0, 16], sizes = [6, 4, 8], strides = [1, 1, 1]} : vector<6x4x32xf32> to vector<6x4x8xf32>
    %76 = arith.truncf %75 : vector<6x4x8xf32> to vector<6x4x8xbf16>
    "tpu.trace_start"() <{level = 10 : i32, message = "bqd,bkd->bqk"}> : () -> ()
    %cst_36 = arith.constant dense<0.000000e+00> : vector<6x4x4xf32>
    %77 = tpu.matmul %74, %76, %cst_36 {dimension_numbers = #tpu.dot_dimension_numbers<[2], [2], [1], [1], [0, 0, 0, 1, 1, 1], [0], [0]>} : vector<6x4x8xbf16>, vector<6x4x8xbf16>, vector<6x4x4xf32> -> vector<6x4x4xf32>
    "tpu.trace_stop"() : () -> ()
    %cst_37 = arith.constant 0.353553385 : f32
    %78 = vector.broadcast %cst_37 : f32 to vector<6x4x4xf32>
    %79 = arith.mulf %77, %78 : vector<6x4x4xf32>
    %cst_38 = arith.constant dense<0xFF800000> : vector<6x4xf32>
    %80 = vector.multi_reduction <maximumf>, %79, %cst_38 [2] : vector<6x4x4xf32> to vector<6x4xf32>
    %81 = vector.shape_cast %80 : vector<6x4xf32> to vector<6x4x1xf32>
    %82 = vector.broadcast %81 : vector<6x4x1xf32> to vector<6x4x4xf32>
    %83 = arith.subf %79, %82 : vector<6x4x4xf32>
    %84 = math.exp %83 : vector<6x4x4xf32>
    %cst_39 = arith.constant dense<0.000000e+00> : vector<6x4xf32>
    %85 = vector.multi_reduction <add>, %84, %cst_39 [2] : vector<6x4x4xf32> to vector<6x4xf32>
    %86 = vector.shape_cast %85 : vector<6x4xf32> to vector<6x4x1xf32>
    %87 = vector.broadcast %86 : vector<6x4x1xf32> to vector<6x4x4xf32>
    %88 = arith.divf %84, %87 : vector<6x4x4xf32>
    %89 = arith.truncf %88 : vector<6x4x4xf32> to vector<6x4x4xbf16>
    %90 = vector.extract_strided_slice %30 {offsets = [0, 0, 16], sizes = [6, 4, 8], strides = [1, 1, 1]} : vector<6x4x32xf32> to vector<6x4x8xf32>
    %91 = arith.truncf %90 : vector<6x4x8xf32> to vector<6x4x8xbf16>
    "tpu.trace_start"() <{level = 10 : i32, message = "bqk,bkd->bqd"}> : () -> ()
    %cst_40 = arith.constant dense<0.000000e+00> : vector<6x4x8xf32>
    %92 = tpu.matmul %89, %91, %cst_40 {dimension_numbers = #tpu.dot_dimension_numbers<[2], [1], [1], [2], [0, 0, 0, 1, 1, 2], [0], [0]>} : vector<6x4x4xbf16>, vector<6x4x8xbf16>, vector<6x4x8xf32> -> vector<6x4x8xf32>
    "tpu.trace_stop"() : () -> ()
    %93 = vector.extract_strided_slice %32 {offsets = [0, 0, 24], sizes = [6, 4, 8], strides = [1, 1, 1]} : vector<6x4x32xf32> to vector<6x4x8xf32>
    %94 = arith.truncf %93 : vector<6x4x8xf32> to vector<6x4x8xbf16>
    %95 = vector.extract_strided_slice %23 {offsets = [0, 0, 24], sizes = [6, 4, 8], strides = [1, 1, 1]} : vector<6x4x32xf32> to vector<6x4x8xf32>
    %96 = arith.truncf %95 : vector<6x4x8xf32> to vector<6x4x8xbf16>
    "tpu.trace_start"() <{level = 10 : i32, message = "bqd,bkd->bqk"}> : () -> ()
    %cst_41 = arith.constant dense<0.000000e+00> : vector<6x4x4xf32>
    %97 = tpu.matmul %94, %96, %cst_41 {dimension_numbers = #tpu.dot_dimension_numbers<[2], [2], [1], [1], [0, 0, 0, 1, 1, 1], [0], [0]>} : vector<6x4x8xbf16>, vector<6x4x8xbf16>, vector<6x4x4xf32> -> vector<6x4x4xf32>
    "tpu.trace_stop"() : () -> ()
    %cst_42 = arith.constant 0.353553385 : f32
    %98 = vector.broadcast %cst_42 : f32 to vector<6x4x4xf32>
    %99 = arith.mulf %97, %98 : vector<6x4x4xf32>
    %cst_43 = arith.constant dense<0xFF800000> : vector<6x4xf32>
    %100 = vector.multi_reduction <maximumf>, %99, %cst_43 [2] : vector<6x4x4xf32> to vector<6x4xf32>
    %101 = vector.shape_cast %100 : vector<6x4xf32> to vector<6x4x1xf32>
    %102 = vector.broadcast %101 : vector<6x4x1xf32> to vector<6x4x4xf32>
    %103 = arith.subf %99, %102 : vector<6x4x4xf32>
    %104 = math.exp %103 : vector<6x4x4xf32>
    %cst_44 = arith.constant dense<0.000000e+00> : vector<6x4xf32>
    %105 = vector.multi_reduction <add>, %104, %cst_44 [2] : vector<6x4x4xf32> to vector<6x4xf32>
    %106 = vector.shape_cast %105 : vector<6x4xf32> to vector<6x4x1xf32>
    %107 = vector.broadcast %106 : vector<6x4x1xf32> to vector<6x4x4xf32>
    %108 = arith.divf %104, %107 : vector<6x4x4xf32>
    %109 = arith.truncf %108 : vector<6x4x4xf32> to vector<6x4x4xbf16>
    %110 = vector.extract_strided_slice %30 {offsets = [0, 0, 24], sizes = [6, 4, 8], strides = [1, 1, 1]} : vector<6x4x32xf32> to vector<6x4x8xf32>
    %111 = arith.truncf %110 : vector<6x4x8xf32> to vector<6x4x8xbf16>
    "tpu.trace_start"() <{level = 10 : i32, message = "bqk,bkd->bqd"}> : () -> ()
    %cst_45 = arith.constant dense<0.000000e+00> : vector<6x4x8xf32>
    %112 = tpu.matmul %109, %111, %cst_45 {dimension_numbers = #tpu.dot_dimension_numbers<[2], [1], [1], [2], [0, 0, 0, 1, 1, 2], [0], [0]>} : vector<6x4x4xbf16>, vector<6x4x8xbf16>, vector<6x4x8xf32> -> vector<6x4x8xf32>
    "tpu.trace_stop"() : () -> ()
    %113 = tpu.concatenate %52, %72, %92, %112 in 2 : vector<6x4x8xf32>, vector<6x4x8xf32>, vector<6x4x8xf32>, vector<6x4x8xf32> -> vector<6x4x32xf32>
    %114 = vector.shape_cast %6 : vector<32x32xbf16> to vector<1x32x32xbf16>
    %115 = vector.broadcast %114 : vector<1x32x32xbf16> to vector<6x32x32xbf16>
    %116 = arith.truncf %113 : vector<6x4x32xf32> to vector<6x4x32xbf16>
    "tpu.trace_start"() <{level = 10 : i32, message = "bld,bde->ble"}> : () -> ()
    %cst_46 = arith.constant dense<0.000000e+00> : vector<6x4x32xf32>
    %117 = tpu.matmul %116, %115, %cst_46 {dimension_numbers = #tpu.dot_dimension_numbers<[2], [1], [1], [2], [0, 0, 0, 1, 1, 2], [0], [0]>} : vector<6x4x32xbf16>, vector<6x32x32xbf16>, vector<6x4x32xf32> -> vector<6x4x32xf32>
    "tpu.trace_stop"() : () -> ()
    %118 = vector.shape_cast %7 : vector<1x32xf32> to vector<1x1x32xf32>
    %119 = vector.broadcast %118 : vector<1x1x32xf32> to vector<6x4x32xf32>
    %120 = arith.addf %117, %119 : vector<6x4x32xf32>
    %121 = arith.addf %12, %120 : vector<6x4x32xf32>
    %122 = arith.mulf %121, %121 : vector<6x4x32xf32>
    %cst_47 = arith.constant dense<0.000000e+00> : vector<6x4xf32>
    %123 = vector.multi_reduction <add>, %122, %cst_47 [2] : vector<6x4x32xf32> to vector<6x4xf32>
    %124 = vector.shape_cast %123 : vector<6x4xf32> to vector<6x4x1xf32>
    %cst_48 = arith.constant 3.200000e+01 : f32
    %125 = vector.broadcast %cst_48 : f32 to vector<6x4x1xf32>
    %126 = arith.divf %124, %125 : vector<6x4x1xf32>
    %cst_49 = arith.constant 9.99999997E-7 : f32
    %127 = vector.broadcast %cst_49 : f32 to vector<6x4x1xf32>
    %128 = arith.addf %126, %127 : vector<6x4x1xf32>
    %129 = math.rsqrt %128 : vector<6x4x1xf32>
    %130 = vector.broadcast %129 : vector<6x4x1xf32> to vector<6x4x32xf32>
    %131 = arith.mulf %121, %130 : vector<6x4x32xf32>
    %132 = vector.shape_cast %8 : vector<1x32xf32> to vector<1x1x32xf32>
    %133 = vector.broadcast %132 : vector<1x1x32xf32> to vector<6x4x32xf32>
    %134 = arith.mulf %131, %133 : vector<6x4x32xf32>
    %c0_50 = arith.constant 0 : index
    %c0_51 = arith.constant 0 : index
    %c0_52 = arith.constant 0 : index
    %c0_53 = arith.constant 0 : index
    %135 = vector.load %arg12[%c0_50, %c0_51, %c0_52, %c0_53] : memref<1x6x4x32xf32, #tpu.memory_space<vmem>>, vector<1x6x4x32xf32>
    %136 = vector.shape_cast %135 : vector<1x6x4x32xf32> to vector<6x4x32xf32>
    %137 = vector.shape_cast %134 : vector<6x4x32xf32> to vector<1x6x4x32xf32>
    tpu.vector_store %arg12[%c0_50, %c0_51, %c0_52, %c0_53], %137 {strides = array<i32>} : memref<1x6x4x32xf32, #tpu.memory_space<vmem>>, vector<1x6x4x32xf32>,
    return
  }
  func.func @transform_0(%arg0: i32) -> (i32, i32, i32) {
    %c0_i32 = arith.constant 0 : i32
    %c0_i32_0 = arith.constant 0 : i32
    %c0_i32_1 = arith.constant 0 : i32
    return %arg0, %c0_i32, %c0_i32_0 : i32, i32, i32
  }
  func.func @transform_1(%arg0: i32) -> (i32, i32, i32, i32) {
    %c0_i32 = arith.constant 0 : i32
    %c0_i32_0 = arith.constant 0 : i32
    %c0_i32_1 = arith.constant 0 : i32
    %c0_i32_2 = arith.constant 0 : i32
    return %arg0, %c0_i32, %c0_i32_0, %c0_i32_1 : i32, i32, i32, i32
  }
  func.func @transform_2(%arg0: i32) -> (i32, i32) {
    %c0_i32 = arith.constant 0 : i32
    %c0_i32_0 = arith.constant 0 : i32
    %c0_i32_1 = arith.constant 0 : i32
    return %c0_i32, %c0_i32_0 : i32, i32
  }
  func.func @transform_3(%arg0: i32) -> (i32, i32) {
    %c0_i32 = arith.constant 0 : i32
    %c0_i32_0 = arith.constant 0 : i32
    %c0_i32_1 = arith.constant 0 : i32
    return %c0_i32, %c0_i32_0 : i32, i32
  }
  func.func @transform_4(%arg0: i32) -> (i32, i32) {
    %c0_i32 = arith.constant 0 : i32
    %c0_i32_0 = arith.constant 0 : i32
    %c0_i32_1 = arith.constant 0 : i32
    return %c0_i32, %c0_i32_0 : i32, i32
  }
  func.func @transform_5(%arg0: i32) -> (i32, i32) {
    %c0_i32 = arith.constant 0 : i32
    %c0_i32_0 = arith.constant 0 : i32
    %c0_i32_1 = arith.constant 0 : i32
    return %c0_i32, %c0_i32_0 : i32, i32
  }
  func.func @transform_6(%arg0: i32) -> (i32, i32) {
    %c0_i32 = arith.constant 0 : i32
    %c0_i32_0 = arith.constant 0 : i32
    %c0_i32_1 = arith.constant 0 : i32
    return %c0_i32, %c0_i32_0 : i32, i32
  }
  func.func @transform_7(%arg0: i32) -> (i32, i32) {
    %c0_i32 = arith.constant 0 : i32
    %c0_i32_0 = arith.constant 0 : i32
    %c0_i32_1 = arith.constant 0 : i32
    return %c0_i32, %c0_i32_0 : i32, i32
  }
  func.func @transform_8(%arg0: i32) -> (i32, i32) {
    %c0_i32 = arith.constant 0 : i32
    %c0_i32_0 = arith.constant 0 : i32
    %c0_i32_1 = arith.constant 0 : i32
    return %c0_i32, %c0_i32_0 : i32, i32
  }
  func.func @transform_9(%arg0: i32) -> (i32, i32) {
    %c0_i32 = arith.constant 0 : i32
    %c0_i32_0 = arith.constant 0 : i32
    %c0_i32_1 = arith.constant 0 : i32
    return %c0_i32, %c0_i32_0 : i32, i32
  }
  func.func @transform_10(%arg0: i32) -> (i32, i32) {
    %c0_i32 = arith.constant 0 : i32
    %c0_i32_0 = arith.constant 0 : i32
    %c0_i32_1 = arith.constant 0 : i32
    return %c0_i32, %c0_i32_0 : i32, i32
  }
  func.func @transform_11(%arg0: i32) -> (i32, i32, i32, i32) {
    %c0_i32 = arith.constant 0 : i32
    %c0_i32_0 = arith.constant 0 : i32
    %c0_i32_1 = arith.constant 0 : i32
    %c0_i32_2 = arith.constant 0 : i32
    return %arg0, %c0_i32, %c0_i32_0, %c0_i32_1 : i32, i32, i32, i32
  }
}

module attributes {stable_mosaic.version = 11 : i64} {
  func.func @_tlp_cross_kernel(%arg0: i32, %arg1: memref<1x8x32xf32, #tpu.memory_space<vmem>>, %arg2: memref<1x4x6x32xf32, #tpu.memory_space<vmem>>, %arg3: memref<32x32xbf16, #tpu.memory_space<vmem>>, %arg4: memref<1x32xf32, #tpu.memory_space<vmem>>, %arg5: memref<32x32xbf16, #tpu.memory_space<vmem>>, %arg6: memref<1x32xf32, #tpu.memory_space<vmem>>, %arg7: memref<32x32xbf16, #tpu.memory_space<vmem>>, %arg8: memref<1x32xf32, #tpu.memory_space<vmem>>, %arg9: memref<32x32xbf16, #tpu.memory_space<vmem>>, %arg10: memref<1x32xf32, #tpu.memory_space<vmem>>, %arg11: memref<1x32xf32, #tpu.memory_space<vmem>>, %arg12: memref<32x64xbf16, #tpu.memory_space<vmem>>, %arg13: memref<1x64xf32, #tpu.memory_space<vmem>>, %arg14: memref<32x64xbf16, #tpu.memory_space<vmem>>, %arg15: memref<1x64xf32, #tpu.memory_space<vmem>>, %arg16: memref<64x32xbf16, #tpu.memory_space<vmem>>, %arg17: memref<1x32xf32, #tpu.memory_space<vmem>>, %arg18: memref<1x32xf32, #tpu.memory_space<vmem>>, %arg19: memref<1x4x8x32xf32, #tpu.memory_space<vmem>>) attributes {dimension_semantics = [#tpu.dimension_semantics<parallel>], iteration_bounds = array<i64: 2>, scalar_prefetch = 0 : i64, scratch_operands = 0 : i64, tpu.core_type = #tpu.core_type<tc>, window_params = [{transform_indices = @transform_0, window_bounds = array<i64: 1, 8, 32>}, {transform_indices = @transform_1, window_bounds = array<i64: 1, 4, 6, 32>}, {pipeline_mode = #tpu.pipeline_mode<synchronous>, transform_indices = @transform_2, window_bounds = array<i64: 32, 32>}, {pipeline_mode = #tpu.pipeline_mode<synchronous>, transform_indices = @transform_3, window_bounds = array<i64: 1, 32>}, {pipeline_mode = #tpu.pipeline_mode<synchronous>, transform_indices = @transform_4, window_bounds = array<i64: 32, 32>}, {pipeline_mode = #tpu.pipeline_mode<synchronous>, transform_indices = @transform_5, window_bounds = array<i64: 1, 32>}, {pipeline_mode = #tpu.pipeline_mode<synchronous>, transform_indices = @transform_6, window_bounds = array<i64: 32, 32>}, {pipeline_mode = #tpu.pipeline_mode<synchronous>, transform_indices = @transform_7, window_bounds = array<i64: 1, 32>}, {pipeline_mode = #tpu.pipeline_mode<synchronous>, transform_indices = @transform_8, window_bounds = array<i64: 32, 32>}, {pipeline_mode = #tpu.pipeline_mode<synchronous>, transform_indices = @transform_9, window_bounds = array<i64: 1, 32>}, {pipeline_mode = #tpu.pipeline_mode<synchronous>, transform_indices = @transform_10, window_bounds = array<i64: 1, 32>}, {pipeline_mode = #tpu.pipeline_mode<synchronous>, transform_indices = @transform_11, window_bounds = array<i64: 32, 64>}, {pipeline_mode = #tpu.pipeline_mode<synchronous>, transform_indices = @transform_12, window_bounds = array<i64: 1, 64>}, {pipeline_mode = #tpu.pipeline_mode<synchronous>, transform_indices = @transform_13, window_bounds = array<i64: 32, 64>}, {pipeline_mode = #tpu.pipeline_mode<synchronous>, transform_indices = @transform_14, window_bounds = array<i64: 1, 64>}, {pipeline_mode = #tpu.pipeline_mode<synchronous>, transform_indices = @transform_15, window_bounds = array<i64: 64, 32>}, {pipeline_mode = #tpu.pipeline_mode<synchronous>, transform_indices = @transform_16, window_bounds = array<i64: 1, 32>}, {pipeline_mode = #tpu.pipeline_mode<synchronous>, transform_indices = @transform_17, window_bounds = array<i64: 1, 32>}, {transform_indices = @transform_18, window_bounds = array<i64: 1, 4, 8, 32>}]} {
    %c0 = arith.constant 0 : index
    %c0_0 = arith.constant 0 : index
    %0 = vector.load %arg3[%c0, %c0_0] : memref<32x32xbf16, #tpu.memory_space<vmem>>, vector<32x32xbf16>
    %c0_1 = arith.constant 0 : index
    %c0_2 = arith.constant 0 : index
    %1 = vector.load %arg4[%c0_1, %c0_2] : memref<1x32xf32, #tpu.memory_space<vmem>>, vector<1x32xf32>
    %c0_3 = arith.constant 0 : index
    %c0_4 = arith.constant 0 : index
    %2 = vector.load %arg5[%c0_3, %c0_4] : memref<32x32xbf16, #tpu.memory_space<vmem>>, vector<32x32xbf16>
    %c0_5 = arith.constant 0 : index
    %c0_6 = arith.constant 0 : index
    %3 = vector.load %arg6[%c0_5, %c0_6] : memref<1x32xf32, #tpu.memory_space<vmem>>, vector<1x32xf32>
    %c0_7 = arith.constant 0 : index
    %c0_8 = arith.constant 0 : index
    %4 = vector.load %arg7[%c0_7, %c0_8] : memref<32x32xbf16, #tpu.memory_space<vmem>>, vector<32x32xbf16>
    %c0_9 = arith.constant 0 : index
    %c0_10 = arith.constant 0 : index
    %5 = vector.load %arg8[%c0_9, %c0_10] : memref<1x32xf32, #tpu.memory_space<vmem>>, vector<1x32xf32>
    %c0_11 = arith.constant 0 : index
    %c0_12 = arith.constant 0 : index
    %6 = vector.load %arg9[%c0_11, %c0_12] : memref<32x32xbf16, #tpu.memory_space<vmem>>, vector<32x32xbf16>
    %c0_13 = arith.constant 0 : index
    %c0_14 = arith.constant 0 : index
    %7 = vector.load %arg10[%c0_13, %c0_14] : memref<1x32xf32, #tpu.memory_space<vmem>>, vector<1x32xf32>
    %c0_15 = arith.constant 0 : index
    %c0_16 = arith.constant 0 : index
    %8 = vector.load %arg11[%c0_15, %c0_16] : memref<1x32xf32, #tpu.memory_space<vmem>>, vector<1x32xf32>
    %c0_17 = arith.constant 0 : index
    %c0_18 = arith.constant 0 : index
    %9 = vector.load %arg12[%c0_17, %c0_18] : memref<32x64xbf16, #tpu.memory_space<vmem>>, vector<32x64xbf16>
    %c0_19 = arith.constant 0 : index
    %c0_20 = arith.constant 0 : index
    %10 = vector.load %arg13[%c0_19, %c0_20] : memref<1x64xf32, #tpu.memory_space<vmem>>, vector<1x64xf32>
    %c0_21 = arith.constant 0 : index
    %c0_22 = arith.constant 0 : index
    %11 = vector.load %arg14[%c0_21, %c0_22] : memref<32x64xbf16, #tpu.memory_space<vmem>>, vector<32x64xbf16>
    %c0_23 = arith.constant 0 : index
    %c0_24 = arith.constant 0 : index
    %12 = vector.load %arg15[%c0_23, %c0_24] : memref<1x64xf32, #tpu.memory_space<vmem>>, vector<1x64xf32>
    %c0_25 = arith.constant 0 : index
    %c0_26 = arith.constant 0 : index
    %13 = vector.load %arg16[%c0_25, %c0_26] : memref<64x32xbf16, #tpu.memory_space<vmem>>, vector<64x32xbf16>
    %c0_27 = arith.constant 0 : index
    %c0_28 = arith.constant 0 : index
    %14 = vector.load %arg17[%c0_27, %c0_28] : memref<1x32xf32, #tpu.memory_space<vmem>>, vector<1x32xf32>
    %c0_29 = arith.constant 0 : index
    %c0_30 = arith.constant 0 : index
    %15 = vector.load %arg18[%c0_29, %c0_30] : memref<1x32xf32, #tpu.memory_space<vmem>>, vector<1x32xf32>
    %c0_31 = arith.constant 0 : index
    %c0_32 = arith.constant 0 : index
    %c0_33 = arith.constant 0 : index
    %16 = vector.load %arg1[%c0_31, %c0_32, %c0_33] : memref<1x8x32xf32, #tpu.memory_space<vmem>>, vector<1x8x32xf32>
    %17 = vector.shape_cast %16 : vector<1x8x32xf32> to vector<8x32xf32>
    %c0_34 = arith.constant 0 : index
    %c0_35 = arith.constant 0 : index
    %c0_36 = arith.constant 0 : index
    %c0_37 = arith.constant 0 : index
    %18 = vector.load %arg2[%c0_34, %c0_35, %c0_36, %c0_37] : memref<1x4x6x32xf32, #tpu.memory_space<vmem>>, vector<1x4x6x32xf32>
    %19 = vector.shape_cast %18 : vector<1x4x6x32xf32> to vector<4x6x32xf32>
    %20 = arith.truncf %17 : vector<8x32xf32> to vector<8x32xbf16>
    %cst = arith.constant dense<0.000000e+00> : vector<8x32xf32>
    %21 = tpu.matmul %20, %0, %cst {dimension_numbers = #tpu.dot_dimension_numbers<[1], [0], [0], [1], [0, 0, 1, 1], [], []>} : vector<8x32xbf16>, vector<32x32xbf16>, vector<8x32xf32> -> vector<8x32xf32>
    %22 = vector.broadcast %1 : vector<1x32xf32> to vector<8x32xf32>
    %23 = arith.addf %21, %22 : vector<8x32xf32>
    %24 = vector.shape_cast %2 : vector<32x32xbf16> to vector<1x32x32xbf16>
    %25 = vector.broadcast %24 : vector<1x32x32xbf16> to vector<4x32x32xbf16>
    %26 = arith.truncf %19 : vector<4x6x32xf32> to vector<4x6x32xbf16>
    "tpu.trace_start"() <{level = 10 : i32, message = "bld,bde->ble"}> : () -> ()
    %cst_38 = arith.constant dense<0.000000e+00> : vector<4x6x32xf32>
    %27 = tpu.matmul %26, %25, %cst_38 {dimension_numbers = #tpu.dot_dimension_numbers<[2], [1], [1], [2], [0, 0, 0, 1, 1, 2], [0], [0]>} : vector<4x6x32xbf16>, vector<4x32x32xbf16>, vector<4x6x32xf32> -> vector<4x6x32xf32>
    "tpu.trace_stop"() : () -> ()
    %28 = vector.shape_cast %3 : vector<1x32xf32> to vector<1x1x32xf32>
    %29 = vector.broadcast %28 : vector<1x1x32xf32> to vector<4x6x32xf32>
    %30 = arith.addf %27, %29 : vector<4x6x32xf32>
    %31 = vector.shape_cast %4 : vector<32x32xbf16> to vector<1x32x32xbf16>
    %32 = vector.broadcast %31 : vector<1x32x32xbf16> to vector<4x32x32xbf16>
    %33 = arith.truncf %19 : vector<4x6x32xf32> to vector<4x6x32xbf16>
    "tpu.trace_start"() <{level = 10 : i32, message = "bld,bde->ble"}> : () -> ()
    %cst_39 = arith.constant dense<0.000000e+00> : vector<4x6x32xf32>
    %34 = tpu.matmul %33, %32, %cst_39 {dimension_numbers = #tpu.dot_dimension_numbers<[2], [1], [1], [2], [0, 0, 0, 1, 1, 2], [0], [0]>} : vector<4x6x32xbf16>, vector<4x32x32xbf16>, vector<4x6x32xf32> -> vector<4x6x32xf32>
    "tpu.trace_stop"() : () -> ()
    %35 = vector.shape_cast %5 : vector<1x32xf32> to vector<1x1x32xf32>
    %36 = vector.broadcast %35 : vector<1x1x32xf32> to vector<4x6x32xf32>
    %37 = arith.addf %34, %36 : vector<4x6x32xf32>
    %38 = vector.shape_cast %23 : vector<8x32xf32> to vector<1x8x32xf32>
    %39 = vector.broadcast %38 : vector<1x8x32xf32> to vector<4x8x32xf32>
    %40 = vector.extract_strided_slice %39 {offsets = [0, 0, 0], sizes = [4, 8, 8], strides = [1, 1, 1]} : vector<4x8x32xf32> to vector<4x8x8xf32>
    %41 = arith.truncf %40 : vector<4x8x8xf32> to vector<4x8x8xbf16>
    %42 = vector.extract_strided_slice %30 {offsets = [0, 0, 0], sizes = [4, 6, 8], strides = [1, 1, 1]} : vector<4x6x32xf32> to vector<4x6x8xf32>
    %43 = arith.truncf %42 : vector<4x6x8xf32> to vector<4x6x8xbf16>
    "tpu.trace_start"() <{level = 10 : i32, message = "bqd,bkd->bqk"}> : () -> ()
    %cst_40 = arith.constant dense<0.000000e+00> : vector<4x8x6xf32>
    %44 = tpu.matmul %41, %43, %cst_40 {dimension_numbers = #tpu.dot_dimension_numbers<[2], [2], [1], [1], [0, 0, 0, 1, 1, 1], [0], [0]>} : vector<4x8x8xbf16>, vector<4x6x8xbf16>, vector<4x8x6xf32> -> vector<4x8x6xf32>
    "tpu.trace_stop"() : () -> ()
    %cst_41 = arith.constant 0.353553385 : f32
    %45 = vector.broadcast %cst_41 : f32 to vector<4x8x6xf32>
    %46 = arith.mulf %44, %45 : vector<4x8x6xf32>
    %cst_42 = arith.constant dense<0xFF800000> : vector<4x8xf32>
    %47 = vector.multi_reduction <maximumf>, %46, %cst_42 [2] : vector<4x8x6xf32> to vector<4x8xf32>
    %48 = vector.shape_cast %47 : vector<4x8xf32> to vector<4x8x1xf32>
    %49 = vector.broadcast %48 : vector<4x8x1xf32> to vector<4x8x6xf32>
    %50 = arith.subf %46, %49 : vector<4x8x6xf32>
    %51 = math.exp %50 : vector<4x8x6xf32>
    %cst_43 = arith.constant dense<0.000000e+00> : vector<4x8xf32>
    %52 = vector.multi_reduction <add>, %51, %cst_43 [2] : vector<4x8x6xf32> to vector<4x8xf32>
    %53 = vector.shape_cast %52 : vector<4x8xf32> to vector<4x8x1xf32>
    %54 = vector.broadcast %53 : vector<4x8x1xf32> to vector<4x8x6xf32>
    %55 = arith.divf %51, %54 : vector<4x8x6xf32>
    %56 = arith.truncf %55 : vector<4x8x6xf32> to vector<4x8x6xbf16>
    %57 = vector.extract_strided_slice %37 {offsets = [0, 0, 0], sizes = [4, 6, 8], strides = [1, 1, 1]} : vector<4x6x32xf32> to vector<4x6x8xf32>
    %58 = arith.truncf %57 : vector<4x6x8xf32> to vector<4x6x8xbf16>
    "tpu.trace_start"() <{level = 10 : i32, message = "bqk,bkd->bqd"}> : () -> ()
    %cst_44 = arith.constant dense<0.000000e+00> : vector<4x8x8xf32>
    %59 = tpu.matmul %56, %58, %cst_44 {dimension_numbers = #tpu.dot_dimension_numbers<[2], [1], [1], [2], [0, 0, 0, 1, 1, 2], [0], [0]>} : vector<4x8x6xbf16>, vector<4x6x8xbf16>, vector<4x8x8xf32> -> vector<4x8x8xf32>
    "tpu.trace_stop"() : () -> ()
    %60 = vector.extract_strided_slice %39 {offsets = [0, 0, 8], sizes = [4, 8, 8], strides = [1, 1, 1]} : vector<4x8x32xf32> to vector<4x8x8xf32>
    %61 = arith.truncf %60 : vector<4x8x8xf32> to vector<4x8x8xbf16>
    %62 = vector.extract_strided_slice %30 {offsets = [0, 0, 8], sizes = [4, 6, 8], strides = [1, 1, 1]} : vector<4x6x32xf32> to vector<4x6x8xf32>
    %63 = arith.truncf %62 : vector<4x6x8xf32> to vector<4x6x8xbf16>
    "tpu.trace_start"() <{level = 10 : i32, message = "bqd,bkd->bqk"}> : () -> ()
    %cst_45 = arith.constant dense<0.000000e+00> : vector<4x8x6xf32>
    %64 = tpu.matmul %61, %63, %cst_45 {dimension_numbers = #tpu.dot_dimension_numbers<[2], [2], [1], [1], [0, 0, 0, 1, 1, 1], [0], [0]>} : vector<4x8x8xbf16>, vector<4x6x8xbf16>, vector<4x8x6xf32> -> vector<4x8x6xf32>
    "tpu.trace_stop"() : () -> ()
    %cst_46 = arith.constant 0.353553385 : f32
    %65 = vector.broadcast %cst_46 : f32 to vector<4x8x6xf32>
    %66 = arith.mulf %64, %65 : vector<4x8x6xf32>
    %cst_47 = arith.constant dense<0xFF800000> : vector<4x8xf32>
    %67 = vector.multi_reduction <maximumf>, %66, %cst_47 [2] : vector<4x8x6xf32> to vector<4x8xf32>
    %68 = vector.shape_cast %67 : vector<4x8xf32> to vector<4x8x1xf32>
    %69 = vector.broadcast %68 : vector<4x8x1xf32> to vector<4x8x6xf32>
    %70 = arith.subf %66, %69 : vector<4x8x6xf32>
    %71 = math.exp %70 : vector<4x8x6xf32>
    %cst_48 = arith.constant dense<0.000000e+00> : vector<4x8xf32>
    %72 = vector.multi_reduction <add>, %71, %cst_48 [2] : vector<4x8x6xf32> to vector<4x8xf32>
    %73 = vector.shape_cast %72 : vector<4x8xf32> to vector<4x8x1xf32>
    %74 = vector.broadcast %73 : vector<4x8x1xf32> to vector<4x8x6xf32>
    %75 = arith.divf %71, %74 : vector<4x8x6xf32>
    %76 = arith.truncf %75 : vector<4x8x6xf32> to vector<4x8x6xbf16>
    %77 = vector.extract_strided_slice %37 {offsets = [0, 0, 8], sizes = [4, 6, 8], strides = [1, 1, 1]} : vector<4x6x32xf32> to vector<4x6x8xf32>
    %78 = arith.truncf %77 : vector<4x6x8xf32> to vector<4x6x8xbf16>
    "tpu.trace_start"() <{level = 10 : i32, message = "bqk,bkd->bqd"}> : () -> ()
    %cst_49 = arith.constant dense<0.000000e+00> : vector<4x8x8xf32>
    %79 = tpu.matmul %76, %78, %cst_49 {dimension_numbers = #tpu.dot_dimension_numbers<[2], [1], [1], [2], [0, 0, 0, 1, 1, 2], [0], [0]>} : vector<4x8x6xbf16>, vector<4x6x8xbf16>, vector<4x8x8xf32> -> vector<4x8x8xf32>
    "tpu.trace_stop"() : () -> ()
    %80 = vector.extract_strided_slice %39 {offsets = [0, 0, 16], sizes = [4, 8, 8], strides = [1, 1, 1]} : vector<4x8x32xf32> to vector<4x8x8xf32>
    %81 = arith.truncf %80 : vector<4x8x8xf32> to vector<4x8x8xbf16>
    %82 = vector.extract_strided_slice %30 {offsets = [0, 0, 16], sizes = [4, 6, 8], strides = [1, 1, 1]} : vector<4x6x32xf32> to vector<4x6x8xf32>
    %83 = arith.truncf %82 : vector<4x6x8xf32> to vector<4x6x8xbf16>
    "tpu.trace_start"() <{level = 10 : i32, message = "bqd,bkd->bqk"}> : () -> ()
    %cst_50 = arith.constant dense<0.000000e+00> : vector<4x8x6xf32>
    %84 = tpu.matmul %81, %83, %cst_50 {dimension_numbers = #tpu.dot_dimension_numbers<[2], [2], [1], [1], [0, 0, 0, 1, 1, 1], [0], [0]>} : vector<4x8x8xbf16>, vector<4x6x8xbf16>, vector<4x8x6xf32> -> vector<4x8x6xf32>
    "tpu.trace_stop"() : () -> ()
    %cst_51 = arith.constant 0.353553385 : f32
    %85 = vector.broadcast %cst_51 : f32 to vector<4x8x6xf32>
    %86 = arith.mulf %84, %85 : vector<4x8x6xf32>
    %cst_52 = arith.constant dense<0xFF800000> : vector<4x8xf32>
    %87 = vector.multi_reduction <maximumf>, %86, %cst_52 [2] : vector<4x8x6xf32> to vector<4x8xf32>
    %88 = vector.shape_cast %87 : vector<4x8xf32> to vector<4x8x1xf32>
    %89 = vector.broadcast %88 : vector<4x8x1xf32> to vector<4x8x6xf32>
    %90 = arith.subf %86, %89 : vector<4x8x6xf32>
    %91 = math.exp %90 : vector<4x8x6xf32>
    %cst_53 = arith.constant dense<0.000000e+00> : vector<4x8xf32>
    %92 = vector.multi_reduction <add>, %91, %cst_53 [2] : vector<4x8x6xf32> to vector<4x8xf32>
    %93 = vector.shape_cast %92 : vector<4x8xf32> to vector<4x8x1xf32>
    %94 = vector.broadcast %93 : vector<4x8x1xf32> to vector<4x8x6xf32>
    %95 = arith.divf %91, %94 : vector<4x8x6xf32>
    %96 = arith.truncf %95 : vector<4x8x6xf32> to vector<4x8x6xbf16>
    %97 = vector.extract_strided_slice %37 {offsets = [0, 0, 16], sizes = [4, 6, 8], strides = [1, 1, 1]} : vector<4x6x32xf32> to vector<4x6x8xf32>
    %98 = arith.truncf %97 : vector<4x6x8xf32> to vector<4x6x8xbf16>
    "tpu.trace_start"() <{level = 10 : i32, message = "bqk,bkd->bqd"}> : () -> ()
    %cst_54 = arith.constant dense<0.000000e+00> : vector<4x8x8xf32>
    %99 = tpu.matmul %96, %98, %cst_54 {dimension_numbers = #tpu.dot_dimension_numbers<[2], [1], [1], [2], [0, 0, 0, 1, 1, 2], [0], [0]>} : vector<4x8x6xbf16>, vector<4x6x8xbf16>, vector<4x8x8xf32> -> vector<4x8x8xf32>
    "tpu.trace_stop"() : () -> ()
    %100 = vector.extract_strided_slice %39 {offsets = [0, 0, 24], sizes = [4, 8, 8], strides = [1, 1, 1]} : vector<4x8x32xf32> to vector<4x8x8xf32>
    %101 = arith.truncf %100 : vector<4x8x8xf32> to vector<4x8x8xbf16>
    %102 = vector.extract_strided_slice %30 {offsets = [0, 0, 24], sizes = [4, 6, 8], strides = [1, 1, 1]} : vector<4x6x32xf32> to vector<4x6x8xf32>
    %103 = arith.truncf %102 : vector<4x6x8xf32> to vector<4x6x8xbf16>
    "tpu.trace_start"() <{level = 10 : i32, message = "bqd,bkd->bqk"}> : () -> ()
    %cst_55 = arith.constant dense<0.000000e+00> : vector<4x8x6xf32>
    %104 = tpu.matmul %101, %103, %cst_55 {dimension_numbers = #tpu.dot_dimension_numbers<[2], [2], [1], [1], [0, 0, 0, 1, 1, 1], [0], [0]>} : vector<4x8x8xbf16>, vector<4x6x8xbf16>, vector<4x8x6xf32> -> vector<4x8x6xf32>
    "tpu.trace_stop"() : () -> ()
    %cst_56 = arith.constant 0.353553385 : f32
    %105 = vector.broadcast %cst_56 : f32 to vector<4x8x6xf32>
    %106 = arith.mulf %104, %105 : vector<4x8x6xf32>
    %cst_57 = arith.constant dense<0xFF800000> : vector<4x8xf32>
    %107 = vector.multi_reduction <maximumf>, %106, %cst_57 [2] : vector<4x8x6xf32> to vector<4x8xf32>
    %108 = vector.shape_cast %107 : vector<4x8xf32> to vector<4x8x1xf32>
    %109 = vector.broadcast %108 : vector<4x8x1xf32> to vector<4x8x6xf32>
    %110 = arith.subf %106, %109 : vector<4x8x6xf32>
    %111 = math.exp %110 : vector<4x8x6xf32>
    %cst_58 = arith.constant dense<0.000000e+00> : vector<4x8xf32>
    %112 = vector.multi_reduction <add>, %111, %cst_58 [2] : vector<4x8x6xf32> to vector<4x8xf32>
    %113 = vector.shape_cast %112 : vector<4x8xf32> to vector<4x8x1xf32>
    %114 = vector.broadcast %113 : vector<4x8x1xf32> to vector<4x8x6xf32>
    %115 = arith.divf %111, %114 : vector<4x8x6xf32>
    %116 = arith.truncf %115 : vector<4x8x6xf32> to vector<4x8x6xbf16>
    %117 = vector.extract_strided_slice %37 {offsets = [0, 0, 24], sizes = [4, 6, 8], strides = [1, 1, 1]} : vector<4x6x32xf32> to vector<4x6x8xf32>
    %118 = arith.truncf %117 : vector<4x6x8xf32> to vector<4x6x8xbf16>
    "tpu.trace_start"() <{level = 10 : i32, message = "bqk,bkd->bqd"}> : () -> ()
    %cst_59 = arith.constant dense<0.000000e+00> : vector<4x8x8xf32>
    %119 = tpu.matmul %116, %118, %cst_59 {dimension_numbers = #tpu.dot_dimension_numbers<[2], [1], [1], [2], [0, 0, 0, 1, 1, 2], [0], [0]>} : vector<4x8x6xbf16>, vector<4x6x8xbf16>, vector<4x8x8xf32> -> vector<4x8x8xf32>
    "tpu.trace_stop"() : () -> ()
    %120 = tpu.concatenate %59, %79, %99, %119 in 2 : vector<4x8x8xf32>, vector<4x8x8xf32>, vector<4x8x8xf32>, vector<4x8x8xf32> -> vector<4x8x32xf32>
    %121 = vector.shape_cast %6 : vector<32x32xbf16> to vector<1x32x32xbf16>
    %122 = vector.broadcast %121 : vector<1x32x32xbf16> to vector<4x32x32xbf16>
    %123 = arith.truncf %120 : vector<4x8x32xf32> to vector<4x8x32xbf16>
    "tpu.trace_start"() <{level = 10 : i32, message = "bld,bde->ble"}> : () -> ()
    %cst_60 = arith.constant dense<0.000000e+00> : vector<4x8x32xf32>
    %124 = tpu.matmul %123, %122, %cst_60 {dimension_numbers = #tpu.dot_dimension_numbers<[2], [1], [1], [2], [0, 0, 0, 1, 1, 2], [0], [0]>} : vector<4x8x32xbf16>, vector<4x32x32xbf16>, vector<4x8x32xf32> -> vector<4x8x32xf32>
    "tpu.trace_stop"() : () -> ()
    %125 = vector.shape_cast %7 : vector<1x32xf32> to vector<1x1x32xf32>
    %126 = vector.broadcast %125 : vector<1x1x32xf32> to vector<4x8x32xf32>
    %127 = arith.addf %124, %126 : vector<4x8x32xf32>
    %128 = vector.shape_cast %17 : vector<8x32xf32> to vector<1x8x32xf32>
    %129 = vector.broadcast %128 : vector<1x8x32xf32> to vector<4x8x32xf32>
    %130 = arith.addf %129, %127 : vector<4x8x32xf32>
    %131 = arith.mulf %130, %130 : vector<4x8x32xf32>
    %cst_61 = arith.constant dense<0.000000e+00> : vector<4x8xf32>
    %132 = vector.multi_reduction <add>, %131, %cst_61 [2] : vector<4x8x32xf32> to vector<4x8xf32>
    %133 = vector.shape_cast %132 : vector<4x8xf32> to vector<4x8x1xf32>
    %cst_62 = arith.constant 3.200000e+01 : f32
    %134 = vector.broadcast %cst_62 : f32 to vector<4x8x1xf32>
    %135 = arith.divf %133, %134 : vector<4x8x1xf32>
    %cst_63 = arith.constant 9.99999997E-7 : f32
    %136 = vector.broadcast %cst_63 : f32 to vector<4x8x1xf32>
    %137 = arith.addf %135, %136 : vector<4x8x1xf32>
    %138 = math.rsqrt %137 : vector<4x8x1xf32>
    %139 = vector.broadcast %138 : vector<4x8x1xf32> to vector<4x8x32xf32>
    %140 = arith.mulf %130, %139 : vector<4x8x32xf32>
    %141 = vector.shape_cast %8 : vector<1x32xf32> to vector<1x1x32xf32>
    %142 = vector.broadcast %141 : vector<1x1x32xf32> to vector<4x8x32xf32>
    %143 = arith.mulf %140, %142 : vector<4x8x32xf32>
    %144 = vector.shape_cast %9 : vector<32x64xbf16> to vector<1x32x64xbf16>
    %145 = vector.broadcast %144 : vector<1x32x64xbf16> to vector<4x32x64xbf16>
    %146 = arith.truncf %143 : vector<4x8x32xf32> to vector<4x8x32xbf16>
    "tpu.trace_start"() <{level = 10 : i32, message = "bld,bde->ble"}> : () -> ()
    %cst_64 = arith.constant dense<0.000000e+00> : vector<4x8x64xf32>
    %147 = tpu.matmul %146, %145, %cst_64 {dimension_numbers = #tpu.dot_dimension_numbers<[2], [1], [1], [2], [0, 0, 0, 1, 1, 2], [0], [0]>} : vector<4x8x32xbf16>, vector<4x32x64xbf16>, vector<4x8x64xf32> -> vector<4x8x64xf32>
    "tpu.trace_stop"() : () -> ()
    %148 = vector.shape_cast %10 : vector<1x64xf32> to vector<1x1x64xf32>
    %149 = vector.broadcast %148 : vector<1x1x64xf32> to vector<4x8x64xf32>
    %150 = arith.addf %147, %149 : vector<4x8x64xf32>
    %151 = vector.shape_cast %11 : vector<32x64xbf16> to vector<1x32x64xbf16>
    %152 = vector.broadcast %151 : vector<1x32x64xbf16> to vector<4x32x64xbf16>
    %153 = arith.truncf %143 : vector<4x8x32xf32> to vector<4x8x32xbf16>
    "tpu.trace_start"() <{level = 10 : i32, message = "bld,bde->ble"}> : () -> ()
    %cst_65 = arith.constant dense<0.000000e+00> : vector<4x8x64xf32>
    %154 = tpu.matmul %153, %152, %cst_65 {dimension_numbers = #tpu.dot_dimension_numbers<[2], [1], [1], [2], [0, 0, 0, 1, 1, 2], [0], [0]>} : vector<4x8x32xbf16>, vector<4x32x64xbf16>, vector<4x8x64xf32> -> vector<4x8x64xf32>
    "tpu.trace_stop"() : () -> ()
    %155 = vector.shape_cast %12 : vector<1x64xf32> to vector<1x1x64xf32>
    %156 = vector.broadcast %155 : vector<1x1x64xf32> to vector<4x8x64xf32>
    %157 = arith.addf %154, %156 : vector<4x8x64xf32>
    %158 = arith.negf %150 : vector<4x8x64xf32>
    %159 = math.exp %158 : vector<4x8x64xf32>
    %cst_66 = arith.constant 1.000000e+00 : f32
    %160 = vector.broadcast %cst_66 : f32 to vector<4x8x64xf32>
    %161 = arith.addf %160, %159 : vector<4x8x64xf32>
    %162 = arith.divf %160, %161 : vector<4x8x64xf32>
    %163 = arith.mulf %150, %162 : vector<4x8x64xf32>
    %164 = arith.mulf %163, %157 : vector<4x8x64xf32>
    %165 = vector.shape_cast %13 : vector<64x32xbf16> to vector<1x64x32xbf16>
    %166 = vector.broadcast %165 : vector<1x64x32xbf16> to vector<4x64x32xbf16>
    %167 = arith.truncf %164 : vector<4x8x64xf32> to vector<4x8x64xbf16>
    "tpu.trace_start"() <{level = 10 : i32, message = "bld,bde->ble"}> : () -> ()
    %cst_67 = arith.constant dense<0.000000e+00> : vector<4x8x32xf32>
    %168 = tpu.matmul %167, %166, %cst_67 {dimension_numbers = #tpu.dot_dimension_numbers<[2], [1], [1], [2], [0, 0, 0, 1, 1, 2], [0], [0]>} : vector<4x8x64xbf16>, vector<4x64x32xbf16>, vector<4x8x32xf32> -> vector<4x8x32xf32>
    "tpu.trace_stop"() : () -> ()
    %169 = vector.shape_cast %14 : vector<1x32xf32> to vector<1x1x32xf32>
    %170 = vector.broadcast %169 : vector<1x1x32xf32> to vector<4x8x32xf32>
    %171 = arith.addf %168, %170 : vector<4x8x32xf32>
    %172 = arith.addf %143, %171 : vector<4x8x32xf32>
    %173 = arith.mulf %172, %172 : vector<4x8x32xf32>
    %cst_68 = arith.constant dense<0.000000e+00> : vector<4x8xf32>
    %174 = vector.multi_reduction <add>, %173, %cst_68 [2] : vector<4x8x32xf32> to vector<4x8xf32>
    %175 = vector.shape_cast %174 : vector<4x8xf32> to vector<4x8x1xf32>
    %cst_69 = arith.constant 3.200000e+01 : f32
    %176 = vector.broadcast %cst_69 : f32 to vector<4x8x1xf32>
    %177 = arith.divf %175, %176 : vector<4x8x1xf32>
    %cst_70 = arith.constant 9.99999997E-7 : f32
    %178 = vector.broadcast %cst_70 : f32 to vector<4x8x1xf32>
    %179 = arith.addf %177, %178 : vector<4x8x1xf32>
    %180 = math.rsqrt %179 : vector<4x8x1xf32>
    %181 = vector.broadcast %180 : vector<4x8x1xf32> to vector<4x8x32xf32>
    %182 = arith.mulf %172, %181 : vector<4x8x32xf32>
    %183 = vector.shape_cast %15 : vector<1x32xf32> to vector<1x1x32xf32>
    %184 = vector.broadcast %183 : vector<1x1x32xf32> to vector<4x8x32xf32>
    %185 = arith.mulf %182, %184 : vector<4x8x32xf32>
    %c0_71 = arith.constant 0 : index
    %c0_72 = arith.constant 0 : index
    %c0_73 = arith.constant 0 : index
    %c0_74 = arith.constant 0 : index
    %186 = vector.load %arg19[%c0_71, %c0_72, %c0_73, %c0_74] : memref<1x4x8x32xf32, #tpu.memory_space<vmem>>, vector<1x4x8x32xf32>
    %187 = vector.shape_cast %186 : vector<1x4x8x32xf32> to vector<4x8x32xf32>
    %188 = vector.shape_cast %185 : vector<4x8x32xf32> to vector<1x4x8x32xf32>
    tpu.vector_store %arg19[%c0_71, %c0_72, %c0_73, %c0_74], %188 {strides = array<i32>} : memref<1x4x8x32xf32, #tpu.memory_space<vmem>>, vector<1x4x8x32xf32>,
    return
  }
  func.func @transform_0(%arg0: i32) -> (i32, i32, i32) {
    %c0_i32 = arith.constant 0 : i32
    %c0_i32_0 = arith.constant 0 : i32
    %c0_i32_1 = arith.constant 0 : i32
    return %arg0, %c0_i32, %c0_i32_0 : i32, i32, i32
  }
  func.func @transform_1(%arg0: i32) -> (i32, i32, i32, i32) {
    %c0_i32 = arith.constant 0 : i32
    %c0_i32_0 = arith.constant 0 : i32
    %c0_i32_1 = arith.constant 0 : i32
    %c0_i32_2 = arith.constant 0 : i32
    return %arg0, %c0_i32, %c0_i32_0, %c0_i32_1 : i32, i32, i32, i32
  }
  func.func @transform_2(%arg0: i32) -> (i32, i32) {
    %c0_i32 = arith.constant 0 : i32
    %c0_i32_0 = arith.constant 0 : i32
    %c0_i32_1 = arith.constant 0 : i32
    return %c0_i32, %c0_i32_0 : i32, i32
  }
  func.func @transform_3(%arg0: i32) -> (i32, i32) {
    %c0_i32 = arith.constant 0 : i32
    %c0_i32_0 = arith.constant 0 : i32
    %c0_i32_1 = arith.constant 0 : i32
    return %c0_i32, %c0_i32_0 : i32, i32
  }
  func.func @transform_4(%arg0: i32) -> (i32, i32) {
    %c0_i32 = arith.constant 0 : i32
    %c0_i32_0 = arith.constant 0 : i32
    %c0_i32_1 = arith.constant 0 : i32
    return %c0_i32, %c0_i32_0 : i32, i32
  }
  func.func @transform_5(%arg0: i32) -> (i32, i32) {
    %c0_i32 = arith.constant 0 : i32
    %c0_i32_0 = arith.constant 0 : i32
    %c0_i32_1 = arith.constant 0 : i32
    return %c0_i32, %c0_i32_0 : i32, i32
  }
  func.func @transform_6(%arg0: i32) -> (i32, i32) {
    %c0_i32 = arith.constant 0 : i32
    %c0_i32_0 = arith.constant 0 : i32
    %c0_i32_1 = arith.constant 0 : i32
    return %c0_i32, %c0_i32_0 : i32, i32
  }
  func.func @transform_7(%arg0: i32) -> (i32, i32) {
    %c0_i32 = arith.constant 0 : i32
    %c0_i32_0 = arith.constant 0 : i32
    %c0_i32_1 = arith.constant 0 : i32
    return %c0_i32, %c0_i32_0 : i32, i32
  }
  func.func @transform_8(%arg0: i32) -> (i32, i32) {
    %c0_i32 = arith.constant 0 : i32
    %c0_i32_0 = arith.constant 0 : i32
    %c0_i32_1 = arith.constant 0 : i32
    return %c0_i32, %c0_i32_0 : i32, i32
  }
  func.func @transform_9(%arg0: i32) -> (i32, i32) {
    %c0_i32 = arith.constant 0 : i32
    %c0_i32_0 = arith.constant 0 : i32
    %c0_i32_1 = arith.constant 0 : i32
    return %c0_i32, %c0_i32_0 : i32, i32
  }
  func.func @transform_10(%arg0: i32) -> (i32, i32) {
    %c0_i32 = arith.constant 0 : i32
    %c0_i32_0 = arith.constant 0 : i32
    %c0_i32_1 = arith.constant 0 : i32
    return %c0_i32, %c0_i32_0 : i32, i32
  }
  func.func @transform_11(%arg0: i32) -> (i32, i32) {
    %c0_i32 = arith.constant 0 : i32
    %c0_i32_0 = arith.constant 0 : i32
    %c0_i32_1 = arith.constant 0 : i32
    return %c0_i32, %c0_i32_0 : i32, i32
  }
  func.func @transform_12(%arg0: i32) -> (i32, i32) {
    %c0_i32 = arith.constant 0 : i32
    %c0_i32_0 = arith.constant 0 : i32
    %c0_i32_1 = arith.constant 0 : i32
    return %c0_i32, %c0_i32_0 : i32, i32
  }
  func.func @transform_13(%arg0: i32) -> (i32, i32) {
    %c0_i32 = arith.constant 0 : i32
    %c0_i32_0 = arith.constant 0 : i32
    %c0_i32_1 = arith.constant 0 : i32
    return %c0_i32, %c0_i32_0 : i32, i32
  }
  func.func @transform_14(%arg0: i32) -> (i32, i32) {
    %c0_i32 = arith.constant 0 : i32
    %c0_i32_0 = arith.constant 0 : i32
    %c0_i32_1 = arith.constant 0 : i32
    return %c0_i32, %c0_i32_0 : i32, i32
  }
  func.func @transform_15(%arg0: i32) -> (i32, i32) {
    %c0_i32 = arith.constant 0 : i32
    %c0_i32_0 = arith.constant 0 : i32
    %c0_i32_1 = arith.constant 0 : i32
    return %c0_i32, %c0_i32_0 : i32, i32
  }
  func.func @transform_16(%arg0: i32) -> (i32, i32) {
    %c0_i32 = arith.constant 0 : i32
    %c0_i32_0 = arith.constant 0 : i32
    %c0_i32_1 = arith.constant 0 : i32
    return %c0_i32, %c0_i32_0 : i32, i32
  }
  func.func @transform_17(%arg0: i32) -> (i32, i32) {
    %c0_i32 = arith.constant 0 : i32
    %c0_i32_0 = arith.constant 0 : i32
    %c0_i32_1 = arith.constant 0 : i32
    return %c0_i32, %c0_i32_0 : i32, i32
  }
  func.func @transform_18(%arg0: i32) -> (i32, i32, i32, i32) {
    %c0_i32 = arith.constant 0 : i32
    %c0_i32_0 = arith.constant 0 : i32
    %c0_i32_1 = arith.constant 0 : i32
    %c0_i32_2 = arith.constant 0 : i32
    return %arg0, %c0_i32, %c0_i32_0, %c0_i32_1 : i32, i32, i32, i32
  }
}

module attributes {stable_mosaic.version = 11 : i64} {
  func.func @_double_tlp_kernel(%arg0: i32, %arg1: memref<1x8x32xf32, #tpu.memory_space<vmem>>, %arg2: memref<1x1x8x32xf32, #tpu.memory_space<vmem>>, %arg3: memref<32x32xbf16, #tpu.memory_space<vmem>>, %arg4: memref<1x32xf32, #tpu.memory_space<vmem>>, %arg5: memref<32x32xbf16, #tpu.memory_space<vmem>>, %arg6: memref<1x32xf32, #tpu.memory_space<vmem>>, %arg7: memref<32x32xbf16, #tpu.memory_space<vmem>>, %arg8: memref<1x32xf32, #tpu.memory_space<vmem>>, %arg9: memref<32x32xbf16, #tpu.memory_space<vmem>>, %arg10: memref<1x32xf32, #tpu.memory_space<vmem>>, %arg11: memref<1x32xf32, #tpu.memory_space<vmem>>, %arg12: memref<32x64xbf16, #tpu.memory_space<vmem>>, %arg13: memref<1x64xf32, #tpu.memory_space<vmem>>, %arg14: memref<32x64xbf16, #tpu.memory_space<vmem>>, %arg15: memref<1x64xf32, #tpu.memory_space<vmem>>, %arg16: memref<64x32xbf16, #tpu.memory_space<vmem>>, %arg17: memref<1x32xf32, #tpu.memory_space<vmem>>, %arg18: memref<1x32xf32, #tpu.memory_space<vmem>>, %arg19: memref<32x32xbf16, #tpu.memory_space<vmem>>, %arg20: memref<1x32xf32, #tpu.memory_space<vmem>>, %arg21: memref<32x32xbf16, #tpu.memory_space<vmem>>, %arg22: memref<1x32xf32, #tpu.memory_space<vmem>>, %arg23: memref<32x32xbf16, #tpu.memory_space<vmem>>, %arg24: memref<1x32xf32, #tpu.memory_space<vmem>>, %arg25: memref<32x32xbf16, #tpu.memory_space<vmem>>, %arg26: memref<1x32xf32, #tpu.memory_space<vmem>>, %arg27: memref<1x32xf32, #tpu.memory_space<vmem>>, %arg28: memref<32x64xbf16, #tpu.memory_space<vmem>>, %arg29: memref<1x64xf32, #tpu.memory_space<vmem>>, %arg30: memref<32x64xbf16, #tpu.memory_space<vmem>>, %arg31: memref<1x64xf32, #tpu.memory_space<vmem>>, %arg32: memref<64x32xbf16, #tpu.memory_space<vmem>>, %arg33: memref<1x32xf32, #tpu.memory_space<vmem>>, %arg34: memref<1x32xf32, #tpu.memory_space<vmem>>, %arg35: memref<1x8x32xf32, #tpu.memory_space<vmem>>) attributes {dimension_semantics = [#tpu.dimension_semantics<parallel>], iteration_bounds = array<i64: 2>, scalar_prefetch = 0 : i64, scratch_operands = 0 : i64, tpu.core_type = #tpu.core_type<tc>, window_params = [{transform_indices = @transform_0, window_bounds = array<i64: 1, 8, 32>}, {transform_indices = @transform_1, window_bounds = array<i64: 1, 1, 8, 32>}, {pipeline_mode = #tpu.pipeline_mode<synchronous>, transform_indices = @transform_2, window_bounds = array<i64: 32, 32>}, {pipeline_mode = #tpu.pipeline_mode<synchronous>, transform_indices = @transform_3, window_bounds = array<i64: 1, 32>}, {pipeline_mode = #tpu.pipeline_mode<synchronous>, transform_indices = @transform_4, window_bounds = array<i64: 32, 32>}, {pipeline_mode = #tpu.pipeline_mode<synchronous>, transform_indices = @transform_5, window_bounds = array<i64: 1, 32>}, {pipeline_mode = #tpu.pipeline_mode<synchronous>, transform_indices = @transform_6, window_bounds = array<i64: 32, 32>}, {pipeline_mode = #tpu.pipeline_mode<synchronous>, transform_indices = @transform_7, window_bounds = array<i64: 1, 32>}, {pipeline_mode = #tpu.pipeline_mode<synchronous>, transform_indices = @transform_8, window_bounds = array<i64: 32, 32>}, {pipeline_mode = #tpu.pipeline_mode<synchronous>, transform_indices = @transform_9, window_bounds = array<i64: 1, 32>}, {pipeline_mode = #tpu.pipeline_mode<synchronous>, transform_indices = @transform_10, window_bounds = array<i64: 1, 32>}, {pipeline_mode = #tpu.pipeline_mode<synchronous>, transform_indices = @transform_11, window_bounds = array<i64: 32, 64>}, {pipeline_mode = #tpu.pipeline_mode<synchronous>, transform_indices = @transform_12, window_bounds = array<i64: 1, 64>}, {pipeline_mode = #tpu.pipeline_mode<synchronous>, transform_indices = @transform_13, window_bounds = array<i64: 32, 64>}, {pipeline_mode = #tpu.pipeline_mode<synchronous>, transform_indices = @transform_14, window_bounds = array<i64: 1, 64>}, {pipeline_mode = #tpu.pipeline_mode<synchronous>, transform_indices = @transform_15, window_bounds = array<i64: 64, 32>}, {pipeline_mode = #tpu.pipeline_mode<synchronous>, transform_indices = @transform_16, window_bounds = array<i64: 1, 32>}, {pipeline_mode = #tpu.pipeline_mode<synchronous>, transform_indices = @transform_17, window_bounds = array<i64: 1, 32>}, {pipeline_mode = #tpu.pipeline_mode<synchronous>, transform_indices = @transform_18, window_bounds = array<i64: 32, 32>}, {pipeline_mode = #tpu.pipeline_mode<synchronous>, transform_indices = @transform_19, window_bounds = array<i64: 1, 32>}, {pipeline_mode = #tpu.pipeline_mode<synchronous>, transform_indices = @transform_20, window_bounds = array<i64: 32, 32>}, {pipeline_mode = #tpu.pipeline_mode<synchronous>, transform_indices = @transform_21, window_bounds = array<i64: 1, 32>}, {pipeline_mode = #tpu.pipeline_mode<synchronous>, transform_indices = @transform_22, window_bounds = array<i64: 32, 32>}, {pipeline_mode = #tpu.pipeline_mode<synchronous>, transform_indices = @transform_23, window_bounds = array<i64: 1, 32>}, {pipeline_mode = #tpu.pipeline_mode<synchronous>, transform_indices = @transform_24, window_bounds = array<i64: 32, 32>}, {pipeline_mode = #tpu.pipeline_mode<synchronous>, transform_indices = @transform_25, window_bounds = array<i64: 1, 32>}, {pipeline_mode = #tpu.pipeline_mode<synchronous>, transform_indices = @transform_26, window_bounds = array<i64: 1, 32>}, {pipeline_mode = #tpu.pipeline_mode<synchronous>, transform_indices = @transform_27, window_bounds = array<i64: 32, 64>}, {pipeline_mode = #tpu.pipeline_mode<synchronous>, transform_indices = @transform_28, window_bounds = array<i64: 1, 64>}, {pipeline_mode = #tpu.pipeline_mode<synchronous>, transform_indices = @transform_29, window_bounds = array<i64: 32, 64>}, {pipeline_mode = #tpu.pipeline_mode<synchronous>, transform_indices = @transform_30, window_bounds = array<i64: 1, 64>}, {pipeline_mode = #tpu.pipeline_mode<synchronous>, transform_indices = @transform_31, window_bounds = array<i64: 64, 32>}, {pipeline_mode = #tpu.pipeline_mode<synchronous>, transform_indices = @transform_32, window_bounds = array<i64: 1, 32>}, {pipeline_mode = #tpu.pipeline_mode<synchronous>, transform_indices = @transform_33, window_bounds = array<i64: 1, 32>}, {transform_indices = @transform_34, window_bounds = array<i64: 1, 8, 32>}]} {
    %c0 = arith.constant 0 : index
    %c0_0 = arith.constant 0 : index
    %0 = vector.load %arg3[%c0, %c0_0] : memref<32x32xbf16, #tpu.memory_space<vmem>>, vector<32x32xbf16>
    %c0_1 = arith.constant 0 : index
    %c0_2 = arith.constant 0 : index
    %1 = vector.load %arg4[%c0_1, %c0_2] : memref<1x32xf32, #tpu.memory_space<vmem>>, vector<1x32xf32>
    %c0_3 = arith.constant 0 : index
    %c0_4 = arith.constant 0 : index
    %2 = vector.load %arg5[%c0_3, %c0_4] : memref<32x32xbf16, #tpu.memory_space<vmem>>, vector<32x32xbf16>
    %c0_5 = arith.constant 0 : index
    %c0_6 = arith.constant 0 : index
    %3 = vector.load %arg6[%c0_5, %c0_6] : memref<1x32xf32, #tpu.memory_space<vmem>>, vector<1x32xf32>
    %c0_7 = arith.constant 0 : index
    %c0_8 = arith.constant 0 : index
    %4 = vector.load %arg7[%c0_7, %c0_8] : memref<32x32xbf16, #tpu.memory_space<vmem>>, vector<32x32xbf16>
    %c0_9 = arith.constant 0 : index
    %c0_10 = arith.constant 0 : index
    %5 = vector.load %arg8[%c0_9, %c0_10] : memref<1x32xf32, #tpu.memory_space<vmem>>, vector<1x32xf32>
    %c0_11 = arith.constant 0 : index
    %c0_12 = arith.constant 0 : index
    %6 = vector.load %arg9[%c0_11, %c0_12] : memref<32x32xbf16, #tpu.memory_space<vmem>>, vector<32x32xbf16>
    %c0_13 = arith.constant 0 : index
    %c0_14 = arith.constant 0 : index
    %7 = vector.load %arg10[%c0_13, %c0_14] : memref<1x32xf32, #tpu.memory_space<vmem>>, vector<1x32xf32>
    %c0_15 = arith.constant 0 : index
    %c0_16 = arith.constant 0 : index
    %8 = vector.load %arg11[%c0_15, %c0_16] : memref<1x32xf32, #tpu.memory_space<vmem>>, vector<1x32xf32>
    %c0_17 = arith.constant 0 : index
    %c0_18 = arith.constant 0 : index
    %9 = vector.load %arg12[%c0_17, %c0_18] : memref<32x64xbf16, #tpu.memory_space<vmem>>, vector<32x64xbf16>
    %c0_19 = arith.constant 0 : index
    %c0_20 = arith.constant 0 : index
    %10 = vector.load %arg13[%c0_19, %c0_20] : memref<1x64xf32, #tpu.memory_space<vmem>>, vector<1x64xf32>
    %c0_21 = arith.constant 0 : index
    %c0_22 = arith.constant 0 : index
    %11 = vector.load %arg14[%c0_21, %c0_22] : memref<32x64xbf16, #tpu.memory_space<vmem>>, vector<32x64xbf16>
    %c0_23 = arith.constant 0 : index
    %c0_24 = arith.constant 0 : index
    %12 = vector.load %arg15[%c0_23, %c0_24] : memref<1x64xf32, #tpu.memory_space<vmem>>, vector<1x64xf32>
    %c0_25 = arith.constant 0 : index
    %c0_26 = arith.constant 0 : index
    %13 = vector.load %arg16[%c0_25, %c0_26] : memref<64x32xbf16, #tpu.memory_space<vmem>>, vector<64x32xbf16>
    %c0_27 = arith.constant 0 : index
    %c0_28 = arith.constant 0 : index
    %14 = vector.load %arg17[%c0_27, %c0_28] : memref<1x32xf32, #tpu.memory_space<vmem>>, vector<1x32xf32>
    %c0_29 = arith.constant 0 : index
    %c0_30 = arith.constant 0 : index
    %15 = vector.load %arg18[%c0_29, %c0_30] : memref<1x32xf32, #tpu.memory_space<vmem>>, vector<1x32xf32>
    %c0_31 = arith.constant 0 : index
    %c0_32 = arith.constant 0 : index
    %16 = vector.load %arg19[%c0_31, %c0_32] : memref<32x32xbf16, #tpu.memory_space<vmem>>, vector<32x32xbf16>
    %c0_33 = arith.constant 0 : index
    %c0_34 = arith.constant 0 : index
    %17 = vector.load %arg20[%c0_33, %c0_34] : memref<1x32xf32, #tpu.memory_space<vmem>>, vector<1x32xf32>
    %c0_35 = arith.constant 0 : index
    %c0_36 = arith.constant 0 : index
    %18 = vector.load %arg21[%c0_35, %c0_36] : memref<32x32xbf16, #tpu.memory_space<vmem>>, vector<32x32xbf16>
    %c0_37 = arith.constant 0 : index
    %c0_38 = arith.constant 0 : index
    %19 = vector.load %arg22[%c0_37, %c0_38] : memref<1x32xf32, #tpu.memory_space<vmem>>, vector<1x32xf32>
    %c0_39 = arith.constant 0 : index
    %c0_40 = arith.constant 0 : index
    %20 = vector.load %arg23[%c0_39, %c0_40] : memref<32x32xbf16, #tpu.memory_space<vmem>>, vector<32x32xbf16>
    %c0_41 = arith.constant 0 : index
    %c0_42 = arith.constant 0 : index
    %21 = vector.load %arg24[%c0_41, %c0_42] : memref<1x32xf32, #tpu.memory_space<vmem>>, vector<1x32xf32>
    %c0_43 = arith.constant 0 : index
    %c0_44 = arith.constant 0 : index
    %22 = vector.load %arg25[%c0_43, %c0_44] : memref<32x32xbf16, #tpu.memory_space<vmem>>, vector<32x32xbf16>
    %c0_45 = arith.constant 0 : index
    %c0_46 = arith.constant 0 : index
    %23 = vector.load %arg26[%c0_45, %c0_46] : memref<1x32xf32, #tpu.memory_space<vmem>>, vector<1x32xf32>
    %c0_47 = arith.constant 0 : index
    %c0_48 = arith.constant 0 : index
    %24 = vector.load %arg27[%c0_47, %c0_48] : memref<1x32xf32, #tpu.memory_space<vmem>>, vector<1x32xf32>
    %c0_49 = arith.constant 0 : index
    %c0_50 = arith.constant 0 : index
    %25 = vector.load %arg28[%c0_49, %c0_50] : memref<32x64xbf16, #tpu.memory_space<vmem>>, vector<32x64xbf16>
    %c0_51 = arith.constant 0 : index
    %c0_52 = arith.constant 0 : index
    %26 = vector.load %arg29[%c0_51, %c0_52] : memref<1x64xf32, #tpu.memory_space<vmem>>, vector<1x64xf32>
    %c0_53 = arith.constant 0 : index
    %c0_54 = arith.constant 0 : index
    %27 = vector.load %arg30[%c0_53, %c0_54] : memref<32x64xbf16, #tpu.memory_space<vmem>>, vector<32x64xbf16>
    %c0_55 = arith.constant 0 : index
    %c0_56 = arith.constant 0 : index
    %28 = vector.load %arg31[%c0_55, %c0_56] : memref<1x64xf32, #tpu.memory_space<vmem>>, vector<1x64xf32>
    %c0_57 = arith.constant 0 : index
    %c0_58 = arith.constant 0 : index
    %29 = vector.load %arg32[%c0_57, %c0_58] : memref<64x32xbf16, #tpu.memory_space<vmem>>, vector<64x32xbf16>
    %c0_59 = arith.constant 0 : index
    %c0_60 = arith.constant 0 : index
    %30 = vector.load %arg33[%c0_59, %c0_60] : memref<1x32xf32, #tpu.memory_space<vmem>>, vector<1x32xf32>
    %c0_61 = arith.constant 0 : index
    %c0_62 = arith.constant 0 : index
    %31 = vector.load %arg34[%c0_61, %c0_62] : memref<1x32xf32, #tpu.memory_space<vmem>>, vector<1x32xf32>
    %c0_63 = arith.constant 0 : index
    %c0_64 = arith.constant 0 : index
    %c0_65 = arith.constant 0 : index
    %32 = vector.load %arg1[%c0_63, %c0_64, %c0_65] : memref<1x8x32xf32, #tpu.memory_space<vmem>>, vector<1x8x32xf32>
    %33 = vector.shape_cast %32 : vector<1x8x32xf32> to vector<8x32xf32>
    %c0_66 = arith.constant 0 : index
    %c0_67 = arith.constant 0 : index
    %c0_68 = arith.constant 0 : index
    %c0_69 = arith.constant 0 : index
    %34 = vector.load %arg2[%c0_66, %c0_67, %c0_68, %c0_69] : memref<1x1x8x32xf32, #tpu.memory_space<vmem>>, vector<1x1x8x32xf32>
    %35 = vector.shape_cast %34 : vector<1x1x8x32xf32> to vector<8x32xf32>
    %36 = arith.addf %33, %35 : vector<8x32xf32>
    %37 = vector.shape_cast %36 : vector<8x32xf32> to vector<1x8x32xf32>
    %38 = arith.truncf %36 : vector<8x32xf32> to vector<8x32xbf16>
    %cst = arith.constant dense<0.000000e+00> : vector<8x32xf32>
    %39 = tpu.matmul %38, %0, %cst {dimension_numbers = #tpu.dot_dimension_numbers<[1], [0], [0], [1], [0, 0, 1, 1], [], []>} : vector<8x32xbf16>, vector<32x32xbf16>, vector<8x32xf32> -> vector<8x32xf32>
    %40 = vector.broadcast %1 : vector<1x32xf32> to vector<8x32xf32>
    %41 = arith.addf %39, %40 : vector<8x32xf32>
    %42 = vector.shape_cast %2 : vector<32x32xbf16> to vector<1x32x32xbf16>
    %43 = arith.truncf %37 : vector<1x8x32xf32> to vector<1x8x32xbf16>
    "tpu.trace_start"() <{level = 10 : i32, message = "bld,bde->ble"}> : () -> ()
    %cst_70 = arith.constant dense<0.000000e+00> : vector<1x8x32xf32>
    %44 = tpu.matmul %43, %42, %cst_70 {dimension_numbers = #tpu.dot_dimension_numbers<[2], [1], [1], [2], [0, 0, 0, 1, 1, 2], [0], [0]>} : vector<1x8x32xbf16>, vector<1x32x32xbf16>, vector<1x8x32xf32> -> vector<1x8x32xf32>
    "tpu.trace_stop"() : () -> ()
    %45 = vector.shape_cast %3 : vector<1x32xf32> to vector<1x1x32xf32>
    %46 = vector.broadcast %45 : vector<1x1x32xf32> to vector<1x8x32xf32>
    %47 = arith.addf %44, %46 : vector<1x8x32xf32>
    %48 = vector.shape_cast %4 : vector<32x32xbf16> to vector<1x32x32xbf16>
    %49 = arith.truncf %37 : vector<1x8x32xf32> to vector<1x8x32xbf16>
    "tpu.trace_start"() <{level = 10 : i32, message = "bld,bde->ble"}> : () -> ()
    %cst_71 = arith.constant dense<0.000000e+00> : vector<1x8x32xf32>
    %50 = tpu.matmul %49, %48, %cst_71 {dimension_numbers = #tpu.dot_dimension_numbers<[2], [1], [1], [2], [0, 0, 0, 1, 1, 2], [0], [0]>} : vector<1x8x32xbf16>, vector<1x32x32xbf16>, vector<1x8x32xf32> -> vector<1x8x32xf32>
    "tpu.trace_stop"() : () -> ()
    %51 = vector.shape_cast %5 : vector<1x32xf32> to vector<1x1x32xf32>
    %52 = vector.broadcast %51 : vector<1x1x32xf32> to vector<1x8x32xf32>
    %53 = arith.addf %50, %52 : vector<1x8x32xf32>
    %54 = vector.shape_cast %41 : vector<8x32xf32> to vector<1x8x32xf32>
    %55 = vector.extract_strided_slice %54 {offsets = [0, 0, 0], sizes = [1, 8, 8], strides = [1, 1, 1]} : vector<1x8x32xf32> to vector<1x8x8xf32>
    %56 = arith.truncf %55 : vector<1x8x8xf32> to vector<1x8x8xbf16>
    %57 = vector.extract_strided_slice %47 {offsets = [0, 0, 0], sizes = [1, 8, 8], strides = [1, 1, 1]} : vector<1x8x32xf32> to vector<1x8x8xf32>
    %58 = arith.truncf %57 : vector<1x8x8xf32> to vector<1x8x8xbf16>
    "tpu.trace_start"() <{level = 10 : i32, message = "bqd,bkd->bqk"}> : () -> ()
    %cst_72 = arith.constant dense<0.000000e+00> : vector<1x8x8xf32>
    %59 = tpu.matmul %56, %58, %cst_72 {dimension_numbers = #tpu.dot_dimension_numbers<[2], [2], [1], [1], [0, 0, 0, 1, 1, 1], [0], [0]>} : vector<1x8x8xbf16>, vector<1x8x8xbf16>, vector<1x8x8xf32> -> vector<1x8x8xf32>
    "tpu.trace_stop"() : () -> ()
    %cst_73 = arith.constant 0.353553385 : f32
    %60 = vector.broadcast %cst_73 : f32 to vector<1x8x8xf32>
    %61 = arith.mulf %59, %60 : vector<1x8x8xf32>
    %cst_74 = arith.constant dense<0xFF800000> : vector<1x8xf32>
    %62 = vector.multi_reduction <maximumf>, %61, %cst_74 [2] : vector<1x8x8xf32> to vector<1x8xf32>
    %63 = vector.shape_cast %62 : vector<1x8xf32> to vector<1x8x1xf32>
    %64 = vector.broadcast %63 : vector<1x8x1xf32> to vector<1x8x8xf32>
    %65 = arith.subf %61, %64 : vector<1x8x8xf32>
    %66 = math.exp %65 : vector<1x8x8xf32>
    %cst_75 = arith.constant dense<0.000000e+00> : vector<1x8xf32>
    %67 = vector.multi_reduction <add>, %66, %cst_75 [2] : vector<1x8x8xf32> to vector<1x8xf32>
    %68 = vector.shape_cast %67 : vector<1x8xf32> to vector<1x8x1xf32>
    %69 = vector.broadcast %68 : vector<1x8x1xf32> to vector<1x8x8xf32>
    %70 = arith.divf %66, %69 : vector<1x8x8xf32>
    %71 = arith.truncf %70 : vector<1x8x8xf32> to vector<1x8x8xbf16>
    %72 = vector.extract_strided_slice %53 {offsets = [0, 0, 0], sizes = [1, 8, 8], strides = [1, 1, 1]} : vector<1x8x32xf32> to vector<1x8x8xf32>
    %73 = arith.truncf %72 : vector<1x8x8xf32> to vector<1x8x8xbf16>
    "tpu.trace_start"() <{level = 10 : i32, message = "bqk,bkd->bqd"}> : () -> ()
    %cst_76 = arith.constant dense<0.000000e+00> : vector<1x8x8xf32>
    %74 = tpu.matmul %71, %73, %cst_76 {dimension_numbers = #tpu.dot_dimension_numbers<[2], [1], [1], [2], [0, 0, 0, 1, 1, 2], [0], [0]>} : vector<1x8x8xbf16>, vector<1x8x8xbf16>, vector<1x8x8xf32> -> vector<1x8x8xf32>
    "tpu.trace_stop"() : () -> ()
    %75 = vector.extract_strided_slice %54 {offsets = [0, 0, 8], sizes = [1, 8, 8], strides = [1, 1, 1]} : vector<1x8x32xf32> to vector<1x8x8xf32>
    %76 = arith.truncf %75 : vector<1x8x8xf32> to vector<1x8x8xbf16>
    %77 = vector.extract_strided_slice %47 {offsets = [0, 0, 8], sizes = [1, 8, 8], strides = [1, 1, 1]} : vector<1x8x32xf32> to vector<1x8x8xf32>
    %78 = arith.truncf %77 : vector<1x8x8xf32> to vector<1x8x8xbf16>
    "tpu.trace_start"() <{level = 10 : i32, message = "bqd,bkd->bqk"}> : () -> ()
    %cst_77 = arith.constant dense<0.000000e+00> : vector<1x8x8xf32>
    %79 = tpu.matmul %76, %78, %cst_77 {dimension_numbers = #tpu.dot_dimension_numbers<[2], [2], [1], [1], [0, 0, 0, 1, 1, 1], [0], [0]>} : vector<1x8x8xbf16>, vector<1x8x8xbf16>, vector<1x8x8xf32> -> vector<1x8x8xf32>
    "tpu.trace_stop"() : () -> ()
    %cst_78 = arith.constant 0.353553385 : f32
    %80 = vector.broadcast %cst_78 : f32 to vector<1x8x8xf32>
    %81 = arith.mulf %79, %80 : vector<1x8x8xf32>
    %cst_79 = arith.constant dense<0xFF800000> : vector<1x8xf32>
    %82 = vector.multi_reduction <maximumf>, %81, %cst_79 [2] : vector<1x8x8xf32> to vector<1x8xf32>
    %83 = vector.shape_cast %82 : vector<1x8xf32> to vector<1x8x1xf32>
    %84 = vector.broadcast %83 : vector<1x8x1xf32> to vector<1x8x8xf32>
    %85 = arith.subf %81, %84 : vector<1x8x8xf32>
    %86 = math.exp %85 : vector<1x8x8xf32>
    %cst_80 = arith.constant dense<0.000000e+00> : vector<1x8xf32>
    %87 = vector.multi_reduction <add>, %86, %cst_80 [2] : vector<1x8x8xf32> to vector<1x8xf32>
    %88 = vector.shape_cast %87 : vector<1x8xf32> to vector<1x8x1xf32>
    %89 = vector.broadcast %88 : vector<1x8x1xf32> to vector<1x8x8xf32>
    %90 = arith.divf %86, %89 : vector<1x8x8xf32>
    %91 = arith.truncf %90 : vector<1x8x8xf32> to vector<1x8x8xbf16>
    %92 = vector.extract_strided_slice %53 {offsets = [0, 0, 8], sizes = [1, 8, 8], strides = [1, 1, 1]} : vector<1x8x32xf32> to vector<1x8x8xf32>
    %93 = arith.truncf %92 : vector<1x8x8xf32> to vector<1x8x8xbf16>
    "tpu.trace_start"() <{level = 10 : i32, message = "bqk,bkd->bqd"}> : () -> ()
    %cst_81 = arith.constant dense<0.000000e+00> : vector<1x8x8xf32>
    %94 = tpu.matmul %91, %93, %cst_81 {dimension_numbers = #tpu.dot_dimension_numbers<[2], [1], [1], [2], [0, 0, 0, 1, 1, 2], [0], [0]>} : vector<1x8x8xbf16>, vector<1x8x8xbf16>, vector<1x8x8xf32> -> vector<1x8x8xf32>
    "tpu.trace_stop"() : () -> ()
    %95 = vector.extract_strided_slice %54 {offsets = [0, 0, 16], sizes = [1, 8, 8], strides = [1, 1, 1]} : vector<1x8x32xf32> to vector<1x8x8xf32>
    %96 = arith.truncf %95 : vector<1x8x8xf32> to vector<1x8x8xbf16>
    %97 = vector.extract_strided_slice %47 {offsets = [0, 0, 16], sizes = [1, 8, 8], strides = [1, 1, 1]} : vector<1x8x32xf32> to vector<1x8x8xf32>
    %98 = arith.truncf %97 : vector<1x8x8xf32> to vector<1x8x8xbf16>
    "tpu.trace_start"() <{level = 10 : i32, message = "bqd,bkd->bqk"}> : () -> ()
    %cst_82 = arith.constant dense<0.000000e+00> : vector<1x8x8xf32>
    %99 = tpu.matmul %96, %98, %cst_82 {dimension_numbers = #tpu.dot_dimension_numbers<[2], [2], [1], [1], [0, 0, 0, 1, 1, 1], [0], [0]>} : vector<1x8x8xbf16>, vector<1x8x8xbf16>, vector<1x8x8xf32> -> vector<1x8x8xf32>
    "tpu.trace_stop"() : () -> ()
    %cst_83 = arith.constant 0.353553385 : f32
    %100 = vector.broadcast %cst_83 : f32 to vector<1x8x8xf32>
    %101 = arith.mulf %99, %100 : vector<1x8x8xf32>
    %cst_84 = arith.constant dense<0xFF800000> : vector<1x8xf32>
    %102 = vector.multi_reduction <maximumf>, %101, %cst_84 [2] : vector<1x8x8xf32> to vector<1x8xf32>
    %103 = vector.shape_cast %102 : vector<1x8xf32> to vector<1x8x1xf32>
    %104 = vector.broadcast %103 : vector<1x8x1xf32> to vector<1x8x8xf32>
    %105 = arith.subf %101, %104 : vector<1x8x8xf32>
    %106 = math.exp %105 : vector<1x8x8xf32>
    %cst_85 = arith.constant dense<0.000000e+00> : vector<1x8xf32>
    %107 = vector.multi_reduction <add>, %106, %cst_85 [2] : vector<1x8x8xf32> to vector<1x8xf32>
    %108 = vector.shape_cast %107 : vector<1x8xf32> to vector<1x8x1xf32>
    %109 = vector.broadcast %108 : vector<1x8x1xf32> to vector<1x8x8xf32>
    %110 = arith.divf %106, %109 : vector<1x8x8xf32>
    %111 = arith.truncf %110 : vector<1x8x8xf32> to vector<1x8x8xbf16>
    %112 = vector.extract_strided_slice %53 {offsets = [0, 0, 16], sizes = [1, 8, 8], strides = [1, 1, 1]} : vector<1x8x32xf32> to vector<1x8x8xf32>
    %113 = arith.truncf %112 : vector<1x8x8xf32> to vector<1x8x8xbf16>
    "tpu.trace_start"() <{level = 10 : i32, message = "bqk,bkd->bqd"}> : () -> ()
    %cst_86 = arith.constant dense<0.000000e+00> : vector<1x8x8xf32>
    %114 = tpu.matmul %111, %113, %cst_86 {dimension_numbers = #tpu.dot_dimension_numbers<[2], [1], [1], [2], [0, 0, 0, 1, 1, 2], [0], [0]>} : vector<1x8x8xbf16>, vector<1x8x8xbf16>, vector<1x8x8xf32> -> vector<1x8x8xf32>
    "tpu.trace_stop"() : () -> ()
    %115 = vector.extract_strided_slice %54 {offsets = [0, 0, 24], sizes = [1, 8, 8], strides = [1, 1, 1]} : vector<1x8x32xf32> to vector<1x8x8xf32>
    %116 = arith.truncf %115 : vector<1x8x8xf32> to vector<1x8x8xbf16>
    %117 = vector.extract_strided_slice %47 {offsets = [0, 0, 24], sizes = [1, 8, 8], strides = [1, 1, 1]} : vector<1x8x32xf32> to vector<1x8x8xf32>
    %118 = arith.truncf %117 : vector<1x8x8xf32> to vector<1x8x8xbf16>
    "tpu.trace_start"() <{level = 10 : i32, message = "bqd,bkd->bqk"}> : () -> ()
    %cst_87 = arith.constant dense<0.000000e+00> : vector<1x8x8xf32>
    %119 = tpu.matmul %116, %118, %cst_87 {dimension_numbers = #tpu.dot_dimension_numbers<[2], [2], [1], [1], [0, 0, 0, 1, 1, 1], [0], [0]>} : vector<1x8x8xbf16>, vector<1x8x8xbf16>, vector<1x8x8xf32> -> vector<1x8x8xf32>
    "tpu.trace_stop"() : () -> ()
    %cst_88 = arith.constant 0.353553385 : f32
    %120 = vector.broadcast %cst_88 : f32 to vector<1x8x8xf32>
    %121 = arith.mulf %119, %120 : vector<1x8x8xf32>
    %cst_89 = arith.constant dense<0xFF800000> : vector<1x8xf32>
    %122 = vector.multi_reduction <maximumf>, %121, %cst_89 [2] : vector<1x8x8xf32> to vector<1x8xf32>
    %123 = vector.shape_cast %122 : vector<1x8xf32> to vector<1x8x1xf32>
    %124 = vector.broadcast %123 : vector<1x8x1xf32> to vector<1x8x8xf32>
    %125 = arith.subf %121, %124 : vector<1x8x8xf32>
    %126 = math.exp %125 : vector<1x8x8xf32>
    %cst_90 = arith.constant dense<0.000000e+00> : vector<1x8xf32>
    %127 = vector.multi_reduction <add>, %126, %cst_90 [2] : vector<1x8x8xf32> to vector<1x8xf32>
    %128 = vector.shape_cast %127 : vector<1x8xf32> to vector<1x8x1xf32>
    %129 = vector.broadcast %128 : vector<1x8x1xf32> to vector<1x8x8xf32>
    %130 = arith.divf %126, %129 : vector<1x8x8xf32>
    %131 = arith.truncf %130 : vector<1x8x8xf32> to vector<1x8x8xbf16>
    %132 = vector.extract_strided_slice %53 {offsets = [0, 0, 24], sizes = [1, 8, 8], strides = [1, 1, 1]} : vector<1x8x32xf32> to vector<1x8x8xf32>
    %133 = arith.truncf %132 : vector<1x8x8xf32> to vector<1x8x8xbf16>
    "tpu.trace_start"() <{level = 10 : i32, message = "bqk,bkd->bqd"}> : () -> ()
    %cst_91 = arith.constant dense<0.000000e+00> : vector<1x8x8xf32>
    %134 = tpu.matmul %131, %133, %cst_91 {dimension_numbers = #tpu.dot_dimension_numbers<[2], [1], [1], [2], [0, 0, 0, 1, 1, 2], [0], [0]>} : vector<1x8x8xbf16>, vector<1x8x8xbf16>, vector<1x8x8xf32> -> vector<1x8x8xf32>
    "tpu.trace_stop"() : () -> ()
    %135 = tpu.concatenate %74, %94, %114, %134 in 2 : vector<1x8x8xf32>, vector<1x8x8xf32>, vector<1x8x8xf32>, vector<1x8x8xf32> -> vector<1x8x32xf32>
    %136 = vector.shape_cast %6 : vector<32x32xbf16> to vector<1x32x32xbf16>
    %137 = arith.truncf %135 : vector<1x8x32xf32> to vector<1x8x32xbf16>
    "tpu.trace_start"() <{level = 10 : i32, message = "bld,bde->ble"}> : () -> ()
    %cst_92 = arith.constant dense<0.000000e+00> : vector<1x8x32xf32>
    %138 = tpu.matmul %137, %136, %cst_92 {dimension_numbers = #tpu.dot_dimension_numbers<[2], [1], [1], [2], [0, 0, 0, 1, 1, 2], [0], [0]>} : vector<1x8x32xbf16>, vector<1x32x32xbf16>, vector<1x8x32xf32> -> vector<1x8x32xf32>
    "tpu.trace_stop"() : () -> ()
    %139 = vector.shape_cast %7 : vector<1x32xf32> to vector<1x1x32xf32>
    %140 = vector.broadcast %139 : vector<1x1x32xf32> to vector<1x8x32xf32>
    %141 = arith.addf %138, %140 : vector<1x8x32xf32>
    %142 = vector.shape_cast %36 : vector<8x32xf32> to vector<1x8x32xf32>
    %143 = arith.addf %142, %141 : vector<1x8x32xf32>
    %144 = arith.mulf %143, %143 : vector<1x8x32xf32>
    %cst_93 = arith.constant dense<0.000000e+00> : vector<1x8xf32>
    %145 = vector.multi_reduction <add>, %144, %cst_93 [2] : vector<1x8x32xf32> to vector<1x8xf32>
    %146 = vector.shape_cast %145 : vector<1x8xf32> to vector<1x8x1xf32>
    %cst_94 = arith.constant 3.200000e+01 : f32
    %147 = vector.broadcast %cst_94 : f32 to vector<1x8x1xf32>
    %148 = arith.divf %146, %147 : vector<1x8x1xf32>
    %cst_95 = arith.constant 9.99999997E-7 : f32
    %149 = vector.broadcast %cst_95 : f32 to vector<1x8x1xf32>
    %150 = arith.addf %148, %149 : vector<1x8x1xf32>
    %151 = math.rsqrt %150 : vector<1x8x1xf32>
    %152 = vector.broadcast %151 : vector<1x8x1xf32> to vector<1x8x32xf32>
    %153 = arith.mulf %143, %152 : vector<1x8x32xf32>
    %154 = vector.shape_cast %8 : vector<1x32xf32> to vector<1x1x32xf32>
    %155 = vector.broadcast %154 : vector<1x1x32xf32> to vector<1x8x32xf32>
    %156 = arith.mulf %153, %155 : vector<1x8x32xf32>
    %157 = vector.shape_cast %9 : vector<32x64xbf16> to vector<1x32x64xbf16>
    %158 = arith.truncf %156 : vector<1x8x32xf32> to vector<1x8x32xbf16>
    "tpu.trace_start"() <{level = 10 : i32, message = "bld,bde->ble"}> : () -> ()
    %cst_96 = arith.constant dense<0.000000e+00> : vector<1x8x64xf32>
    %159 = tpu.matmul %158, %157, %cst_96 {dimension_numbers = #tpu.dot_dimension_numbers<[2], [1], [1], [2], [0, 0, 0, 1, 1, 2], [0], [0]>} : vector<1x8x32xbf16>, vector<1x32x64xbf16>, vector<1x8x64xf32> -> vector<1x8x64xf32>
    "tpu.trace_stop"() : () -> ()
    %160 = vector.shape_cast %10 : vector<1x64xf32> to vector<1x1x64xf32>
    %161 = vector.broadcast %160 : vector<1x1x64xf32> to vector<1x8x64xf32>
    %162 = arith.addf %159, %161 : vector<1x8x64xf32>
    %163 = vector.shape_cast %11 : vector<32x64xbf16> to vector<1x32x64xbf16>
    %164 = arith.truncf %156 : vector<1x8x32xf32> to vector<1x8x32xbf16>
    "tpu.trace_start"() <{level = 10 : i32, message = "bld,bde->ble"}> : () -> ()
    %cst_97 = arith.constant dense<0.000000e+00> : vector<1x8x64xf32>
    %165 = tpu.matmul %164, %163, %cst_97 {dimension_numbers = #tpu.dot_dimension_numbers<[2], [1], [1], [2], [0, 0, 0, 1, 1, 2], [0], [0]>} : vector<1x8x32xbf16>, vector<1x32x64xbf16>, vector<1x8x64xf32> -> vector<1x8x64xf32>
    "tpu.trace_stop"() : () -> ()
    %166 = vector.shape_cast %12 : vector<1x64xf32> to vector<1x1x64xf32>
    %167 = vector.broadcast %166 : vector<1x1x64xf32> to vector<1x8x64xf32>
    %168 = arith.addf %165, %167 : vector<1x8x64xf32>
    %169 = arith.negf %162 : vector<1x8x64xf32>
    %170 = math.exp %169 : vector<1x8x64xf32>
    %cst_98 = arith.constant 1.000000e+00 : f32
    %171 = vector.broadcast %cst_98 : f32 to vector<1x8x64xf32>
    %172 = arith.addf %171, %170 : vector<1x8x64xf32>
    %173 = arith.divf %171, %172 : vector<1x8x64xf32>
    %174 = arith.mulf %162, %173 : vector<1x8x64xf32>
    %175 = arith.mulf %174, %168 : vector<1x8x64xf32>
    %176 = vector.shape_cast %13 : vector<64x32xbf16> to vector<1x64x32xbf16>
    %177 = arith.truncf %175 : vector<1x8x64xf32> to vector<1x8x64xbf16>
    "tpu.trace_start"() <{level = 10 : i32, message = "bld,bde->ble"}> : () -> ()
    %cst_99 = arith.constant dense<0.000000e+00> : vector<1x8x32xf32>
    %178 = tpu.matmul %177, %176, %cst_99 {dimension_numbers = #tpu.dot_dimension_numbers<[2], [1], [1], [2], [0, 0, 0, 1, 1, 2], [0], [0]>} : vector<1x8x64xbf16>, vector<1x64x32xbf16>, vector<1x8x32xf32> -> vector<1x8x32xf32>
    "tpu.trace_stop"() : () -> ()
    %179 = vector.shape_cast %14 : vector<1x32xf32> to vector<1x1x32xf32>
    %180 = vector.broadcast %179 : vector<1x1x32xf32> to vector<1x8x32xf32>
    %181 = arith.addf %178, %180 : vector<1x8x32xf32>
    %182 = arith.addf %156, %181 : vector<1x8x32xf32>
    %183 = arith.mulf %182, %182 : vector<1x8x32xf32>
    %cst_100 = arith.constant dense<0.000000e+00> : vector<1x8xf32>
    %184 = vector.multi_reduction <add>, %183, %cst_100 [2] : vector<1x8x32xf32> to vector<1x8xf32>
    %185 = vector.shape_cast %184 : vector<1x8xf32> to vector<1x8x1xf32>
    %cst_101 = arith.constant 3.200000e+01 : f32
    %186 = vector.broadcast %cst_101 : f32 to vector<1x8x1xf32>
    %187 = arith.divf %185, %186 : vector<1x8x1xf32>
    %cst_102 = arith.constant 9.99999997E-7 : f32
    %188 = vector.broadcast %cst_102 : f32 to vector<1x8x1xf32>
    %189 = arith.addf %187, %188 : vector<1x8x1xf32>
    %190 = math.rsqrt %189 : vector<1x8x1xf32>
    %191 = vector.broadcast %190 : vector<1x8x1xf32> to vector<1x8x32xf32>
    %192 = arith.mulf %182, %191 : vector<1x8x32xf32>
    %193 = vector.shape_cast %15 : vector<1x32xf32> to vector<1x1x32xf32>
    %194 = vector.broadcast %193 : vector<1x1x32xf32> to vector<1x8x32xf32>
    %195 = arith.mulf %192, %194 : vector<1x8x32xf32>
    %196 = vector.shape_cast %195 : vector<1x8x32xf32> to vector<8x32xf32>
    %197 = vector.shape_cast %196 : vector<8x32xf32> to vector<1x8x32xf32>
    %198 = arith.truncf %196 : vector<8x32xf32> to vector<8x32xbf16>
    %cst_103 = arith.constant dense<0.000000e+00> : vector<8x32xf32>
    %199 = tpu.matmul %198, %16, %cst_103 {dimension_numbers = #tpu.dot_dimension_numbers<[1], [0], [0], [1], [0, 0, 1, 1], [], []>} : vector<8x32xbf16>, vector<32x32xbf16>, vector<8x32xf32> -> vector<8x32xf32>
    %200 = vector.broadcast %17 : vector<1x32xf32> to vector<8x32xf32>
    %201 = arith.addf %199, %200 : vector<8x32xf32>
    %202 = vector.shape_cast %18 : vector<32x32xbf16> to vector<1x32x32xbf16>
    %203 = arith.truncf %197 : vector<1x8x32xf32> to vector<1x8x32xbf16>
    "tpu.trace_start"() <{level = 10 : i32, message = "bld,bde->ble"}> : () -> ()
    %cst_104 = arith.constant dense<0.000000e+00> : vector<1x8x32xf32>
    %204 = tpu.matmul %203, %202, %cst_104 {dimension_numbers = #tpu.dot_dimension_numbers<[2], [1], [1], [2], [0, 0, 0, 1, 1, 2], [0], [0]>} : vector<1x8x32xbf16>, vector<1x32x32xbf16>, vector<1x8x32xf32> -> vector<1x8x32xf32>
    "tpu.trace_stop"() : () -> ()
    %205 = vector.shape_cast %19 : vector<1x32xf32> to vector<1x1x32xf32>
    %206 = vector.broadcast %205 : vector<1x1x32xf32> to vector<1x8x32xf32>
    %207 = arith.addf %204, %206 : vector<1x8x32xf32>
    %208 = vector.shape_cast %20 : vector<32x32xbf16> to vector<1x32x32xbf16>
    %209 = arith.truncf %197 : vector<1x8x32xf32> to vector<1x8x32xbf16>
    "tpu.trace_start"() <{level = 10 : i32, message = "bld,bde->ble"}> : () -> ()
    %cst_105 = arith.constant dense<0.000000e+00> : vector<1x8x32xf32>
    %210 = tpu.matmul %209, %208, %cst_105 {dimension_numbers = #tpu.dot_dimension_numbers<[2], [1], [1], [2], [0, 0, 0, 1, 1, 2], [0], [0]>} : vector<1x8x32xbf16>, vector<1x32x32xbf16>, vector<1x8x32xf32> -> vector<1x8x32xf32>
    "tpu.trace_stop"() : () -> ()
    %211 = vector.shape_cast %21 : vector<1x32xf32> to vector<1x1x32xf32>
    %212 = vector.broadcast %211 : vector<1x1x32xf32> to vector<1x8x32xf32>
    %213 = arith.addf %210, %212 : vector<1x8x32xf32>
    %214 = vector.shape_cast %201 : vector<8x32xf32> to vector<1x8x32xf32>
    %215 = vector.extract_strided_slice %214 {offsets = [0, 0, 0], sizes = [1, 8, 8], strides = [1, 1, 1]} : vector<1x8x32xf32> to vector<1x8x8xf32>
    %216 = arith.truncf %215 : vector<1x8x8xf32> to vector<1x8x8xbf16>
    %217 = vector.extract_strided_slice %207 {offsets = [0, 0, 0], sizes = [1, 8, 8], strides = [1, 1, 1]} : vector<1x8x32xf32> to vector<1x8x8xf32>
    %218 = arith.truncf %217 : vector<1x8x8xf32> to vector<1x8x8xbf16>
    "tpu.trace_start"() <{level = 10 : i32, message = "bqd,bkd->bqk"}> : () -> ()
    %cst_106 = arith.constant dense<0.000000e+00> : vector<1x8x8xf32>
    %219 = tpu.matmul %216, %218, %cst_106 {dimension_numbers = #tpu.dot_dimension_numbers<[2], [2], [1], [1], [0, 0, 0, 1, 1, 1], [0], [0]>} : vector<1x8x8xbf16>, vector<1x8x8xbf16>, vector<1x8x8xf32> -> vector<1x8x8xf32>
    "tpu.trace_stop"() : () -> ()
    %cst_107 = arith.constant 0.353553385 : f32
    %220 = vector.broadcast %cst_107 : f32 to vector<1x8x8xf32>
    %221 = arith.mulf %219, %220 : vector<1x8x8xf32>
    %cst_108 = arith.constant dense<0xFF800000> : vector<1x8xf32>
    %222 = vector.multi_reduction <maximumf>, %221, %cst_108 [2] : vector<1x8x8xf32> to vector<1x8xf32>
    %223 = vector.shape_cast %222 : vector<1x8xf32> to vector<1x8x1xf32>
    %224 = vector.broadcast %223 : vector<1x8x1xf32> to vector<1x8x8xf32>
    %225 = arith.subf %221, %224 : vector<1x8x8xf32>
    %226 = math.exp %225 : vector<1x8x8xf32>
    %cst_109 = arith.constant dense<0.000000e+00> : vector<1x8xf32>
    %227 = vector.multi_reduction <add>, %226, %cst_109 [2] : vector<1x8x8xf32> to vector<1x8xf32>
    %228 = vector.shape_cast %227 : vector<1x8xf32> to vector<1x8x1xf32>
    %229 = vector.broadcast %228 : vector<1x8x1xf32> to vector<1x8x8xf32>
    %230 = arith.divf %226, %229 : vector<1x8x8xf32>
    %231 = arith.truncf %230 : vector<1x8x8xf32> to vector<1x8x8xbf16>
    %232 = vector.extract_strided_slice %213 {offsets = [0, 0, 0], sizes = [1, 8, 8], strides = [1, 1, 1]} : vector<1x8x32xf32> to vector<1x8x8xf32>
    %233 = arith.truncf %232 : vector<1x8x8xf32> to vector<1x8x8xbf16>
    "tpu.trace_start"() <{level = 10 : i32, message = "bqk,bkd->bqd"}> : () -> ()
    %cst_110 = arith.constant dense<0.000000e+00> : vector<1x8x8xf32>
    %234 = tpu.matmul %231, %233, %cst_110 {dimension_numbers = #tpu.dot_dimension_numbers<[2], [1], [1], [2], [0, 0, 0, 1, 1, 2], [0], [0]>} : vector<1x8x8xbf16>, vector<1x8x8xbf16>, vector<1x8x8xf32> -> vector<1x8x8xf32>
    "tpu.trace_stop"() : () -> ()
    %235 = vector.extract_strided_slice %214 {offsets = [0, 0, 8], sizes = [1, 8, 8], strides = [1, 1, 1]} : vector<1x8x32xf32> to vector<1x8x8xf32>
    %236 = arith.truncf %235 : vector<1x8x8xf32> to vector<1x8x8xbf16>
    %237 = vector.extract_strided_slice %207 {offsets = [0, 0, 8], sizes = [1, 8, 8], strides = [1, 1, 1]} : vector<1x8x32xf32> to vector<1x8x8xf32>
    %238 = arith.truncf %237 : vector<1x8x8xf32> to vector<1x8x8xbf16>
    "tpu.trace_start"() <{level = 10 : i32, message = "bqd,bkd->bqk"}> : () -> ()
    %cst_111 = arith.constant dense<0.000000e+00> : vector<1x8x8xf32>
    %239 = tpu.matmul %236, %238, %cst_111 {dimension_numbers = #tpu.dot_dimension_numbers<[2], [2], [1], [1], [0, 0, 0, 1, 1, 1], [0], [0]>} : vector<1x8x8xbf16>, vector<1x8x8xbf16>, vector<1x8x8xf32> -> vector<1x8x8xf32>
    "tpu.trace_stop"() : () -> ()
    %cst_112 = arith.constant 0.353553385 : f32
    %240 = vector.broadcast %cst_112 : f32 to vector<1x8x8xf32>
    %241 = arith.mulf %239, %240 : vector<1x8x8xf32>
    %cst_113 = arith.constant dense<0xFF800000> : vector<1x8xf32>
    %242 = vector.multi_reduction <maximumf>, %241, %cst_113 [2] : vector<1x8x8xf32> to vector<1x8xf32>
    %243 = vector.shape_cast %242 : vector<1x8xf32> to vector<1x8x1xf32>
    %244 = vector.broadcast %243 : vector<1x8x1xf32> to vector<1x8x8xf32>
    %245 = arith.subf %241, %244 : vector<1x8x8xf32>
    %246 = math.exp %245 : vector<1x8x8xf32>
    %cst_114 = arith.constant dense<0.000000e+00> : vector<1x8xf32>
    %247 = vector.multi_reduction <add>, %246, %cst_114 [2] : vector<1x8x8xf32> to vector<1x8xf32>
    %248 = vector.shape_cast %247 : vector<1x8xf32> to vector<1x8x1xf32>
    %249 = vector.broadcast %248 : vector<1x8x1xf32> to vector<1x8x8xf32>
    %250 = arith.divf %246, %249 : vector<1x8x8xf32>
    %251 = arith.truncf %250 : vector<1x8x8xf32> to vector<1x8x8xbf16>
    %252 = vector.extract_strided_slice %213 {offsets = [0, 0, 8], sizes = [1, 8, 8], strides = [1, 1, 1]} : vector<1x8x32xf32> to vector<1x8x8xf32>
    %253 = arith.truncf %252 : vector<1x8x8xf32> to vector<1x8x8xbf16>
    "tpu.trace_start"() <{level = 10 : i32, message = "bqk,bkd->bqd"}> : () -> ()
    %cst_115 = arith.constant dense<0.000000e+00> : vector<1x8x8xf32>
    %254 = tpu.matmul %251, %253, %cst_115 {dimension_numbers = #tpu.dot_dimension_numbers<[2], [1], [1], [2], [0, 0, 0, 1, 1, 2], [0], [0]>} : vector<1x8x8xbf16>, vector<1x8x8xbf16>, vector<1x8x8xf32> -> vector<1x8x8xf32>
    "tpu.trace_stop"() : () -> ()
    %255 = vector.extract_strided_slice %214 {offsets = [0, 0, 16], sizes = [1, 8, 8], strides = [1, 1, 1]} : vector<1x8x32xf32> to vector<1x8x8xf32>
    %256 = arith.truncf %255 : vector<1x8x8xf32> to vector<1x8x8xbf16>
    %257 = vector.extract_strided_slice %207 {offsets = [0, 0, 16], sizes = [1, 8, 8], strides = [1, 1, 1]} : vector<1x8x32xf32> to vector<1x8x8xf32>
    %258 = arith.truncf %257 : vector<1x8x8xf32> to vector<1x8x8xbf16>
    "tpu.trace_start"() <{level = 10 : i32, message = "bqd,bkd->bqk"}> : () -> ()
    %cst_116 = arith.constant dense<0.000000e+00> : vector<1x8x8xf32>
    %259 = tpu.matmul %256, %258, %cst_116 {dimension_numbers = #tpu.dot_dimension_numbers<[2], [2], [1], [1], [0, 0, 0, 1, 1, 1], [0], [0]>} : vector<1x8x8xbf16>, vector<1x8x8xbf16>, vector<1x8x8xf32> -> vector<1x8x8xf32>
    "tpu.trace_stop"() : () -> ()
    %cst_117 = arith.constant 0.353553385 : f32
    %260 = vector.broadcast %cst_117 : f32 to vector<1x8x8xf32>
    %261 = arith.mulf %259, %260 : vector<1x8x8xf32>
    %cst_118 = arith.constant dense<0xFF800000> : vector<1x8xf32>
    %262 = vector.multi_reduction <maximumf>, %261, %cst_118 [2] : vector<1x8x8xf32> to vector<1x8xf32>
    %263 = vector.shape_cast %262 : vector<1x8xf32> to vector<1x8x1xf32>
    %264 = vector.broadcast %263 : vector<1x8x1xf32> to vector<1x8x8xf32>
    %265 = arith.subf %261, %264 : vector<1x8x8xf32>
    %266 = math.exp %265 : vector<1x8x8xf32>
    %cst_119 = arith.constant dense<0.000000e+00> : vector<1x8xf32>
    %267 = vector.multi_reduction <add>, %266, %cst_119 [2] : vector<1x8x8xf32> to vector<1x8xf32>
    %268 = vector.shape_cast %267 : vector<1x8xf32> to vector<1x8x1xf32>
    %269 = vector.broadcast %268 : vector<1x8x1xf32> to vector<1x8x8xf32>
    %270 = arith.divf %266, %269 : vector<1x8x8xf32>
    %271 = arith.truncf %270 : vector<1x8x8xf32> to vector<1x8x8xbf16>
    %272 = vector.extract_strided_slice %213 {offsets = [0, 0, 16], sizes = [1, 8, 8], strides = [1, 1, 1]} : vector<1x8x32xf32> to vector<1x8x8xf32>
    %273 = arith.truncf %272 : vector<1x8x8xf32> to vector<1x8x8xbf16>
    "tpu.trace_start"() <{level = 10 : i32, message = "bqk,bkd->bqd"}> : () -> ()
    %cst_120 = arith.constant dense<0.000000e+00> : vector<1x8x8xf32>
    %274 = tpu.matmul %271, %273, %cst_120 {dimension_numbers = #tpu.dot_dimension_numbers<[2], [1], [1], [2], [0, 0, 0, 1, 1, 2], [0], [0]>} : vector<1x8x8xbf16>, vector<1x8x8xbf16>, vector<1x8x8xf32> -> vector<1x8x8xf32>
    "tpu.trace_stop"() : () -> ()
    %275 = vector.extract_strided_slice %214 {offsets = [0, 0, 24], sizes = [1, 8, 8], strides = [1, 1, 1]} : vector<1x8x32xf32> to vector<1x8x8xf32>
    %276 = arith.truncf %275 : vector<1x8x8xf32> to vector<1x8x8xbf16>
    %277 = vector.extract_strided_slice %207 {offsets = [0, 0, 24], sizes = [1, 8, 8], strides = [1, 1, 1]} : vector<1x8x32xf32> to vector<1x8x8xf32>
    %278 = arith.truncf %277 : vector<1x8x8xf32> to vector<1x8x8xbf16>
    "tpu.trace_start"() <{level = 10 : i32, message = "bqd,bkd->bqk"}> : () -> ()
    %cst_121 = arith.constant dense<0.000000e+00> : vector<1x8x8xf32>
    %279 = tpu.matmul %276, %278, %cst_121 {dimension_numbers = #tpu.dot_dimension_numbers<[2], [2], [1], [1], [0, 0, 0, 1, 1, 1], [0], [0]>} : vector<1x8x8xbf16>, vector<1x8x8xbf16>, vector<1x8x8xf32> -> vector<1x8x8xf32>
    "tpu.trace_stop"() : () -> ()
    %cst_122 = arith.constant 0.353553385 : f32
    %280 = vector.broadcast %cst_122 : f32 to vector<1x8x8xf32>
    %281 = arith.mulf %279, %280 : vector<1x8x8xf32>
    %cst_123 = arith.constant dense<0xFF800000> : vector<1x8xf32>
    %282 = vector.multi_reduction <maximumf>, %281, %cst_123 [2] : vector<1x8x8xf32> to vector<1x8xf32>
    %283 = vector.shape_cast %282 : vector<1x8xf32> to vector<1x8x1xf32>
    %284 = vector.broadcast %283 : vector<1x8x1xf32> to vector<1x8x8xf32>
    %285 = arith.subf %281, %284 : vector<1x8x8xf32>
    %286 = math.exp %285 : vector<1x8x8xf32>
    %cst_124 = arith.constant dense<0.000000e+00> : vector<1x8xf32>
    %287 = vector.multi_reduction <add>, %286, %cst_124 [2] : vector<1x8x8xf32> to vector<1x8xf32>
    %288 = vector.shape_cast %287 : vector<1x8xf32> to vector<1x8x1xf32>
    %289 = vector.broadcast %288 : vector<1x8x1xf32> to vector<1x8x8xf32>
    %290 = arith.divf %286, %289 : vector<1x8x8xf32>
    %291 = arith.truncf %290 : vector<1x8x8xf32> to vector<1x8x8xbf16>
    %292 = vector.extract_strided_slice %213 {offsets = [0, 0, 24], sizes = [1, 8, 8], strides = [1, 1, 1]} : vector<1x8x32xf32> to vector<1x8x8xf32>
    %293 = arith.truncf %292 : vector<1x8x8xf32> to vector<1x8x8xbf16>
    "tpu.trace_start"() <{level = 10 : i32, message = "bqk,bkd->bqd"}> : () -> ()
    %cst_125 = arith.constant dense<0.000000e+00> : vector<1x8x8xf32>
    %294 = tpu.matmul %291, %293, %cst_125 {dimension_numbers = #tpu.dot_dimension_numbers<[2], [1], [1], [2], [0, 0, 0, 1, 1, 2], [0], [0]>} : vector<1x8x8xbf16>, vector<1x8x8xbf16>, vector<1x8x8xf32> -> vector<1x8x8xf32>
    "tpu.trace_stop"() : () -> ()
    %295 = tpu.concatenate %234, %254, %274, %294 in 2 : vector<1x8x8xf32>, vector<1x8x8xf32>, vector<1x8x8xf32>, vector<1x8x8xf32> -> vector<1x8x32xf32>
    %296 = vector.shape_cast %22 : vector<32x32xbf16> to vector<1x32x32xbf16>
    %297 = arith.truncf %295 : vector<1x8x32xf32> to vector<1x8x32xbf16>
    "tpu.trace_start"() <{level = 10 : i32, message = "bld,bde->ble"}> : () -> ()
    %cst_126 = arith.constant dense<0.000000e+00> : vector<1x8x32xf32>
    %298 = tpu.matmul %297, %296, %cst_126 {dimension_numbers = #tpu.dot_dimension_numbers<[2], [1], [1], [2], [0, 0, 0, 1, 1, 2], [0], [0]>} : vector<1x8x32xbf16>, vector<1x32x32xbf16>, vector<1x8x32xf32> -> vector<1x8x32xf32>
    "tpu.trace_stop"() : () -> ()
    %299 = vector.shape_cast %23 : vector<1x32xf32> to vector<1x1x32xf32>
    %300 = vector.broadcast %299 : vector<1x1x32xf32> to vector<1x8x32xf32>
    %301 = arith.addf %298, %300 : vector<1x8x32xf32>
    %302 = vector.shape_cast %196 : vector<8x32xf32> to vector<1x8x32xf32>
    %303 = arith.addf %302, %301 : vector<1x8x32xf32>
    %304 = arith.mulf %303, %303 : vector<1x8x32xf32>
    %cst_127 = arith.constant dense<0.000000e+00> : vector<1x8xf32>
    %305 = vector.multi_reduction <add>, %304, %cst_127 [2] : vector<1x8x32xf32> to vector<1x8xf32>
    %306 = vector.shape_cast %305 : vector<1x8xf32> to vector<1x8x1xf32>
    %cst_128 = arith.constant 3.200000e+01 : f32
    %307 = vector.broadcast %cst_128 : f32 to vector<1x8x1xf32>
    %308 = arith.divf %306, %307 : vector<1x8x1xf32>
    %cst_129 = arith.constant 9.99999997E-7 : f32
    %309 = vector.broadcast %cst_129 : f32 to vector<1x8x1xf32>
    %310 = arith.addf %308, %309 : vector<1x8x1xf32>
    %311 = math.rsqrt %310 : vector<1x8x1xf32>
    %312 = vector.broadcast %311 : vector<1x8x1xf32> to vector<1x8x32xf32>
    %313 = arith.mulf %303, %312 : vector<1x8x32xf32>
    %314 = vector.shape_cast %24 : vector<1x32xf32> to vector<1x1x32xf32>
    %315 = vector.broadcast %314 : vector<1x1x32xf32> to vector<1x8x32xf32>
    %316 = arith.mulf %313, %315 : vector<1x8x32xf32>
    %317 = vector.shape_cast %25 : vector<32x64xbf16> to vector<1x32x64xbf16>
    %318 = arith.truncf %316 : vector<1x8x32xf32> to vector<1x8x32xbf16>
    "tpu.trace_start"() <{level = 10 : i32, message = "bld,bde->ble"}> : () -> ()
    %cst_130 = arith.constant dense<0.000000e+00> : vector<1x8x64xf32>
    %319 = tpu.matmul %318, %317, %cst_130 {dimension_numbers = #tpu.dot_dimension_numbers<[2], [1], [1], [2], [0, 0, 0, 1, 1, 2], [0], [0]>} : vector<1x8x32xbf16>, vector<1x32x64xbf16>, vector<1x8x64xf32> -> vector<1x8x64xf32>
    "tpu.trace_stop"() : () -> ()
    %320 = vector.shape_cast %26 : vector<1x64xf32> to vector<1x1x64xf32>
    %321 = vector.broadcast %320 : vector<1x1x64xf32> to vector<1x8x64xf32>
    %322 = arith.addf %319, %321 : vector<1x8x64xf32>
    %323 = vector.shape_cast %27 : vector<32x64xbf16> to vector<1x32x64xbf16>
    %324 = arith.truncf %316 : vector<1x8x32xf32> to vector<1x8x32xbf16>
    "tpu.trace_start"() <{level = 10 : i32, message = "bld,bde->ble"}> : () -> ()
    %cst_131 = arith.constant dense<0.000000e+00> : vector<1x8x64xf32>
    %325 = tpu.matmul %324, %323, %cst_131 {dimension_numbers = #tpu.dot_dimension_numbers<[2], [1], [1], [2], [0, 0, 0, 1, 1, 2], [0], [0]>} : vector<1x8x32xbf16>, vector<1x32x64xbf16>, vector<1x8x64xf32> -> vector<1x8x64xf32>
    "tpu.trace_stop"() : () -> ()
    %326 = vector.shape_cast %28 : vector<1x64xf32> to vector<1x1x64xf32>
    %327 = vector.broadcast %326 : vector<1x1x64xf32> to vector<1x8x64xf32>
    %328 = arith.addf %325, %327 : vector<1x8x64xf32>
    %329 = arith.negf %322 : vector<1x8x64xf32>
    %330 = math.exp %329 : vector<1x8x64xf32>
    %cst_132 = arith.constant 1.000000e+00 : f32
    %331 = vector.broadcast %cst_132 : f32 to vector<1x8x64xf32>
    %332 = arith.addf %331, %330 : vector<1x8x64xf32>
    %333 = arith.divf %331, %332 : vector<1x8x64xf32>
    %334 = arith.mulf %322, %333 : vector<1x8x64xf32>
    %335 = arith.mulf %334, %328 : vector<1x8x64xf32>
    %336 = vector.shape_cast %29 : vector<64x32xbf16> to vector<1x64x32xbf16>
    %337 = arith.truncf %335 : vector<1x8x64xf32> to vector<1x8x64xbf16>
    "tpu.trace_start"() <{level = 10 : i32, message = "bld,bde->ble"}> : () -> ()
    %cst_133 = arith.constant dense<0.000000e+00> : vector<1x8x32xf32>
    %338 = tpu.matmul %337, %336, %cst_133 {dimension_numbers = #tpu.dot_dimension_numbers<[2], [1], [1], [2], [0, 0, 0, 1, 1, 2], [0], [0]>} : vector<1x8x64xbf16>, vector<1x64x32xbf16>, vector<1x8x32xf32> -> vector<1x8x32xf32>
    "tpu.trace_stop"() : () -> ()
    %339 = vector.shape_cast %30 : vector<1x32xf32> to vector<1x1x32xf32>
    %340 = vector.broadcast %339 : vector<1x1x32xf32> to vector<1x8x32xf32>
    %341 = arith.addf %338, %340 : vector<1x8x32xf32>
    %342 = arith.addf %316, %341 : vector<1x8x32xf32>
    %343 = arith.mulf %342, %342 : vector<1x8x32xf32>
    %cst_134 = arith.constant dense<0.000000e+00> : vector<1x8xf32>
    %344 = vector.multi_reduction <add>, %343, %cst_134 [2] : vector<1x8x32xf32> to vector<1x8xf32>
    %345 = vector.shape_cast %344 : vector<1x8xf32> to vector<1x8x1xf32>
    %cst_135 = arith.constant 3.200000e+01 : f32
    %346 = vector.broadcast %cst_135 : f32 to vector<1x8x1xf32>
    %347 = arith.divf %345, %346 : vector<1x8x1xf32>
    %cst_136 = arith.constant 9.99999997E-7 : f32
    %348 = vector.broadcast %cst_136 : f32 to vector<1x8x1xf32>
    %349 = arith.addf %347, %348 : vector<1x8x1xf32>
    %350 = math.rsqrt %349 : vector<1x8x1xf32>
    %351 = vector.broadcast %350 : vector<1x8x1xf32> to vector<1x8x32xf32>
    %352 = arith.mulf %342, %351 : vector<1x8x32xf32>
    %353 = vector.shape_cast %31 : vector<1x32xf32> to vector<1x1x32xf32>
    %354 = vector.broadcast %353 : vector<1x1x32xf32> to vector<1x8x32xf32>
    %355 = arith.mulf %352, %354 : vector<1x8x32xf32>
    %356 = vector.shape_cast %355 : vector<1x8x32xf32> to vector<8x32xf32>
    %c0_137 = arith.constant 0 : index
    %c0_138 = arith.constant 0 : index
    %c0_139 = arith.constant 0 : index
    %357 = vector.load %arg35[%c0_137, %c0_138, %c0_139] : memref<1x8x32xf32, #tpu.memory_space<vmem>>, vector<1x8x32xf32>
    %358 = vector.shape_cast %357 : vector<1x8x32xf32> to vector<8x32xf32>
    %359 = vector.shape_cast %356 : vector<8x32xf32> to vector<1x8x32xf32>
    tpu.vector_store %arg35[%c0_137, %c0_138, %c0_139], %359 {strides = array<i32>} : memref<1x8x32xf32, #tpu.memory_space<vmem>>, vector<1x8x32xf32>,
    return
  }
  func.func @transform_0(%arg0: i32) -> (i32, i32, i32) {
    %c0_i32 = arith.constant 0 : i32
    %c0_i32_0 = arith.constant 0 : i32
    %c0_i32_1 = arith.constant 0 : i32
    return %arg0, %c0_i32, %c0_i32_0 : i32, i32, i32
  }
  func.func @transform_1(%arg0: i32) -> (i32, i32, i32, i32) {
    %c0_i32 = arith.constant 0 : i32
    %c0_i32_0 = arith.constant 0 : i32
    %c0_i32_1 = arith.constant 0 : i32
    %c0_i32_2 = arith.constant 0 : i32
    return %arg0, %c0_i32, %c0_i32_0, %c0_i32_1 : i32, i32, i32, i32
  }
  func.func @transform_2(%arg0: i32) -> (i32, i32) {
    %c0_i32 = arith.constant 0 : i32
    %c0_i32_0 = arith.constant 0 : i32
    %c0_i32_1 = arith.constant 0 : i32
    return %c0_i32, %c0_i32_0 : i32, i32
  }
  func.func @transform_3(%arg0: i32) -> (i32, i32) {
    %c0_i32 = arith.constant 0 : i32
    %c0_i32_0 = arith.constant 0 : i32
    %c0_i32_1 = arith.constant 0 : i32
    return %c0_i32, %c0_i32_0 : i32, i32
  }
  func.func @transform_4(%arg0: i32) -> (i32, i32) {
    %c0_i32 = arith.constant 0 : i32
    %c0_i32_0 = arith.constant 0 : i32
    %c0_i32_1 = arith.constant 0 : i32
    return %c0_i32, %c0_i32_0 : i32, i32
  }
  func.func @transform_5(%arg0: i32) -> (i32, i32) {
    %c0_i32 = arith.constant 0 : i32
    %c0_i32_0 = arith.constant 0 : i32
    %c0_i32_1 = arith.constant 0 : i32
    return %c0_i32, %c0_i32_0 : i32, i32
  }
  func.func @transform_6(%arg0: i32) -> (i32, i32) {
    %c0_i32 = arith.constant 0 : i32
    %c0_i32_0 = arith.constant 0 : i32
    %c0_i32_1 = arith.constant 0 : i32
    return %c0_i32, %c0_i32_0 : i32, i32
  }
  func.func @transform_7(%arg0: i32) -> (i32, i32) {
    %c0_i32 = arith.constant 0 : i32
    %c0_i32_0 = arith.constant 0 : i32
    %c0_i32_1 = arith.constant 0 : i32
    return %c0_i32, %c0_i32_0 : i32, i32
  }
  func.func @transform_8(%arg0: i32) -> (i32, i32) {
    %c0_i32 = arith.constant 0 : i32
    %c0_i32_0 = arith.constant 0 : i32
    %c0_i32_1 = arith.constant 0 : i32
    return %c0_i32, %c0_i32_0 : i32, i32
  }
  func.func @transform_9(%arg0: i32) -> (i32, i32) {
    %c0_i32 = arith.constant 0 : i32
    %c0_i32_0 = arith.constant 0 : i32
    %c0_i32_1 = arith.constant 0 : i32
    return %c0_i32, %c0_i32_0 : i32, i32
  }
  func.func @transform_10(%arg0: i32) -> (i32, i32) {
    %c0_i32 = arith.constant 0 : i32
    %c0_i32_0 = arith.constant 0 : i32
    %c0_i32_1 = arith.constant 0 : i32
    return %c0_i32, %c0_i32_0 : i32, i32
  }
  func.func @transform_11(%arg0: i32) -> (i32, i32) {
    %c0_i32 = arith.constant 0 : i32
    %c0_i32_0 = arith.constant 0 : i32
    %c0_i32_1 = arith.constant 0 : i32
    return %c0_i32, %c0_i32_0 : i32, i32
  }
  func.func @transform_12(%arg0: i32) -> (i32, i32) {
    %c0_i32 = arith.constant 0 : i32
    %c0_i32_0 = arith.constant 0 : i32
    %c0_i32_1 = arith.constant 0 : i32
    return %c0_i32, %c0_i32_0 : i32, i32
  }
  func.func @transform_13(%arg0: i32) -> (i32, i32) {
    %c0_i32 = arith.constant 0 : i32
    %c0_i32_0 = arith.constant 0 : i32
    %c0_i32_1 = arith.constant 0 : i32
    return %c0_i32, %c0_i32_0 : i32, i32
  }
  func.func @transform_14(%arg0: i32) -> (i32, i32) {
    %c0_i32 = arith.constant 0 : i32
    %c0_i32_0 = arith.constant 0 : i32
    %c0_i32_1 = arith.constant 0 : i32
    return %c0_i32, %c0_i32_0 : i32, i32
  }
  func.func @transform_15(%arg0: i32) -> (i32, i32) {
    %c0_i32 = arith.constant 0 : i32
    %c0_i32_0 = arith.constant 0 : i32
    %c0_i32_1 = arith.constant 0 : i32
    return %c0_i32, %c0_i32_0 : i32, i32
  }
  func.func @transform_16(%arg0: i32) -> (i32, i32) {
    %c0_i32 = arith.constant 0 : i32
    %c0_i32_0 = arith.constant 0 : i32
    %c0_i32_1 = arith.constant 0 : i32
    return %c0_i32, %c0_i32_0 : i32, i32
  }
  func.func @transform_17(%arg0: i32) -> (i32, i32) {
    %c0_i32 = arith.constant 0 : i32
    %c0_i32_0 = arith.constant 0 : i32
    %c0_i32_1 = arith.constant 0 : i32
    return %c0_i32, %c0_i32_0 : i32, i32
  }
  func.func @transform_18(%arg0: i32) -> (i32, i32) {
    %c0_i32 = arith.constant 0 : i32
    %c0_i32_0 = arith.constant 0 : i32
    %c0_i32_1 = arith.constant 0 : i32
    return %c0_i32, %c0_i32_0 : i32, i32
  }
  func.func @transform_19(%arg0: i32) -> (i32, i32) {
    %c0_i32 = arith.constant 0 : i32
    %c0_i32_0 = arith.constant 0 : i32
    %c0_i32_1 = arith.constant 0 : i32
    return %c0_i32, %c0_i32_0 : i32, i32
  }
  func.func @transform_20(%arg0: i32) -> (i32, i32) {
    %c0_i32 = arith.constant 0 : i32
    %c0_i32_0 = arith.constant 0 : i32
    %c0_i32_1 = arith.constant 0 : i32
    return %c0_i32, %c0_i32_0 : i32, i32
  }
  func.func @transform_21(%arg0: i32) -> (i32, i32) {
    %c0_i32 = arith.constant 0 : i32
    %c0_i32_0 = arith.constant 0 : i32
    %c0_i32_1 = arith.constant 0 : i32
    return %c0_i32, %c0_i32_0 : i32, i32
  }
  func.func @transform_22(%arg0: i32) -> (i32, i32) {
    %c0_i32 = arith.constant 0 : i32
    %c0_i32_0 = arith.constant 0 : i32
    %c0_i32_1 = arith.constant 0 : i32
    return %c0_i32, %c0_i32_0 : i32, i32
  }
  func.func @transform_23(%arg0: i32) -> (i32, i32) {
    %c0_i32 = arith.constant 0 : i32
    %c0_i32_0 = arith.constant 0 : i32
    %c0_i32_1 = arith.constant 0 : i32
    return %c0_i32, %c0_i32_0 : i32, i32
  }
  func.func @transform_24(%arg0: i32) -> (i32, i32) {
    %c0_i32 = arith.constant 0 : i32
    %c0_i32_0 = arith.constant 0 : i32
    %c0_i32_1 = arith.constant 0 : i32
    return %c0_i32, %c0_i32_0 : i32, i32
  }
  func.func @transform_25(%arg0: i32) -> (i32, i32) {
    %c0_i32 = arith.constant 0 : i32
    %c0_i32_0 = arith.constant 0 : i32
    %c0_i32_1 = arith.constant 0 : i32
    return %c0_i32, %c0_i32_0 : i32, i32
  }
  func.func @transform_26(%arg0: i32) -> (i32, i32) {
    %c0_i32 = arith.constant 0 : i32
    %c0_i32_0 = arith.constant 0 : i32
    %c0_i32_1 = arith.constant 0 : i32
    return %c0_i32, %c0_i32_0 : i32, i32
  }
  func.func @transform_27(%arg0: i32) -> (i32, i32) {
    %c0_i32 = arith.constant 0 : i32
    %c0_i32_0 = arith.constant 0 : i32
    %c0_i32_1 = arith.constant 0 : i32
    return %c0_i32, %c0_i32_0 : i32, i32
  }
  func.func @transform_28(%arg0: i32) -> (i32, i32) {
    %c0_i32 = arith.constant 0 : i32
    %c0_i32_0 = arith.constant 0 : i32
    %c0_i32_1 = arith.constant 0 : i32
    return %c0_i32, %c0_i32_0 : i32, i32
  }
  func.func @transform_29(%arg0: i32) -> (i32, i32) {
    %c0_i32 = arith.constant 0 : i32
    %c0_i32_0 = arith.constant 0 : i32
    %c0_i32_1 = arith.constant 0 : i32
    return %c0_i32, %c0_i32_0 : i32, i32
  }
  func.func @transform_30(%arg0: i32) -> (i32, i32) {
    %c0_i32 = arith.constant 0 : i32
    %c0_i32_0 = arith.constant 0 : i32
    %c0_i32_1 = arith.constant 0 : i32
    return %c0_i32, %c0_i32_0 : i32, i32
  }
  func.func @transform_31(%arg0: i32) -> (i32, i32) {
    %c0_i32 = arith.constant 0 : i32
    %c0_i32_0 = arith.constant 0 : i32
    %c0_i32_1 = arith.constant 0 : i32
    return %c0_i32, %c0_i32_0 : i32, i32
  }
  func.func @transform_32(%arg0: i32) -> (i32, i32) {
    %c0_i32 = arith.constant 0 : i32
    %c0_i32_0 = arith.constant 0 : i32
    %c0_i32_1 = arith.constant 0 : i32
    return %c0_i32, %c0_i32_0 : i32, i32
  }
  func.func @transform_33(%arg0: i32) -> (i32, i32) {
    %c0_i32 = arith.constant 0 : i32
    %c0_i32_0 = arith.constant 0 : i32
    %c0_i32_1 = arith.constant 0 : i32
    return %c0_i32, %c0_i32_0 : i32, i32
  }
  func.func @transform_34(%arg0: i32) -> (i32, i32, i32) {
    %c0_i32 = arith.constant 0 : i32
    %c0_i32_0 = arith.constant 0 : i32
    %c0_i32_1 = arith.constant 0 : i32
    return %arg0, %c0_i32, %c0_i32_0 : i32, i32, i32
  }
}

</mosaic_0001>

<llo_original>
// kernel: block_forward.4
$region0: #{block_forward.4}
  #allocation0 [shape = 'u32[]', space=smem, size = 0x4, offset = 0x4, fixed_abs, tag = 'smem constant byte address 0x4 - core index']
  #allocation1 [shape = 'u32[72,128]{1,0:T(1,128)}', space=vmem, size = 0x9000, scoped, tag = 'internal scratch']
  %s0 = inlined_call_operand.vmem [shape: f32[2,8,32], index: 0, kind: input, shape index: {}]
  %s1 = inlined_call_operand.vmem [shape: bf16[32,128], index: 1, kind: input, shape index: {}]
  %s2 = inlined_call_operand.vmem [shape: f32[1,128], index: 2, kind: input, shape index: {}]
  %s3 = inlined_call_operand.vmem [shape: bf16[32,128], index: 3, kind: input, shape index: {}]
  %s4 = inlined_call_operand.vmem [shape: f32[1,128], index: 4, kind: input, shape index: {}]
  %s5 = inlined_call_operand.hbm [shape: bf16[32,32], index: 5, kind: input, shape index: {}]
  %s6 = inlined_call_operand.vmem [shape: f32[1,32], index: 6, kind: input, shape index: {}]
  %s7 = inlined_call_operand.hbm [shape: bf16[32,32], index: 7, kind: input, shape index: {}]
  %s8 = inlined_call_operand.vmem [shape: f32[1,32], index: 8, kind: input, shape index: {}]
  %s9 = inlined_call_operand.vmem [shape: f32[2,1,128], index: 9, kind: output, shape index: {0}]
  %s10 = inlined_call_operand.vmem [shape: f32[2,8,32], index: 10, kind: output, shape index: {1}]
  %11 = xla_tuple %s9, %s10
  %s12 = sld [smem:[#allocation0]]
  $region85: #{block_forward.4} parent=0
    _
  %s14 = ssub.s32 1, %s12
  %s15 = scalar_select 0, %s14, %s12
  $region1: #{block_forward.4} parent=0
    #allocation2 [shape = 'u8[8192]{0}', space=vmem, size = 0x2000, scoped, tag = 'input window, operand 5, single buffered']
    #allocation3 [shape = 's32[2]{0}', space=sflag, size = 0x8, scoped, tag = 'scoped memory for block_forward.4']
    #allocation4 [shape = 'u8[8192]{0}', space=vmem, size = 0x2000, scoped, tag = 'input window, operand 7, single buffered']
    #allocation5 [shape = 's32[1]{0}', space=sflag, size = 0x4, scoped, tag = 'scoped memory for block_forward.4']
    %16 = vsyncpa [#allocation3], 0
    %17 = vsyncpa [#allocation5], 0
    loop: start=0, step=1, limit=4
    $region2: #{block_forward.4} parent=1 // loop_pre_header
      _
    $region3: #{block_forward.4} parent=1 // loop_header
      %s19 = sphi 0, %s23
      %p20 = scmp.ge.s32.totalorder %s19, 4
      %s29 = sphi 0, %s31
      %s32 = sphi 0, %s29
      %s33 = sphi 0, %s32
      %s49 = sphi 0, %s33
      %s53 = sphi 0, %s53
      %s55 = sphi 0, %s53
      %s56 = sphi 0, %s55
      %s70 = sphi 0, %s56
      %s74 = sphi 0, %s74
      %s76 = sphi 0, %s74
      %s77 = sphi 0, %s76
      %s91 = sphi 0, %s77
      %s95 = sphi 0, %s95
      %s97 = sphi 0, %s95
      %s98 = sphi 0, %s97
      %s112 = sphi 0, %s98
      %s116 = sphi 0, %s116
      %s118 = sphi 0, %s116
      %s119 = sphi 0, %s118
      %s133 = sphi 0, %s119
      %s137 = sphi 0, %s137
      %s139 = sphi 0, %s137
      %s140 = sphi 0, %s139
      %s154 = sphi 0, %s140
      %s158 = sphi 0, %s158
      %s160 = sphi 0, %s158
      %s161 = sphi 0, %s160
      %s175 = sphi 0, %s161
      %s179 = sphi 0, %s179
      %s181 = sphi 0, %s179
      %s182 = sphi 0, %s181
      %s196 = sphi 0, %s182
      %s200 = sphi 0, %s200
      %s202 = sphi 0, %s200
      %s203 = sphi 0, %s202
      %s217 = sphi 0, %s203
      %s223 = sphi 0, %s225
      %s226 = sphi 0, %s223
      %s227 = sphi 0, %s226
      %s243 = sphi 0, %s227
      %s249 = sphi 0, %s251
      %s252 = sphi 0, %s249
      %s253 = sphi 0, %s252
      %s269 = sphi 0, %s253
    $region4: #{block_forward.4} parent=1 // loop_header_branch
      %22 = sbr.rel (%p20) target = $region8
    $region5: #{block_forward.4} parent=1 // loop_body
      %s24 = ssub.s32 %s19, 1
      %s25 = ssub.s32 %s19, 2
      %s26 = sadd.s32 %s19, 1
      %s27 = ssub.s32 %s19, %s26
      %p28 = scmp.eq.s32.totalorder %s27, 0
      %s30 = sadd.s32 %s29, 1
      %s31 = scalar_select %p28, %s29, %s30
      %p34 = pneg %p28
      %p35 = scmp.eq.s32.totalorder %s19, 1
      %p36 = por %p34, %p35
      %p37 = scmp.ne.s32.totalorder %s29, %s32
      %p38 = scmp.eq.s32.totalorder %s19, 0
      %p39 = por %p37, %p38
      %p40 = scmp.ne.s32.totalorder %s29, %s32
      %p41 = scmp.eq.s32.totalorder %s24, 1
      %p42 = por %p40, %p41
      %p43 = scmp.ne.s32.totalorder %s32, %s33
      %p44 = scmp.eq.s32.totalorder %s24, 0
      %p45 = por %p43, %p44
      %p46 = scmp.ne.s32.totalorder %s32, %s33
      %p47 = scmp.eq.s32.totalorder %s25, 1
      %p48 = por %p46, %p47
      %p50 = scmp.ne.s32.totalorder %s33, %s49
      %p51 = scmp.eq.s32.totalorder %s25, 0
      %p52 = por %p50, %p51
      %s54 = sadd.s32 %s53, 1
      %p57 = scmp.eq.s32.totalorder %s19, 1
      %p58 = scmp.ne.s32.totalorder %s53, %s55
      %p59 = scmp.eq.s32.totalorder %s19, 0
      %p60 = por %p58, %p59
      %p61 = scmp.ne.s32.totalorder %s53, %s55
      %p62 = scmp.eq.s32.totalorder %s24, 1
      %p63 = por %p61, %p62
      %p64 = scmp.ne.s32.totalorder %s55, %s56
      %p65 = scmp.eq.s32.totalorder %s24, 0
      %p66 = por %p64, %p65
      %p67 = scmp.ne.s32.totalorder %s55, %s56
      %p68 = scmp.eq.s32.totalorder %s25, 1
      %p69 = por %p67, %p68
      %p71 = scmp.ne.s32.totalorder %s56, %s70
      %p72 = scmp.eq.s32.totalorder %s25, 0
      %p73 = por %p71, %p72
      %s75 = sadd.s32 %s74, 1
      %p78 = scmp.eq.s32.totalorder %s19, 1
      %p79 = scmp.ne.s32.totalorder %s74, %s76
      %p80 = scmp.eq.s32.totalorder %s19, 0
      %p81 = por %p79, %p80
      %p82 = scmp.ne.s32.totalorder %s74, %s76
      %p83 = scmp.eq.s32.totalorder %s24, 1
      %p84 = por %p82, %p83
      %p85 = scmp.ne.s32.totalorder %s76, %s77
      %p86 = scmp.eq.s32.totalorder %s24, 0
      %p87 = por %p85, %p86
      %p88 = scmp.ne.s32.totalorder %s76, %s77
      %p89 = scmp.eq.s32.totalorder %s25, 1
      %p90 = por %p88, %p89
      %p92 = scmp.ne.s32.totalorder %s77, %s91
      %p93 = scmp.eq.s32.totalorder %s25, 0
      %p94 = por %p92, %p93
      %s96 = sadd.s32 %s95, 1
      %p99 = scmp.eq.s32.totalorder %s19, 1
      %p100 = scmp.ne.s32.totalorder %s95, %s97
      %p101 = scmp.eq.s32.totalorder %s19, 0
      %p102 = por %p100, %p101
      %p103 = scmp.ne.s32.totalorder %s95, %s97
      %p104 = scmp.eq.s32.totalorder %s24, 1
      %p105 = por %p103, %p104
      %p106 = scmp.ne.s32.totalorder %s97, %s98
      %p107 = scmp.eq.s32.totalorder %s24, 0
      %p108 = por %p106, %p107
      %p109 = scmp.ne.s32.totalorder %s97, %s98
      %p110 = scmp.eq.s32.totalorder %s25, 1
      %p111 = por %p109, %p110
      %p113 = scmp.ne.s32.totalorder %s98, %s112
      %p114 = scmp.eq.s32.totalorder %s25, 0
      %p115 = por %p113, %p114
      %s117 = sadd.s32 %s116, 1
      %p120 = scmp.eq.s32.totalorder %s19, 1
      %p121 = scmp.ne.s32.totalorder %s116, %s118
      %p122 = scmp.eq.s32.totalorder %s19, 0
      %p123 = por %p121, %p122
      %p124 = scmp.ne.s32.totalorder %s116, %s118
      %p125 = scmp.eq.s32.totalorder %s24, 1
      %p126 = por %p124, %p125
      %p127 = scmp.ne.s32.totalorder %s118, %s119
      %p128 = scmp.eq.s32.totalorder %s24, 0
      %p129 = por %p127, %p128
      %p130 = scmp.ne.s32.totalorder %s118, %s119
      %p131 = scmp.eq.s32.totalorder %s25, 1
      %p132 = por %p130, %p131
      %p134 = scmp.ne.s32.totalorder %s119, %s133
      %p135 = scmp.eq.s32.totalorder %s25, 0
      %p136 = por %p134, %p135
      %s138 = sadd.s32 %s137, 1
      %p141 = scmp.eq.s32.totalorder %s19, 1
      %p142 = scmp.ne.s32.totalorder %s137, %s139
      %p143 = scmp.eq.s32.totalorder %s19, 0
      %p144 = por %p142, %p143
      %p145 = scmp.ne.s32.totalorder %s137, %s139
      %p146 = scmp.eq.s32.totalorder %s24, 1
      %p147 = por %p145, %p146
      %p148 = scmp.ne.s32.totalorder %s139, %s140
      %p149 = scmp.eq.s32.totalorder %s24, 0
      %p150 = por %p148, %p149
      %p151 = scmp.ne.s32.totalorder %s139, %s140
      %p152 = scmp.eq.s32.totalorder %s25, 1
      %p153 = por %p151, %p152
      %p155 = scmp.ne.s32.totalorder %s140, %s154
      %p156 = scmp.eq.s32.totalorder %s25, 0
      %p157 = por %p155, %p156
      %s159 = sadd.s32 %s158, 1
      %p162 = scmp.eq.s32.totalorder %s19, 1
      %p163 = scmp.ne.s32.totalorder %s158, %s160
      %p164 = scmp.eq.s32.totalorder %s19, 0
      %p165 = por %p163, %p164
      %p166 = scmp.ne.s32.totalorder %s158, %s160
      %p167 = scmp.eq.s32.totalorder %s24, 1
      %p168 = por %p166, %p167
      %p169 = scmp.ne.s32.totalorder %s160, %s161
      %p170 = scmp.eq.s32.totalorder %s24, 0
      %p171 = por %p169, %p170
      %p172 = scmp.ne.s32.totalorder %s160, %s161
      %p173 = scmp.eq.s32.totalorder %s25, 1
      %p174 = por %p172, %p173
      %p176 = scmp.ne.s32.totalorder %s161, %s175
      %p177 = scmp.eq.s32.totalorder %s25, 0
      %p178 = por %p176, %p177
      %s180 = sadd.s32 %s179, 1
      %p183 = scmp.eq.s32.totalorder %s19, 1
      %p184 = scmp.ne.s32.totalorder %s179, %s181
      %p185 = scmp.eq.s32.totalorder %s19, 0
      %p186 = por %p184, %p185
      %p187 = scmp.ne.s32.totalorder %s179, %s181
      %p188 = scmp.eq.s32.totalorder %s24, 1
      %p189 = por %p187, %p188
      %p190 = scmp.ne.s32.totalorder %s181, %s182
      %p191 = scmp.eq.s32.totalorder %s24, 0
      %p192 = por %p190, %p191
      %p193 = scmp.ne.s32.totalorder %s181, %s182
      %p194 = scmp.eq.s32.totalorder %s25, 1
      %p195 = por %p193, %p194
      %p197 = scmp.ne.s32.totalorder %s182, %s196
      %p198 = scmp.eq.s32.totalorder %s25, 0
      %p199 = por %p197, %p198
      %s201 = sadd.s32 %s200, 1
      %p204 = scmp.eq.s32.totalorder %s19, 1
      %p205 = scmp.ne.s32.totalorder %s200, %s202
      %p206 = scmp.eq.s32.totalorder %s19, 0
      %p207 = por %p205, %p206
      %p208 = scmp.ne.s32.totalorder %s200, %s202
      %p209 = scmp.eq.s32.totalorder %s24, 1
      %p210 = por %p208, %p209
      %p211 = scmp.ne.s32.totalorder %s202, %s203
      %p212 = scmp.eq.s32.totalorder %s24, 0
      %p213 = por %p211, %p212
      %p214 = scmp.ne.s32.totalorder %s202, %s203
      %p215 = scmp.eq.s32.totalorder %s25, 1
      %p216 = por %p214, %p215
      %p218 = scmp.ne.s32.totalorder %s203, %s217
      %p219 = scmp.eq.s32.totalorder %s25, 0
      %p220 = por %p218, %p219
      %s221 = ssub.s32 %s19, %s26
      %p222 = scmp.eq.s32.totalorder %s221, 0
      %s224 = sadd.s32 %s223, 1
      %s225 = scalar_select %p222, %s223, %s224
      %p228 = pneg %p222
      %p229 = scmp.eq.s32.totalorder %s19, 1
      %p230 = por %p228, %p229
      %p231 = scmp.ne.s32.totalorder %s223, %s226
      %p232 = scmp.eq.s32.totalorder %s19, 0
      %p233 = por %p231, %p232
      %p234 = scmp.ne.s32.totalorder %s223, %s226
      %p235 = scmp.eq.s32.totalorder %s24, 1
      %p236 = por %p234, %p235
      %p237 = scmp.ne.s32.totalorder %s226, %s227
      %p238 = scmp.eq.s32.totalorder %s24, 0
      %p239 = por %p237, %p238
      %p240 = scmp.ne.s32.totalorder %s226, %s227
      %p241 = scmp.eq.s32.totalorder %s25, 1
      %p242 = por %p240, %p241
      %p244 = scmp.ne.s32.totalorder %s227, %s243
      %p245 = scmp.eq.s32.totalorder %s25, 0
      %p246 = por %p244, %p245
      %s247 = ssub.s32 %s19, %s26
      %p248 = scmp.eq.s32.totalorder %s247, 0
      %s250 = sadd.s32 %s249, 1
      %s251 = scalar_select %p248, %s249, %s250
      %p254 = pneg %p248
      %p255 = scmp.eq.s32.totalorder %s19, 1
      %p256 = por %p254, %p255
      %p257 = scmp.ne.s32.totalorder %s249, %s252
      %p258 = scmp.eq.s32.totalorder %s19, 0
      %p259 = por %p257, %p258
      %p260 = scmp.ne.s32.totalorder %s249, %s252
      %p261 = scmp.eq.s32.totalorder %s24, 1
      %p262 = por %p260, %p261
      %p263 = scmp.ne.s32.totalorder %s252, %s253
      %p264 = scmp.eq.s32.totalorder %s24, 0
      %p265 = por %p263, %p264
      %p266 = scmp.ne.s32.totalorder %s252, %s253
      %p267 = scmp.eq.s32.totalorder %s25, 1
      %p268 = por %p266, %p267
      %p270 = scmp.ne.s32.totalorder %s253, %s269
      %p271 = scmp.eq.s32.totalorder %s25, 0
      %p272 = por %p270, %p271
      %p273 = scmp.le.s32.totalorder 1, %s19
      %p274 = scmp.lt.s32.totalorder %s19, 3
      %p275 = pnand %p273, %p274
      %p276 = pneg %p275
      // Predicated region
      $region9: #{block_forward.4} parent=5 // pred_check
        _
      $region10: #{block_forward.4} parent=5 // pred_check_branch
        %278 = sbr.rel (%p275) target = $region12
      $region11: #{block_forward.4} parent=5 // pred_region
        %s279 = ssub.s32 %s19, 1
        // Predicated region
        $region13: #{block_forward.4} parent=11 // pred_check
          %p280 = pneg %p66
        $region14: #{block_forward.4} parent=11 // pred_check_branch
          %282 = sbr.rel (%p280) target = $region16
        $region15: #{block_forward.4} parent=11 // pred_region
          _
        $region16: #{block_forward.4} parent=11 // pred_fallthru
          _
        // Predicated region
        $region17: #{block_forward.4} parent=11 // pred_check
          %p283 = pneg %p87
        $region18: #{block_forward.4} parent=11 // pred_check_branch
          %285 = sbr.rel (%p283) target = $region20
        $region19: #{block_forward.4} parent=11 // pred_region
          _
        $region20: #{block_forward.4} parent=11 // pred_fallthru
          _
        // Predicated region
        $region21: #{block_forward.4} parent=11 // pred_check
          %p286 = pneg %p108
        $region22: #{block_forward.4} parent=11 // pred_check_branch
          %288 = sbr.rel (%p286) target = $region24
        $region23: #{block_forward.4} parent=11 // pred_region
          _
        $region24: #{block_forward.4} parent=11 // pred_fallthru
          _
        // Predicated region
        $region25: #{block_forward.4} parent=11 // pred_check
          %p289 = pneg %p129
        $region26: #{block_forward.4} parent=11 // pred_check_branch
          %291 = sbr.rel (%p289) target = $region28
        $region27: #{block_forward.4} parent=11 // pred_region
          _
        $region28: #{block_forward.4} parent=11 // pred_fallthru
          _
        // Predicated region
        $region29: #{block_forward.4} parent=11 // pred_check
          %p292 = pneg %p150
        $region30: #{block_forward.4} parent=11 // pred_check_branch
          %294 = sbr.rel (%p292) target = $region32
        $region31: #{block_forward.4} parent=11 // pred_region
          %296 = vsyncadd [#allocation3], 0
          %s297 = sshll.u32 %s5, 4
          %s298 = int_to_ptr.hbm [resolvable:$true] %s297
          %s299 = sshll.u32 [#allocation2], 4
          %s300 = int_to_ptr.vmem [resolvable:$true] %s299
          %305 = dma.hbm_to_vmem [thread:$0]  %s298, 256, %s300, [#allocation3], 64, 64, 4
        $region32: #{block_forward.4} parent=11 // pred_fallthru
          _
        // Predicated region
        $region33: #{block_forward.4} parent=11 // pred_check
          %p306 = pneg %p171
        $region34: #{block_forward.4} parent=11 // pred_check_branch
          %308 = sbr.rel (%p306) target = $region36
        $region35: #{block_forward.4} parent=11 // pred_region
          _
        $region36: #{block_forward.4} parent=11 // pred_fallthru
          _
        // Predicated region
        $region37: #{block_forward.4} parent=11 // pred_check
          %p309 = pneg %p192
        $region38: #{block_forward.4} parent=11 // pred_check_branch
          %311 = sbr.rel (%p309) target = $region40
        $region39: #{block_forward.4} parent=11 // pred_region
          %313 = vsyncadd [#allocation5], 0
          %s314 = sshll.u32 %s7, 4
          %s315 = int_to_ptr.hbm [resolvable:$true] %s314
          %s316 = sshll.u32 [#allocation4], 4
          %s317 = int_to_ptr.vmem [resolvable:$true] %s316
          %322 = dma.hbm_to_vmem [thread:$0]  %s315, 256, %s317, [#allocation5], 64, 64, 4
        $region40: #{block_forward.4} parent=11 // pred_fallthru
          _
        // Predicated region
        $region41: #{block_forward.4} parent=11 // pred_check
          %p323 = pneg %p213
        $region42: #{block_forward.4} parent=11 // pred_check_branch
          %325 = sbr.rel (%p323) target = $region44
        $region43: #{block_forward.4} parent=11 // pred_region
          _
        $region44: #{block_forward.4} parent=11 // pred_fallthru
          _
      $region12: #{block_forward.4} parent=5 // pred_fallthru
        _
      %p326 = scmp.lt.s32.totalorder %s19, 2
      // Predicated region
      $region45: #{block_forward.4} parent=5 // pred_check
        %p327 = pneg %p326
      $region46: #{block_forward.4} parent=5 // pred_check_branch
        %329 = sbr.rel (%p327) target = $region48
      $region47: #{block_forward.4} parent=5 // pred_region
        // Predicated region
        $region49: #{block_forward.4} parent=47 // pred_check
          %p330 = pneg %p39
        $region50: #{block_forward.4} parent=47 // pred_check_branch
          %332 = sbr.rel (%p330) target = $region52
        $region51: #{block_forward.4} parent=47 // pred_region
          %p333 = scmp.lt.s32.totalorder %s19, 1
          %s334 = scalar_select %p333, %s19, 1
          %s335 = smul.addr %s334, 8
          %s336 = scalar_lea.vmem %s0, %s335
        $region52: #{block_forward.4} parent=47 // pred_fallthru
          _
      $region48: #{block_forward.4} parent=5 // pred_fallthru
        _
      %p337 = scmp.le.s32.totalorder 1, %s19
      %p338 = scmp.lt.s32.totalorder %s19, 3
      %p339 = pnand %p337, %p338
      %p340 = pneg %p339
      // Predicated region
      $region53: #{block_forward.4} parent=5 // pred_check
        _
      $region54: #{block_forward.4} parent=5 // pred_check_branch
        %342 = sbr.rel (%p339) target = $region56
      $region55: #{block_forward.4} parent=5 // pred_region
        %s343 = ssub.s32 %s19, 1
        // Predicated region
        $region57: #{block_forward.4} parent=55 // pred_check
          %p344 = pneg %p150
        $region58: #{block_forward.4} parent=55 // pred_check_branch
          %346 = sbr.rel (%p344) target = $region60
        $region59: #{block_forward.4} parent=55 // pred_region
          %348 = dma.done [#allocation3], 256
        $region60: #{block_forward.4} parent=55 // pred_fallthru
          _
        // Predicated region
        $region61: #{block_forward.4} parent=55 // pred_check
          %p349 = pneg %p192
        $region62: #{block_forward.4} parent=55 // pred_check_branch
          %351 = sbr.rel (%p349) target = $region64
        $region63: #{block_forward.4} parent=55 // pred_region
          %353 = dma.done [#allocation5], 256
        $region64: #{block_forward.4} parent=55 // pred_fallthru
          _
        %p354 = scmp.lt.s32.totalorder %s24, 1
        %s355 = scalar_select %p354, %s24, 1
        %s356 = smul.addr %s355, 8
        %s357 = scalar_lea.vmem %s0, %s356
        %p358 = pneg %p45
        %p359 = pneg %p42
        %p360 = pneg %p66
        %p361 = pneg %p63
        %p362 = pneg %p87
        %p363 = pneg %p84
        %p364 = pneg %p108
        %p365 = pneg %p105
        %p366 = pneg %p129
        %p367 = pneg %p126
        %p368 = pneg %p150
        %p369 = pneg %p147
        %p370 = pneg %p171
        %p371 = pneg %p168
        %p372 = pneg %p192
        %p373 = pneg %p189
        %p374 = pneg %p213
        %p375 = pneg %p210
        %p376 = pneg %p239
        %p377 = pneg %p236
        %p378 = scmp.lt.s32.totalorder %s24, 1
        %s379 = scalar_select %p378, %s24, 1
        %s380 = scalar_lea.vmem %s9, %s379
        %p381 = pneg %p265
        %p382 = pneg %p262
        %p383 = scmp.lt.s32.totalorder %s24, 1
        %s384 = scalar_select %p383, %s24, 1
        %s385 = smul.addr %s384, 8
        %s386 = scalar_lea.vmem %s10, %s385
        %p387 = scmp.lt.s32.totalorder %s24, 1
        %s388 = scalar_select %p387, %s24, 1
        %s389 = smul.addr %s388, 8
        %s390 = scalar_lea.vmem %s0, %s389
        %p391 = scmp.lt.s32.totalorder %s24, 1
        %s392 = scalar_select %p391, %s24, 1
        %s393 = scalar_lea.vmem %s9, %s392
        %p394 = scmp.lt.s32.totalorder %s24, 1
        %s395 = scalar_select %p394, %s24, 1
        %s396 = smul.addr %s395, 8
        %s397 = scalar_lea.vmem %s10, %s396
        %v399 = vld [vmem:[%s1] sm:$0xf]
        %v400 = vld [vmem:[%s1 + $0x4] sm:$0xf]
        %v401 = vld [vmem:[%s1 + $0x8] sm:$0xf]
        %v402 = vld [vmem:[%s1 + $0xc] sm:$0xf]
        %v403 = vld [vmem:[%s2] sm:$0x1]
        %v404 = vld [vmem:[%s3] sm:$0xf]
        %v405 = vld [vmem:[%s3 + $0x4] sm:$0xf]
        %v406 = vld [vmem:[%s3 + $0x8] sm:$0xf]
        %v407 = vld [vmem:[%s3 + $0xc] sm:$0xf]
        %v408 = vld [vmem:[%s4] sm:$0x1]
        %v409 = vld [vmem:[#allocation2] sm:$0xf]
        %v410 = vld [vmem:[#allocation2 + $0x4] sm:$0xf]
        %v411 = vld [vmem:[#allocation2 + $0x8] sm:$0xf]
        %v412 = vld [vmem:[#allocation2 + $0xc] sm:$0xf]
        %v413 = vld [vmem:[%s6] sm:$0x1]
        %v414 = vld [vmem:[#allocation4] sm:$0xf]
        %v415 = vld [vmem:[#allocation4 + $0x4] sm:$0xf]
        %v416 = vld [vmem:[#allocation4 + $0x8] sm:$0xf]
        %v417 = vld [vmem:[#allocation4 + $0xc] sm:$0xf]
        %v418 = vld [vmem:[%s8] sm:$0x1]
        %v419 = vld [vmem:[%s390] sm:$0xff]
        %v420 = vpack.c.bf16 %v419, %v419
        %v422 = vperm.slane %v413, 0
        %v428 = vunpack.c.l.b16 %v409
        %v429 = vunpack.c.l.b16 %v410
        %v430 = vunpack.c.l.b16 %v411
        %v431 = vunpack.c.l.b16 %v412
        %v432 = vpack.c.b16 %v429, %v428
        %v433 = vpack.c.b16 %v431, %v430
        %vm436 = vcmask 261120
        %v438 = vsel %vm436, %v420, 0
        %440 = vmatpush.bf16.msra.mxu0 0
        %441 = vmatpush.bf16.msra.mxu0 0
        %442 = vmatpush.bf16.msra.mxu0 0
        %443 = vmatpush.bf16.msra.mxu0 0
        %444 = vmatpush.bf16.msra.mxu0 0
        %445 = vmatpush.bf16.msra.mxu0 0
        %446 = vmatpush.bf16.msra.mxu0 %v433
        %447 = vmatpush.bf16.msra.mxu0 %v432
        %448 = vmatmul.bf16.gmra.mxu0 %v438
        %v449 = vpop.f32.mrf.mxu0
        %v450 = vadd.f32 %v422, %v449
        %v451 = vpop.f32.mrf.mxu0
        %452 = vdwg.mxu0
        %v454 = vperm.slane %v418, 0
        %v460 = vunpack.c.l.b16 %v414
        %v461 = vunpack.c.l.b16 %v415
        %v462 = vunpack.c.l.b16 %v416
        %v463 = vunpack.c.l.b16 %v417
        %v464 = vpack.c.b16 %v461, %v460
        %v465 = vpack.c.b16 %v463, %v462
        %468 = vmatpush.bf16.msra.mxu0 0
        %469 = vmatpush.bf16.msra.mxu0 0
        %470 = vmatpush.bf16.msra.mxu0 0
        %471 = vmatpush.bf16.msra.mxu0 0
        %472 = vmatpush.bf16.msra.mxu0 0
        %473 = vmatpush.bf16.msra.mxu0 0
        %474 = vmatpush.bf16.msra.mxu0 %v465
        %475 = vmatpush.bf16.msra.mxu0 %v464
        %476 = vmatmul.bf16.gmra.mxu0 %v438
        %v477 = vpop.f32.mrf.mxu0
        %v478 = vadd.f32 %v454, %v477
        %v479 = vpop.f32.mrf.mxu0
        %480 = vdwg.mxu0
        %v481 = vxor.u32 %v450, 2147483648
        %v482 = vmul.f32 %v481, 1.442695
        %v483 = vpow.pop %v482
        %v484 = vadd.f32 %v483, 1.0
        %v485 = vrcp.pop %v484
        %v486 = vmul.f32 %v484, %v485
        %v487 = vsub.f32 1.0, %v486
        %v488 = vmul.f32 %v485, %v487
        %v489 = vadd.f32 %v485, %v488
        %vm490 = vweird.f32 %v484
        %vm491 = vweird.f32 %v485
        %vm492 = vmor %vm490, %vm491
        %v493 = vsel %vm492, %v485, %v489
        %v494 = vand.u32 2147483647, %v484
        %vm495 = vcmp.eq.f32.partialorder %v494, 8.507059e+37
        %v496 = vand.u32 %v484, 2147483648
        %v497 = vor.u32 1.1754944e-38, %v496
        %v498 = vsel %vm495, %v497, %v493
        %v499 = vmul.f32 1.0, %v498
        %v500 = vmul.f32 %v450, %v499
        %v501 = vmul.f32 %v500, %v478
        %502 = vst.msk [vmem:[%s397] sm:$0xff] %vm436, %v501
        %v507 = vunpack.c.l.b16 %v399
        %v508 = vunpack.c.l.b16 %v400
        %v509 = vunpack.c.l.b16 %v401
        %v510 = vunpack.c.l.b16 %v402
        %v511 = vpack.c.b16 %v508, %v507
        %v512 = vpack.c.b16 %v510, %v509
        %515 = vmatpush.bf16.msra.mxu0 0
        %516 = vmatpush.bf16.msra.mxu0 0
        %517 = vmatpush.bf16.msra.mxu0 0
        %518 = vmatpush.bf16.msra.mxu0 0
        %519 = vmatpush.bf16.msra.mxu0 0
        %520 = vmatpush.bf16.msra.mxu0 0
        %521 = vmatpush.bf16.msra.mxu0 %v512
        %522 = vmatpush.bf16.msra.mxu0 %v511
        %523 = vmatmul.bf16.gmra.mxu0 %v438
        %v524 = vpop.f32.mrf.mxu0
        %v525 = vadd.f32 %v403, %v524
        %v526 = vpop.f32.mrf.mxu0
        %527 = vdwg.mxu0
        %v532 = vunpack.c.l.b16 %v404
        %v533 = vunpack.c.l.b16 %v405
        %v534 = vunpack.c.l.b16 %v406
        %v535 = vunpack.c.l.b16 %v407
        %v536 = vpack.c.b16 %v533, %v532
        %v537 = vpack.c.b16 %v535, %v534
        %540 = vmatpush.bf16.msra.mxu0 0
        %541 = vmatpush.bf16.msra.mxu0 0
        %542 = vmatpush.bf16.msra.mxu0 0
        %543 = vmatpush.bf16.msra.mxu0 0
        %544 = vmatpush.bf16.msra.mxu0 0
        %545 = vmatpush.bf16.msra.mxu0 0
        %546 = vmatpush.bf16.msra.mxu0 %v537
        %547 = vmatpush.bf16.msra.mxu0 %v536
        %548 = vmatmul.bf16.gmra.mxu0 %v438
        %v549 = vpop.f32.mrf.mxu0
        %v550 = vadd.f32 %v408, %v549
        %v551 = vpop.f32.mrf.mxu0
        %552 = vdwg.mxu0
        %v553 = vxor.u32 %v525, 2147483648
        %v554 = vmul.f32 %v553, 1.442695
        %v555 = vpow.pop %v554
        %v556 = vadd.f32 %v555, 1.0
        %v557 = vrcp.pop %v556
        %v558 = vmul.f32 %v556, %v557
        %v559 = vsub.f32 1.0, %v558
        %v560 = vmul.f32 %v557, %v559
        %v561 = vadd.f32 %v557, %v560
        %vm562 = vweird.f32 %v556
        %vm563 = vweird.f32 %v557
        %vm564 = vmor %vm562, %vm563
        %v565 = vsel %vm564, %v557, %v561
        %v566 = vand.u32 2147483647, %v556
        %vm567 = vcmp.eq.f32.partialorder %v566, 8.507059e+37
        %v568 = vand.u32 %v556, 2147483648
        %v569 = vor.u32 1.1754944e-38, %v568
        %v570 = vsel %vm567, %v569, %v565
        %v571 = vmul.f32 1.0, %v570
        %v572 = vmul.f32 %v525, %v571
        %v573 = vmul.f32 %v572, %v550
        %574 = vst [vmem:[%s393] sm:$0x1] %v573
        %p575 = scmp.lt.s32.totalorder %s24, 1
        %s576 = scalar_select %p575, %s24, 1
        %s577 = scalar_lea.vmem %s9, %s576
        %p578 = scmp.lt.s32.totalorder %s24, 1
        %s579 = scalar_select %p578, %s24, 1
        %s580 = smul.addr %s579, 8
        %s581 = scalar_lea.vmem %s10, %s580
        // Predicated region
        $region65: #{block_forward.4} parent=55 // pred_check
          %p582 = pneg %p236
        $region66: #{block_forward.4} parent=55 // pred_check_branch
          %584 = sbr.rel (%p582) target = $region68
        $region67: #{block_forward.4} parent=55 // pred_region
          _
        $region68: #{block_forward.4} parent=55 // pred_fallthru
          _
        // Predicated region
        $region69: #{block_forward.4} parent=55 // pred_check
          %p585 = pneg %p262
        $region70: #{block_forward.4} parent=55 // pred_check_branch
          %587 = sbr.rel (%p585) target = $region72
        $region71: #{block_forward.4} parent=55 // pred_region
          _
        $region72: #{block_forward.4} parent=55 // pred_fallthru
          _
      $region56: #{block_forward.4} parent=5 // pred_fallthru
        _
      %p588 = scmp.le.s32.totalorder 2, %s19
      // Predicated region
      $region73: #{block_forward.4} parent=5 // pred_check
        %p589 = pneg %p588
      $region74: #{block_forward.4} parent=5 // pred_check_branch
        %591 = sbr.rel (%p589) target = $region76
      $region75: #{block_forward.4} parent=5 // pred_region
        %s592 = ssub.s32 %s19, 2
        // Predicated region
        $region77: #{block_forward.4} parent=75 // pred_check
          %p593 = pneg %p242
        $region78: #{block_forward.4} parent=75 // pred_check_branch
          %595 = sbr.rel (%p593) target = $region80
        $region79: #{block_forward.4} parent=75 // pred_region
          %p596 = scmp.lt.s32.totalorder %s25, 1
          %s597 = scalar_select %p596, %s25, 1
          %s598 = scalar_lea.vmem %s9, %s597
        $region80: #{block_forward.4} parent=75 // pred_fallthru
          _
        // Predicated region
        $region81: #{block_forward.4} parent=75 // pred_check
          %p599 = pneg %p268
        $region82: #{block_forward.4} parent=75 // pred_check_branch
          %601 = sbr.rel (%p599) target = $region84
        $region83: #{block_forward.4} parent=75 // pred_region
          %p602 = scmp.lt.s32.totalorder %s25, 1
          %s603 = scalar_select %p602, %s25, 1
          %s604 = smul.addr %s603, 8
          %s605 = scalar_lea.vmem %s10, %s604
        $region84: #{block_forward.4} parent=75 // pred_fallthru
          _
      $region76: #{block_forward.4} parent=5 // pred_fallthru
        _
    $region6: #{block_forward.4} parent=1 // loop_footer
      %s23 = sadd.s32 1, %s19
    $region7: #{block_forward.4} parent=1 // loop_footer_branch
      %18 = sbr.rel target = $region3
    $region8: #{block_forward.4} parent=1 // loop_exit
      _
    %606 = vsyncpa [#allocation3], 1
    %s607 = scalar_lea.sflag [#allocation3], 1
    %608 = vsyncpa %s607, 1
    %609 = vsyncpa [#allocation5], 1

// kernel: block_forward.6
$region0: #{block_forward.6}
  #allocation0 [shape = 'u32[]', space=smem, size = 0x4, offset = 0x4, fixed_abs, tag = 'smem constant byte address 0x4 - core index']
  #allocation1 [shape = 'u32[72,128]{1,0:T(1,128)}', space=vmem, size = 0x9000, scoped, tag = 'internal scratch']
  %s0 = inlined_call_operand.vmem [shape: f32[2,8,32], index: 0, kind: input, shape index: {}]
  %s1 = inlined_call_operand.vmem [shape: f32[2,4,6,32], index: 1, kind: input, shape index: {}]
  %s2 = inlined_call_operand.vmem [shape: bf16[32,32], index: 2, kind: input, shape index: {}]
  %s3 = inlined_call_operand.vmem [shape: f32[1,32], index: 3, kind: input, shape index: {}]
  %s4 = inlined_call_operand.vmem [shape: bf16[32,32], index: 4, kind: input, shape index: {}]
  %s5 = inlined_call_operand.vmem [shape: f32[1,32], index: 5, kind: input, shape index: {}]
  %s6 = inlined_call_operand.vmem [shape: bf16[32,32], index: 6, kind: input, shape index: {}]
  %s7 = inlined_call_operand.vmem [shape: f32[1,32], index: 7, kind: input, shape index: {}]
  %s8 = inlined_call_operand.vmem [shape: bf16[32,32], index: 8, kind: input, shape index: {}]
  %s9 = inlined_call_operand.vmem [shape: f32[1,32], index: 9, kind: input, shape index: {}]
  %s10 = inlined_call_operand.vmem [shape: f32[1,32], index: 10, kind: input, shape index: {}]
  %s11 = inlined_call_operand.vmem [shape: bf16[32,64], index: 11, kind: input, shape index: {}]
  %s12 = inlined_call_operand.vmem [shape: f32[1,64], index: 12, kind: input, shape index: {}]
  %s13 = inlined_call_operand.vmem [shape: bf16[32,64], index: 13, kind: input, shape index: {}]
  %s14 = inlined_call_operand.vmem [shape: f32[1,64], index: 14, kind: input, shape index: {}]
  %s15 = inlined_call_operand.vmem [shape: bf16[64,32], index: 15, kind: input, shape index: {}]
  %s16 = inlined_call_operand.vmem [shape: f32[1,32], index: 16, kind: input, shape index: {}]
  %s17 = inlined_call_operand.vmem [shape: f32[1,32], index: 17, kind: input, shape index: {}]
  %s18 = inlined_call_operand.vmem [shape: f32[2,4,8,32], index: 18, kind: output, shape index: {}]
  %s19 = sld [smem:[#allocation0]]
  $region105: #{block_forward.6} parent=0
    _
  %s21 = ssub.s32 1, %s19
  %s22 = scalar_select 0, %s21, %s19
  loop: start=0, step=1, limit=4
  $region2: #{block_forward.6} parent=0 // loop_pre_header
    _
  $region3: #{block_forward.6} parent=0 // loop_header
    %s24 = sphi 0, %s28
    %p25 = scmp.ge.s32.totalorder %s24, 4
    %s34 = sphi 0, %s36
    %s37 = sphi 0, %s34
    %s38 = sphi 0, %s37
    %s54 = sphi 0, %s38
    %s60 = sphi 0, %s62
    %s63 = sphi 0, %s60
    %s64 = sphi 0, %s63
    %s80 = sphi 0, %s64
    %s84 = sphi 0, %s84
    %s86 = sphi 0, %s84
    %s87 = sphi 0, %s86
    %s101 = sphi 0, %s87
    %s105 = sphi 0, %s105
    %s107 = sphi 0, %s105
    %s108 = sphi 0, %s107
    %s122 = sphi 0, %s108
    %s126 = sphi 0, %s126
    %s128 = sphi 0, %s126
    %s129 = sphi 0, %s128
    %s143 = sphi 0, %s129
    %s147 = sphi 0, %s147
    %s149 = sphi 0, %s147
    %s150 = sphi 0, %s149
    %s164 = sphi 0, %s150
    %s168 = sphi 0, %s168
    %s170 = sphi 0, %s168
    %s171 = sphi 0, %s170
    %s185 = sphi 0, %s171
    %s189 = sphi 0, %s189
    %s191 = sphi 0, %s189
    %s192 = sphi 0, %s191
    %s206 = sphi 0, %s192
    %s210 = sphi 0, %s210
    %s212 = sphi 0, %s210
    %s213 = sphi 0, %s212
    %s227 = sphi 0, %s213
    %s231 = sphi 0, %s231
    %s233 = sphi 0, %s231
    %s234 = sphi 0, %s233
    %s248 = sphi 0, %s234
    %s252 = sphi 0, %s252
    %s254 = sphi 0, %s252
    %s255 = sphi 0, %s254
    %s269 = sphi 0, %s255
    %s273 = sphi 0, %s273
    %s275 = sphi 0, %s273
    %s276 = sphi 0, %s275
    %s290 = sphi 0, %s276
    %s294 = sphi 0, %s294
    %s296 = sphi 0, %s294
    %s297 = sphi 0, %s296
    %s311 = sphi 0, %s297
    %s315 = sphi 0, %s315
    %s317 = sphi 0, %s315
    %s318 = sphi 0, %s317
    %s332 = sphi 0, %s318
    %s336 = sphi 0, %s336
    %s338 = sphi 0, %s336
    %s339 = sphi 0, %s338
    %s353 = sphi 0, %s339
    %s357 = sphi 0, %s357
    %s359 = sphi 0, %s357
    %s360 = sphi 0, %s359
    %s374 = sphi 0, %s360
    %s378 = sphi 0, %s378
    %s380 = sphi 0, %s378
    %s381 = sphi 0, %s380
    %s395 = sphi 0, %s381
    %s399 = sphi 0, %s399
    %s401 = sphi 0, %s399
    %s402 = sphi 0, %s401
    %s416 = sphi 0, %s402
    %s422 = sphi 0, %s424
    %s425 = sphi 0, %s422
    %s426 = sphi 0, %s425
    %s442 = sphi 0, %s426
  $region4: #{block_forward.6} parent=0 // loop_header_branch
    %27 = sbr.rel (%p25) target = $region8
  $region5: #{block_forward.6} parent=0 // loop_body
    %s29 = ssub.s32 %s24, 1
    %s30 = ssub.s32 %s24, 2
    %s31 = sadd.s32 %s24, 1
    %s32 = ssub.s32 %s24, %s31
    %p33 = scmp.eq.s32.totalorder %s32, 0
    %s35 = sadd.s32 %s34, 1
    %s36 = scalar_select %p33, %s34, %s35
    %p39 = pneg %p33
    %p40 = scmp.eq.s32.totalorder %s24, 1
    %p41 = por %p39, %p40
    %p42 = scmp.ne.s32.totalorder %s34, %s37
    %p43 = scmp.eq.s32.totalorder %s24, 0
    %p44 = por %p42, %p43
    %p45 = scmp.ne.s32.totalorder %s34, %s37
    %p46 = scmp.eq.s32.totalorder %s29, 1
    %p47 = por %p45, %p46
    %p48 = scmp.ne.s32.totalorder %s37, %s38
    %p49 = scmp.eq.s32.totalorder %s29, 0
    %p50 = por %p48, %p49
    %p51 = scmp.ne.s32.totalorder %s37, %s38
    %p52 = scmp.eq.s32.totalorder %s30, 1
    %p53 = por %p51, %p52
    %p55 = scmp.ne.s32.totalorder %s38, %s54
    %p56 = scmp.eq.s32.totalorder %s30, 0
    %p57 = por %p55, %p56
    %s58 = ssub.s32 %s24, %s31
    %p59 = scmp.eq.s32.totalorder %s58, 0
    %s61 = sadd.s32 %s60, 1
    %s62 = scalar_select %p59, %s60, %s61
    %p65 = pneg %p59
    %p66 = scmp.eq.s32.totalorder %s24, 1
    %p67 = por %p65, %p66
    %p68 = scmp.ne.s32.totalorder %s60, %s63
    %p69 = scmp.eq.s32.totalorder %s24, 0
    %p70 = por %p68, %p69
    %p71 = scmp.ne.s32.totalorder %s60, %s63
    %p72 = scmp.eq.s32.totalorder %s29, 1
    %p73 = por %p71, %p72
    %p74 = scmp.ne.s32.totalorder %s63, %s64
    %p75 = scmp.eq.s32.totalorder %s29, 0
    %p76 = por %p74, %p75
    %p77 = scmp.ne.s32.totalorder %s63, %s64
    %p78 = scmp.eq.s32.totalorder %s30, 1
    %p79 = por %p77, %p78
    %p81 = scmp.ne.s32.totalorder %s64, %s80
    %p82 = scmp.eq.s32.totalorder %s30, 0
    %p83 = por %p81, %p82
    %s85 = sadd.s32 %s84, 1
    %p88 = scmp.eq.s32.totalorder %s24, 1
    %p89 = scmp.ne.s32.totalorder %s84, %s86
    %p90 = scmp.eq.s32.totalorder %s24, 0
    %p91 = por %p89, %p90
    %p92 = scmp.ne.s32.totalorder %s84, %s86
    %p93 = scmp.eq.s32.totalorder %s29, 1
    %p94 = por %p92, %p93
    %p95 = scmp.ne.s32.totalorder %s86, %s87
    %p96 = scmp.eq.s32.totalorder %s29, 0
    %p97 = por %p95, %p96
    %p98 = scmp.ne.s32.totalorder %s86, %s87
    %p99 = scmp.eq.s32.totalorder %s30, 1
    %p100 = por %p98, %p99
    %p102 = scmp.ne.s32.totalorder %s87, %s101
    %p103 = scmp.eq.s32.totalorder %s30, 0
    %p104 = por %p102, %p103
    %s106 = sadd.s32 %s105, 1
    %p109 = scmp.eq.s32.totalorder %s24, 1
    %p110 = scmp.ne.s32.totalorder %s105, %s107
    %p111 = scmp.eq.s32.totalorder %s24, 0
    %p112 = por %p110, %p111
    %p113 = scmp.ne.s32.totalorder %s105, %s107
    %p114 = scmp.eq.s32.totalorder %s29, 1
    %p115 = por %p113, %p114
    %p116 = scmp.ne.s32.totalorder %s107, %s108
    %p117 = scmp.eq.s32.totalorder %s29, 0
    %p118 = por %p116, %p117
    %p119 = scmp.ne.s32.totalorder %s107, %s108
    %p120 = scmp.eq.s32.totalorder %s30, 1
    %p121 = por %p119, %p120
    %p123 = scmp.ne.s32.totalorder %s108, %s122
    %p124 = scmp.eq.s32.totalorder %s30, 0
    %p125 = por %p123, %p124
    %s127 = sadd.s32 %s126, 1
    %p130 = scmp.eq.s32.totalorder %s24, 1
    %p131 = scmp.ne.s32.totalorder %s126, %s128
    %p132 = scmp.eq.s32.totalorder %s24, 0
    %p133 = por %p131, %p132
    %p134 = scmp.ne.s32.totalorder %s126, %s128
    %p135 = scmp.eq.s32.totalorder %s29, 1
    %p136 = por %p134, %p135
    %p137 = scmp.ne.s32.totalorder %s128, %s129
    %p138 = scmp.eq.s32.totalorder %s29, 0
    %p139 = por %p137, %p138
    %p140 = scmp.ne.s32.totalorder %s128, %s129
    %p141 = scmp.eq.s32.totalorder %s30, 1
    %p142 = por %p140, %p141
    %p144 = scmp.ne.s32.totalorder %s129, %s143
    %p145 = scmp.eq.s32.totalorder %s30, 0
    %p146 = por %p144, %p145
    %s148 = sadd.s32 %s147, 1
    %p151 = scmp.eq.s32.totalorder %s24, 1
    %p152 = scmp.ne.s32.totalorder %s147, %s149
    %p153 = scmp.eq.s32.totalorder %s24, 0
    %p154 = por %p152, %p153
    %p155 = scmp.ne.s32.totalorder %s147, %s149
    %p156 = scmp.eq.s32.totalorder %s29, 1
    %p157 = por %p155, %p156
    %p158 = scmp.ne.s32.totalorder %s149, %s150
    %p159 = scmp.eq.s32.totalorder %s29, 0
    %p160 = por %p158, %p159
    %p161 = scmp.ne.s32.totalorder %s149, %s150
    %p162 = scmp.eq.s32.totalorder %s30, 1
    %p163 = por %p161, %p162
    %p165 = scmp.ne.s32.totalorder %s150, %s164
    %p166 = scmp.eq.s32.totalorder %s30, 0
    %p167 = por %p165, %p166
    %s169 = sadd.s32 %s168, 1
    %p172 = scmp.eq.s32.totalorder %s24, 1
    %p173 = scmp.ne.s32.totalorder %s168, %s170
    %p174 = scmp.eq.s32.totalorder %s24, 0
    %p175 = por %p173, %p174
    %p176 = scmp.ne.s32.totalorder %s168, %s170
    %p177 = scmp.eq.s32.totalorder %s29, 1
    %p178 = por %p176, %p177
    %p179 = scmp.ne.s32.totalorder %s170, %s171
    %p180 = scmp.eq.s32.totalorder %s29, 0
    %p181 = por %p179, %p180
    %p182 = scmp.ne.s32.totalorder %s170, %s171
    %p183 = scmp.eq.s32.totalorder %s30, 1
    %p184 = por %p182, %p183
    %p186 = scmp.ne.s32.totalorder %s171, %s185
    %p187 = scmp.eq.s32.totalorder %s30, 0
    %p188 = por %p186, %p187
    %s190 = sadd.s32 %s189, 1
    %p193 = scmp.eq.s32.totalorder %s24, 1
    %p194 = scmp.ne.s32.totalorder %s189, %s191
    %p195 = scmp.eq.s32.totalorder %s24, 0
    %p196 = por %p194, %p195
    %p197 = scmp.ne.s32.totalorder %s189, %s191
    %p198 = scmp.eq.s32.totalorder %s29, 1
    %p199 = por %p197, %p198
    %p200 = scmp.ne.s32.totalorder %s191, %s192
    %p201 = scmp.eq.s32.totalorder %s29, 0
    %p202 = por %p200, %p201
    %p203 = scmp.ne.s32.totalorder %s191, %s192
    %p204 = scmp.eq.s32.totalorder %s30, 1
    %p205 = por %p203, %p204
    %p207 = scmp.ne.s32.totalorder %s192, %s206
    %p208 = scmp.eq.s32.totalorder %s30, 0
    %p209 = por %p207, %p208
    %s211 = sadd.s32 %s210, 1
    %p214 = scmp.eq.s32.totalorder %s24, 1
    %p215 = scmp.ne.s32.totalorder %s210, %s212
    %p216 = scmp.eq.s32.totalorder %s24, 0
    %p217 = por %p215, %p216
    %p218 = scmp.ne.s32.totalorder %s210, %s212
    %p219 = scmp.eq.s32.totalorder %s29, 1
    %p220 = por %p218, %p219
    %p221 = scmp.ne.s32.totalorder %s212, %s213
    %p222 = scmp.eq.s32.totalorder %s29, 0
    %p223 = por %p221, %p222
    %p224 = scmp.ne.s32.totalorder %s212, %s213
    %p225 = scmp.eq.s32.totalorder %s30, 1
    %p226 = por %p224, %p225
    %p228 = scmp.ne.s32.totalorder %s213, %s227
    %p229 = scmp.eq.s32.totalorder %s30, 0
    %p230 = por %p228, %p229
    %s232 = sadd.s32 %s231, 1
    %p235 = scmp.eq.s32.totalorder %s24, 1
    %p236 = scmp.ne.s32.totalorder %s231, %s233
    %p237 = scmp.eq.s32.totalorder %s24, 0
    %p238 = por %p236, %p237
    %p239 = scmp.ne.s32.totalorder %s231, %s233
    %p240 = scmp.eq.s32.totalorder %s29, 1
    %p241 = por %p239, %p240
    %p242 = scmp.ne.s32.totalorder %s233, %s234
    %p243 = scmp.eq.s32.totalorder %s29, 0
    %p244 = por %p242, %p243
    %p245 = scmp.ne.s32.totalorder %s233, %s234
    %p246 = scmp.eq.s32.totalorder %s30, 1
    %p247 = por %p245, %p246
    %p249 = scmp.ne.s32.totalorder %s234, %s248
    %p250 = scmp.eq.s32.totalorder %s30, 0
    %p251 = por %p249, %p250
    %s253 = sadd.s32 %s252, 1
    %p256 = scmp.eq.s32.totalorder %s24, 1
    %p257 = scmp.ne.s32.totalorder %s252, %s254
    %p258 = scmp.eq.s32.totalorder %s24, 0
    %p259 = por %p257, %p258
    %p260 = scmp.ne.s32.totalorder %s252, %s254
    %p261 = scmp.eq.s32.totalorder %s29, 1
    %p262 = por %p260, %p261
    %p263 = scmp.ne.s32.totalorder %s254, %s255
    %p264 = scmp.eq.s32.totalorder %s29, 0
    %p265 = por %p263, %p264
    %p266 = scmp.ne.s32.totalorder %s254, %s255
    %p267 = scmp.eq.s32.totalorder %s30, 1
    %p268 = por %p266, %p267
    %p270 = scmp.ne.s32.totalorder %s255, %s269
    %p271 = scmp.eq.s32.totalorder %s30, 0
    %p272 = por %p270, %p271
    %s274 = sadd.s32 %s273, 1
    %p277 = scmp.eq.s32.totalorder %s24, 1
    %p278 = scmp.ne.s32.totalorder %s273, %s275
    %p279 = scmp.eq.s32.totalorder %s24, 0
    %p280 = por %p278, %p279
    %p281 = scmp.ne.s32.totalorder %s273, %s275
    %p282 = scmp.eq.s32.totalorder %s29, 1
    %p283 = por %p281, %p282
    %p284 = scmp.ne.s32.totalorder %s275, %s276
    %p285 = scmp.eq.s32.totalorder %s29, 0
    %p286 = por %p284, %p285
    %p287 = scmp.ne.s32.totalorder %s275, %s276
    %p288 = scmp.eq.s32.totalorder %s30, 1
    %p289 = por %p287, %p288
    %p291 = scmp.ne.s32.totalorder %s276, %s290
    %p292 = scmp.eq.s32.totalorder %s30, 0
    %p293 = por %p291, %p292
    %s295 = sadd.s32 %s294, 1
    %p298 = scmp.eq.s32.totalorder %s24, 1
    %p299 = scmp.ne.s32.totalorder %s294, %s296
    %p300 = scmp.eq.s32.totalorder %s24, 0
    %p301 = por %p299, %p300
    %p302 = scmp.ne.s32.totalorder %s294, %s296
    %p303 = scmp.eq.s32.totalorder %s29, 1
    %p304 = por %p302, %p303
    %p305 = scmp.ne.s32.totalorder %s296, %s297
    %p306 = scmp.eq.s32.totalorder %s29, 0
    %p307 = por %p305, %p306
    %p308 = scmp.ne.s32.totalorder %s296, %s297
    %p309 = scmp.eq.s32.totalorder %s30, 1
    %p310 = por %p308, %p309
    %p312 = scmp.ne.s32.totalorder %s297, %s311
    %p313 = scmp.eq.s32.totalorder %s30, 0
    %p314 = por %p312, %p313
    %s316 = sadd.s32 %s315, 1
    %p319 = scmp.eq.s32.totalorder %s24, 1
    %p320 = scmp.ne.s32.totalorder %s315, %s317
    %p321 = scmp.eq.s32.totalorder %s24, 0
    %p322 = por %p320, %p321
    %p323 = scmp.ne.s32.totalorder %s315, %s317
    %p324 = scmp.eq.s32.totalorder %s29, 1
    %p325 = por %p323, %p324
    %p326 = scmp.ne.s32.totalorder %s317, %s318
    %p327 = scmp.eq.s32.totalorder %s29, 0
    %p328 = por %p326, %p327
    %p329 = scmp.ne.s32.totalorder %s317, %s318
    %p330 = scmp.eq.s32.totalorder %s30, 1
    %p331 = por %p329, %p330
    %p333 = scmp.ne.s32.totalorder %s318, %s332
    %p334 = scmp.eq.s32.totalorder %s30, 0
    %p335 = por %p333, %p334
    %s337 = sadd.s32 %s336, 1
    %p340 = scmp.eq.s32.totalorder %s24, 1
    %p341 = scmp.ne.s32.totalorder %s336, %s338
    %p342 = scmp.eq.s32.totalorder %s24, 0
    %p343 = por %p341, %p342
    %p344 = scmp.ne.s32.totalorder %s336, %s338
    %p345 = scmp.eq.s32.totalorder %s29, 1
    %p346 = por %p344, %p345
    %p347 = scmp.ne.s32.totalorder %s338, %s339
    %p348 = scmp.eq.s32.totalorder %s29, 0
    %p349 = por %p347, %p348
    %p350 = scmp.ne.s32.totalorder %s338, %s339
    %p351 = scmp.eq.s32.totalorder %s30, 1
    %p352 = por %p350, %p351
    %p354 = scmp.ne.s32.totalorder %s339, %s353
    %p355 = scmp.eq.s32.totalorder %s30, 0
    %p356 = por %p354, %p355
    %s358 = sadd.s32 %s357, 1
    %p361 = scmp.eq.s32.totalorder %s24, 1
    %p362 = scmp.ne.s32.totalorder %s357, %s359
    %p363 = scmp.eq.s32.totalorder %s24, 0
    %p364 = por %p362, %p363
    %p365 = scmp.ne.s32.totalorder %s357, %s359
    %p366 = scmp.eq.s32.totalorder %s29, 1
    %p367 = por %p365, %p366
    %p368 = scmp.ne.s32.totalorder %s359, %s360
    %p369 = scmp.eq.s32.totalorder %s29, 0
    %p370 = por %p368, %p369
    %p371 = scmp.ne.s32.totalorder %s359, %s360
    %p372 = scmp.eq.s32.totalorder %s30, 1
    %p373 = por %p371, %p372
    %p375 = scmp.ne.s32.totalorder %s360, %s374
    %p376 = scmp.eq.s32.totalorder %s30, 0
    %p377 = por %p375, %p376
    %s379 = sadd.s32 %s378, 1
    %p382 = scmp.eq.s32.totalorder %s24, 1
    %p383 = scmp.ne.s32.totalorder %s378, %s380
    %p384 = scmp.eq.s32.totalorder %s24, 0
    %p385 = por %p383, %p384
    %p386 = scmp.ne.s32.totalorder %s378, %s380
    %p387 = scmp.eq.s32.totalorder %s29, 1
    %p388 = por %p386, %p387
    %p389 = scmp.ne.s32.totalorder %s380, %s381
    %p390 = scmp.eq.s32.totalorder %s29, 0
    %p391 = por %p389, %p390
    %p392 = scmp.ne.s32.totalorder %s380, %s381
    %p393 = scmp.eq.s32.totalorder %s30, 1
    %p394 = por %p392, %p393
    %p396 = scmp.ne.s32.totalorder %s381, %s395
    %p397 = scmp.eq.s32.totalorder %s30, 0
    %p398 = por %p396, %p397
    %s400 = sadd.s32 %s399, 1
    %p403 = scmp.eq.s32.totalorder %s24, 1
    %p404 = scmp.ne.s32.totalorder %s399, %s401
    %p405 = scmp.eq.s32.totalorder %s24, 0
    %p406 = por %p404, %p405
    %p407 = scmp.ne.s32.totalorder %s399, %s401
    %p408 = scmp.eq.s32.totalorder %s29, 1
    %p409 = por %p407, %p408
    %p410 = scmp.ne.s32.totalorder %s401, %s402
    %p411 = scmp.eq.s32.totalorder %s29, 0
    %p412 = por %p410, %p411
    %p413 = scmp.ne.s32.totalorder %s401, %s402
    %p414 = scmp.eq.s32.totalorder %s30, 1
    %p415 = por %p413, %p414
    %p417 = scmp.ne.s32.totalorder %s402, %s416
    %p418 = scmp.eq.s32.totalorder %s30, 0
    %p419 = por %p417, %p418
    %s420 = ssub.s32 %s24, %s31
    %p421 = scmp.eq.s32.totalorder %s420, 0
    %s423 = sadd.s32 %s422, 1
    %s424 = scalar_select %p421, %s422, %s423
    %p427 = pneg %p421
    %p428 = scmp.eq.s32.totalorder %s24, 1
    %p429 = por %p427, %p428
    %p430 = scmp.ne.s32.totalorder %s422, %s425
    %p431 = scmp.eq.s32.totalorder %s24, 0
    %p432 = por %p430, %p431
    %p433 = scmp.ne.s32.totalorder %s422, %s425
    %p434 = scmp.eq.s32.totalorder %s29, 1
    %p435 = por %p433, %p434
    %p436 = scmp.ne.s32.totalorder %s425, %s426
    %p437 = scmp.eq.s32.totalorder %s29, 0
    %p438 = por %p436, %p437
    %p439 = scmp.ne.s32.totalorder %s425, %s426
    %p440 = scmp.eq.s32.totalorder %s30, 1
    %p441 = por %p439, %p440
    %p443 = scmp.ne.s32.totalorder %s426, %s442
    %p444 = scmp.eq.s32.totalorder %s30, 0
    %p445 = por %p443, %p444
    %p446 = scmp.le.s32.totalorder 1, %s24
    %p447 = scmp.lt.s32.totalorder %s24, 3
    %p448 = pnand %p446, %p447
    %p449 = pneg %p448
    // Predicated region
    $region9: #{block_forward.6} parent=5 // pred_check
      _
    $region10: #{block_forward.6} parent=5 // pred_check_branch
      %451 = sbr.rel (%p448) target = $region12
    $region11: #{block_forward.6} parent=5 // pred_region
      %s452 = ssub.s32 %s24, 1
      // Predicated region
      $region13: #{block_forward.6} parent=11 // pred_check
        %p453 = pneg %p97
      $region14: #{block_forward.6} parent=11 // pred_check_branch
        %455 = sbr.rel (%p453) target = $region16
      $region15: #{block_forward.6} parent=11 // pred_region
        _
      $region16: #{block_forward.6} parent=11 // pred_fallthru
        _
      // Predicated region
      $region17: #{block_forward.6} parent=11 // pred_check
        %p456 = pneg %p118
      $region18: #{block_forward.6} parent=11 // pred_check_branch
        %458 = sbr.rel (%p456) target = $region20
      $region19: #{block_forward.6} parent=11 // pred_region
        _
      $region20: #{block_forward.6} parent=11 // pred_fallthru
        _
      // Predicated region
      $region21: #{block_forward.6} parent=11 // pred_check
        %p459 = pneg %p139
      $region22: #{block_forward.6} parent=11 // pred_check_branch
        %461 = sbr.rel (%p459) target = $region24
      $region23: #{block_forward.6} parent=11 // pred_region
        _
      $region24: #{block_forward.6} parent=11 // pred_fallthru
        _
      // Predicated region
      $region25: #{block_forward.6} parent=11 // pred_check
        %p462 = pneg %p160
      $region26: #{block_forward.6} parent=11 // pred_check_branch
        %464 = sbr.rel (%p462) target = $region28
      $region27: #{block_forward.6} parent=11 // pred_region
        _
      $region28: #{block_forward.6} parent=11 // pred_fallthru
        _
      // Predicated region
      $region29: #{block_forward.6} parent=11 // pred_check
        %p465 = pneg %p181
      $region30: #{block_forward.6} parent=11 // pred_check_branch
        %467 = sbr.rel (%p465) target = $region32
      $region31: #{block_forward.6} parent=11 // pred_region
        _
      $region32: #{block_forward.6} parent=11 // pred_fallthru
        _
      // Predicated region
      $region33: #{block_forward.6} parent=11 // pred_check
        %p468 = pneg %p202
      $region34: #{block_forward.6} parent=11 // pred_check_branch
        %470 = sbr.rel (%p468) target = $region36
      $region35: #{block_forward.6} parent=11 // pred_region
        _
      $region36: #{block_forward.6} parent=11 // pred_fallthru
        _
      // Predicated region
      $region37: #{block_forward.6} parent=11 // pred_check
        %p471 = pneg %p223
      $region38: #{block_forward.6} parent=11 // pred_check_branch
        %473 = sbr.rel (%p471) target = $region40
      $region39: #{block_forward.6} parent=11 // pred_region
        _
      $region40: #{block_forward.6} parent=11 // pred_fallthru
        _
      // Predicated region
      $region41: #{block_forward.6} parent=11 // pred_check
        %p474 = pneg %p244
      $region42: #{block_forward.6} parent=11 // pred_check_branch
        %476 = sbr.rel (%p474) target = $region44
      $region43: #{block_forward.6} parent=11 // pred_region
        _
      $region44: #{block_forward.6} parent=11 // pred_fallthru
        _
      // Predicated region
      $region45: #{block_forward.6} parent=11 // pred_check
        %p477 = pneg %p265
      $region46: #{block_forward.6} parent=11 // pred_check_branch
        %479 = sbr.rel (%p477) target = $region48
      $region47: #{block_forward.6} parent=11 // pred_region
        _
      $region48: #{block_forward.6} parent=11 // pred_fallthru
        _
      // Predicated region
      $region49: #{block_forward.6} parent=11 // pred_check
        %p480 = pneg %p286
      $region50: #{block_forward.6} parent=11 // pred_check_branch
        %482 = sbr.rel (%p480) target = $region52
      $region51: #{block_forward.6} parent=11 // pred_region
        _
      $region52: #{block_forward.6} parent=11 // pred_fallthru
        _
      // Predicated region
      $region53: #{block_forward.6} parent=11 // pred_check
        %p483 = pneg %p307
      $region54: #{block_forward.6} parent=11 // pred_check_branch
        %485 = sbr.rel (%p483) target = $region56
      $region55: #{block_forward.6} parent=11 // pred_region
        _
      $region56: #{block_forward.6} parent=11 // pred_fallthru
        _
      // Predicated region
      $region57: #{block_forward.6} parent=11 // pred_check
        %p486 = pneg %p328
      $region58: #{block_forward.6} parent=11 // pred_check_branch
        %488 = sbr.rel (%p486) target = $region60
      $region59: #{block_forward.6} parent=11 // pred_region
        _
      $region60: #{block_forward.6} parent=11 // pred_fallthru
        _
      // Predicated region
      $region61: #{block_forward.6} parent=11 // pred_check
        %p489 = pneg %p349
      $region62: #{block_forward.6} parent=11 // pred_check_branch
        %491 = sbr.rel (%p489) target = $region64
      $region63: #{block_forward.6} parent=11 // pred_region
        _
      $region64: #{block_forward.6} parent=11 // pred_fallthru
        _
      // Predicated region
      $region65: #{block_forward.6} parent=11 // pred_check
        %p492 = pneg %p370
      $region66: #{block_forward.6} parent=11 // pred_check_branch
        %494 = sbr.rel (%p492) target = $region68
      $region67: #{block_forward.6} parent=11 // pred_region
        _
      $region68: #{block_forward.6} parent=11 // pred_fallthru
        _
      // Predicated region
      $region69: #{block_forward.6} parent=11 // pred_check
        %p495 = pneg %p391
      $region70: #{block_forward.6} parent=11 // pred_check_branch
        %497 = sbr.rel (%p495) target = $region72
      $region71: #{block_forward.6} parent=11 // pred_region
        _
      $region72: #{block_forward.6} parent=11 // pred_fallthru
        _
      // Predicated region
      $region73: #{block_forward.6} parent=11 // pred_check
        %p498 = pneg %p412
      $region74: #{block_forward.6} parent=11 // pred_check_branch
        %500 = sbr.rel (%p498) target = $region76
      $region75: #{block_forward.6} parent=11 // pred_region
        _
      $region76: #{block_forward.6} parent=11 // pred_fallthru
        _
    $region12: #{block_forward.6} parent=5 // pred_fallthru
      _
    %p501 = scmp.lt.s32.totalorder %s24, 2
    // Predicated region
    $region77: #{block_forward.6} parent=5 // pred_check
      %p502 = pneg %p501
    $region78: #{block_forward.6} parent=5 // pred_check_branch
      %504 = sbr.rel (%p502) target = $region80
    $region79: #{block_forward.6} parent=5 // pred_region
      // Predicated region
      $region81: #{block_forward.6} parent=79 // pred_check
        %p505 = pneg %p44
      $region82: #{block_forward.6} parent=79 // pred_check_branch
        %507 = sbr.rel (%p505) target = $region84
      $region83: #{block_forward.6} parent=79 // pred_region
        %p508 = scmp.lt.s32.totalorder %s24, 1
        %s509 = scalar_select %p508, %s24, 1
        %s510 = smul.addr %s509, 8
        %s511 = scalar_lea.vmem %s0, %s510
      $region84: #{block_forward.6} parent=79 // pred_fallthru
        _
      // Predicated region
      $region85: #{block_forward.6} parent=79 // pred_check
        %p512 = pneg %p70
      $region86: #{block_forward.6} parent=79 // pred_check_branch
        %514 = sbr.rel (%p512) target = $region88
      $region87: #{block_forward.6} parent=79 // pred_region
        %p515 = scmp.lt.s32.totalorder %s24, 1
        %s516 = scalar_select %p515, %s24, 1
        %s517 = smul.addr %s516, 4
        %s518 = smul.addr %s517, 8
        %s519 = scalar_lea.vmem %s1, %s518
      $region88: #{block_forward.6} parent=79 // pred_fallthru
        _
    $region80: #{block_forward.6} parent=5 // pred_fallthru
      _
    %p520 = scmp.le.s32.totalorder 1, %s24
    %p521 = scmp.lt.s32.totalorder %s24, 3
    %p522 = pnand %p520, %p521
    %p523 = pneg %p522
    // Predicated region
    $region89: #{block_forward.6} parent=5 // pred_check
      _
    $region90: #{block_forward.6} parent=5 // pred_check_branch
      %525 = sbr.rel (%p522) target = $region92
    $region91: #{block_forward.6} parent=5 // pred_region
      %s526 = ssub.s32 %s24, 1
      %p527 = scmp.lt.s32.totalorder %s29, 1
      %s528 = scalar_select %p527, %s29, 1
      %s529 = smul.addr %s528, 8
      %s530 = scalar_lea.vmem %s0, %s529
      %p531 = pneg %p50
      %p532 = pneg %p47
      %p533 = scmp.lt.s32.totalorder %s29, 1
      %s534 = scalar_select %p533, %s29, 1
      %s535 = smul.addr %s534, 4
      %s536 = smul.addr %s535, 8
      %s537 = scalar_lea.vmem %s1, %s536
      %p538 = pneg %p76
      %p539 = pneg %p73
      %p540 = pneg %p97
      %p541 = pneg %p94
      %p542 = pneg %p118
      %p543 = pneg %p115
      %p544 = pneg %p139
      %p545 = pneg %p136
      %p546 = pneg %p160
      %p547 = pneg %p157
      %p548 = pneg %p181
      %p549 = pneg %p178
      %p550 = pneg %p202
      %p551 = pneg %p199
      %p552 = pneg %p223
      %p553 = pneg %p220
      %p554 = pneg %p244
      %p555 = pneg %p241
      %p556 = pneg %p265
      %p557 = pneg %p262
      %p558 = pneg %p286
      %p559 = pneg %p283
      %p560 = pneg %p307
      %p561 = pneg %p304
      %p562 = pneg %p328
      %p563 = pneg %p325
      %p564 = pneg %p349
      %p565 = pneg %p346
      %p566 = pneg %p370
      %p567 = pneg %p367
      %p568 = pneg %p391
      %p569 = pneg %p388
      %p570 = pneg %p412
      %p571 = pneg %p409
      %p572 = pneg %p438
      %p573 = pneg %p435
      %p574 = scmp.lt.s32.totalorder %s29, 1
      %s575 = scalar_select %p574, %s29, 1
      %s576 = smul.addr %s575, 4
      %s577 = smul.addr %s576, 8
      %s578 = scalar_lea.vmem %s18, %s577
      %p579 = scmp.lt.s32.totalorder %s29, 1
      %s580 = scalar_select %p579, %s29, 1
      %s581 = smul.addr %s580, 8
      %s582 = scalar_lea.vmem %s0, %s581
      %p583 = scmp.lt.s32.totalorder %s29, 1
      %s584 = scalar_select %p583, %s29, 1
      %s585 = smul.addr %s584, 4
      %s586 = smul.addr %s585, 8
      %s587 = scalar_lea.vmem %s1, %s586
      %p588 = scmp.lt.s32.totalorder %s29, 1
      %s589 = scalar_select %p588, %s29, 1
      %s590 = smul.addr %s589, 4
      %s591 = smul.addr %s590, 8
      %s592 = scalar_lea.vmem %s18, %s591
      %v594 = vld [vmem:[%s2] sm:$0xf]
      %v595 = vld [vmem:[%s2 + $0x4] sm:$0xf]
      %v596 = vld [vmem:[%s2 + $0x8] sm:$0xf]
      %v597 = vld [vmem:[%s2 + $0xc] sm:$0xf]
      %v598 = vld [vmem:[%s3] sm:$0x1]
      %v599 = vld [vmem:[%s4] sm:$0xf]
      %v600 = vld [vmem:[%s4 + $0x4] sm:$0xf]
      %v601 = vld [vmem:[%s4 + $0x8] sm:$0xf]
      %v602 = vld [vmem:[%s4 + $0xc] sm:$0xf]
      %v603 = vld [vmem:[%s5] sm:$0x1]
      %v604 = vld [vmem:[%s6] sm:$0xf]
      %v605 = vld [vmem:[%s6 + $0x4] sm:$0xf]
      %v606 = vld [vmem:[%s6 + $0x8] sm:$0xf]
      %v607 = vld [vmem:[%s6 + $0xc] sm:$0xf]
      %v608 = vld [vmem:[%s7] sm:$0x1]
      %v609 = vld [vmem:[%s8] sm:$0xf]
      %v610 = vld [vmem:[%s8 + $0x4] sm:$0xf]
      %v611 = vld [vmem:[%s8 + $0x8] sm:$0xf]
      %v612 = vld [vmem:[%s8 + $0xc] sm:$0xf]
      %v613 = vld [vmem:[%s9] sm:$0x1]
      %v614 = vld [vmem:[%s10] sm:$0x1]
      %v615 = vld [vmem:[%s11] sm:$0xf]
      %v616 = vld [vmem:[%s11 + $0x4] sm:$0xf]
      %v617 = vld [vmem:[%s11 + $0x8] sm:$0xf]
      %v618 = vld [vmem:[%s11 + $0xc] sm:$0xf]
      %v619 = vld [vmem:[%s12] sm:$0x1]
      %v620 = vld [vmem:[%s13] sm:$0xf]
      %v621 = vld [vmem:[%s13 + $0x4] sm:$0xf]
      %v622 = vld [vmem:[%s13 + $0x8] sm:$0xf]
      %v623 = vld [vmem:[%s13 + $0xc] sm:$0xf]
      %v624 = vld [vmem:[%s14] sm:$0x1]
      %v625 = vld [vmem:[%s15] sm:$0xf]
      %v626 = vld [vmem:[%s15 + $0x4] sm:$0xf]
      %v627 = vld [vmem:[%s15 + $0x8] sm:$0xf]
      %v628 = vld [vmem:[%s15 + $0xc] sm:$0xf]
      %v629 = vld [vmem:[%s15 + $0x10] sm:$0xf]
      %v630 = vld [vmem:[%s15 + $0x14] sm:$0xf]
      %v631 = vld [vmem:[%s15 + $0x18] sm:$0xf]
      %v632 = vld [vmem:[%s15 + $0x1c] sm:$0xf]
      %v633 = vld [vmem:[%s16] sm:$0x1]
      %v634 = vld [vmem:[%s17] sm:$0x1]
      %v635 = vld [vmem:[%s582] sm:$0xff]
      %v636 = vld [vmem:[%s587] sm:$0x3f]
      %v637 = vld [vmem:[%s587 + $0x8] sm:$0x3f]
      %v638 = vld [vmem:[%s587 + $0x10] sm:$0x3f]
      %v639 = vld [vmem:[%s587 + $0x18] sm:$0x3f]
      %v640 = vpack.c.bf16 %v635, %v635
      %v642 = vperm.slane %v598, 0
      %v648 = vunpack.c.l.b16 %v594
      %v649 = vunpack.c.l.b16 %v595
      %v650 = vunpack.c.l.b16 %v596
      %v651 = vunpack.c.l.b16 %v597
      %v652 = vpack.c.b16 %v649, %v648
      %v653 = vpack.c.b16 %v651, %v650
      %vm656 = vcmask 261120
      %v658 = vsel %vm656, %v640, 0
      %660 = vmatpush.bf16.msra.mxu0 0
      %661 = vmatpush.bf16.msra.mxu0 0
      %662 = vmatpush.bf16.msra.mxu0 0
      %663 = vmatpush.bf16.msra.mxu0 0
      %664 = vmatpush.bf16.msra.mxu0 0
      %665 = vmatpush.bf16.msra.mxu0 0
      %666 = vmatpush.bf16.msra.mxu0 %v653
      %667 = vmatpush.bf16.msra.mxu0 %v652
      %668 = vmatmul.bf16.gmra.mxu0 %v658
      %v669 = vpop.f32.mrf.mxu0
      %v670 = vadd.f32 %v642, %v669
      %v671 = vpop.f32.mrf.mxu0
      %672 = vdwg.mxu0
      %v673 = vpack.c.bf16 %v636, %v636
      %v674 = vpack.c.bf16 %v637, %v637
      %v675 = vpack.c.bf16 %v638, %v638
      %v676 = vpack.c.bf16 %v639, %v639
      %v678 = vperm.slane %v603, 0
      %v684 = vunpack.c.l.b16 %v599
      %v685 = vunpack.c.l.b16 %v600
      %v686 = vunpack.c.l.b16 %v601
      %v687 = vunpack.c.l.b16 %v602
      %v688 = vpack.c.b16 %v685, %v684
      %v689 = vpack.c.b16 %v687, %v686
      %v693 = vsel %vm656, %v673, 0
      %695 = vmatpush.bf16.msra.mxu0 0
      %696 = vmatpush.bf16.msra.mxu0 0
      %697 = vmatpush.bf16.msra.mxu0 0
      %698 = vmatpush.bf16.msra.mxu0 0
      %699 = vmatpush.bf16.msra.mxu0 0
      %700 = vmatpush.bf16.msra.mxu0 0
      %701 = vmatpush.bf16.msra.mxu0 %v689
      %702 = vmatpush.bf16.msra.mxu0 %v688
      %703 = vmatmul.bf16.gmra.mxu0 %v693
      %v704 = vpop.f32.mrf.mxu0
      %v705 = vadd.f32 %v678, %v704
      %v706 = vpop.f32.mrf.mxu0
      %707 = vdwg.mxu0
      %v709 = vsel %vm656, %v674, 0
      %711 = vmatpush.bf16.msra.mxu0 0
      %712 = vmatpush.bf16.msra.mxu0 0
      %713 = vmatpush.bf16.msra.mxu0 0
      %714 = vmatpush.bf16.msra.mxu0 0
      %715 = vmatpush.bf16.msra.mxu0 0
      %716 = vmatpush.bf16.msra.mxu0 0
      %717 = vmatpush.bf16.msra.mxu0 %v689
      %718 = vmatpush.bf16.msra.mxu0 %v688
      %719 = vmatmul.bf16.gmra.mxu0 %v709
      %v720 = vpop.f32.mrf.mxu0
      %v721 = vadd.f32 %v678, %v720
      %v722 = vpop.f32.mrf.mxu0
      %723 = vdwg.mxu0
      %v725 = vsel %vm656, %v675, 0
      %727 = vmatpush.bf16.msra.mxu0 0
      %728 = vmatpush.bf16.msra.mxu0 0
      %729 = vmatpush.bf16.msra.mxu0 0
      %730 = vmatpush.bf16.msra.mxu0 0
      %731 = vmatpush.bf16.msra.mxu0 0
      %732 = vmatpush.bf16.msra.mxu0 0
      %733 = vmatpush.bf16.msra.mxu0 %v689
      %734 = vmatpush.bf16.msra.mxu0 %v688
      %735 = vmatmul.bf16.gmra.mxu0 %v725
      %v736 = vpop.f32.mrf.mxu0
      %v737 = vadd.f32 %v678, %v736
      %v738 = vpop.f32.mrf.mxu0
      %739 = vdwg.mxu0
      %v741 = vsel %vm656, %v676, 0
      %743 = vmatpush.bf16.msra.mxu0 0
      %744 = vmatpush.bf16.msra.mxu0 0
      %745 = vmatpush.bf16.msra.mxu0 0
      %746 = vmatpush.bf16.msra.mxu0 0
      %747 = vmatpush.bf16.msra.mxu0 0
      %748 = vmatpush.bf16.msra.mxu0 0
      %749 = vmatpush.bf16.msra.mxu0 %v689
      %750 = vmatpush.bf16.msra.mxu0 %v688
      %751 = vmatmul.bf16.gmra.mxu0 %v741
      %v752 = vpop.f32.mrf.mxu0
      %v753 = vadd.f32 %v678, %v752
      %v754 = vpop.f32.mrf.mxu0
      %755 = vdwg.mxu0
      %v757 = vperm.slane %v608, 0
      %v763 = vunpack.c.l.b16 %v604
      %v764 = vunpack.c.l.b16 %v605
      %v765 = vunpack.c.l.b16 %v606
      %v766 = vunpack.c.l.b16 %v607
      %v767 = vpack.c.b16 %v764, %v763
      %v768 = vpack.c.b16 %v766, %v765
      %771 = vmatpush.bf16.msra.mxu0 0
      %772 = vmatpush.bf16.msra.mxu0 0
      %773 = vmatpush.bf16.msra.mxu0 0
      %774 = vmatpush.bf16.msra.mxu0 0
      %775 = vmatpush.bf16.msra.mxu0 0
      %776 = vmatpush.bf16.msra.mxu0 0
      %777 = vmatpush.bf16.msra.mxu0 %v768
      %778 = vmatpush.bf16.msra.mxu0 %v767
      %779 = vmatmul.bf16.gmra.mxu0 %v693
      %v780 = vpop.f32.mrf.mxu0
      %v781 = vadd.f32 %v757, %v780
      %v782 = vpop.f32.mrf.mxu0
      %783 = vdwg.mxu0
      %784 = vmatpush.bf16.msra.mxu0 0
      %785 = vmatpush.bf16.msra.mxu0 0
      %786 = vmatpush.bf16.msra.mxu0 0
      %787 = vmatpush.bf16.msra.mxu0 0
      %788 = vmatpush.bf16.msra.mxu0 0
      %789 = vmatpush.bf16.msra.mxu0 0
      %790 = vmatpush.bf16.msra.mxu0 %v768
      %791 = vmatpush.bf16.msra.mxu0 %v767
      %792 = vmatmul.bf16.gmra.mxu0 %v709
      %v793 = vpop.f32.mrf.mxu0
      %v794 = vadd.f32 %v757, %v793
      %v795 = vpop.f32.mrf.mxu0
      %796 = vdwg.mxu0
      %797 = vmatpush.bf16.msra.mxu0 0
      %798 = vmatpush.bf16.msra.mxu0 0
      %799 = vmatpush.bf16.msra.mxu0 0
      %800 = vmatpush.bf16.msra.mxu0 0
      %801 = vmatpush.bf16.msra.mxu0 0
      %802 = vmatpush.bf16.msra.mxu0 0
      %803 = vmatpush.bf16.msra.mxu0 %v768
      %804 = vmatpush.bf16.msra.mxu0 %v767
      %805 = vmatmul.bf16.gmra.mxu0 %v725
      %v806 = vpop.f32.mrf.mxu0
      %v807 = vadd.f32 %v757, %v806
      %v808 = vpop.f32.mrf.mxu0
      %809 = vdwg.mxu0
      %810 = vmatpush.bf16.msra.mxu0 0
      %811 = vmatpush.bf16.msra.mxu0 0
      %812 = vmatpush.bf16.msra.mxu0 0
      %813 = vmatpush.bf16.msra.mxu0 0
      %814 = vmatpush.bf16.msra.mxu0 0
      %815 = vmatpush.bf16.msra.mxu0 0
      %816 = vmatpush.bf16.msra.mxu0 %v768
      %817 = vmatpush.bf16.msra.mxu0 %v767
      %818 = vmatmul.bf16.gmra.mxu0 %v741
      %v819 = vpop.f32.mrf.mxu0
      %v820 = vadd.f32 %v757, %v819
      %v821 = vpop.f32.mrf.mxu0
      %822 = vdwg.mxu0
      %v823 = vpack.c.bf16 %v670, %v670
      %v824 = vpack.c.bf16 %v705, %v705
      %v825 = vpack.c.bf16 %v721, %v721
      %v826 = vpack.c.bf16 %v737, %v737
      %v827 = vpack.c.bf16 %v753, %v753
      %vm828 = vcmask 64512
      %v830 = vsel %vm828, %v823, 0
      %v833 = vsel %vm828, %v824, 0
      %835 = vmatpush.bf16.xpose.msra.mxu0 0
      %836 = vmatpush.bf16.xpose.msra.mxu0 0
      %837 = vmatpush.bf16.xpose.msra.mxu0 0
      %838 = vmatpush.bf16.xpose.msra.mxu0 0
      %839 = vmatpush.bf16.xpose.msra.mxu0 0
      %840 = vmatpush.bf16.xpose.msra.mxu0 0
      %841 = vmatpush.bf16.xpose.msra.mxu0 0
      %842 = vmatpush.bf16.xpose.msra.mxu0 %v833
      %843 = vmatmul.bf16.gmra.mxu0 %v830
      %v844 = vpop.f32.mrf.mxu0
      %v845 = vadd.f32 0.0, %v844
      %v846 = vpop.f32.mrf.mxu0
      %847 = vdwg.mxu0
      %v849 = vsel %vm828, %v825, 0
      %851 = vmatpush.bf16.xpose.msra.mxu0 0
      %852 = vmatpush.bf16.xpose.msra.mxu0 0
      %853 = vmatpush.bf16.xpose.msra.mxu0 0
      %854 = vmatpush.bf16.xpose.msra.mxu0 0
      %855 = vmatpush.bf16.xpose.msra.mxu0 0
      %856 = vmatpush.bf16.xpose.msra.mxu0 0
      %857 = vmatpush.bf16.xpose.msra.mxu0 0
      %858 = vmatpush.bf16.xpose.msra.mxu0 %v849
      %859 = vmatmul.bf16.gmra.mxu0 %v830
      %v860 = vpop.f32.mrf.mxu0
      %v861 = vadd.f32 0.0, %v860
      %v862 = vpop.f32.mrf.mxu0
      %863 = vdwg.mxu0
      %v865 = vsel %vm828, %v826, 0
      %867 = vmatpush.bf16.xpose.msra.mxu0 0
      %868 = vmatpush.bf16.xpose.msra.mxu0 0
      %869 = vmatpush.bf16.xpose.msra.mxu0 0
      %870 = vmatpush.bf16.xpose.msra.mxu0 0
      %871 = vmatpush.bf16.xpose.msra.mxu0 0
      %872 = vmatpush.bf16.xpose.msra.mxu0 0
      %873 = vmatpush.bf16.xpose.msra.mxu0 0
      %874 = vmatpush.bf16.xpose.msra.mxu0 %v865
      %875 = vmatmul.bf16.gmra.mxu0 %v830
      %v876 = vpop.f32.mrf.mxu0
      %v877 = vadd.f32 0.0, %v876
      %v878 = vpop.f32.mrf.mxu0
      %879 = vdwg.mxu0
      %v881 = vsel %vm828, %v827, 0
      %883 = vmatpush.bf16.xpose.msra.mxu0 0
      %884 = vmatpush.bf16.xpose.msra.mxu0 0
      %885 = vmatpush.bf16.xpose.msra.mxu0 0
      %886 = vmatpush.bf16.xpose.msra.mxu0 0
      %887 = vmatpush.bf16.xpose.msra.mxu0 0
      %888 = vmatpush.bf16.xpose.msra.mxu0 0
      %889 = vmatpush.bf16.xpose.msra.mxu0 0
      %890 = vmatpush.bf16.xpose.msra.mxu0 %v881
      %891 = vmatmul.bf16.gmra.mxu0 %v830
      %v892 = vpop.f32.mrf.mxu0
      %v893 = vadd.f32 0.0, %v892
      %v894 = vpop.f32.mrf.mxu0
      %895 = vdwg.mxu0
      %v896 = vmul.f32 %v845, 0.35355338
      %v897 = vmul.f32 %v861, 0.35355338
      %v898 = vmul.f32 %v877, 0.35355338
      %v899 = vmul.f32 %v893, 0.35355338
      %vm900 = vcmask 48128
      %v901 = vsel %vm900, %v896, -inf
      %902 = vmax.xlane.f32.xlu0 %v901
      %v903 = vpop.xlane.xlu0 %902
      %v904 = vsel %vm900, %v897, -inf
      %905 = vmax.xlane.f32.xlu0 %v904
      %v906 = vpop.xlane.xlu0 %905
      %v907 = vsel %vm900, %v898, -inf
      %908 = vmax.xlane.f32.xlu0 %v907
      %v909 = vpop.xlane.xlu0 %908
      %v910 = vsel %vm900, %v899, -inf
      %911 = vmax.xlane.f32.xlu0 %v910
      %v912 = vpop.xlane.xlu0 %911
      %v913 = vsub.f32 %v896, %v903
      %v914 = vsub.f32 %v897, %v906
      %v915 = vsub.f32 %v898, %v909
      %v916 = vsub.f32 %v899, %v912
      %v917 = vmul.f32 %v913, 1.442695
      %v918 = vpow.pop %v917
      %v919 = vmul.f32 %v914, 1.442695
      %v920 = vpow.pop %v919
      %v921 = vmul.f32 %v915, 1.442695
      %v922 = vpow.pop %v921
      %v923 = vmul.f32 %v916, 1.442695
      %v924 = vpow.pop %v923
      %v925 = vsel %vm900, %v918, 0.0
      %926 = vadd.xlane.f32.xlu0 %v925
      %v927 = vpop.xlane.xlu0 %926
      %v928 = vsel %vm900, %v920, 0.0
      %929 = vadd.xlane.f32.xlu0 %v928
      %v930 = vpop.xlane.xlu0 %929
      %v931 = vsel %vm900, %v922, 0.0
      %932 = vadd.xlane.f32.xlu0 %v931
      %v933 = vpop.xlane.xlu0 %932
      %v934 = vsel %vm900, %v924, 0.0
      %935 = vadd.xlane.f32.xlu0 %v934
      %v936 = vpop.xlane.xlu0 %935
      %v937 = vrcp.pop %v927
      %v938 = vmul.f32 %v927, %v937
      %v939 = vsub.f32 1.0, %v938
      %v940 = vmul.f32 %v937, %v939
      %v941 = vadd.f32 %v937, %v940
      %vm942 = vweird.f32 %v927
      %vm943 = vweird.f32 %v937
      %vm944 = vmor %vm942, %vm943
      %v945 = vsel %vm944, %v937, %v941
      %v946 = vand.u32 2147483647, %v927
      %vm947 = vcmp.eq.f32.partialorder %v946, 8.507059e+37
      %v948 = vand.u32 %v927, 2147483648
      %v949 = vor.u32 1.1754944e-38, %v948
      %v950 = vsel %vm947, %v949, %v945
      %v951 = vmul.f32 %v918, %v950
      %v952 = vrcp.pop %v930
      %v953 = vmul.f32 %v930, %v952
      %v954 = vsub.f32 1.0, %v953
      %v955 = vmul.f32 %v952, %v954
      %v956 = vadd.f32 %v952, %v955
      %vm957 = vweird.f32 %v930
      %vm958 = vweird.f32 %v952
      %vm959 = vmor %vm957, %vm958
      %v960 = vsel %vm959, %v952, %v956
      %v961 = vand.u32 2147483647, %v930
      %vm962 = vcmp.eq.f32.partialorder %v961, 8.507059e+37
      %v963 = vand.u32 %v930, 2147483648
      %v964 = vor.u32 1.1754944e-38, %v963
      %v965 = vsel %vm962, %v964, %v960
      %v966 = vmul.f32 %v920, %v965
      %v967 = vrcp.pop %v933
      %v968 = vmul.f32 %v933, %v967
      %v969 = vsub.f32 1.0, %v968
      %v970 = vmul.f32 %v967, %v969
      %v971 = vadd.f32 %v967, %v970
      %vm972 = vweird.f32 %v933
      %vm973 = vweird.f32 %v967
      %vm974 = vmor %vm972, %vm973
      %v975 = vsel %vm974, %v967, %v971
      %v976 = vand.u32 2147483647, %v933
      %vm977 = vcmp.eq.f32.partialorder %v976, 8.507059e+37
      %v978 = vand.u32 %v933, 2147483648
      %v979 = vor.u32 1.1754944e-38, %v978
      %v980 = vsel %vm977, %v979, %v975
      %v981 = vmul.f32 %v922, %v980
      %v982 = vrcp.pop %v936
      %v983 = vmul.f32 %v936, %v982
      %v984 = vsub.f32 1.0, %v983
      %v985 = vmul.f32 %v982, %v984
      %v986 = vadd.f32 %v982, %v985
      %vm987 = vweird.f32 %v936
      %vm988 = vweird.f32 %v982
      %vm989 = vmor %vm987, %vm988
      %v990 = vsel %vm989, %v982, %v986
      %v991 = vand.u32 2147483647, %v936
      %vm992 = vcmp.eq.f32.partialorder %v991, 8.507059e+37
      %v993 = vand.u32 %v936, 2147483648
      %v994 = vor.u32 1.1754944e-38, %v993
      %v995 = vsel %vm992, %v994, %v990
      %v996 = vmul.f32 %v924, %v995
      %v997 = vpack.c.bf16 %v951, %v951
      %v998 = vpack.c.bf16 %v966, %v966
      %v999 = vpack.c.bf16 %v981, %v981
      %v1000 = vpack.c.bf16 %v996, %v996
      %v1001 = vpack.c.bf16 %v781, %v781
      %v1002 = vpack.c.bf16 %v794, %v794
      %v1003 = vpack.c.bf16 %v807, %v807
      %v1004 = vpack.c.bf16 %v820, %v820
      %v1006 = vsel %vm900, %v997, 0
      %vm1008 = vcmask 1042432
      %v1010 = vsel %vm1008, %v1001, 0
      %1012 = vmatpush.bf16.msra.mxu0 0
      %1013 = vmatpush.bf16.msra.mxu0 0
      %1014 = vmatpush.bf16.msra.mxu0 0
      %1015 = vmatpush.bf16.msra.mxu0 0
      %1016 = vmatpush.bf16.msra.mxu0 0
      %1017 = vmatpush.bf16.msra.mxu0 0
      %1018 = vmatpush.bf16.msra.mxu0 0
      %1019 = vmatpush.bf16.msra.mxu0 %v1010
      %1020 = vmatmul.bf16.gmra.mxu0 %v1006
      %v1021 = vpop.f32.mrf.mxu0
      %v1022 = vadd.f32 0.0, %v1021
      %v1023 = vpop.f32.mrf.mxu0
      %1024 = vdwg.mxu0
      %v1026 = vsel %vm900, %v998, 0
      %v1029 = vsel %vm1008, %v1002, 0
      %1031 = vmatpush.bf16.msra.mxu0 0
      %1032 = vmatpush.bf16.msra.mxu0 0
      %1033 = vmatpush.bf16.msra.mxu0 0
      %1034 = vmatpush.bf16.msra.mxu0 0
      %1035 = vmatpush.bf16.msra.mxu0 0
      %1036 = vmatpush.bf16.msra.mxu0 0
      %1037 = vmatpush.bf16.msra.mxu0 0
      %1038 = vmatpush.bf16.msra.mxu0 %v1029
      %1039 = vmatmul.bf16.gmra.mxu0 %v1026
      %v1040 = vpop.f32.mrf.mxu0
      %v1041 = vadd.f32 0.0, %v1040
      %v1042 = vpop.f32.mrf.mxu0
      %1043 = vdwg.mxu0
      %v1045 = vsel %vm900, %v999, 0
      %v1048 = vsel %vm1008, %v1003, 0
      %1050 = vmatpush.bf16.msra.mxu0 0
      %1051 = vmatpush.bf16.msra.mxu0 0
      %1052 = vmatpush.bf16.msra.mxu0 0
      %1053 = vmatpush.bf16.msra.mxu0 0
      %1054 = vmatpush.bf16.msra.mxu0 0
      %1055 = vmatpush.bf16.msra.mxu0 0
      %1056 = vmatpush.bf16.msra.mxu0 0
      %1057 = vmatpush.bf16.msra.mxu0 %v1048
      %1058 = vmatmul.bf16.gmra.mxu0 %v1045
      %v1059 = vpop.f32.mrf.mxu0
      %v1060 = vadd.f32 0.0, %v1059
      %v1061 = vpop.f32.mrf.mxu0
      %1062 = vdwg.mxu0
      %v1064 = vsel %vm900, %v1000, 0
      %v1067 = vsel %vm1008, %v1004, 0
      %1069 = vmatpush.bf16.msra.mxu0 0
      %1070 = vmatpush.bf16.msra.mxu0 0
      %1071 = vmatpush.bf16.msra.mxu0 0
      %1072 = vmatpush.bf16.msra.mxu0 0
      %1073 = vmatpush.bf16.msra.mxu0 0
      %1074 = vmatpush.bf16.msra.mxu0 0
      %1075 = vmatpush.bf16.msra.mxu0 0
      %1076 = vmatpush.bf16.msra.mxu0 %v1067
      %1077 = vmatmul.bf16.gmra.mxu0 %v1064
      %v1078 = vpop.f32.mrf.mxu0
      %v1079 = vadd.f32 0.0, %v1078
      %v1080 = vpop.f32.mrf.mxu0
      %1081 = vdwg.mxu0
      %v1083 = vunpack.c.l.b16 %v823
      %v1084 = vpack.c.b16 %v1083, %v1083
      %1085 = vrot.lane.b32.xlu0 %v1084, 120
      %v1086 = vpop.permute.xlu0 %1085
      %v1088 = vunpack.c.l.b16 %v824
      %v1089 = vpack.c.b16 %v1088, %v1088
      %1090 = vrot.lane.b32.xlu0 %v1089, 120
      %v1091 = vpop.permute.xlu0 %1090
      %v1093 = vsel %vm828, %v1086, 0
      %v1096 = vsel %vm828, %v1091, 0
      %1098 = vmatpush.bf16.xpose.msra.mxu0 0
      %1099 = vmatpush.bf16.xpose.msra.mxu0 0
      %1100 = vmatpush.bf16.xpose.msra.mxu0 0
      %1101 = vmatpush.bf16.xpose.msra.mxu0 0
      %1102 = vmatpush.bf16.xpose.msra.mxu0 0
      %1103 = vmatpush.bf16.xpose.msra.mxu0 0
      %1104 = vmatpush.bf16.xpose.msra.mxu0 0
      %1105 = vmatpush.bf16.xpose.msra.mxu0 %v1096
      %1106 = vmatmul.bf16.gmra.mxu0 %v1093
      %v1107 = vpop.f32.mrf.mxu0
      %v1108 = vadd.f32 0.0, %v1107
      %v1109 = vpop.f32.mrf.mxu0
      %1110 = vdwg.mxu0
      %v1112 = vunpack.c.l.b16 %v825
      %v1113 = vpack.c.b16 %v1112, %v1112
      %1114 = vrot.lane.b32.xlu0 %v1113, 120
      %v1115 = vpop.permute.xlu0 %1114
      %v1117 = vsel %vm828, %v1115, 0
      %1119 = vmatpush.bf16.xpose.msra.mxu0 0
      %1120 = vmatpush.bf16.xpose.msra.mxu0 0
      %1121 = vmatpush.bf16.xpose.msra.mxu0 0
      %1122 = vmatpush.bf16.xpose.msra.mxu0 0
      %1123 = vmatpush.bf16.xpose.msra.mxu0 0
      %1124 = vmatpush.bf16.xpose.msra.mxu0 0
      %1125 = vmatpush.bf16.xpose.msra.mxu0 0
      %1126 = vmatpush.bf16.xpose.msra.mxu0 %v1117
      %1127 = vmatmul.bf16.gmra.mxu0 %v1093
      %v1128 = vpop.f32.mrf.mxu0
      %v1129 = vadd.f32 0.0, %v1128
      %v1130 = vpop.f32.mrf.mxu0
      %1131 = vdwg.mxu0
      %v1133 = vunpack.c.l.b16 %v826
      %v1134 = vpack.c.b16 %v1133, %v1133
      %1135 = vrot.lane.b32.xlu0 %v1134, 120
      %v1136 = vpop.permute.xlu0 %1135
      %v1138 = vsel %vm828, %v1136, 0
      %1140 = vmatpush.bf16.xpose.msra.mxu0 0
      %1141 = vmatpush.bf16.xpose.msra.mxu0 0
      %1142 = vmatpush.bf16.xpose.msra.mxu0 0
      %1143 = vmatpush.bf16.xpose.msra.mxu0 0
      %1144 = vmatpush.bf16.xpose.msra.mxu0 0
      %1145 = vmatpush.bf16.xpose.msra.mxu0 0
      %1146 = vmatpush.bf16.xpose.msra.mxu0 0
      %1147 = vmatpush.bf16.xpose.msra.mxu0 %v1138
      %1148 = vmatmul.bf16.gmra.mxu0 %v1093
      %v1149 = vpop.f32.mrf.mxu0
      %v1150 = vadd.f32 0.0, %v1149
      %v1151 = vpop.f32.mrf.mxu0
      %1152 = vdwg.mxu0
      %v1154 = vunpack.c.l.b16 %v827
      %v1155 = vpack.c.b16 %v1154, %v1154
      %1156 = vrot.lane.b32.xlu0 %v1155, 120
      %v1157 = vpop.permute.xlu0 %1156
      %v1159 = vsel %vm828, %v1157, 0
      %1161 = vmatpush.bf16.xpose.msra.mxu0 0
      %1162 = vmatpush.bf16.xpose.msra.mxu0 0
      %1163 = vmatpush.bf16.xpose.msra.mxu0 0
      %1164 = vmatpush.bf16.xpose.msra.mxu0 0
      %1165 = vmatpush.bf16.xpose.msra.mxu0 0
      %1166 = vmatpush.bf16.xpose.msra.mxu0 0
      %1167 = vmatpush.bf16.xpose.msra.mxu0 0
      %1168 = vmatpush.bf16.xpose.msra.mxu0 %v1159
      %1169 = vmatmul.bf16.gmra.mxu0 %v1093
      %v1170 = vpop.f32.mrf.mxu0
      %v1171 = vadd.f32 0.0, %v1170
      %v1172 = vpop.f32.mrf.mxu0
      %1173 = vdwg.mxu0
      %v1174 = vmul.f32 %v1108, 0.35355338
      %v1175 = vmul.f32 %v1129, 0.35355338
      %v1176 = vmul.f32 %v1150, 0.35355338
      %v1177 = vmul.f32 %v1171, 0.35355338
      %v1178 = vsel %vm900, %v1174, -inf
      %1179 = vmax.xlane.f32.xlu0 %v1178
      %v1180 = vpop.xlane.xlu0 %1179
      %v1181 = vsel %vm900, %v1175, -inf
      %1182 = vmax.xlane.f32.xlu0 %v1181
      %v1183 = vpop.xlane.xlu0 %1182
      %v1184 = vsel %vm900, %v1176, -inf
      %1185 = vmax.xlane.f32.xlu0 %v1184
      %v1186 = vpop.xlane.xlu0 %1185
      %v1187 = vsel %vm900, %v1177, -inf
      %1188 = vmax.xlane.f32.xlu0 %v1187
      %v1189 = vpop.xlane.xlu0 %1188
      %v1190 = vsub.f32 %v1174, %v1180
      %v1191 = vsub.f32 %v1175, %v1183
      %v1192 = vsub.f32 %v1176, %v1186
      %v1193 = vsub.f32 %v1177, %v1189
      %v1194 = vmul.f32 %v1190, 1.442695
      %v1195 = vpow.pop %v1194
      %v1196 = vmul.f32 %v1191, 1.442695
      %v1197 = vpow.pop %v1196
      %v1198 = vmul.f32 %v1192, 1.442695
      %v1199 = vpow.pop %v1198
      %v1200 = vmul.f32 %v1193, 1.442695
      %v1201 = vpow.pop %v1200
      %v1202 = vsel %vm900, %v1195, 0.0
      %1203 = vadd.xlane.f32.xlu0 %v1202
      %v1204 = vpop.xlane.xlu0 %1203
      %v1205 = vsel %vm900, %v1197, 0.0
      %1206 = vadd.xlane.f32.xlu0 %v1205
      %v1207 = vpop.xlane.xlu0 %1206
      %v1208 = vsel %vm900, %v1199, 0.0
      %1209 = vadd.xlane.f32.xlu0 %v1208
      %v1210 = vpop.xlane.xlu0 %1209
      %v1211 = vsel %vm900, %v1201, 0.0
      %1212 = vadd.xlane.f32.xlu0 %v1211
      %v1213 = vpop.xlane.xlu0 %1212
      %v1214 = vrcp.pop %v1204
      %v1215 = vmul.f32 %v1204, %v1214
      %v1216 = vsub.f32 1.0, %v1215
      %v1217 = vmul.f32 %v1214, %v1216
      %v1218 = vadd.f32 %v1214, %v1217
      %vm1219 = vweird.f32 %v1204
      %vm1220 = vweird.f32 %v1214
      %vm1221 = vmor %vm1219, %vm1220
      %v1222 = vsel %vm1221, %v1214, %v1218
      %v1223 = vand.u32 2147483647, %v1204
      %vm1224 = vcmp.eq.f32.partialorder %v1223, 8.507059e+37
      %v1225 = vand.u32 %v1204, 2147483648
      %v1226 = vor.u32 1.1754944e-38, %v1225
      %v1227 = vsel %vm1224, %v1226, %v1222
      %v1228 = vmul.f32 %v1195, %v1227
      %v1229 = vrcp.pop %v1207
      %v1230 = vmul.f32 %v1207, %v1229
      %v1231 = vsub.f32 1.0, %v1230
      %v1232 = vmul.f32 %v1229, %v1231
      %v1233 = vadd.f32 %v1229, %v1232
      %vm1234 = vweird.f32 %v1207
      %vm1235 = vweird.f32 %v1229
      %vm1236 = vmor %vm1234, %vm1235
      %v1237 = vsel %vm1236, %v1229, %v1233
      %v1238 = vand.u32 2147483647, %v1207
      %vm1239 = vcmp.eq.f32.partialorder %v1238, 8.507059e+37
      %v1240 = vand.u32 %v1207, 2147483648
      %v1241 = vor.u32 1.1754944e-38, %v1240
      %v1242 = vsel %vm1239, %v1241, %v1237
      %v1243 = vmul.f32 %v1197, %v1242
      %v1244 = vrcp.pop %v1210
      %v1245 = vmul.f32 %v1210, %v1244
      %v1246 = vsub.f32 1.0, %v1245
      %v1247 = vmul.f32 %v1244, %v1246
      %v1248 = vadd.f32 %v1244, %v1247
      %vm1249 = vweird.f32 %v1210
      %vm1250 = vweird.f32 %v1244
      %vm1251 = vmor %vm1249, %vm1250
      %v1252 = vsel %vm1251, %v1244, %v1248
      %v1253 = vand.u32 2147483647, %v1210
      %vm1254 = vcmp.eq.f32.partialorder %v1253, 8.507059e+37
      %v1255 = vand.u32 %v1210, 2147483648
      %v1256 = vor.u32 1.1754944e-38, %v1255
      %v1257 = vsel %vm1254, %v1256, %v1252
      %v1258 = vmul.f32 %v1199, %v1257
      %v1259 = vrcp.pop %v1213
      %v1260 = vmul.f32 %v1213, %v1259
      %v1261 = vsub.f32 1.0, %v1260
      %v1262 = vmul.f32 %v1259, %v1261
      %v1263 = vadd.f32 %v1259, %v1262
      %vm1264 = vweird.f32 %v1213
      %vm1265 = vweird.f32 %v1259
      %vm1266 = vmor %vm1264, %vm1265
      %v1267 = vsel %vm1266, %v1259, %v1263
      %v1268 = vand.u32 2147483647, %v1213
      %vm1269 = vcmp.eq.f32.partialorder %v1268, 8.507059e+37
      %v1270 = vand.u32 %v1213, 2147483648
      %v1271 = vor.u32 1.1754944e-38, %v1270
      %v1272 = vsel %vm1269, %v1271, %v1267
      %v1273 = vmul.f32 %v1201, %v1272
      %v1274 = vpack.c.bf16 %v1228, %v1228
      %v1275 = vpack.c.bf16 %v1243, %v1243
      %v1276 = vpack.c.bf16 %v1258, %v1258
      %v1277 = vpack.c.bf16 %v1273, %v1273
      %v1279 = vunpack.c.l.b16 %v1001
      %v1280 = vpack.c.b16 %v1279, %v1279
      %1281 = vrot.lane.b32.xlu0 %v1280, 120
      %v1282 = vpop.permute.xlu0 %1281
      %v1284 = vsel %vm900, %v1274, 0
      %v1287 = vsel %vm1008, %v1282, 0
      %1289 = vmatpush.bf16.msra.mxu0 0
      %1290 = vmatpush.bf16.msra.mxu0 0
      %1291 = vmatpush.bf16.msra.mxu0 0
      %1292 = vmatpush.bf16.msra.mxu0 0
      %1293 = vmatpush.bf16.msra.mxu0 0
      %1294 = vmatpush.bf16.msra.mxu0 0
      %1295 = vmatpush.bf16.msra.mxu0 0
      %1296 = vmatpush.bf16.msra.mxu0 %v1287
      %1297 = vmatmul.bf16.gmra.mxu0 %v1284
      %v1298 = vpop.f32.mrf.mxu0
      %v1299 = vadd.f32 0.0, %v1298
      %v1300 = vpop.f32.mrf.mxu0
      %1301 = vdwg.mxu0
      %v1303 = vunpack.c.l.b16 %v1002
      %v1304 = vpack.c.b16 %v1303, %v1303
      %1305 = vrot.lane.b32.xlu0 %v1304, 120
      %v1306 = vpop.permute.xlu0 %1305
      %v1308 = vsel %vm900, %v1275, 0
      %v1311 = vsel %vm1008, %v1306, 0
      %1313 = vmatpush.bf16.msra.mxu0 0
      %1314 = vmatpush.bf16.msra.mxu0 0
      %1315 = vmatpush.bf16.msra.mxu0 0
      %1316 = vmatpush.bf16.msra.mxu0 0
      %1317 = vmatpush.bf16.msra.mxu0 0
      %1318 = vmatpush.bf16.msra.mxu0 0
      %1319 = vmatpush.bf16.msra.mxu0 0
      %1320 = vmatpush.bf16.msra.mxu0 %v1311
      %1321 = vmatmul.bf16.gmra.mxu0 %v1308
      %v1322 = vpop.f32.mrf.mxu0
      %v1323 = vadd.f32 0.0, %v1322
      %v1324 = vpop.f32.mrf.mxu0
      %1325 = vdwg.mxu0
      %v1327 = vunpack.c.l.b16 %v1003
      %v1328 = vpack.c.b16 %v1327, %v1327
      %1329 = vrot.lane.b32.xlu0 %v1328, 120
      %v1330 = vpop.permute.xlu0 %1329
      %v1332 = vsel %vm900, %v1276, 0
      %v1335 = vsel %vm1008, %v1330, 0
      %1337 = vmatpush.bf16.msra.mxu0 0
      %1338 = vmatpush.bf16.msra.mxu0 0
      %1339 = vmatpush.bf16.msra.mxu0 0
      %1340 = vmatpush.bf16.msra.mxu0 0
      %1341 = vmatpush.bf16.msra.mxu0 0
      %1342 = vmatpush.bf16.msra.mxu0 0
      %1343 = vmatpush.bf16.msra.mxu0 0
      %1344 = vmatpush.bf16.msra.mxu0 %v1335
      %1345 = vmatmul.bf16.gmra.mxu0 %v1332
      %v1346 = vpop.f32.mrf.mxu0
      %v1347 = vadd.f32 0.0, %v1346
      %v1348 = vpop.f32.mrf.mxu0
      %1349 = vdwg.mxu0
      %v1351 = vunpack.c.l.b16 %v1004
      %v1352 = vpack.c.b16 %v1351, %v1351
      %1353 = vrot.lane.b32.xlu0 %v1352, 120
      %v1354 = vpop.permute.xlu0 %1353
      %v1356 = vsel %vm900, %v1277, 0
      %v1359 = vsel %vm1008, %v1354, 0
      %1361 = vmatpush.bf16.msra.mxu0 0
      %1362 = vmatpush.bf16.msra.mxu0 0
      %1363 = vmatpush.bf16.msra.mxu0 0
      %1364 = vmatpush.bf16.msra.mxu0 0
      %1365 = vmatpush.bf16.msra.mxu0 0
      %1366 = vmatpush.bf16.msra.mxu0 0
      %1367 = vmatpush.bf16.msra.mxu0 0
      %1368 = vmatpush.bf16.msra.mxu0 %v1359
      %1369 = vmatmul.bf16.gmra.mxu0 %v1356
      %v1370 = vpop.f32.mrf.mxu0
      %v1371 = vadd.f32 0.0, %v1370
      %v1372 = vpop.f32.mrf.mxu0
      %1373 = vdwg.mxu0
      %1374 = vrot.lane.b32.xlu0 %v1084, 112
      %v1375 = vpop.permute.xlu0 %1374
      %1376 = vrot.lane.b32.xlu0 %v1089, 112
      %v1377 = vpop.permute.xlu0 %1376
      %v1379 = vsel %vm828, %v1375, 0
      %v1382 = vsel %vm828, %v1377, 0
      %1384 = vmatpush.bf16.xpose.msra.mxu0 0
      %1385 = vmatpush.bf16.xpose.msra.mxu0 0
      %1386 = vmatpush.bf16.xpose.msra.mxu0 0
      %1387 = vmatpush.bf16.xpose.msra.mxu0 0
      %1388 = vmatpush.bf16.xpose.msra.mxu0 0
      %1389 = vmatpush.bf16.xpose.msra.mxu0 0
      %1390 = vmatpush.bf16.xpose.msra.mxu0 0
      %1391 = vmatpush.bf16.xpose.msra.mxu0 %v1382
      %1392 = vmatmul.bf16.gmra.mxu0 %v1379
      %v1393 = vpop.f32.mrf.mxu0
      %v1394 = vadd.f32 0.0, %v1393
      %v1395 = vpop.f32.mrf.mxu0
      %1396 = vdwg.mxu0
      %1397 = vrot.lane.b32.xlu0 %v1113, 112
      %v1398 = vpop.permute.xlu0 %1397
      %v1400 = vsel %vm828, %v1398, 0
      %1402 = vmatpush.bf16.xpose.msra.mxu0 0
      %1403 = vmatpush.bf16.xpose.msra.mxu0 0
      %1404 = vmatpush.bf16.xpose.msra.mxu0 0
      %1405 = vmatpush.bf16.xpose.msra.mxu0 0
      %1406 = vmatpush.bf16.xpose.msra.mxu0 0
      %1407 = vmatpush.bf16.xpose.msra.mxu0 0
      %1408 = vmatpush.bf16.xpose.msra.mxu0 0
      %1409 = vmatpush.bf16.xpose.msra.mxu0 %v1400
      %1410 = vmatmul.bf16.gmra.mxu0 %v1379
      %v1411 = vpop.f32.mrf.mxu0
      %v1412 = vadd.f32 0.0, %v1411
      %v1413 = vpop.f32.mrf.mxu0
      %1414 = vdwg.mxu0
      %1415 = vrot.lane.b32.xlu0 %v1134, 112
      %v1416 = vpop.permute.xlu0 %1415
      %v1418 = vsel %vm828, %v1416, 0
      %1420 = vmatpush.bf16.xpose.msra.mxu0 0
      %1421 = vmatpush.bf16.xpose.msra.mxu0 0
      %1422 = vmatpush.bf16.xpose.msra.mxu0 0
      %1423 = vmatpush.bf16.xpose.msra.mxu0 0
      %1424 = vmatpush.bf16.xpose.msra.mxu0 0
      %1425 = vmatpush.bf16.xpose.msra.mxu0 0
      %1426 = vmatpush.bf16.xpose.msra.mxu0 0
      %1427 = vmatpush.bf16.xpose.msra.mxu0 %v1418
      %1428 = vmatmul.bf16.gmra.mxu0 %v1379
      %v1429 = vpop.f32.mrf.mxu0
      %v1430 = vadd.f32 0.0, %v1429
      %v1431 = vpop.f32.mrf.mxu0
      %1432 = vdwg.mxu0
      %1433 = vrot.lane.b32.xlu0 %v1155, 112
      %v1434 = vpop.permute.xlu0 %1433
      %v1436 = vsel %vm828, %v1434, 0
      %1438 = vmatpush.bf16.xpose.msra.mxu0 0
      %1439 = vmatpush.bf16.xpose.msra.mxu0 0
      %1440 = vmatpush.bf16.xpose.msra.mxu0 0
      %1441 = vmatpush.bf16.xpose.msra.mxu0 0
      %1442 = vmatpush.bf16.xpose.msra.mxu0 0
      %1443 = vmatpush.bf16.xpose.msra.mxu0 0
      %1444 = vmatpush.bf16.xpose.msra.mxu0 0
      %1445 = vmatpush.bf16.xpose.msra.mxu0 %v1436
      %1446 = vmatmul.bf16.gmra.mxu0 %v1379
      %v1447 = vpop.f32.mrf.mxu0
      %v1448 = vadd.f32 0.0, %v1447
      %v1449 = vpop.f32.mrf.mxu0
      %1450 = vdwg.mxu0
      %v1451 = vmul.f32 %v1394, 0.35355338
      %v1452 = vmul.f32 %v1412, 0.35355338
      %v1453 = vmul.f32 %v1430, 0.35355338
      %v1454 = vmul.f32 %v1448, 0.35355338
      %v1455 = vsel %vm900, %v1451, -inf
      %1456 = vmax.xlane.f32.xlu0 %v1455
      %v1457 = vpop.xlane.xlu0 %1456
      %v1458 = vsel %vm900, %v1452, -inf
      %1459 = vmax.xlane.f32.xlu0 %v1458
      %v1460 = vpop.xlane.xlu0 %1459
      %v1461 = vsel %vm900, %v1453, -inf
      %1462 = vmax.xlane.f32.xlu0 %v1461
      %v1463 = vpop.xlane.xlu0 %1462
      %v1464 = vsel %vm900, %v1454, -inf
      %1465 = vmax.xlane.f32.xlu0 %v1464
      %v1466 = vpop.xlane.xlu0 %1465
      %v1467 = vsub.f32 %v1451, %v1457
      %v1468 = vsub.f32 %v1452, %v1460
      %v1469 = vsub.f32 %v1453, %v1463
      %v1470 = vsub.f32 %v1454, %v1466
      %v1471 = vmul.f32 %v1467, 1.442695
      %v1472 = vpow.pop %v1471
      %v1473 = vmul.f32 %v1468, 1.442695
      %v1474 = vpow.pop %v1473
      %v1475 = vmul.f32 %v1469, 1.442695
      %v1476 = vpow.pop %v1475
      %v1477 = vmul.f32 %v1470, 1.442695
      %v1478 = vpow.pop %v1477
      %v1479 = vsel %vm900, %v1472, 0.0
      %1480 = vadd.xlane.f32.xlu0 %v1479
      %v1481 = vpop.xlane.xlu0 %1480
      %v1482 = vsel %vm900, %v1474, 0.0
      %1483 = vadd.xlane.f32.xlu0 %v1482
      %v1484 = vpop.xlane.xlu0 %1483
      %v1485 = vsel %vm900, %v1476, 0.0
      %1486 = vadd.xlane.f32.xlu0 %v1485
      %v1487 = vpop.xlane.xlu0 %1486
      %v1488 = vsel %vm900, %v1478, 0.0
      %1489 = vadd.xlane.f32.xlu0 %v1488
      %v1490 = vpop.xlane.xlu0 %1489
      %v1491 = vrcp.pop %v1481
      %v1492 = vmul.f32 %v1481, %v1491
      %v1493 = vsub.f32 1.0, %v1492
      %v1494 = vmul.f32 %v1491, %v1493
      %v1495 = vadd.f32 %v1491, %v1494
      %vm1496 = vweird.f32 %v1481
      %vm1497 = vweird.f32 %v1491
      %vm1498 = vmor %vm1496, %vm1497
      %v1499 = vsel %vm1498, %v1491, %v1495
      %v1500 = vand.u32 2147483647, %v1481
      %vm1501 = vcmp.eq.f32.partialorder %v1500, 8.507059e+37
      %v1502 = vand.u32 %v1481, 2147483648
      %v1503 = vor.u32 1.1754944e-38, %v1502
      %v1504 = vsel %vm1501, %v1503, %v1499
      %v1505 = vmul.f32 %v1472, %v1504
      %v1506 = vrcp.pop %v1484
      %v1507 = vmul.f32 %v1484, %v1506
      %v1508 = vsub.f32 1.0, %v1507
      %v1509 = vmul.f32 %v1506, %v1508
      %v1510 = vadd.f32 %v1506, %v1509
      %vm1511 = vweird.f32 %v1484
      %vm1512 = vweird.f32 %v1506
      %vm1513 = vmor %vm1511, %vm1512
      %v1514 = vsel %vm1513, %v1506, %v1510
      %v1515 = vand.u32 2147483647, %v1484
      %vm1516 = vcmp.eq.f32.partialorder %v1515, 8.507059e+37
      %v1517 = vand.u32 %v1484, 2147483648
      %v1518 = vor.u32 1.1754944e-38, %v1517
      %v1519 = vsel %vm1516, %v1518, %v1514
      %v1520 = vmul.f32 %v1474, %v1519
      %v1521 = vrcp.pop %v1487
      %v1522 = vmul.f32 %v1487, %v1521
      %v1523 = vsub.f32 1.0, %v1522
      %v1524 = vmul.f32 %v1521, %v1523
      %v1525 = vadd.f32 %v1521, %v1524
      %vm1526 = vweird.f32 %v1487
      %vm1527 = vweird.f32 %v1521
      %vm1528 = vmor %vm1526, %vm1527
      %v1529 = vsel %vm1528, %v1521, %v1525
      %v1530 = vand.u32 2147483647, %v1487
      %vm1531 = vcmp.eq.f32.partialorder %v1530, 8.507059e+37
      %v1532 = vand.u32 %v1487, 2147483648
      %v1533 = vor.u32 1.1754944e-38, %v1532
      %v1534 = vsel %vm1531, %v1533, %v1529
      %v1535 = vmul.f32 %v1476, %v1534
      %v1536 = vrcp.pop %v1490
      %v1537 = vmul.f32 %v1490, %v1536
      %v1538 = vsub.f32 1.0, %v1537
      %v1539 = vmul.f32 %v1536, %v1538
      %v1540 = vadd.f32 %v1536, %v1539
      %vm1541 = vweird.f32 %v1490
      %vm1542 = vweird.f32 %v1536
      %vm1543 = vmor %vm1541, %vm1542
      %v1544 = vsel %vm1543, %v1536, %v1540
      %v1545 = vand.u32 2147483647, %v1490
      %vm1546 = vcmp.eq.f32.partialorder %v1545, 8.507059e+37
      %v1547 = vand.u32 %v1490, 2147483648
      %v1548 = vor.u32 1.1754944e-38, %v1547
      %v1549 = vsel %vm1546, %v1548, %v1544
      %v1550 = vmul.f32 %v1478, %v1549
      %v1551 = vpack.c.bf16 %v1505, %v1505
      %v1552 = vpack.c.bf16 %v1520, %v1520
      %v1553 = vpack.c.bf16 %v1535, %v1535
      %v1554 = vpack.c.bf16 %v1550, %v1550
      %1555 = vrot.lane.b32.xlu0 %v1280, 112
      %v1556 = vpop.permute.xlu0 %1555
      %v1558 = vsel %vm900, %v1551, 0
      %v1561 = vsel %vm1008, %v1556, 0
      %1563 = vmatpush.bf16.msra.mxu0 0
      %1564 = vmatpush.bf16.msra.mxu0 0
      %1565 = vmatpush.bf16.msra.mxu0 0
      %1566 = vmatpush.bf16.msra.mxu0 0
      %1567 = vmatpush.bf16.msra.mxu0 0
      %1568 = vmatpush.bf16.msra.mxu0 0
      %1569 = vmatpush.bf16.msra.mxu0 0
      %1570 = vmatpush.bf16.msra.mxu0 %v1561
      %1571 = vmatmul.bf16.gmra.mxu0 %v1558
      %v1572 = vpop.f32.mrf.mxu0
      %v1573 = vadd.f32 0.0, %v1572
      %v1574 = vpop.f32.mrf.mxu0
      %1575 = vdwg.mxu0
      %1576 = vrot.lane.b32.xlu0 %v1304, 112
      %v1577 = vpop.permute.xlu0 %1576
      %v1579 = vsel %vm900, %v1552, 0
      %v1582 = vsel %vm1008, %v1577, 0
      %1584 = vmatpush.bf16.msra.mxu0 0
      %1585 = vmatpush.bf16.msra.mxu0 0
      %1586 = vmatpush.bf16.msra.mxu0 0
      %1587 = vmatpush.bf16.msra.mxu0 0
      %1588 = vmatpush.bf16.msra.mxu0 0
      %1589 = vmatpush.bf16.msra.mxu0 0
      %1590 = vmatpush.bf16.msra.mxu0 0
      %1591 = vmatpush.bf16.msra.mxu0 %v1582
      %1592 = vmatmul.bf16.gmra.mxu0 %v1579
      %v1593 = vpop.f32.mrf.mxu0
      %v1594 = vadd.f32 0.0, %v1593
      %v1595 = vpop.f32.mrf.mxu0
      %1596 = vdwg.mxu0
      %1597 = vrot.lane.b32.xlu0 %v1328, 112
      %v1598 = vpop.permute.xlu0 %1597
      %v1600 = vsel %vm900, %v1553, 0
      %v1603 = vsel %vm1008, %v1598, 0
      %1605 = vmatpush.bf16.msra.mxu0 0
      %1606 = vmatpush.bf16.msra.mxu0 0
      %1607 = vmatpush.bf16.msra.mxu0 0
      %1608 = vmatpush.bf16.msra.mxu0 0
      %1609 = vmatpush.bf16.msra.mxu0 0
      %1610 = vmatpush.bf16.msra.mxu0 0
      %1611 = vmatpush.bf16.msra.mxu0 0
      %1612 = vmatpush.bf16.msra.mxu0 %v1603
      %1613 = vmatmul.bf16.gmra.mxu0 %v1600
      %v1614 = vpop.f32.mrf.mxu0
      %v1615 = vadd.f32 0.0, %v1614
      %v1616 = vpop.f32.mrf.mxu0
      %1617 = vdwg.mxu0
      %1618 = vrot.lane.b32.xlu0 %v1352, 112
      %v1619 = vpop.permute.xlu0 %1618
      %v1621 = vsel %vm900, %v1554, 0
      %v1624 = vsel %vm1008, %v1619, 0
      %1626 = vmatpush.bf16.msra.mxu0 0
      %1627 = vmatpush.bf16.msra.mxu0 0
      %1628 = vmatpush.bf16.msra.mxu0 0
      %1629 = vmatpush.bf16.msra.mxu0 0
      %1630 = vmatpush.bf16.msra.mxu0 0
      %1631 = vmatpush.bf16.msra.mxu0 0
      %1632 = vmatpush.bf16.msra.mxu0 0
      %1633 = vmatpush.bf16.msra.mxu0 %v1624
      %1634 = vmatmul.bf16.gmra.mxu0 %v1621
      %v1635 = vpop.f32.mrf.mxu0
      %v1636 = vadd.f32 0.0, %v1635
      %v1637 = vpop.f32.mrf.mxu0
      %1638 = vdwg.mxu0
      %1639 = vrot.lane.b32.xlu0 %v1084, 104
      %v1640 = vpop.permute.xlu0 %1639
      %1641 = vrot.lane.b32.xlu0 %v1089, 104
      %v1642 = vpop.permute.xlu0 %1641
      %v1644 = vsel %vm828, %v1640, 0
      %v1647 = vsel %vm828, %v1642, 0
      %1649 = vmatpush.bf16.xpose.msra.mxu0 0
      %1650 = vmatpush.bf16.xpose.msra.mxu0 0
      %1651 = vmatpush.bf16.xpose.msra.mxu0 0
      %1652 = vmatpush.bf16.xpose.msra.mxu0 0
      %1653 = vmatpush.bf16.xpose.msra.mxu0 0
      %1654 = vmatpush.bf16.xpose.msra.mxu0 0
      %1655 = vmatpush.bf16.xpose.msra.mxu0 0
      %1656 = vmatpush.bf16.xpose.msra.mxu0 %v1647
      %1657 = vmatmul.bf16.gmra.mxu0 %v1644
      %v1658 = vpop.f32.mrf.mxu0
      %v1659 = vadd.f32 0.0, %v1658
      %v1660 = vpop.f32.mrf.mxu0
      %1661 = vdwg.mxu0
      %1662 = vrot.lane.b32.xlu0 %v1113, 104
      %v1663 = vpop.permute.xlu0 %1662
      %v1665 = vsel %vm828, %v1663, 0
      %1667 = vmatpush.bf16.xpose.msra.mxu0 0
      %1668 = vmatpush.bf16.xpose.msra.mxu0 0
      %1669 = vmatpush.bf16.xpose.msra.mxu0 0
      %1670 = vmatpush.bf16.xpose.msra.mxu0 0
      %1671 = vmatpush.bf16.xpose.msra.mxu0 0
      %1672 = vmatpush.bf16.xpose.msra.mxu0 0
      %1673 = vmatpush.bf16.xpose.msra.mxu0 0
      %1674 = vmatpush.bf16.xpose.msra.mxu0 %v1665
      %1675 = vmatmul.bf16.gmra.mxu0 %v1644
      %v1676 = vpop.f32.mrf.mxu0
      %v1677 = vadd.f32 0.0, %v1676
      %v1678 = vpop.f32.mrf.mxu0
      %1679 = vdwg.mxu0
      %1680 = vrot.lane.b32.xlu0 %v1134, 104
      %v1681 = vpop.permute.xlu0 %1680
      %v1683 = vsel %vm828, %v1681, 0
      %1685 = vmatpush.bf16.xpose.msra.mxu0 0
      %1686 = vmatpush.bf16.xpose.msra.mxu0 0
      %1687 = vmatpush.bf16.xpose.msra.mxu0 0
      %1688 = vmatpush.bf16.xpose.msra.mxu0 0
      %1689 = vmatpush.bf16.xpose.msra.mxu0 0
      %1690 = vmatpush.bf16.xpose.msra.mxu0 0
      %1691 = vmatpush.bf16.xpose.msra.mxu0 0
      %1692 = vmatpush.bf16.xpose.msra.mxu0 %v1683
      %1693 = vmatmul.bf16.gmra.mxu0 %v1644
      %v1694 = vpop.f32.mrf.mxu0
      %v1695 = vadd.f32 0.0, %v1694
      %v1696 = vpop.f32.mrf.mxu0
      %1697 = vdwg.mxu0
      %1698 = vrot.lane.b32.xlu0 %v1155, 104
      %v1699 = vpop.permute.xlu0 %1698
      %v1701 = vsel %vm828, %v1699, 0
      %1703 = vmatpush.bf16.xpose.msra.mxu0 0
      %1704 = vmatpush.bf16.xpose.msra.mxu0 0
      %1705 = vmatpush.bf16.xpose.msra.mxu0 0
      %1706 = vmatpush.bf16.xpose.msra.mxu0 0
      %1707 = vmatpush.bf16.xpose.msra.mxu0 0
      %1708 = vmatpush.bf16.xpose.msra.mxu0 0
      %1709 = vmatpush.bf16.xpose.msra.mxu0 0
      %1710 = vmatpush.bf16.xpose.msra.mxu0 %v1701
      %1711 = vmatmul.bf16.gmra.mxu0 %v1644
      %v1712 = vpop.f32.mrf.mxu0
      %v1713 = vadd.f32 0.0, %v1712
      %v1714 = vpop.f32.mrf.mxu0
      %1715 = vdwg.mxu0
      %v1716 = vmul.f32 %v1659, 0.35355338
      %v1717 = vmul.f32 %v1677, 0.35355338
      %v1718 = vmul.f32 %v1695, 0.35355338
      %v1719 = vmul.f32 %v1713, 0.35355338
      %v1720 = vsel %vm900, %v1716, -inf
      %1721 = vmax.xlane.f32.xlu0 %v1720
      %v1722 = vpop.xlane.xlu0 %1721
      %v1723 = vsel %vm900, %v1717, -inf
      %1724 = vmax.xlane.f32.xlu0 %v1723
      %v1725 = vpop.xlane.xlu0 %1724
      %v1726 = vsel %vm900, %v1718, -inf
      %1727 = vmax.xlane.f32.xlu0 %v1726
      %v1728 = vpop.xlane.xlu0 %1727
      %v1729 = vsel %vm900, %v1719, -inf
      %1730 = vmax.xlane.f32.xlu0 %v1729
      %v1731 = vpop.xlane.xlu0 %1730
      %v1732 = vsub.f32 %v1716, %v1722
      %v1733 = vsub.f32 %v1717, %v1725
      %v1734 = vsub.f32 %v1718, %v1728
      %v1735 = vsub.f32 %v1719, %v1731
      %v1736 = vmul.f32 %v1732, 1.442695
      %v1737 = vpow.pop %v1736
      %v1738 = vmul.f32 %v1733, 1.442695
      %v1739 = vpow.pop %v1738
      %v1740 = vmul.f32 %v1734, 1.442695
      %v1741 = vpow.pop %v1740
      %v1742 = vmul.f32 %v1735, 1.442695
      %v1743 = vpow.pop %v1742
      %v1744 = vsel %vm900, %v1737, 0.0
      %1745 = vadd.xlane.f32.xlu0 %v1744
      %v1746 = vpop.xlane.xlu0 %1745
      %v1747 = vsel %vm900, %v1739, 0.0
      %1748 = vadd.xlane.f32.xlu0 %v1747
      %v1749 = vpop.xlane.xlu0 %1748
      %v1750 = vsel %vm900, %v1741, 0.0
      %1751 = vadd.xlane.f32.xlu0 %v1750
      %v1752 = vpop.xlane.xlu0 %1751
      %v1753 = vsel %vm900, %v1743, 0.0
      %1754 = vadd.xlane.f32.xlu0 %v1753
      %v1755 = vpop.xlane.xlu0 %1754
      %v1756 = vrcp.pop %v1746
      %v1757 = vmul.f32 %v1746, %v1756
      %v1758 = vsub.f32 1.0, %v1757
      %v1759 = vmul.f32 %v1756, %v1758
      %v1760 = vadd.f32 %v1756, %v1759
      %vm1761 = vweird.f32 %v1746
      %vm1762 = vweird.f32 %v1756
      %vm1763 = vmor %vm1761, %vm1762
      %v1764 = vsel %vm1763, %v1756, %v1760
      %v1765 = vand.u32 2147483647, %v1746
      %vm1766 = vcmp.eq.f32.partialorder %v1765, 8.507059e+37
      %v1767 = vand.u32 %v1746, 2147483648
      %v1768 = vor.u32 1.1754944e-38, %v1767
      %v1769 = vsel %vm1766, %v1768, %v1764
      %v1770 = vmul.f32 %v1737, %v1769
      %v1771 = vrcp.pop %v1749
      %v1772 = vmul.f32 %v1749, %v1771
      %v1773 = vsub.f32 1.0, %v1772
      %v1774 = vmul.f32 %v1771, %v1773
      %v1775 = vadd.f32 %v1771, %v1774
      %vm1776 = vweird.f32 %v1749
      %vm1777 = vweird.f32 %v1771
      %vm1778 = vmor %vm1776, %vm1777
      %v1779 = vsel %vm1778, %v1771, %v1775
      %v1780 = vand.u32 2147483647, %v1749
      %vm1781 = vcmp.eq.f32.partialorder %v1780, 8.507059e+37
      %v1782 = vand.u32 %v1749, 2147483648
      %v1783 = vor.u32 1.1754944e-38, %v1782
      %v1784 = vsel %vm1781, %v1783, %v1779
      %v1785 = vmul.f32 %v1739, %v1784
      %v1786 = vrcp.pop %v1752
      %v1787 = vmul.f32 %v1752, %v1786
      %v1788 = vsub.f32 1.0, %v1787
      %v1789 = vmul.f32 %v1786, %v1788
      %v1790 = vadd.f32 %v1786, %v1789
      %vm1791 = vweird.f32 %v1752
      %vm1792 = vweird.f32 %v1786
      %vm1793 = vmor %vm1791, %vm1792
      %v1794 = vsel %vm1793, %v1786, %v1790
      %v1795 = vand.u32 2147483647, %v1752
      %vm1796 = vcmp.eq.f32.partialorder %v1795, 8.507059e+37
      %v1797 = vand.u32 %v1752, 2147483648
      %v1798 = vor.u32 1.1754944e-38, %v1797
      %v1799 = vsel %vm1796, %v1798, %v1794
      %v1800 = vmul.f32 %v1741, %v1799
      %v1801 = vrcp.pop %v1755
      %v1802 = vmul.f32 %v1755, %v1801
      %v1803 = vsub.f32 1.0, %v1802
      %v1804 = vmul.f32 %v1801, %v1803
      %v1805 = vadd.f32 %v1801, %v1804
      %vm1806 = vweird.f32 %v1755
      %vm1807 = vweird.f32 %v1801
      %vm1808 = vmor %vm1806, %vm1807
      %v1809 = vsel %vm1808, %v1801, %v1805
      %v1810 = vand.u32 2147483647, %v1755
      %vm1811 = vcmp.eq.f32.partialorder %v1810, 8.507059e+37
      %v1812 = vand.u32 %v1755, 2147483648
      %v1813 = vor.u32 1.1754944e-38, %v1812
      %v1814 = vsel %vm1811, %v1813, %v1809
      %v1815 = vmul.f32 %v1743, %v1814
      %v1816 = vpack.c.bf16 %v1770, %v1770
      %v1817 = vpack.c.bf16 %v1785, %v1785
      %v1818 = vpack.c.bf16 %v1800, %v1800
      %v1819 = vpack.c.bf16 %v1815, %v1815
      %1820 = vrot.lane.b32.xlu0 %v1280, 104
      %v1821 = vpop.permute.xlu0 %1820
      %v1823 = vsel %vm900, %v1816, 0
      %v1826 = vsel %vm1008, %v1821, 0
      %1828 = vmatpush.bf16.msra.mxu0 0
      %1829 = vmatpush.bf16.msra.mxu0 0
      %1830 = vmatpush.bf16.msra.mxu0 0
      %1831 = vmatpush.bf16.msra.mxu0 0
      %1832 = vmatpush.bf16.msra.mxu0 0
      %1833 = vmatpush.bf16.msra.mxu0 0
      %1834 = vmatpush.bf16.msra.mxu0 0
      %1835 = vmatpush.bf16.msra.mxu0 %v1826
      %1836 = vmatmul.bf16.gmra.mxu0 %v1823
      %v1837 = vpop.f32.mrf.mxu0
      %v1838 = vadd.f32 0.0, %v1837
      %v1839 = vpop.f32.mrf.mxu0
      %1840 = vdwg.mxu0
      %1841 = vrot.lane.b32.xlu0 %v1304, 104
      %v1842 = vpop.permute.xlu0 %1841
      %v1844 = vsel %vm900, %v1817, 0
      %v1847 = vsel %vm1008, %v1842, 0
      %1849 = vmatpush.bf16.msra.mxu0 0
      %1850 = vmatpush.bf16.msra.mxu0 0
      %1851 = vmatpush.bf16.msra.mxu0 0
      %1852 = vmatpush.bf16.msra.mxu0 0
      %1853 = vmatpush.bf16.msra.mxu0 0
      %1854 = vmatpush.bf16.msra.mxu0 0
      %1855 = vmatpush.bf16.msra.mxu0 0
      %1856 = vmatpush.bf16.msra.mxu0 %v1847
      %1857 = vmatmul.bf16.gmra.mxu0 %v1844
      %v1858 = vpop.f32.mrf.mxu0
      %v1859 = vadd.f32 0.0, %v1858
      %v1860 = vpop.f32.mrf.mxu0
      %1861 = vdwg.mxu0
      %1862 = vrot.lane.b32.xlu0 %v1328, 104
      %v1863 = vpop.permute.xlu0 %1862
      %v1865 = vsel %vm900, %v1818, 0
      %v1868 = vsel %vm1008, %v1863, 0
      %1870 = vmatpush.bf16.msra.mxu0 0
      %1871 = vmatpush.bf16.msra.mxu0 0
      %1872 = vmatpush.bf16.msra.mxu0 0
      %1873 = vmatpush.bf16.msra.mxu0 0
      %1874 = vmatpush.bf16.msra.mxu0 0
      %1875 = vmatpush.bf16.msra.mxu0 0
      %1876 = vmatpush.bf16.msra.mxu0 0
      %1877 = vmatpush.bf16.msra.mxu0 %v1868
      %1878 = vmatmul.bf16.gmra.mxu0 %v1865
      %v1879 = vpop.f32.mrf.mxu0
      %v1880 = vadd.f32 0.0, %v1879
      %v1881 = vpop.f32.mrf.mxu0
      %1882 = vdwg.mxu0
      %1883 = vrot.lane.b32.xlu0 %v1352, 104
      %v1884 = vpop.permute.xlu0 %1883
      %v1886 = vsel %vm900, %v1819, 0
      %v1889 = vsel %vm1008, %v1884, 0
      %1891 = vmatpush.bf16.msra.mxu0 0
      %1892 = vmatpush.bf16.msra.mxu0 0
      %1893 = vmatpush.bf16.msra.mxu0 0
      %1894 = vmatpush.bf16.msra.mxu0 0
      %1895 = vmatpush.bf16.msra.mxu0 0
      %1896 = vmatpush.bf16.msra.mxu0 0
      %1897 = vmatpush.bf16.msra.mxu0 0
      %1898 = vmatpush.bf16.msra.mxu0 %v1889
      %1899 = vmatmul.bf16.gmra.mxu0 %v1886
      %v1900 = vpop.f32.mrf.mxu0
      %v1901 = vadd.f32 0.0, %v1900
      %v1902 = vpop.f32.mrf.mxu0
      %1903 = vdwg.mxu0
      %1908 = vrot.lane.b32.xlu0 %v1299, 8
      %v1909 = vpop.permute.xlu0 %1908
      %1910 = vrot.lane.b32.xlu0 %v1323, 8
      %v1911 = vpop.permute.xlu0 %1910
      %1912 = vrot.lane.b32.xlu0 %v1347, 8
      %v1913 = vpop.permute.xlu0 %1912
      %1914 = vrot.lane.b32.xlu0 %v1371, 8
      %v1915 = vpop.permute.xlu0 %1914
      %1924 = vrot.lane.b32.xlu0 %v1573, 16
      %v1925 = vpop.permute.xlu0 %1924
      %1926 = vrot.lane.b32.xlu0 %v1594, 16
      %v1927 = vpop.permute.xlu0 %1926
      %1928 = vrot.lane.b32.xlu0 %v1615, 16
      %v1929 = vpop.permute.xlu0 %1928
      %1930 = vrot.lane.b32.xlu0 %v1636, 16
      %v1931 = vpop.permute.xlu0 %1930
      %1940 = vrot.lane.b32.xlu0 %v1838, 24
      %v1941 = vpop.permute.xlu0 %1940
      %1942 = vrot.lane.b32.xlu0 %v1859, 24
      %v1943 = vpop.permute.xlu0 %1942
      %1944 = vrot.lane.b32.xlu0 %v1880, 24
      %v1945 = vpop.permute.xlu0 %1944
      %1946 = vrot.lane.b32.xlu0 %v1901, 24
      %v1947 = vpop.permute.xlu0 %1946
      %v1952 = vsel %vm828, %v1022, %v1909
      %v1953 = vsel %vm828, %v1041, %v1911
      %v1954 = vsel %vm828, %v1060, %v1913
      %v1955 = vsel %vm828, %v1079, %v1915
      %vm1956 = vcmask 130048
      %v1957 = vsel %vm1956, %v1952, %v1925
      %v1958 = vsel %vm1956, %v1953, %v1927
      %v1959 = vsel %vm1956, %v1954, %v1929
      %v1960 = vsel %vm1956, %v1955, %v1931
      %vm1961 = vcmask 195584
      %v1962 = vsel %vm1961, %v1957, %v1941
      %v1963 = vsel %vm1961, %v1958, %v1943
      %v1964 = vsel %vm1961, %v1959, %v1945
      %v1965 = vsel %vm1961, %v1960, %v1947
      %v1966 = vpack.c.bf16 %v1962, %v1962
      %v1967 = vpack.c.bf16 %v1963, %v1963
      %v1968 = vpack.c.bf16 %v1964, %v1964
      %v1969 = vpack.c.bf16 %v1965, %v1965
      %v1971 = vperm.slane %v613, 0
      %v1977 = vunpack.c.l.b16 %v609
      %v1978 = vunpack.c.l.b16 %v610
      %v1979 = vunpack.c.l.b16 %v611
      %v1980 = vunpack.c.l.b16 %v612
      %v1981 = vpack.c.b16 %v1978, %v1977
      %v1982 = vpack.c.b16 %v1980, %v1979
      %v1986 = vsel %vm656, %v1966, 0
      %1988 = vmatpush.bf16.msra.mxu0 0
      %1989 = vmatpush.bf16.msra.mxu0 0
      %1990 = vmatpush.bf16.msra.mxu0 0
      %1991 = vmatpush.bf16.msra.mxu0 0
      %1992 = vmatpush.bf16.msra.mxu0 0
      %1993 = vmatpush.bf16.msra.mxu0 0
      %1994 = vmatpush.bf16.msra.mxu0 %v1982
      %1995 = vmatpush.bf16.msra.mxu0 %v1981
      %1996 = vmatmul.bf16.gmra.mxu0 %v1986
      %v1997 = vpop.f32.mrf.mxu0
      %v1998 = vadd.f32 %v1971, %v1997
      %v1999 = vpop.f32.mrf.mxu0
      %2000 = vdwg.mxu0
      %v2002 = vsel %vm656, %v1967, 0
      %2004 = vmatpush.bf16.msra.mxu0 0
      %2005 = vmatpush.bf16.msra.mxu0 0
      %2006 = vmatpush.bf16.msra.mxu0 0
      %2007 = vmatpush.bf16.msra.mxu0 0
      %2008 = vmatpush.bf16.msra.mxu0 0
      %2009 = vmatpush.bf16.msra.mxu0 0
      %2010 = vmatpush.bf16.msra.mxu0 %v1982
      %2011 = vmatpush.bf16.msra.mxu0 %v1981
      %2012 = vmatmul.bf16.gmra.mxu0 %v2002
      %v2013 = vpop.f32.mrf.mxu0
      %v2014 = vadd.f32 %v1971, %v2013
      %v2015 = vpop.f32.mrf.mxu0
      %2016 = vdwg.mxu0
      %v2018 = vsel %vm656, %v1968, 0
      %2020 = vmatpush.bf16.msra.mxu0 0
      %2021 = vmatpush.bf16.msra.mxu0 0
      %2022 = vmatpush.bf16.msra.mxu0 0
      %2023 = vmatpush.bf16.msra.mxu0 0
      %2024 = vmatpush.bf16.msra.mxu0 0
      %2025 = vmatpush.bf16.msra.mxu0 0
      %2026 = vmatpush.bf16.msra.mxu0 %v1982
      %2027 = vmatpush.bf16.msra.mxu0 %v1981
      %2028 = vmatmul.bf16.gmra.mxu0 %v2018
      %v2029 = vpop.f32.mrf.mxu0
      %v2030 = vadd.f32 %v1971, %v2029
      %v2031 = vpop.f32.mrf.mxu0
      %2032 = vdwg.mxu0
      %v2034 = vsel %vm656, %v1969, 0
      %2036 = vmatpush.bf16.msra.mxu0 0
      %2037 = vmatpush.bf16.msra.mxu0 0
      %2038 = vmatpush.bf16.msra.mxu0 0
      %2039 = vmatpush.bf16.msra.mxu0 0
      %2040 = vmatpush.bf16.msra.mxu0 0
      %2041 = vmatpush.bf16.msra.mxu0 0
      %2042 = vmatpush.bf16.msra.mxu0 %v1982
      %2043 = vmatpush.bf16.msra.mxu0 %v1981
      %2044 = vmatmul.bf16.gmra.mxu0 %v2034
      %v2045 = vpop.f32.mrf.mxu0
      %v2046 = vadd.f32 %v1971, %v2045
      %v2047 = vpop.f32.mrf.mxu0
      %2048 = vdwg.mxu0
      %v2049 = vadd.f32 %v635, %v1998
      %v2050 = vadd.f32 %v635, %v2014
      %v2051 = vadd.f32 %v635, %v2030
      %v2052 = vadd.f32 %v635, %v2046
      %v2053 = vmul.f32 %v2049, %v2049
      %v2054 = vmul.f32 %v2050, %v2050
      %v2055 = vmul.f32 %v2051, %v2051
      %v2056 = vmul.f32 %v2052, %v2052
      %v2057 = vsel %vm656, %v2053, 0.0
      %2058 = vadd.xlane.f32.xlu0 %v2057
      %v2059 = vpop.xlane.xlu0 %2058
      %v2060 = vsel %vm656, %v2054, 0.0
      %2061 = vadd.xlane.f32.xlu0 %v2060
      %v2062 = vpop.xlane.xlu0 %2061
      %v2063 = vsel %vm656, %v2055, 0.0
      %2064 = vadd.xlane.f32.xlu0 %v2063
      %v2065 = vpop.xlane.xlu0 %2064
      %v2066 = vsel %vm656, %v2056, 0.0
      %2067 = vadd.xlane.f32.xlu0 %v2066
      %v2068 = vpop.xlane.xlu0 %2067
      %v2069 = vrcp.pop 32.0
      %v2070 = vmul.f32 32.0, %v2069
      %v2071 = vsub.f32 1.0, %v2070
      %v2072 = vmul.f32 %v2069, %v2071
      %v2073 = vadd.f32 %v2069, %v2072
      %vm2074 = vweird.f32 %v2069
      %v2075 = vsel %vm2074, %v2069, %v2073
      %v2076 = vmul.f32 %v2059, %v2075
      %v2077 = vmul.f32 %v2062, %v2075
      %v2078 = vmul.f32 %v2065, %v2075
      %v2079 = vmul.f32 %v2068, %v2075
      %v2080 = vadd.f32 %v2076, 1e-06
      %v2081 = vadd.f32 %v2077, 1e-06
      %v2082 = vadd.f32 %v2078, 1e-06
      %v2083 = vadd.f32 %v2079, 1e-06
      %v2084 = vrsqrt.pop %v2080
      %v2085 = vmul.f32 %v2084, %v2080
      %v2086 = vmul.f32 %v2085, %v2084
      %v2087 = vmul.f32 0.5, %v2086
      %v2088 = vsub.f32 1.5, %v2087
      %v2089 = vmul.f32 %v2084, %v2088
      %vm2090 = vweird.f32 %v2080
      %vm2091 = vweird.f32 %v2084
      %vm2092 = vmor %vm2090, %vm2091
      %v2093 = vsel %vm2092, %v2084, %v2089
      %v2094 = vrsqrt.pop %v2081
      %v2095 = vmul.f32 %v2094, %v2081
      %v2096 = vmul.f32 %v2095, %v2094
      %v2097 = vmul.f32 0.5, %v2096
      %v2098 = vsub.f32 1.5, %v2097
      %v2099 = vmul.f32 %v2094, %v2098
      %vm2100 = vweird.f32 %v2081
      %vm2101 = vweird.f32 %v2094
      %vm2102 = vmor %vm2100, %vm2101
      %v2103 = vsel %vm2102, %v2094, %v2099
      %v2104 = vrsqrt.pop %v2082
      %v2105 = vmul.f32 %v2104, %v2082
      %v2106 = vmul.f32 %v2105, %v2104
      %v2107 = vmul.f32 0.5, %v2106
      %v2108 = vsub.f32 1.5, %v2107
      %v2109 = vmul.f32 %v2104, %v2108
      %vm2110 = vweird.f32 %v2082
      %vm2111 = vweird.f32 %v2104
      %vm2112 = vmor %vm2110, %vm2111
      %v2113 = vsel %vm2112, %v2104, %v2109
      %v2114 = vrsqrt.pop %v2083
      %v2115 = vmul.f32 %v2114, %v2083
      %v2116 = vmul.f32 %v2115, %v2114
      %v2117 = vmul.f32 0.5, %v2116
      %v2118 = vsub.f32 1.5, %v2117
      %v2119 = vmul.f32 %v2114, %v2118
      %vm2120 = vweird.f32 %v2083
      %vm2121 = vweird.f32 %v2114
      %vm2122 = vmor %vm2120, %vm2121
      %v2123 = vsel %vm2122, %v2114, %v2119
      %v2124 = vmul.f32 %v2049, %v2093
      %v2125 = vmul.f32 %v2050, %v2103
      %v2126 = vmul.f32 %v2051, %v2113
      %v2127 = vmul.f32 %v2052, %v2123
      %v2129 = vperm.slane %v614, 0
      %v2131 = vmul.f32 %v2124, %v2129
      %v2132 = vmul.f32 %v2125, %v2129
      %v2133 = vmul.f32 %v2126, %v2129
      %v2134 = vmul.f32 %v2127, %v2129
      %v2135 = vpack.c.bf16 %v2131, %v2131
      %v2136 = vpack.c.bf16 %v2132, %v2132
      %v2137 = vpack.c.bf16 %v2133, %v2133
      %v2138 = vpack.c.bf16 %v2134, %v2134
      %v2140 = vperm.slane %v619, 0
      %v2146 = vunpack.c.l.b16 %v615
      %v2147 = vunpack.c.l.b16 %v616
      %v2148 = vunpack.c.l.b16 %v617
      %v2149 = vunpack.c.l.b16 %v618
      %v2150 = vpack.c.b16 %v2147, %v2146
      %v2151 = vpack.c.b16 %v2149, %v2148
      %v2155 = vsel %vm656, %v2135, 0
      %2157 = vmatpush.bf16.msra.mxu0 0
      %2158 = vmatpush.bf16.msra.mxu0 0
      %2159 = vmatpush.bf16.msra.mxu0 0
      %2160 = vmatpush.bf16.msra.mxu0 0
      %2161 = vmatpush.bf16.msra.mxu0 0
      %2162 = vmatpush.bf16.msra.mxu0 0
      %2163 = vmatpush.bf16.msra.mxu0 %v2151
      %2164 = vmatpush.bf16.msra.mxu0 %v2150
      %2165 = vmatmul.bf16.gmra.mxu0 %v2155
      %v2166 = vpop.f32.mrf.mxu0
      %v2167 = vadd.f32 %v2140, %v2166
      %v2168 = vpop.f32.mrf.mxu0
      %2169 = vdwg.mxu0
      %v2171 = vsel %vm656, %v2136, 0
      %2173 = vmatpush.bf16.msra.mxu0 0
      %2174 = vmatpush.bf16.msra.mxu0 0
      %2175 = vmatpush.bf16.msra.mxu0 0
      %2176 = vmatpush.bf16.msra.mxu0 0
      %2177 = vmatpush.bf16.msra.mxu0 0
      %2178 = vmatpush.bf16.msra.mxu0 0
      %2179 = vmatpush.bf16.msra.mxu0 %v2151
      %2180 = vmatpush.bf16.msra.mxu0 %v2150
      %2181 = vmatmul.bf16.gmra.mxu0 %v2171
      %v2182 = vpop.f32.mrf.mxu0
      %v2183 = vadd.f32 %v2140, %v2182
      %v2184 = vpop.f32.mrf.mxu0
      %2185 = vdwg.mxu0
      %v2187 = vsel %vm656, %v2137, 0
      %2189 = vmatpush.bf16.msra.mxu0 0
      %2190 = vmatpush.bf16.msra.mxu0 0
      %2191 = vmatpush.bf16.msra.mxu0 0
      %2192 = vmatpush.bf16.msra.mxu0 0
      %2193 = vmatpush.bf16.msra.mxu0 0
      %2194 = vmatpush.bf16.msra.mxu0 0
      %2195 = vmatpush.bf16.msra.mxu0 %v2151
      %2196 = vmatpush.bf16.msra.mxu0 %v2150
      %2197 = vmatmul.bf16.gmra.mxu0 %v2187
      %v2198 = vpop.f32.mrf.mxu0
      %v2199 = vadd.f32 %v2140, %v2198
      %v2200 = vpop.f32.mrf.mxu0
      %2201 = vdwg.mxu0
      %v2203 = vsel %vm656, %v2138, 0
      %2205 = vmatpush.bf16.msra.mxu0 0
      %2206 = vmatpush.bf16.msra.mxu0 0
      %2207 = vmatpush.bf16.msra.mxu0 0
      %2208 = vmatpush.bf16.msra.mxu0 0
      %2209 = vmatpush.bf16.msra.mxu0 0
      %2210 = vmatpush.bf16.msra.mxu0 0
      %2211 = vmatpush.bf16.msra.mxu0 %v2151
      %2212 = vmatpush.bf16.msra.mxu0 %v2150
      %2213 = vmatmul.bf16.gmra.mxu0 %v2203
      %v2214 = vpop.f32.mrf.mxu0
      %v2215 = vadd.f32 %v2140, %v2214
      %v2216 = vpop.f32.mrf.mxu0
      %2217 = vdwg.mxu0
      %v2219 = vperm.slane %v624, 0
      %v2225 = vunpack.c.l.b16 %v620
      %v2226 = vunpack.c.l.b16 %v621
      %v2227 = vunpack.c.l.b16 %v622
      %v2228 = vunpack.c.l.b16 %v623
      %v2229 = vpack.c.b16 %v2226, %v2225
      %v2230 = vpack.c.b16 %v2228, %v2227
      %2233 = vmatpush.bf16.msra.mxu0 0
      %2234 = vmatpush.bf16.msra.mxu0 0
      %2235 = vmatpush.bf16.msra.mxu0 0
      %2236 = vmatpush.bf16.msra.mxu0 0
      %2237 = vmatpush.bf16.msra.mxu0 0
      %2238 = vmatpush.bf16.msra.mxu0 0
      %2239 = vmatpush.bf16.msra.mxu0 %v2230
      %2240 = vmatpush.bf16.msra.mxu0 %v2229
      %2241 = vmatmul.bf16.gmra.mxu0 %v2155
      %v2242 = vpop.f32.mrf.mxu0
      %v2243 = vadd.f32 %v2219, %v2242
      %v2244 = vpop.f32.mrf.mxu0
      %2245 = vdwg.mxu0
      %2246 = vmatpush.bf16.msra.mxu0 0
      %2247 = vmatpush.bf16.msra.mxu0 0
      %2248 = vmatpush.bf16.msra.mxu0 0
      %2249 = vmatpush.bf16.msra.mxu0 0
      %2250 = vmatpush.bf16.msra.mxu0 0
      %2251 = vmatpush.bf16.msra.mxu0 0
      %2252 = vmatpush.bf16.msra.mxu0 %v2230
      %2253 = vmatpush.bf16.msra.mxu0 %v2229
      %2254 = vmatmul.bf16.gmra.mxu0 %v2171
      %v2255 = vpop.f32.mrf.mxu0
      %v2256 = vadd.f32 %v2219, %v2255
      %v2257 = vpop.f32.mrf.mxu0
      %2258 = vdwg.mxu0
      %2259 = vmatpush.bf16.msra.mxu0 0
      %2260 = vmatpush.bf16.msra.mxu0 0
      %2261 = vmatpush.bf16.msra.mxu0 0
      %2262 = vmatpush.bf16.msra.mxu0 0
      %2263 = vmatpush.bf16.msra.mxu0 0
      %2264 = vmatpush.bf16.msra.mxu0 0
      %2265 = vmatpush.bf16.msra.mxu0 %v2230
      %2266 = vmatpush.bf16.msra.mxu0 %v2229
      %2267 = vmatmul.bf16.gmra.mxu0 %v2187
      %v2268 = vpop.f32.mrf.mxu0
      %v2269 = vadd.f32 %v2219, %v2268
      %v2270 = vpop.f32.mrf.mxu0
      %2271 = vdwg.mxu0
      %2272 = vmatpush.bf16.msra.mxu0 0
      %2273 = vmatpush.bf16.msra.mxu0 0
      %2274 = vmatpush.bf16.msra.mxu0 0
      %2275 = vmatpush.bf16.msra.mxu0 0
      %2276 = vmatpush.bf16.msra.mxu0 0
      %2277 = vmatpush.bf16.msra.mxu0 0
      %2278 = vmatpush.bf16.msra.mxu0 %v2230
      %2279 = vmatpush.bf16.msra.mxu0 %v2229
      %2280 = vmatmul.bf16.gmra.mxu0 %v2203
      %v2281 = vpop.f32.mrf.mxu0
      %v2282 = vadd.f32 %v2219, %v2281
      %v2283 = vpop.f32.mrf.mxu0
      %2284 = vdwg.mxu0
      %v2285 = vxor.u32 %v2167, 2147483648
      %v2286 = vxor.u32 %v2183, 2147483648
      %v2287 = vxor.u32 %v2199, 2147483648
      %v2288 = vxor.u32 %v2215, 2147483648
      %v2289 = vmul.f32 %v2285, 1.442695
      %v2290 = vpow.pop %v2289
      %v2291 = vmul.f32 %v2286, 1.442695
      %v2292 = vpow.pop %v2291
      %v2293 = vmul.f32 %v2287, 1.442695
      %v2294 = vpow.pop %v2293
      %v2295 = vmul.f32 %v2288, 1.442695
      %v2296 = vpow.pop %v2295
      %v2297 = vadd.f32 %v2290, 1.0
      %v2298 = vadd.f32 %v2292, 1.0
      %v2299 = vadd.f32 %v2294, 1.0
      %v2300 = vadd.f32 %v2296, 1.0
      %v2301 = vrcp.pop %v2297
      %v2302 = vmul.f32 %v2297, %v2301
      %v2303 = vsub.f32 1.0, %v2302
      %v2304 = vmul.f32 %v2301, %v2303
      %v2305 = vadd.f32 %v2301, %v2304
      %vm2306 = vweird.f32 %v2297
      %vm2307 = vweird.f32 %v2301
      %vm2308 = vmor %vm2306, %vm2307
      %v2309 = vsel %vm2308, %v2301, %v2305
      %v2310 = vand.u32 2147483647, %v2297
      %vm2311 = vcmp.eq.f32.partialorder %v2310, 8.507059e+37
      %v2312 = vand.u32 %v2297, 2147483648
      %v2313 = vor.u32 1.1754944e-38, %v2312
      %v2314 = vsel %vm2311, %v2313, %v2309
      %v2315 = vmul.f32 1.0, %v2314
      %v2316 = vrcp.pop %v2298
      %v2317 = vmul.f32 %v2298, %v2316
      %v2318 = vsub.f32 1.0, %v2317
      %v2319 = vmul.f32 %v2316, %v2318
      %v2320 = vadd.f32 %v2316, %v2319
      %vm2321 = vweird.f32 %v2298
      %vm2322 = vweird.f32 %v2316
      %vm2323 = vmor %vm2321, %vm2322
      %v2324 = vsel %vm2323, %v2316, %v2320
      %v2325 = vand.u32 2147483647, %v2298
      %vm2326 = vcmp.eq.f32.partialorder %v2325, 8.507059e+37
      %v2327 = vand.u32 %v2298, 2147483648
      %v2328 = vor.u32 1.1754944e-38, %v2327
      %v2329 = vsel %vm2326, %v2328, %v2324
      %v2330 = vmul.f32 1.0, %v2329
      %v2331 = vrcp.pop %v2299
      %v2332 = vmul.f32 %v2299, %v2331
      %v2333 = vsub.f32 1.0, %v2332
      %v2334 = vmul.f32 %v2331, %v2333
      %v2335 = vadd.f32 %v2331, %v2334
      %vm2336 = vweird.f32 %v2299
      %vm2337 = vweird.f32 %v2331
      %vm2338 = vmor %vm2336, %vm2337
      %v2339 = vsel %vm2338, %v2331, %v2335
      %v2340 = vand.u32 2147483647, %v2299
      %vm2341 = vcmp.eq.f32.partialorder %v2340, 8.507059e+37
      %v2342 = vand.u32 %v2299, 2147483648
      %v2343 = vor.u32 1.1754944e-38, %v2342
      %v2344 = vsel %vm2341, %v2343, %v2339
      %v2345 = vmul.f32 1.0, %v2344
      %v2346 = vrcp.pop %v2300
      %v2347 = vmul.f32 %v2300, %v2346
      %v2348 = vsub.f32 1.0, %v2347
      %v2349 = vmul.f32 %v2346, %v2348
      %v2350 = vadd.f32 %v2346, %v2349
      %vm2351 = vweird.f32 %v2300
      %vm2352 = vweird.f32 %v2346
      %vm2353 = vmor %vm2351, %vm2352
      %v2354 = vsel %vm2353, %v2346, %v2350
      %v2355 = vand.u32 2147483647, %v2300
      %vm2356 = vcmp.eq.f32.partialorder %v2355, 8.507059e+37
      %v2357 = vand.u32 %v2300, 2147483648
      %v2358 = vor.u32 1.1754944e-38, %v2357
      %v2359 = vsel %vm2356, %v2358, %v2354
      %v2360 = vmul.f32 1.0, %v2359
      %v2361 = vmul.f32 %v2167, %v2315
      %v2362 = vmul.f32 %v2183, %v2330
      %v2363 = vmul.f32 %v2199, %v2345
      %v2364 = vmul.f32 %v2215, %v2360
      %v2365 = vmul.f32 %v2361, %v2243
      %v2366 = vmul.f32 %v2362, %v2256
      %v2367 = vmul.f32 %v2363, %v2269
      %v2368 = vmul.f32 %v2364, %v2282
      %v2369 = vpack.c.bf16 %v2365, %v2365
      %v2370 = vpack.c.bf16 %v2366, %v2366
      %v2371 = vpack.c.bf16 %v2367, %v2367
      %v2372 = vpack.c.bf16 %v2368, %v2368
      %v2374 = vperm.slane %v633, 0
      %v2384 = vunpack.c.l.b16 %v625
      %v2385 = vunpack.c.l.b16 %v626
      %v2386 = vunpack.c.l.b16 %v627
      %v2387 = vunpack.c.l.b16 %v628
      %v2388 = vunpack.c.l.b16 %v629
      %v2389 = vunpack.c.l.b16 %v630
      %v2390 = vunpack.c.l.b16 %v631
      %v2391 = vunpack.c.l.b16 %v632
      %v2392 = vpack.c.b16 %v2385, %v2384
      %v2393 = vpack.c.b16 %v2387, %v2386
      %v2394 = vpack.c.b16 %v2389, %v2388
      %v2395 = vpack.c.b16 %v2391, %v2390
      %vm2400 = vcmask 523264
      %v2402 = vsel %vm2400, %v2369, 0
      %2404 = vmatpush.bf16.msra.mxu0 0
      %2405 = vmatpush.bf16.msra.mxu0 0
      %2406 = vmatpush.bf16.msra.mxu0 0
      %2407 = vmatpush.bf16.msra.mxu0 0
      %2408 = vmatpush.bf16.msra.mxu0 %v2395
      %2409 = vmatpush.bf16.msra.mxu0 %v2394
      %2410 = vmatpush.bf16.msra.mxu0 %v2393
      %2411 = vmatpush.bf16.msra.mxu0 %v2392
      %2412 = vmatmul.bf16.gmra.mxu0 %v2402
      %v2413 = vpop.f32.mrf.mxu0
      %v2414 = vadd.f32 %v2374, %v2413
      %v2415 = vpop.f32.mrf.mxu0
      %2416 = vdwg.mxu0
      %v2418 = vsel %vm2400, %v2370, 0
      %2420 = vmatpush.bf16.msra.mxu0 0
      %2421 = vmatpush.bf16.msra.mxu0 0
      %2422 = vmatpush.bf16.msra.mxu0 0
      %2423 = vmatpush.bf16.msra.mxu0 0
      %2424 = vmatpush.bf16.msra.mxu0 %v2395
      %2425 = vmatpush.bf16.msra.mxu0 %v2394
      %2426 = vmatpush.bf16.msra.mxu0 %v2393
      %2427 = vmatpush.bf16.msra.mxu0 %v2392
      %2428 = vmatmul.bf16.gmra.mxu0 %v2418
      %v2429 = vpop.f32.mrf.mxu0
      %v2430 = vadd.f32 %v2374, %v2429
      %v2431 = vpop.f32.mrf.mxu0
      %2432 = vdwg.mxu0
      %v2434 = vsel %vm2400, %v2371, 0
      %2436 = vmatpush.bf16.msra.mxu0 0
      %2437 = vmatpush.bf16.msra.mxu0 0
      %2438 = vmatpush.bf16.msra.mxu0 0
      %2439 = vmatpush.bf16.msra.mxu0 0
      %2440 = vmatpush.bf16.msra.mxu0 %v2395
      %2441 = vmatpush.bf16.msra.mxu0 %v2394
      %2442 = vmatpush.bf16.msra.mxu0 %v2393
      %2443 = vmatpush.bf16.msra.mxu0 %v2392
      %2444 = vmatmul.bf16.gmra.mxu0 %v2434
      %v2445 = vpop.f32.mrf.mxu0
      %v2446 = vadd.f32 %v2374, %v2445
      %v2447 = vpop.f32.mrf.mxu0
      %2448 = vdwg.mxu0
      %v2450 = vsel %vm2400, %v2372, 0
      %2452 = vmatpush.bf16.msra.mxu0 0
      %2453 = vmatpush.bf16.msra.mxu0 0
      %2454 = vmatpush.bf16.msra.mxu0 0
      %2455 = vmatpush.bf16.msra.mxu0 0
      %2456 = vmatpush.bf16.msra.mxu0 %v2395
      %2457 = vmatpush.bf16.msra.mxu0 %v2394
      %2458 = vmatpush.bf16.msra.mxu0 %v2393
      %2459 = vmatpush.bf16.msra.mxu0 %v2392
      %2460 = vmatmul.bf16.gmra.mxu0 %v2450
      %v2461 = vpop.f32.mrf.mxu0
      %v2462 = vadd.f32 %v2374, %v2461
      %v2463 = vpop.f32.mrf.mxu0
      %2464 = vdwg.mxu0
      %v2465 = vadd.f32 %v2131, %v2414
      %v2466 = vadd.f32 %v2132, %v2430
      %v2467 = vadd.f32 %v2133, %v2446
      %v2468 = vadd.f32 %v2134, %v2462
      %v2469 = vmul.f32 %v2465, %v2465
      %v2470 = vmul.f32 %v2466, %v2466
      %v2471 = vmul.f32 %v2467, %v2467
      %v2472 = vmul.f32 %v2468, %v2468
      %v2473 = vsel %vm656, %v2469, 0.0
      %2474 = vadd.xlane.f32.xlu0 %v2473
      %v2475 = vpop.xlane.xlu0 %2474
      %v2476 = vsel %vm656, %v2470, 0.0
      %2477 = vadd.xlane.f32.xlu0 %v2476
      %v2478 = vpop.xlane.xlu0 %2477
      %v2479 = vsel %vm656, %v2471, 0.0
      %2480 = vadd.xlane.f32.xlu0 %v2479
      %v2481 = vpop.xlane.xlu0 %2480
      %v2482 = vsel %vm656, %v2472, 0.0
      %2483 = vadd.xlane.f32.xlu0 %v2482
      %v2484 = vpop.xlane.xlu0 %2483
      %v2485 = vmul.f32 %v2475, %v2075
      %v2486 = vmul.f32 %v2478, %v2075
      %v2487 = vmul.f32 %v2481, %v2075
      %v2488 = vmul.f32 %v2484, %v2075
      %v2489 = vadd.f32 %v2485, 1e-06
      %v2490 = vadd.f32 %v2486, 1e-06
      %v2491 = vadd.f32 %v2487, 1e-06
      %v2492 = vadd.f32 %v2488, 1e-06
      %v2493 = vrsqrt.pop %v2489
      %v2494 = vmul.f32 %v2493, %v2489
      %v2495 = vmul.f32 %v2494, %v2493
      %v2496 = vmul.f32 0.5, %v2495
      %v2497 = vsub.f32 1.5, %v2496
      %v2498 = vmul.f32 %v2493, %v2497
      %vm2499 = vweird.f32 %v2489
      %vm2500 = vweird.f32 %v2493
      %vm2501 = vmor %vm2499, %vm2500
      %v2502 = vsel %vm2501, %v2493, %v2498
      %v2503 = vrsqrt.pop %v2490
      %v2504 = vmul.f32 %v2503, %v2490
      %v2505 = vmul.f32 %v2504, %v2503
      %v2506 = vmul.f32 0.5, %v2505
      %v2507 = vsub.f32 1.5, %v2506
      %v2508 = vmul.f32 %v2503, %v2507
      %vm2509 = vweird.f32 %v2490
      %vm2510 = vweird.f32 %v2503
      %vm2511 = vmor %vm2509, %vm2510
      %v2512 = vsel %vm2511, %v2503, %v2508
      %v2513 = vrsqrt.pop %v2491
      %v2514 = vmul.f32 %v2513, %v2491
      %v2515 = vmul.f32 %v2514, %v2513
      %v2516 = vmul.f32 0.5, %v2515
      %v2517 = vsub.f32 1.5, %v2516
      %v2518 = vmul.f32 %v2513, %v2517
      %vm2519 = vweird.f32 %v2491
      %vm2520 = vweird.f32 %v2513
      %vm2521 = vmor %vm2519, %vm2520
      %v2522 = vsel %vm2521, %v2513, %v2518
      %v2523 = vrsqrt.pop %v2492
      %v2524 = vmul.f32 %v2523, %v2492
      %v2525 = vmul.f32 %v2524, %v2523
      %v2526 = vmul.f32 0.5, %v2525
      %v2527 = vsub.f32 1.5, %v2526
      %v2528 = vmul.f32 %v2523, %v2527
      %vm2529 = vweird.f32 %v2492
      %vm2530 = vweird.f32 %v2523
      %vm2531 = vmor %vm2529, %vm2530
      %v2532 = vsel %vm2531, %v2523, %v2528
      %v2533 = vmul.f32 %v2465, %v2502
      %v2534 = vmul.f32 %v2466, %v2512
      %v2535 = vmul.f32 %v2467, %v2522
      %v2536 = vmul.f32 %v2468, %v2532
      %v2538 = vperm.slane %v634, 0
      %v2540 = vmul.f32 %v2533, %v2538
      %v2541 = vmul.f32 %v2534, %v2538
      %v2542 = vmul.f32 %v2535, %v2538
      %v2543 = vmul.f32 %v2536, %v2538
      %2544 = vst.msk [vmem:[%s592] sm:$0xff] %vm656, %v2540
      %2545 = vst.msk [vmem:[%s592 + $0x8] sm:$0xff] %vm656, %v2541
      %2546 = vst.msk [vmem:[%s592 + $0x10] sm:$0xff] %vm656, %v2542
      %2547 = vst.msk [vmem:[%s592 + $0x18] sm:$0xff] %vm656, %v2543
      %p2548 = scmp.lt.s32.totalorder %s29, 1
      %s2549 = scalar_select %p2548, %s29, 1
      %s2550 = smul.addr %s2549, 4
      %s2551 = smul.addr %s2550, 8
      %s2552 = scalar_lea.vmem %s18, %s2551
      // Predicated region
      $region93: #{block_forward.6} parent=91 // pred_check
        %p2553 = pneg %p435
      $region94: #{block_forward.6} parent=91 // pred_check_branch
        %2555 = sbr.rel (%p2553) target = $region96
      $region95: #{block_forward.6} parent=91 // pred_region
        _
      $region96: #{block_forward.6} parent=91 // pred_fallthru
        _
    $region92: #{block_forward.6} parent=5 // pred_fallthru
      _
    %p2556 = scmp.le.s32.totalorder 2, %s24
    // Predicated region
    $region97: #{block_forward.6} parent=5 // pred_check
      %p2557 = pneg %p2556
    $region98: #{block_forward.6} parent=5 // pred_check_branch
      %2559 = sbr.rel (%p2557) target = $region100
    $region99: #{block_forward.6} parent=5 // pred_region
      %s2560 = ssub.s32 %s24, 2
      // Predicated region
      $region101: #{block_forward.6} parent=99 // pred_check
        %p2561 = pneg %p441
      $region102: #{block_forward.6} parent=99 // pred_check_branch
        %2563 = sbr.rel (%p2561) target = $region104
      $region103: #{block_forward.6} parent=99 // pred_region
        %p2564 = scmp.lt.s32.totalorder %s30, 1
        %s2565 = scalar_select %p2564, %s30, 1
        %s2566 = smul.addr %s2565, 4
        %s2567 = smul.addr %s2566, 8
        %s2568 = scalar_lea.vmem %s18, %s2567
      $region104: #{block_forward.6} parent=99 // pred_fallthru
        _
    $region100: #{block_forward.6} parent=5 // pred_fallthru
      _
  $region6: #{block_forward.6} parent=0 // loop_footer
    %s28 = sadd.s32 1, %s24
  $region7: #{block_forward.6} parent=0 // loop_footer_branch
    %23 = sbr.rel target = $region3
  $region8: #{block_forward.6} parent=0 // loop_exit
    _

// kernel: block_forward.7
$region0: #{block_forward.7}
  #allocation0 [shape = 'u32[]', space=smem, size = 0x4, offset = 0x4, fixed_abs, tag = 'smem constant byte address 0x4 - core index']
  #allocation1 [shape = 'u32[72,128]{1,0:T(1,128)}', space=vmem, size = 0x9000, scoped, tag = 'internal scratch']
  %s0 = inlined_call_operand.smem [shape: u32[35], index: -1, kind: input, shape index: {}]
  %s1 = sld [smem:[%s0]]
  %s2 = scalar_lea.smem %s0, 1
  %s3 = sld [smem:[%s2]]
  %s4 = scalar_lea.smem %s0, 2
  %s5 = sld [smem:[%s4]]
  %s6 = scalar_lea.smem %s0, 3
  %s7 = sld [smem:[%s6]]
  %s8 = scalar_lea.smem %s0, 4
  %s9 = sld [smem:[%s8]]
  %s10 = scalar_lea.smem %s0, 5
  %s11 = sld [smem:[%s10]]
  %s12 = scalar_lea.smem %s0, 6
  %s13 = sld [smem:[%s12]]
  %s14 = scalar_lea.smem %s0, 7
  %s15 = sld [smem:[%s14]]
  %s16 = scalar_lea.smem %s0, 8
  %s17 = sld [smem:[%s16]]
  %s18 = scalar_lea.smem %s0, 9
  %s19 = sld [smem:[%s18]]
  %s20 = scalar_lea.smem %s0, 10
  %s21 = sld [smem:[%s20]]
  %s22 = scalar_lea.smem %s0, 11
  %s23 = sld [smem:[%s22]]
  %s24 = scalar_lea.smem %s0, 12
  %s25 = sld [smem:[%s24]]
  %s26 = scalar_lea.smem %s0, 13
  %s27 = sld [smem:[%s26]]
  %s28 = scalar_lea.smem %s0, 14
  %s29 = sld [smem:[%s28]]
  %s30 = scalar_lea.smem %s0, 15
  %s31 = sld [smem:[%s30]]
  %s32 = scalar_lea.smem %s0, 16
  %s33 = sld [smem:[%s32]]
  %s34 = scalar_lea.smem %s0, 17
  %s35 = sld [smem:[%s34]]
  %s36 = scalar_lea.smem %s0, 18
  %s37 = sld [smem:[%s36]]
  %s38 = scalar_lea.smem %s0, 19
  %s39 = sld [smem:[%s38]]
  %s40 = scalar_lea.smem %s0, 20
  %s41 = sld [smem:[%s40]]
  %s42 = scalar_lea.smem %s0, 21
  %s43 = sld [smem:[%s42]]
  %s44 = scalar_lea.smem %s0, 22
  %s45 = sld [smem:[%s44]]
  %s46 = scalar_lea.smem %s0, 23
  %s47 = sld [smem:[%s46]]
  %s48 = scalar_lea.smem %s0, 24
  %s49 = sld [smem:[%s48]]
  %s50 = scalar_lea.smem %s0, 25
  %s51 = sld [smem:[%s50]]
  %s52 = scalar_lea.smem %s0, 26
  %s53 = sld [smem:[%s52]]
  %s54 = scalar_lea.smem %s0, 27
  %s55 = sld [smem:[%s54]]
  %s56 = scalar_lea.smem %s0, 28
  %s57 = sld [smem:[%s56]]
  %s58 = scalar_lea.smem %s0, 29
  %s59 = sld [smem:[%s58]]
  %s60 = scalar_lea.smem %s0, 30
  %s61 = sld [smem:[%s60]]
  %s62 = scalar_lea.smem %s0, 31
  %s63 = sld [smem:[%s62]]
  %s64 = scalar_lea.smem %s0, 32
  %s65 = sld [smem:[%s64]]
  %s66 = scalar_lea.smem %s0, 33
  %s67 = sld [smem:[%s66]]
  %s68 = scalar_lea.smem %s0, 34
  %s69 = sld [smem:[%s68]]
  %s70 = sld [smem:[#allocation0]]
  $region201: #{block_forward.7} parent=0
    _
  %s72 = ssub.s32 1, %s70
  %s73 = scalar_select 0, %s72, %s70
  $region1: #{block_forward.7} parent=0
    #allocation2 [shape = 'u8[512]{0}', space=vmem, size = 0x400, scoped, tag = 'input window, operand 21, single buffered']
    #allocation3 [shape = 's32[2]{0}', space=sflag, size = 0x8, scoped, tag = 'scoped memory for block_forward.7']
    #allocation4 [shape = 's32[2]{0}', space=sflag, size = 0x8, scoped, tag = 'scoped memory for block_forward.7']
    #allocation5 [shape = 'u8[512]{0}', space=vmem, size = 0x400, scoped, tag = 'input window, operand 23, single buffered']
    #allocation6 [shape = 's32[1]{0}', space=sflag, size = 0x4, scoped, tag = 'scoped memory for block_forward.7']
    #allocation7 [shape = 'u8[512]{0}', space=vmem, size = 0x400, scoped, tag = 'input window, operand 25, single buffered']
    #allocation8 [shape = 'u8[512]{0}', space=vmem, size = 0x400, scoped, tag = 'input window, operand 26, single buffered']
    #allocation9 [shape = 's32[1]{0}', space=sflag, size = 0x4, scoped, tag = 'scoped memory for block_forward.7']
    #allocation10 [shape = 'u8[512]{0}', space=vmem, size = 0x400, scoped, tag = 'input window, operand 28, single buffered']
    #allocation11 [shape = 'u8[512]{0}', space=vmem, size = 0x400, scoped, tag = 'input window, operand 30, single buffered']
    #allocation12 [shape = 's32[1]{0}', space=sflag, size = 0x4, scoped, tag = 'scoped memory for block_forward.7']
    #allocation13 [shape = 'u8[512]{0}', space=vmem, size = 0x400, scoped, tag = 'input window, operand 32, single buffered']
    #allocation14 [shape = 'u8[512]{0}', space=vmem, size = 0x400, scoped, tag = 'input window, operand 33, single buffered']
    #allocation15 [shape = 's32[1]{0}', space=sflag, size = 0x4, scoped, tag = 'scoped memory for block_forward.7']
    #allocation16 [shape = 'u8[8192]{0}', space=vmem, size = 0x2000, scoped, tag = 'output window, operand 0']
    %74 = vsyncpa [#allocation3], 0
    %75 = vsyncpa [#allocation6], 0
    %76 = vsyncpa [#allocation9], 0
    %77 = vsyncpa [#allocation12], 0
    %78 = vsyncpa [#allocation15], 0
    %79 = vsyncpa [#allocation4], 0
    %s80 = scalar_lea.sflag [#allocation4], 1
    %81 = vsyncpa %s80, 0
    loop: start=0, step=1, limit=4
    $region2: #{block_forward.7} parent=1 // loop_pre_header
      _
    $region3: #{block_forward.7} parent=1 // loop_header
      %s83 = sphi 0, %s87
      %p84 = scmp.ge.s32.totalorder %s83, 4
      %s93 = sphi 0, %s95
      %s96 = sphi 0, %s93
      %s97 = sphi 0, %s96
      %s113 = sphi 0, %s97
      %s119 = sphi 0, %s121
      %s122 = sphi 0, %s119
      %s123 = sphi 0, %s122
      %s139 = sphi 0, %s123
      %s143 = sphi 0, %s143
      %s145 = sphi 0, %s143
      %s146 = sphi 0, %s145
      %s160 = sphi 0, %s146
      %s164 = sphi 0, %s164
      %s166 = sphi 0, %s164
      %s167 = sphi 0, %s166
      %s181 = sphi 0, %s167
      %s185 = sphi 0, %s185
      %s187 = sphi 0, %s185
      %s188 = sphi 0, %s187
      %s202 = sphi 0, %s188
      %s206 = sphi 0, %s206
      %s208 = sphi 0, %s206
      %s209 = sphi 0, %s208
      %s223 = sphi 0, %s209
      %s227 = sphi 0, %s227
      %s229 = sphi 0, %s227
      %s230 = sphi 0, %s229
      %s244 = sphi 0, %s230
      %s248 = sphi 0, %s248
      %s250 = sphi 0, %s248
      %s251 = sphi 0, %s250
      %s265 = sphi 0, %s251
      %s269 = sphi 0, %s269
      %s271 = sphi 0, %s269
      %s272 = sphi 0, %s271
      %s286 = sphi 0, %s272
      %s290 = sphi 0, %s290
      %s292 = sphi 0, %s290
      %s293 = sphi 0, %s292
      %s307 = sphi 0, %s293
      %s311 = sphi 0, %s311
      %s313 = sphi 0, %s311
      %s314 = sphi 0, %s313
      %s328 = sphi 0, %s314
      %s332 = sphi 0, %s332
      %s334 = sphi 0, %s332
      %s335 = sphi 0, %s334
      %s349 = sphi 0, %s335
      %s353 = sphi 0, %s353
      %s355 = sphi 0, %s353
      %s356 = sphi 0, %s355
      %s370 = sphi 0, %s356
      %s374 = sphi 0, %s374
      %s376 = sphi 0, %s374
      %s377 = sphi 0, %s376
      %s391 = sphi 0, %s377
      %s395 = sphi 0, %s395
      %s397 = sphi 0, %s395
      %s398 = sphi 0, %s397
      %s412 = sphi 0, %s398
      %s416 = sphi 0, %s416
      %s418 = sphi 0, %s416
      %s419 = sphi 0, %s418
      %s433 = sphi 0, %s419
      %s437 = sphi 0, %s437
      %s439 = sphi 0, %s437
      %s440 = sphi 0, %s439
      %s454 = sphi 0, %s440
      %s458 = sphi 0, %s458
      %s460 = sphi 0, %s458
      %s461 = sphi 0, %s460
      %s475 = sphi 0, %s461
      %s479 = sphi 0, %s479
      %s481 = sphi 0, %s479
      %s482 = sphi 0, %s481
      %s496 = sphi 0, %s482
      %s500 = sphi 0, %s500
      %s502 = sphi 0, %s500
      %s503 = sphi 0, %s502
      %s517 = sphi 0, %s503
      %s521 = sphi 0, %s521
      %s523 = sphi 0, %s521
      %s524 = sphi 0, %s523
      %s538 = sphi 0, %s524
      %s542 = sphi 0, %s542
      %s544 = sphi 0, %s542
      %s545 = sphi 0, %s544
      %s559 = sphi 0, %s545
      %s563 = sphi 0, %s563
      %s565 = sphi 0, %s563
      %s566 = sphi 0, %s565
      %s580 = sphi 0, %s566
      %s584 = sphi 0, %s584
      %s586 = sphi 0, %s584
      %s587 = sphi 0, %s586
      %s601 = sphi 0, %s587
      %s605 = sphi 0, %s605
      %s607 = sphi 0, %s605
      %s608 = sphi 0, %s607
      %s622 = sphi 0, %s608
      %s626 = sphi 0, %s626
      %s628 = sphi 0, %s626
      %s629 = sphi 0, %s628
      %s643 = sphi 0, %s629
      %s647 = sphi 0, %s647
      %s649 = sphi 0, %s647
      %s650 = sphi 0, %s649
      %s664 = sphi 0, %s650
      %s668 = sphi 0, %s668
      %s670 = sphi 0, %s668
      %s671 = sphi 0, %s670
      %s685 = sphi 0, %s671
      %s689 = sphi 0, %s689
      %s691 = sphi 0, %s689
      %s692 = sphi 0, %s691
      %s706 = sphi 0, %s692
      %s710 = sphi 0, %s710
      %s712 = sphi 0, %s710
      %s713 = sphi 0, %s712
      %s727 = sphi 0, %s713
      %s731 = sphi 0, %s731
      %s733 = sphi 0, %s731
      %s734 = sphi 0, %s733
      %s748 = sphi 0, %s734
      %s752 = sphi 0, %s752
      %s754 = sphi 0, %s752
      %s755 = sphi 0, %s754
      %s769 = sphi 0, %s755
      %s773 = sphi 0, %s773
      %s775 = sphi 0, %s773
      %s776 = sphi 0, %s775
      %s790 = sphi 0, %s776
      %s794 = sphi 0, %s794
      %s796 = sphi 0, %s794
      %s797 = sphi 0, %s796
      %s811 = sphi 0, %s797
      %s817 = sphi 0, %s819
      %s820 = sphi 0, %s817
      %s821 = sphi 0, %s820
      %s837 = sphi 0, %s821
    $region4: #{block_forward.7} parent=1 // loop_header_branch
      %86 = sbr.rel (%p84) target = $region8
    $region5: #{block_forward.7} parent=1 // loop_body
      %s88 = ssub.s32 %s83, 1
      %s89 = ssub.s32 %s83, 2
      %s90 = sadd.s32 %s83, 1
      %s91 = ssub.s32 %s83, %s90
      %p92 = scmp.eq.s32.totalorder %s91, 0
      %s94 = sadd.s32 %s93, 1
      %s95 = scalar_select %p92, %s93, %s94
      %p98 = pneg %p92
      %p99 = scmp.eq.s32.totalorder %s83, 1
      %p100 = por %p98, %p99
      %p101 = scmp.ne.s32.totalorder %s93, %s96
      %p102 = scmp.eq.s32.totalorder %s83, 0
      %p103 = por %p101, %p102
      %p104 = scmp.ne.s32.totalorder %s93, %s96
      %p105 = scmp.eq.s32.totalorder %s88, 1
      %p106 = por %p104, %p105
      %p107 = scmp.ne.s32.totalorder %s96, %s97
      %p108 = scmp.eq.s32.totalorder %s88, 0
      %p109 = por %p107, %p108
      %p110 = scmp.ne.s32.totalorder %s96, %s97
      %p111 = scmp.eq.s32.totalorder %s89, 1
      %p112 = por %p110, %p111
      %p114 = scmp.ne.s32.totalorder %s97, %s113
      %p115 = scmp.eq.s32.totalorder %s89, 0
      %p116 = por %p114, %p115
      %s117 = ssub.s32 %s83, %s90
      %p118 = scmp.eq.s32.totalorder %s117, 0
      %s120 = sadd.s32 %s119, 1
      %s121 = scalar_select %p118, %s119, %s120
      %p124 = pneg %p118
      %p125 = scmp.eq.s32.totalorder %s83, 1
      %p126 = por %p124, %p125
      %p127 = scmp.ne.s32.totalorder %s119, %s122
      %p128 = scmp.eq.s32.totalorder %s83, 0
      %p129 = por %p127, %p128
      %p130 = scmp.ne.s32.totalorder %s119, %s122
      %p131 = scmp.eq.s32.totalorder %s88, 1
      %p132 = por %p130, %p131
      %p133 = scmp.ne.s32.totalorder %s122, %s123
      %p134 = scmp.eq.s32.totalorder %s88, 0
      %p135 = por %p133, %p134
      %p136 = scmp.ne.s32.totalorder %s122, %s123
      %p137 = scmp.eq.s32.totalorder %s89, 1
      %p138 = por %p136, %p137
      %p140 = scmp.ne.s32.totalorder %s123, %s139
      %p141 = scmp.eq.s32.totalorder %s89, 0
      %p142 = por %p140, %p141
      %s144 = sadd.s32 %s143, 1
      %p147 = scmp.eq.s32.totalorder %s83, 1
      %p148 = scmp.ne.s32.totalorder %s143, %s145
      %p149 = scmp.eq.s32.totalorder %s83, 0
      %p150 = por %p148, %p149
      %p151 = scmp.ne.s32.totalorder %s143, %s145
      %p152 = scmp.eq.s32.totalorder %s88, 1
      %p153 = por %p151, %p152
      %p154 = scmp.ne.s32.totalorder %s145, %s146
      %p155 = scmp.eq.s32.totalorder %s88, 0
      %p156 = por %p154, %p155
      %p157 = scmp.ne.s32.totalorder %s145, %s146
      %p158 = scmp.eq.s32.totalorder %s89, 1
      %p159 = por %p157, %p158
      %p161 = scmp.ne.s32.totalorder %s146, %s160
      %p162 = scmp.eq.s32.totalorder %s89, 0
      %p163 = por %p161, %p162
      %s165 = sadd.s32 %s164, 1
      %p168 = scmp.eq.s32.totalorder %s83, 1
      %p169 = scmp.ne.s32.totalorder %s164, %s166
      %p170 = scmp.eq.s32.totalorder %s83, 0
      %p171 = por %p169, %p170
      %p172 = scmp.ne.s32.totalorder %s164, %s166
      %p173 = scmp.eq.s32.totalorder %s88, 1
      %p174 = por %p172, %p173
      %p175 = scmp.ne.s32.totalorder %s166, %s167
      %p176 = scmp.eq.s32.totalorder %s88, 0
      %p177 = por %p175, %p176
      %p178 = scmp.ne.s32.totalorder %s166, %s167
      %p179 = scmp.eq.s32.totalorder %s89, 1
      %p180 = por %p178, %p179
      %p182 = scmp.ne.s32.totalorder %s167, %s181
      %p183 = scmp.eq.s32.totalorder %s89, 0
      %p184 = por %p182, %p183
      %s186 = sadd.s32 %s185, 1
      %p189 = scmp.eq.s32.totalorder %s83, 1
      %p190 = scmp.ne.s32.totalorder %s185, %s187
      %p191 = scmp.eq.s32.totalorder %s83, 0
      %p192 = por %p190, %p191
      %p193 = scmp.ne.s32.totalorder %s185, %s187
      %p194 = scmp.eq.s32.totalorder %s88, 1
      %p195 = por %p193, %p194
      %p196 = scmp.ne.s32.totalorder %s187, %s188
      %p197 = scmp.eq.s32.totalorder %s88, 0
      %p198 = por %p196, %p197
      %p199 = scmp.ne.s32.totalorder %s187, %s188
      %p200 = scmp.eq.s32.totalorder %s89, 1
      %p201 = por %p199, %p200
      %p203 = scmp.ne.s32.totalorder %s188, %s202
      %p204 = scmp.eq.s32.totalorder %s89, 0
      %p205 = por %p203, %p204
      %s207 = sadd.s32 %s206, 1
      %p210 = scmp.eq.s32.totalorder %s83, 1
      %p211 = scmp.ne.s32.totalorder %s206, %s208
      %p212 = scmp.eq.s32.totalorder %s83, 0
      %p213 = por %p211, %p212
      %p214 = scmp.ne.s32.totalorder %s206, %s208
      %p215 = scmp.eq.s32.totalorder %s88, 1
      %p216 = por %p214, %p215
      %p217 = scmp.ne.s32.totalorder %s208, %s209
      %p218 = scmp.eq.s32.totalorder %s88, 0
      %p219 = por %p217, %p218
      %p220 = scmp.ne.s32.totalorder %s208, %s209
      %p221 = scmp.eq.s32.totalorder %s89, 1
      %p222 = por %p220, %p221
      %p224 = scmp.ne.s32.totalorder %s209, %s223
      %p225 = scmp.eq.s32.totalorder %s89, 0
      %p226 = por %p224, %p225
      %s228 = sadd.s32 %s227, 1
      %p231 = scmp.eq.s32.totalorder %s83, 1
      %p232 = scmp.ne.s32.totalorder %s227, %s229
      %p233 = scmp.eq.s32.totalorder %s83, 0
      %p234 = por %p232, %p233
      %p235 = scmp.ne.s32.totalorder %s227, %s229
      %p236 = scmp.eq.s32.totalorder %s88, 1
      %p237 = por %p235, %p236
      %p238 = scmp.ne.s32.totalorder %s229, %s230
      %p239 = scmp.eq.s32.totalorder %s88, 0
      %p240 = por %p238, %p239
      %p241 = scmp.ne.s32.totalorder %s229, %s230
      %p242 = scmp.eq.s32.totalorder %s89, 1
      %p243 = por %p241, %p242
      %p245 = scmp.ne.s32.totalorder %s230, %s244
      %p246 = scmp.eq.s32.totalorder %s89, 0
      %p247 = por %p245, %p246
      %s249 = sadd.s32 %s248, 1
      %p252 = scmp.eq.s32.totalorder %s83, 1
      %p253 = scmp.ne.s32.totalorder %s248, %s250
      %p254 = scmp.eq.s32.totalorder %s83, 0
      %p255 = por %p253, %p254
      %p256 = scmp.ne.s32.totalorder %s248, %s250
      %p257 = scmp.eq.s32.totalorder %s88, 1
      %p258 = por %p256, %p257
      %p259 = scmp.ne.s32.totalorder %s250, %s251
      %p260 = scmp.eq.s32.totalorder %s88, 0
      %p261 = por %p259, %p260
      %p262 = scmp.ne.s32.totalorder %s250, %s251
      %p263 = scmp.eq.s32.totalorder %s89, 1
      %p264 = por %p262, %p263
      %p266 = scmp.ne.s32.totalorder %s251, %s265
      %p267 = scmp.eq.s32.totalorder %s89, 0
      %p268 = por %p266, %p267
      %s270 = sadd.s32 %s269, 1
      %p273 = scmp.eq.s32.totalorder %s83, 1
      %p274 = scmp.ne.s32.totalorder %s269, %s271
      %p275 = scmp.eq.s32.totalorder %s83, 0
      %p276 = por %p274, %p275
      %p277 = scmp.ne.s32.totalorder %s269, %s271
      %p278 = scmp.eq.s32.totalorder %s88, 1
      %p279 = por %p277, %p278
      %p280 = scmp.ne.s32.totalorder %s271, %s272
      %p281 = scmp.eq.s32.totalorder %s88, 0
      %p282 = por %p280, %p281
      %p283 = scmp.ne.s32.totalorder %s271, %s272
      %p284 = scmp.eq.s32.totalorder %s89, 1
      %p285 = por %p283, %p284
      %p287 = scmp.ne.s32.totalorder %s272, %s286
      %p288 = scmp.eq.s32.totalorder %s89, 0
      %p289 = por %p287, %p288
      %s291 = sadd.s32 %s290, 1
      %p294 = scmp.eq.s32.totalorder %s83, 1
      %p295 = scmp.ne.s32.totalorder %s290, %s292
      %p296 = scmp.eq.s32.totalorder %s83, 0
      %p297 = por %p295, %p296
      %p298 = scmp.ne.s32.totalorder %s290, %s292
      %p299 = scmp.eq.s32.totalorder %s88, 1
      %p300 = por %p298, %p299
      %p301 = scmp.ne.s32.totalorder %s292, %s293
      %p302 = scmp.eq.s32.totalorder %s88, 0
      %p303 = por %p301, %p302
      %p304 = scmp.ne.s32.totalorder %s292, %s293
      %p305 = scmp.eq.s32.totalorder %s89, 1
      %p306 = por %p304, %p305
      %p308 = scmp.ne.s32.totalorder %s293, %s307
      %p309 = scmp.eq.s32.totalorder %s89, 0
      %p310 = por %p308, %p309
      %s312 = sadd.s32 %s311, 1
      %p315 = scmp.eq.s32.totalorder %s83, 1
      %p316 = scmp.ne.s32.totalorder %s311, %s313
      %p317 = scmp.eq.s32.totalorder %s83, 0
      %p318 = por %p316, %p317
      %p319 = scmp.ne.s32.totalorder %s311, %s313
      %p320 = scmp.eq.s32.totalorder %s88, 1
      %p321 = por %p319, %p320
      %p322 = scmp.ne.s32.totalorder %s313, %s314
      %p323 = scmp.eq.s32.totalorder %s88, 0
      %p324 = por %p322, %p323
      %p325 = scmp.ne.s32.totalorder %s313, %s314
      %p326 = scmp.eq.s32.totalorder %s89, 1
      %p327 = por %p325, %p326
      %p329 = scmp.ne.s32.totalorder %s314, %s328
      %p330 = scmp.eq.s32.totalorder %s89, 0
      %p331 = por %p329, %p330
      %s333 = sadd.s32 %s332, 1
      %p336 = scmp.eq.s32.totalorder %s83, 1
      %p337 = scmp.ne.s32.totalorder %s332, %s334
      %p338 = scmp.eq.s32.totalorder %s83, 0
      %p339 = por %p337, %p338
      %p340 = scmp.ne.s32.totalorder %s332, %s334
      %p341 = scmp.eq.s32.totalorder %s88, 1
      %p342 = por %p340, %p341
      %p343 = scmp.ne.s32.totalorder %s334, %s335
      %p344 = scmp.eq.s32.totalorder %s88, 0
      %p345 = por %p343, %p344
      %p346 = scmp.ne.s32.totalorder %s334, %s335
      %p347 = scmp.eq.s32.totalorder %s89, 1
      %p348 = por %p346, %p347
      %p350 = scmp.ne.s32.totalorder %s335, %s349
      %p351 = scmp.eq.s32.totalorder %s89, 0
      %p352 = por %p350, %p351
      %s354 = sadd.s32 %s353, 1
      %p357 = scmp.eq.s32.totalorder %s83, 1
      %p358 = scmp.ne.s32.totalorder %s353, %s355
      %p359 = scmp.eq.s32.totalorder %s83, 0
      %p360 = por %p358, %p359
      %p361 = scmp.ne.s32.totalorder %s353, %s355
      %p362 = scmp.eq.s32.totalorder %s88, 1
      %p363 = por %p361, %p362
      %p364 = scmp.ne.s32.totalorder %s355, %s356
      %p365 = scmp.eq.s32.totalorder %s88, 0
      %p366 = por %p364, %p365
      %p367 = scmp.ne.s32.totalorder %s355, %s356
      %p368 = scmp.eq.s32.totalorder %s89, 1
      %p369 = por %p367, %p368
      %p371 = scmp.ne.s32.totalorder %s356, %s370
      %p372 = scmp.eq.s32.totalorder %s89, 0
      %p373 = por %p371, %p372
      %s375 = sadd.s32 %s374, 1
      %p378 = scmp.eq.s32.totalorder %s83, 1
      %p379 = scmp.ne.s32.totalorder %s374, %s376
      %p380 = scmp.eq.s32.totalorder %s83, 0
      %p381 = por %p379, %p380
      %p382 = scmp.ne.s32.totalorder %s374, %s376
      %p383 = scmp.eq.s32.totalorder %s88, 1
      %p384 = por %p382, %p383
      %p385 = scmp.ne.s32.totalorder %s376, %s377
      %p386 = scmp.eq.s32.totalorder %s88, 0
      %p387 = por %p385, %p386
      %p388 = scmp.ne.s32.totalorder %s376, %s377
      %p389 = scmp.eq.s32.totalorder %s89, 1
      %p390 = por %p388, %p389
      %p392 = scmp.ne.s32.totalorder %s377, %s391
      %p393 = scmp.eq.s32.totalorder %s89, 0
      %p394 = por %p392, %p393
      %s396 = sadd.s32 %s395, 1
      %p399 = scmp.eq.s32.totalorder %s83, 1
      %p400 = scmp.ne.s32.totalorder %s395, %s397
      %p401 = scmp.eq.s32.totalorder %s83, 0
      %p402 = por %p400, %p401
      %p403 = scmp.ne.s32.totalorder %s395, %s397
      %p404 = scmp.eq.s32.totalorder %s88, 1
      %p405 = por %p403, %p404
      %p406 = scmp.ne.s32.totalorder %s397, %s398
      %p407 = scmp.eq.s32.totalorder %s88, 0
      %p408 = por %p406, %p407
      %p409 = scmp.ne.s32.totalorder %s397, %s398
      %p410 = scmp.eq.s32.totalorder %s89, 1
      %p411 = por %p409, %p410
      %p413 = scmp.ne.s32.totalorder %s398, %s412
      %p414 = scmp.eq.s32.totalorder %s89, 0
      %p415 = por %p413, %p414
      %s417 = sadd.s32 %s416, 1
      %p420 = scmp.eq.s32.totalorder %s83, 1
      %p421 = scmp.ne.s32.totalorder %s416, %s418
      %p422 = scmp.eq.s32.totalorder %s83, 0
      %p423 = por %p421, %p422
      %p424 = scmp.ne.s32.totalorder %s416, %s418
      %p425 = scmp.eq.s32.totalorder %s88, 1
      %p426 = por %p424, %p425
      %p427 = scmp.ne.s32.totalorder %s418, %s419
      %p428 = scmp.eq.s32.totalorder %s88, 0
      %p429 = por %p427, %p428
      %p430 = scmp.ne.s32.totalorder %s418, %s419
      %p431 = scmp.eq.s32.totalorder %s89, 1
      %p432 = por %p430, %p431
      %p434 = scmp.ne.s32.totalorder %s419, %s433
      %p435 = scmp.eq.s32.totalorder %s89, 0
      %p436 = por %p434, %p435
      %s438 = sadd.s32 %s437, 1
      %p441 = scmp.eq.s32.totalorder %s83, 1
      %p442 = scmp.ne.s32.totalorder %s437, %s439
      %p443 = scmp.eq.s32.totalorder %s83, 0
      %p444 = por %p442, %p443
      %p445 = scmp.ne.s32.totalorder %s437, %s439
      %p446 = scmp.eq.s32.totalorder %s88, 1
      %p447 = por %p445, %p446
      %p448 = scmp.ne.s32.totalorder %s439, %s440
      %p449 = scmp.eq.s32.totalorder %s88, 0
      %p450 = por %p448, %p449
      %p451 = scmp.ne.s32.totalorder %s439, %s440
      %p452 = scmp.eq.s32.totalorder %s89, 1
      %p453 = por %p451, %p452
      %p455 = scmp.ne.s32.totalorder %s440, %s454
      %p456 = scmp.eq.s32.totalorder %s89, 0
      %p457 = por %p455, %p456
      %s459 = sadd.s32 %s458, 1
      %p462 = scmp.eq.s32.totalorder %s83, 1
      %p463 = scmp.ne.s32.totalorder %s458, %s460
      %p464 = scmp.eq.s32.totalorder %s83, 0
      %p465 = por %p463, %p464
      %p466 = scmp.ne.s32.totalorder %s458, %s460
      %p467 = scmp.eq.s32.totalorder %s88, 1
      %p468 = por %p466, %p467
      %p469 = scmp.ne.s32.totalorder %s460, %s461
      %p470 = scmp.eq.s32.totalorder %s88, 0
      %p471 = por %p469, %p470
      %p472 = scmp.ne.s32.totalorder %s460, %s461
      %p473 = scmp.eq.s32.totalorder %s89, 1
      %p474 = por %p472, %p473
      %p476 = scmp.ne.s32.totalorder %s461, %s475
      %p477 = scmp.eq.s32.totalorder %s89, 0
      %p478 = por %p476, %p477
      %s480 = sadd.s32 %s479, 1
      %p483 = scmp.eq.s32.totalorder %s83, 1
      %p484 = scmp.ne.s32.totalorder %s479, %s481
      %p485 = scmp.eq.s32.totalorder %s83, 0
      %p486 = por %p484, %p485
      %p487 = scmp.ne.s32.totalorder %s479, %s481
      %p488 = scmp.eq.s32.totalorder %s88, 1
      %p489 = por %p487, %p488
      %p490 = scmp.ne.s32.totalorder %s481, %s482
      %p491 = scmp.eq.s32.totalorder %s88, 0
      %p492 = por %p490, %p491
      %p493 = scmp.ne.s32.totalorder %s481, %s482
      %p494 = scmp.eq.s32.totalorder %s89, 1
      %p495 = por %p493, %p494
      %p497 = scmp.ne.s32.totalorder %s482, %s496
      %p498 = scmp.eq.s32.totalorder %s89, 0
      %p499 = por %p497, %p498
      %s501 = sadd.s32 %s500, 1
      %p504 = scmp.eq.s32.totalorder %s83, 1
      %p505 = scmp.ne.s32.totalorder %s500, %s502
      %p506 = scmp.eq.s32.totalorder %s83, 0
      %p507 = por %p505, %p506
      %p508 = scmp.ne.s32.totalorder %s500, %s502
      %p509 = scmp.eq.s32.totalorder %s88, 1
      %p510 = por %p508, %p509
      %p511 = scmp.ne.s32.totalorder %s502, %s503
      %p512 = scmp.eq.s32.totalorder %s88, 0
      %p513 = por %p511, %p512
      %p514 = scmp.ne.s32.totalorder %s502, %s503
      %p515 = scmp.eq.s32.totalorder %s89, 1
      %p516 = por %p514, %p515
      %p518 = scmp.ne.s32.totalorder %s503, %s517
      %p519 = scmp.eq.s32.totalorder %s89, 0
      %p520 = por %p518, %p519
      %s522 = sadd.s32 %s521, 1
      %p525 = scmp.eq.s32.totalorder %s83, 1
      %p526 = scmp.ne.s32.totalorder %s521, %s523
      %p527 = scmp.eq.s32.totalorder %s83, 0
      %p528 = por %p526, %p527
      %p529 = scmp.ne.s32.totalorder %s521, %s523
      %p530 = scmp.eq.s32.totalorder %s88, 1
      %p531 = por %p529, %p530
      %p532 = scmp.ne.s32.totalorder %s523, %s524
      %p533 = scmp.eq.s32.totalorder %s88, 0
      %p534 = por %p532, %p533
      %p535 = scmp.ne.s32.totalorder %s523, %s524
      %p536 = scmp.eq.s32.totalorder %s89, 1
      %p537 = por %p535, %p536
      %p539 = scmp.ne.s32.totalorder %s524, %s538
      %p540 = scmp.eq.s32.totalorder %s89, 0
      %p541 = por %p539, %p540
      %s543 = sadd.s32 %s542, 1
      %p546 = scmp.eq.s32.totalorder %s83, 1
      %p547 = scmp.ne.s32.totalorder %s542, %s544
      %p548 = scmp.eq.s32.totalorder %s83, 0
      %p549 = por %p547, %p548
      %p550 = scmp.ne.s32.totalorder %s542, %s544
      %p551 = scmp.eq.s32.totalorder %s88, 1
      %p552 = por %p550, %p551
      %p553 = scmp.ne.s32.totalorder %s544, %s545
      %p554 = scmp.eq.s32.totalorder %s88, 0
      %p555 = por %p553, %p554
      %p556 = scmp.ne.s32.totalorder %s544, %s545
      %p557 = scmp.eq.s32.totalorder %s89, 1
      %p558 = por %p556, %p557
      %p560 = scmp.ne.s32.totalorder %s545, %s559
      %p561 = scmp.eq.s32.totalorder %s89, 0
      %p562 = por %p560, %p561
      %s564 = sadd.s32 %s563, 1
      %p567 = scmp.eq.s32.totalorder %s83, 1
      %p568 = scmp.ne.s32.totalorder %s563, %s565
      %p569 = scmp.eq.s32.totalorder %s83, 0
      %p570 = por %p568, %p569
      %p571 = scmp.ne.s32.totalorder %s563, %s565
      %p572 = scmp.eq.s32.totalorder %s88, 1
      %p573 = por %p571, %p572
      %p574 = scmp.ne.s32.totalorder %s565, %s566
      %p575 = scmp.eq.s32.totalorder %s88, 0
      %p576 = por %p574, %p575
      %p577 = scmp.ne.s32.totalorder %s565, %s566
      %p578 = scmp.eq.s32.totalorder %s89, 1
      %p579 = por %p577, %p578
      %p581 = scmp.ne.s32.totalorder %s566, %s580
      %p582 = scmp.eq.s32.totalorder %s89, 0
      %p583 = por %p581, %p582
      %s585 = sadd.s32 %s584, 1
      %p588 = scmp.eq.s32.totalorder %s83, 1
      %p589 = scmp.ne.s32.totalorder %s584, %s586
      %p590 = scmp.eq.s32.totalorder %s83, 0
      %p591 = por %p589, %p590
      %p592 = scmp.ne.s32.totalorder %s584, %s586
      %p593 = scmp.eq.s32.totalorder %s88, 1
      %p594 = por %p592, %p593
      %p595 = scmp.ne.s32.totalorder %s586, %s587
      %p596 = scmp.eq.s32.totalorder %s88, 0
      %p597 = por %p595, %p596
      %p598 = scmp.ne.s32.totalorder %s586, %s587
      %p599 = scmp.eq.s32.totalorder %s89, 1
      %p600 = por %p598, %p599
      %p602 = scmp.ne.s32.totalorder %s587, %s601
      %p603 = scmp.eq.s32.totalorder %s89, 0
      %p604 = por %p602, %p603
      %s606 = sadd.s32 %s605, 1
      %p609 = scmp.eq.s32.totalorder %s83, 1
      %p610 = scmp.ne.s32.totalorder %s605, %s607
      %p611 = scmp.eq.s32.totalorder %s83, 0
      %p612 = por %p610, %p611
      %p613 = scmp.ne.s32.totalorder %s605, %s607
      %p614 = scmp.eq.s32.totalorder %s88, 1
      %p615 = por %p613, %p614
      %p616 = scmp.ne.s32.totalorder %s607, %s608
      %p617 = scmp.eq.s32.totalorder %s88, 0
      %p618 = por %p616, %p617
      %p619 = scmp.ne.s32.totalorder %s607, %s608
      %p620 = scmp.eq.s32.totalorder %s89, 1
      %p621 = por %p619, %p620
      %p623 = scmp.ne.s32.totalorder %s608, %s622
      %p624 = scmp.eq.s32.totalorder %s89, 0
      %p625 = por %p623, %p624
      %s627 = sadd.s32 %s626, 1
      %p630 = scmp.eq.s32.totalorder %s83, 1
      %p631 = scmp.ne.s32.totalorder %s626, %s628
      %p632 = scmp.eq.s32.totalorder %s83, 0
      %p633 = por %p631, %p632
      %p634 = scmp.ne.s32.totalorder %s626, %s628
      %p635 = scmp.eq.s32.totalorder %s88, 1
      %p636 = por %p634, %p635
      %p637 = scmp.ne.s32.totalorder %s628, %s629
      %p638 = scmp.eq.s32.totalorder %s88, 0
      %p639 = por %p637, %p638
      %p640 = scmp.ne.s32.totalorder %s628, %s629
      %p641 = scmp.eq.s32.totalorder %s89, 1
      %p642 = por %p640, %p641
      %p644 = scmp.ne.s32.totalorder %s629, %s643
      %p645 = scmp.eq.s32.totalorder %s89, 0
      %p646 = por %p644, %p645
      %s648 = sadd.s32 %s647, 1
      %p651 = scmp.eq.s32.totalorder %s83, 1
      %p652 = scmp.ne.s32.totalorder %s647, %s649
      %p653 = scmp.eq.s32.totalorder %s83, 0
      %p654 = por %p652, %p653
      %p655 = scmp.ne.s32.totalorder %s647, %s649
      %p656 = scmp.eq.s32.totalorder %s88, 1
      %p657 = por %p655, %p656
      %p658 = scmp.ne.s32.totalorder %s649, %s650
      %p659 = scmp.eq.s32.totalorder %s88, 0
      %p660 = por %p658, %p659
      %p661 = scmp.ne.s32.totalorder %s649, %s650
      %p662 = scmp.eq.s32.totalorder %s89, 1
      %p663 = por %p661, %p662
      %p665 = scmp.ne.s32.totalorder %s650, %s664
      %p666 = scmp.eq.s32.totalorder %s89, 0
      %p667 = por %p665, %p666
      %s669 = sadd.s32 %s668, 1
      %p672 = scmp.eq.s32.totalorder %s83, 1
      %p673 = scmp.ne.s32.totalorder %s668, %s670
      %p674 = scmp.eq.s32.totalorder %s83, 0
      %p675 = por %p673, %p674
      %p676 = scmp.ne.s32.totalorder %s668, %s670
      %p677 = scmp.eq.s32.totalorder %s88, 1
      %p678 = por %p676, %p677
      %p679 = scmp.ne.s32.totalorder %s670, %s671
      %p680 = scmp.eq.s32.totalorder %s88, 0
      %p681 = por %p679, %p680
      %p682 = scmp.ne.s32.totalorder %s670, %s671
      %p683 = scmp.eq.s32.totalorder %s89, 1
      %p684 = por %p682, %p683
      %p686 = scmp.ne.s32.totalorder %s671, %s685
      %p687 = scmp.eq.s32.totalorder %s89, 0
      %p688 = por %p686, %p687
      %s690 = sadd.s32 %s689, 1
      %p693 = scmp.eq.s32.totalorder %s83, 1
      %p694 = scmp.ne.s32.totalorder %s689, %s691
      %p695 = scmp.eq.s32.totalorder %s83, 0
      %p696 = por %p694, %p695
      %p697 = scmp.ne.s32.totalorder %s689, %s691
      %p698 = scmp.eq.s32.totalorder %s88, 1
      %p699 = por %p697, %p698
      %p700 = scmp.ne.s32.totalorder %s691, %s692
      %p701 = scmp.eq.s32.totalorder %s88, 0
      %p702 = por %p700, %p701
      %p703 = scmp.ne.s32.totalorder %s691, %s692
      %p704 = scmp.eq.s32.totalorder %s89, 1
      %p705 = por %p703, %p704
      %p707 = scmp.ne.s32.totalorder %s692, %s706
      %p708 = scmp.eq.s32.totalorder %s89, 0
      %p709 = por %p707, %p708
      %s711 = sadd.s32 %s710, 1
      %p714 = scmp.eq.s32.totalorder %s83, 1
      %p715 = scmp.ne.s32.totalorder %s710, %s712
      %p716 = scmp.eq.s32.totalorder %s83, 0
      %p717 = por %p715, %p716
      %p718 = scmp.ne.s32.totalorder %s710, %s712
      %p719 = scmp.eq.s32.totalorder %s88, 1
      %p720 = por %p718, %p719
      %p721 = scmp.ne.s32.totalorder %s712, %s713
      %p722 = scmp.eq.s32.totalorder %s88, 0
      %p723 = por %p721, %p722
      %p724 = scmp.ne.s32.totalorder %s712, %s713
      %p725 = scmp.eq.s32.totalorder %s89, 1
      %p726 = por %p724, %p725
      %p728 = scmp.ne.s32.totalorder %s713, %s727
      %p729 = scmp.eq.s32.totalorder %s89, 0
      %p730 = por %p728, %p729
      %s732 = sadd.s32 %s731, 1
      %p735 = scmp.eq.s32.totalorder %s83, 1
      %p736 = scmp.ne.s32.totalorder %s731, %s733
      %p737 = scmp.eq.s32.totalorder %s83, 0
      %p738 = por %p736, %p737
      %p739 = scmp.ne.s32.totalorder %s731, %s733
      %p740 = scmp.eq.s32.totalorder %s88, 1
      %p741 = por %p739, %p740
      %p742 = scmp.ne.s32.totalorder %s733, %s734
      %p743 = scmp.eq.s32.totalorder %s88, 0
      %p744 = por %p742, %p743
      %p745 = scmp.ne.s32.totalorder %s733, %s734
      %p746 = scmp.eq.s32.totalorder %s89, 1
      %p747 = por %p745, %p746
      %p749 = scmp.ne.s32.totalorder %s734, %s748
      %p750 = scmp.eq.s32.totalorder %s89, 0
      %p751 = por %p749, %p750
      %s753 = sadd.s32 %s752, 1
      %p756 = scmp.eq.s32.totalorder %s83, 1
      %p757 = scmp.ne.s32.totalorder %s752, %s754
      %p758 = scmp.eq.s32.totalorder %s83, 0
      %p759 = por %p757, %p758
      %p760 = scmp.ne.s32.totalorder %s752, %s754
      %p761 = scmp.eq.s32.totalorder %s88, 1
      %p762 = por %p760, %p761
      %p763 = scmp.ne.s32.totalorder %s754, %s755
      %p764 = scmp.eq.s32.totalorder %s88, 0
      %p765 = por %p763, %p764
      %p766 = scmp.ne.s32.totalorder %s754, %s755
      %p767 = scmp.eq.s32.totalorder %s89, 1
      %p768 = por %p766, %p767
      %p770 = scmp.ne.s32.totalorder %s755, %s769
      %p771 = scmp.eq.s32.totalorder %s89, 0
      %p772 = por %p770, %p771
      %s774 = sadd.s32 %s773, 1
      %p777 = scmp.eq.s32.totalorder %s83, 1
      %p778 = scmp.ne.s32.totalorder %s773, %s775
      %p779 = scmp.eq.s32.totalorder %s83, 0
      %p780 = por %p778, %p779
      %p781 = scmp.ne.s32.totalorder %s773, %s775
      %p782 = scmp.eq.s32.totalorder %s88, 1
      %p783 = por %p781, %p782
      %p784 = scmp.ne.s32.totalorder %s775, %s776
      %p785 = scmp.eq.s32.totalorder %s88, 0
      %p786 = por %p784, %p785
      %p787 = scmp.ne.s32.totalorder %s775, %s776
      %p788 = scmp.eq.s32.totalorder %s89, 1
      %p789 = por %p787, %p788
      %p791 = scmp.ne.s32.totalorder %s776, %s790
      %p792 = scmp.eq.s32.totalorder %s89, 0
      %p793 = por %p791, %p792
      %s795 = sadd.s32 %s794, 1
      %p798 = scmp.eq.s32.totalorder %s83, 1
      %p799 = scmp.ne.s32.totalorder %s794, %s796
      %p800 = scmp.eq.s32.totalorder %s83, 0
      %p801 = por %p799, %p800
      %p802 = scmp.ne.s32.totalorder %s794, %s796
      %p803 = scmp.eq.s32.totalorder %s88, 1
      %p804 = por %p802, %p803
      %p805 = scmp.ne.s32.totalorder %s796, %s797
      %p806 = scmp.eq.s32.totalorder %s88, 0
      %p807 = por %p805, %p806
      %p808 = scmp.ne.s32.totalorder %s796, %s797
      %p809 = scmp.eq.s32.totalorder %s89, 1
      %p810 = por %p808, %p809
      %p812 = scmp.ne.s32.totalorder %s797, %s811
      %p813 = scmp.eq.s32.totalorder %s89, 0
      %p814 = por %p812, %p813
      %s815 = ssub.s32 %s83, %s90
      %p816 = scmp.eq.s32.totalorder %s815, 0
      %s818 = sadd.s32 %s817, 1
      %s819 = scalar_select %p816, %s817, %s818
      %p822 = pneg %p816
      %p823 = scmp.eq.s32.totalorder %s83, 1
      %p824 = por %p822, %p823
      %p825 = scmp.ne.s32.totalorder %s817, %s820
      %p826 = scmp.eq.s32.totalorder %s83, 0
      %p827 = por %p825, %p826
      %p828 = scmp.ne.s32.totalorder %s817, %s820
      %p829 = scmp.eq.s32.totalorder %s88, 1
      %p830 = por %p828, %p829
      %p831 = scmp.ne.s32.totalorder %s820, %s821
      %p832 = scmp.eq.s32.totalorder %s88, 0
      %p833 = por %p831, %p832
      %p834 = scmp.ne.s32.totalorder %s820, %s821
      %p835 = scmp.eq.s32.totalorder %s89, 1
      %p836 = por %p834, %p835
      %p838 = scmp.ne.s32.totalorder %s821, %s837
      %p839 = scmp.eq.s32.totalorder %s89, 0
      %p840 = por %p838, %p839
      %p841 = scmp.le.s32.totalorder 1, %s83
      %p842 = scmp.lt.s32.totalorder %s83, 3
      %p843 = pnand %p841, %p842
      %p844 = pneg %p843
      // Predicated region
      $region9: #{block_forward.7} parent=5 // pred_check
        _
      $region10: #{block_forward.7} parent=5 // pred_check_branch
        %846 = sbr.rel (%p843) target = $region12
      $region11: #{block_forward.7} parent=5 // pred_region
        %s847 = ssub.s32 %s83, 1
        // Predicated region
        $region13: #{block_forward.7} parent=11 // pred_check
          %p848 = pneg %p156
        $region14: #{block_forward.7} parent=11 // pred_check_branch
          %850 = sbr.rel (%p848) target = $region16
        $region15: #{block_forward.7} parent=11 // pred_region
          _
        $region16: #{block_forward.7} parent=11 // pred_fallthru
          _
        // Predicated region
        $region17: #{block_forward.7} parent=11 // pred_check
          %p851 = pneg %p177
        $region18: #{block_forward.7} parent=11 // pred_check_branch
          %853 = sbr.rel (%p851) target = $region20
        $region19: #{block_forward.7} parent=11 // pred_region
          _
        $region20: #{block_forward.7} parent=11 // pred_fallthru
          _
        // Predicated region
        $region21: #{block_forward.7} parent=11 // pred_check
          %p854 = pneg %p198
        $region22: #{block_forward.7} parent=11 // pred_check_branch
          %856 = sbr.rel (%p854) target = $region24
        $region23: #{block_forward.7} parent=11 // pred_region
          _
        $region24: #{block_forward.7} parent=11 // pred_fallthru
          _
        // Predicated region
        $region25: #{block_forward.7} parent=11 // pred_check
          %p857 = pneg %p219
        $region26: #{block_forward.7} parent=11 // pred_check_branch
          %859 = sbr.rel (%p857) target = $region28
        $region27: #{block_forward.7} parent=11 // pred_region
          _
        $region28: #{block_forward.7} parent=11 // pred_fallthru
          _
        // Predicated region
        $region29: #{block_forward.7} parent=11 // pred_check
          %p860 = pneg %p240
        $region30: #{block_forward.7} parent=11 // pred_check_branch
          %862 = sbr.rel (%p860) target = $region32
        $region31: #{block_forward.7} parent=11 // pred_region
          _
        $region32: #{block_forward.7} parent=11 // pred_fallthru
          _
        // Predicated region
        $region33: #{block_forward.7} parent=11 // pred_check
          %p863 = pneg %p261
        $region34: #{block_forward.7} parent=11 // pred_check_branch
          %865 = sbr.rel (%p863) target = $region36
        $region35: #{block_forward.7} parent=11 // pred_region
          _
        $region36: #{block_forward.7} parent=11 // pred_fallthru
          _
        // Predicated region
        $region37: #{block_forward.7} parent=11 // pred_check
          %p866 = pneg %p282
        $region38: #{block_forward.7} parent=11 // pred_check_branch
          %868 = sbr.rel (%p866) target = $region40
        $region39: #{block_forward.7} parent=11 // pred_region
          _
        $region40: #{block_forward.7} parent=11 // pred_fallthru
          _
        // Predicated region
        $region41: #{block_forward.7} parent=11 // pred_check
          %p869 = pneg %p303
        $region42: #{block_forward.7} parent=11 // pred_check_branch
          %871 = sbr.rel (%p869) target = $region44
        $region43: #{block_forward.7} parent=11 // pred_region
          _
        $region44: #{block_forward.7} parent=11 // pred_fallthru
          _
        // Predicated region
        $region45: #{block_forward.7} parent=11 // pred_check
          %p872 = pneg %p324
        $region46: #{block_forward.7} parent=11 // pred_check_branch
          %874 = sbr.rel (%p872) target = $region48
        $region47: #{block_forward.7} parent=11 // pred_region
          _
        $region48: #{block_forward.7} parent=11 // pred_fallthru
          _
        // Predicated region
        $region49: #{block_forward.7} parent=11 // pred_check
          %p875 = pneg %p345
        $region50: #{block_forward.7} parent=11 // pred_check_branch
          %877 = sbr.rel (%p875) target = $region52
        $region51: #{block_forward.7} parent=11 // pred_region
          _
        $region52: #{block_forward.7} parent=11 // pred_fallthru
          _
        // Predicated region
        $region53: #{block_forward.7} parent=11 // pred_check
          %p878 = pneg %p366
        $region54: #{block_forward.7} parent=11 // pred_check_branch
          %880 = sbr.rel (%p878) target = $region56
        $region55: #{block_forward.7} parent=11 // pred_region
          _
        $region56: #{block_forward.7} parent=11 // pred_fallthru
          _
        // Predicated region
        $region57: #{block_forward.7} parent=11 // pred_check
          %p881 = pneg %p387
        $region58: #{block_forward.7} parent=11 // pred_check_branch
          %883 = sbr.rel (%p881) target = $region60
        $region59: #{block_forward.7} parent=11 // pred_region
          _
        $region60: #{block_forward.7} parent=11 // pred_fallthru
          _
        // Predicated region
        $region61: #{block_forward.7} parent=11 // pred_check
          %p884 = pneg %p408
        $region62: #{block_forward.7} parent=11 // pred_check_branch
          %886 = sbr.rel (%p884) target = $region64
        $region63: #{block_forward.7} parent=11 // pred_region
          _
        $region64: #{block_forward.7} parent=11 // pred_fallthru
          _
        // Predicated region
        $region65: #{block_forward.7} parent=11 // pred_check
          %p887 = pneg %p429
        $region66: #{block_forward.7} parent=11 // pred_check_branch
          %889 = sbr.rel (%p887) target = $region68
        $region67: #{block_forward.7} parent=11 // pred_region
          _
        $region68: #{block_forward.7} parent=11 // pred_fallthru
          _
        // Predicated region
        $region69: #{block_forward.7} parent=11 // pred_check
          %p890 = pneg %p450
        $region70: #{block_forward.7} parent=11 // pred_check_branch
          %892 = sbr.rel (%p890) target = $region72
        $region71: #{block_forward.7} parent=11 // pred_region
          _
        $region72: #{block_forward.7} parent=11 // pred_fallthru
          _
        // Predicated region
        $region73: #{block_forward.7} parent=11 // pred_check
          %p893 = pneg %p471
        $region74: #{block_forward.7} parent=11 // pred_check_branch
          %895 = sbr.rel (%p893) target = $region76
        $region75: #{block_forward.7} parent=11 // pred_region
          _
        $region76: #{block_forward.7} parent=11 // pred_fallthru
          _
        // Predicated region
        $region77: #{block_forward.7} parent=11 // pred_check
          %p896 = pneg %p492
        $region78: #{block_forward.7} parent=11 // pred_check_branch
          %898 = sbr.rel (%p896) target = $region80
        $region79: #{block_forward.7} parent=11 // pred_region
          _
        $region80: #{block_forward.7} parent=11 // pred_fallthru
          _
        // Predicated region
        $region81: #{block_forward.7} parent=11 // pred_check
          %p899 = pneg %p513
        $region82: #{block_forward.7} parent=11 // pred_check_branch
          %901 = sbr.rel (%p899) target = $region84
        $region83: #{block_forward.7} parent=11 // pred_region
          _
        $region84: #{block_forward.7} parent=11 // pred_fallthru
          _
        // Predicated region
        $region85: #{block_forward.7} parent=11 // pred_check
          %p902 = pneg %p534
        $region86: #{block_forward.7} parent=11 // pred_check_branch
          %904 = sbr.rel (%p902) target = $region88
        $region87: #{block_forward.7} parent=11 // pred_region
          _
        $region88: #{block_forward.7} parent=11 // pred_fallthru
          _
        // Predicated region
        $region89: #{block_forward.7} parent=11 // pred_check
          %p905 = pneg %p555
        $region90: #{block_forward.7} parent=11 // pred_check_branch
          %907 = sbr.rel (%p905) target = $region92
        $region91: #{block_forward.7} parent=11 // pred_region
          %909 = vsyncadd [#allocation3], 0
          %s911 = sshll.u32 %s43, 4
          %s912 = int_to_ptr.hbm [resolvable:$true] %s911
          %s913 = sshll.u32 [#allocation2], 4
          %s914 = int_to_ptr.vmem [resolvable:$true] %s913
          %916 = dma.hbm_to_vmem [thread:$0]  %s912, 16, %s914, [#allocation3]
        $region92: #{block_forward.7} parent=11 // pred_fallthru
          _
        // Predicated region
        $region93: #{block_forward.7} parent=11 // pred_check
          %p917 = pneg %p576
        $region94: #{block_forward.7} parent=11 // pred_check_branch
          %919 = sbr.rel (%p917) target = $region96
        $region95: #{block_forward.7} parent=11 // pred_region
          _
        $region96: #{block_forward.7} parent=11 // pred_fallthru
          _
        // Predicated region
        $region97: #{block_forward.7} parent=11 // pred_check
          %p920 = pneg %p597
        $region98: #{block_forward.7} parent=11 // pred_check_branch
          %922 = sbr.rel (%p920) target = $region100
        $region99: #{block_forward.7} parent=11 // pred_region
          %924 = vsyncadd [#allocation6], 0
          %s926 = sshll.u32 %s47, 4
          %s927 = int_to_ptr.hbm [resolvable:$true] %s926
          %s928 = sshll.u32 [#allocation5], 4
          %s929 = int_to_ptr.vmem [resolvable:$true] %s928
          %931 = dma.hbm_to_vmem [thread:$0]  %s927, 16, %s929, [#allocation6]
        $region100: #{block_forward.7} parent=11 // pred_fallthru
          _
        // Predicated region
        $region101: #{block_forward.7} parent=11 // pred_check
          %p932 = pneg %p618
        $region102: #{block_forward.7} parent=11 // pred_check_branch
          %934 = sbr.rel (%p932) target = $region104
        $region103: #{block_forward.7} parent=11 // pred_region
          _
        $region104: #{block_forward.7} parent=11 // pred_fallthru
          _
        // Predicated region
        $region105: #{block_forward.7} parent=11 // pred_check
          %p935 = pneg %p639
        $region106: #{block_forward.7} parent=11 // pred_check_branch
          %937 = sbr.rel (%p935) target = $region108
        $region107: #{block_forward.7} parent=11 // pred_region
          %939 = vsyncadd [#allocation6], 0
          %s941 = sshll.u32 %s51, 4
          %s942 = int_to_ptr.hbm [resolvable:$true] %s941
          %s943 = sshll.u32 [#allocation7], 4
          %s944 = int_to_ptr.vmem [resolvable:$true] %s943
          %946 = dma.hbm_to_vmem [thread:$0]  %s942, 16, %s944, [#allocation6]
        $region108: #{block_forward.7} parent=11 // pred_fallthru
          _
        // Predicated region
        $region109: #{block_forward.7} parent=11 // pred_check
          %p947 = pneg %p660
        $region110: #{block_forward.7} parent=11 // pred_check_branch
          %949 = sbr.rel (%p947) target = $region112
        $region111: #{block_forward.7} parent=11 // pred_region
          %951 = vsyncadd [#allocation9], 0
          %s953 = sshll.u32 %s53, 4
          %s954 = int_to_ptr.hbm [resolvable:$true] %s953
          %s955 = sshll.u32 [#allocation8], 4
          %s956 = int_to_ptr.vmem [resolvable:$true] %s955
          %958 = dma.hbm_to_vmem [thread:$0]  %s954, 16, %s956, [#allocation9]
        $region112: #{block_forward.7} parent=11 // pred_fallthru
          _
        // Predicated region
        $region113: #{block_forward.7} parent=11 // pred_check
          %p959 = pneg %p681
        $region114: #{block_forward.7} parent=11 // pred_check_branch
          %961 = sbr.rel (%p959) target = $region116
        $region115: #{block_forward.7} parent=11 // pred_region
          _
        $region116: #{block_forward.7} parent=11 // pred_fallthru
          _
        // Predicated region
        $region117: #{block_forward.7} parent=11 // pred_check
          %p962 = pneg %p702
        $region118: #{block_forward.7} parent=11 // pred_check_branch
          %964 = sbr.rel (%p962) target = $region120
        $region119: #{block_forward.7} parent=11 // pred_region
          %966 = vsyncadd [#allocation9], 0
          %s968 = sshll.u32 %s57, 4
          %s969 = int_to_ptr.hbm [resolvable:$true] %s968
          %s970 = sshll.u32 [#allocation10], 4
          %s971 = int_to_ptr.vmem [resolvable:$true] %s970
          %973 = dma.hbm_to_vmem [thread:$0]  %s969, 16, %s971, [#allocation9]
        $region120: #{block_forward.7} parent=11 // pred_fallthru
          _
        // Predicated region
        $region121: #{block_forward.7} parent=11 // pred_check
          %p974 = pneg %p723
        $region122: #{block_forward.7} parent=11 // pred_check_branch
          %976 = sbr.rel (%p974) target = $region124
        $region123: #{block_forward.7} parent=11 // pred_region
          _
        $region124: #{block_forward.7} parent=11 // pred_fallthru
          _
        // Predicated region
        $region125: #{block_forward.7} parent=11 // pred_check
          %p977 = pneg %p744
        $region126: #{block_forward.7} parent=11 // pred_check_branch
          %979 = sbr.rel (%p977) target = $region128
        $region127: #{block_forward.7} parent=11 // pred_region
          %981 = vsyncadd [#allocation12], 0
          %s983 = sshll.u32 %s61, 4
          %s984 = int_to_ptr.hbm [resolvable:$true] %s983
          %s985 = sshll.u32 [#allocation11], 4
          %s986 = int_to_ptr.vmem [resolvable:$true] %s985
          %988 = dma.hbm_to_vmem [thread:$0]  %s984, 16, %s986, [#allocation12]
        $region128: #{block_forward.7} parent=11 // pred_fallthru
          _
        // Predicated region
        $region129: #{block_forward.7} parent=11 // pred_check
          %p989 = pneg %p765
        $region130: #{block_forward.7} parent=11 // pred_check_branch
          %991 = sbr.rel (%p989) target = $region132
        $region131: #{block_forward.7} parent=11 // pred_region
          _
        $region132: #{block_forward.7} parent=11 // pred_fallthru
          _
        // Predicated region
        $region133: #{block_forward.7} parent=11 // pred_check
          %p992 = pneg %p786
        $region134: #{block_forward.7} parent=11 // pred_check_branch
          %994 = sbr.rel (%p992) target = $region136
        $region135: #{block_forward.7} parent=11 // pred_region
          %996 = vsyncadd [#allocation12], 0
          %s998 = sshll.u32 %s65, 4
          %s999 = int_to_ptr.hbm [resolvable:$true] %s998
          %s1000 = sshll.u32 [#allocation13], 4
          %s1001 = int_to_ptr.vmem [resolvable:$true] %s1000
          %1003 = dma.hbm_to_vmem [thread:$0]  %s999, 16, %s1001, [#allocation12]
        $region136: #{block_forward.7} parent=11 // pred_fallthru
          _
        // Predicated region
        $region137: #{block_forward.7} parent=11 // pred_check
          %p1004 = pneg %p807
        $region138: #{block_forward.7} parent=11 // pred_check_branch
          %1006 = sbr.rel (%p1004) target = $region140
        $region139: #{block_forward.7} parent=11 // pred_region
          %1008 = vsyncadd [#allocation15], 0
          %s1010 = sshll.u32 %s67, 4
          %s1011 = int_to_ptr.hbm [resolvable:$true] %s1010
          %s1012 = sshll.u32 [#allocation14], 4
          %s1013 = int_to_ptr.vmem [resolvable:$true] %s1012
          %1015 = dma.hbm_to_vmem [thread:$0]  %s1011, 16, %s1013, [#allocation15]
        $region140: #{block_forward.7} parent=11 // pred_fallthru
          _
      $region12: #{block_forward.7} parent=5 // pred_fallthru
        _
      %p1016 = scmp.lt.s32.totalorder %s83, 2
      // Predicated region
      $region141: #{block_forward.7} parent=5 // pred_check
        %p1017 = pneg %p1016
      $region142: #{block_forward.7} parent=5 // pred_check_branch
        %1019 = sbr.rel (%p1017) target = $region144
      $region143: #{block_forward.7} parent=5 // pred_region
        // Predicated region
        $region145: #{block_forward.7} parent=143 // pred_check
          %p1020 = pneg %p103
        $region146: #{block_forward.7} parent=143 // pred_check_branch
          %1022 = sbr.rel (%p1020) target = $region148
        $region147: #{block_forward.7} parent=143 // pred_region
          %p1023 = scmp.lt.s32.totalorder %s83, 1
          %s1024 = scalar_select %p1023, %s83, 1
          %s1025 = smul.addr %s1024, 8
          %s1026 = scalar_lea.vmem %s1, %s1025
        $region148: #{block_forward.7} parent=143 // pred_fallthru
          _
        // Predicated region
        $region149: #{block_forward.7} parent=143 // pred_check
          %p1027 = pneg %p129
        $region150: #{block_forward.7} parent=143 // pred_check_branch
          %1029 = sbr.rel (%p1027) target = $region152
        $region151: #{block_forward.7} parent=143 // pred_region
          %p1030 = scmp.lt.s32.totalorder %s83, 1
          %s1031 = scalar_select %p1030, %s83, 1
          %s1032 = smul.addr %s1031, 4
          %s1033 = smul.addr %s1032, 8
          %s1034 = scalar_lea.vmem %s3, %s1033
        $region152: #{block_forward.7} parent=143 // pred_fallthru
          _
      $region144: #{block_forward.7} parent=5 // pred_fallthru
        _
      %p1035 = scmp.le.s32.totalorder 1, %s83
      %p1036 = scmp.lt.s32.totalorder %s83, 3
      %p1037 = pnand %p1035, %p1036
      %p1038 = pneg %p1037
      // Predicated region
      $region153: #{block_forward.7} parent=5 // pred_check
        _
      $region154: #{block_forward.7} parent=5 // pred_check_branch
        %1040 = sbr.rel (%p1037) target = $region156
      $region155: #{block_forward.7} parent=5 // pred_region
        %s1041 = ssub.s32 %s83, 1
        // Predicated region
        $region157: #{block_forward.7} parent=155 // pred_check
          %p1042 = pneg %p555
        $region158: #{block_forward.7} parent=155 // pred_check_branch
          %1044 = sbr.rel (%p1042) target = $region160
        $region159: #{block_forward.7} parent=155 // pred_region
          %1046 = dma.done [#allocation3], 16
        $region160: #{block_forward.7} parent=155 // pred_fallthru
          _
        // Predicated region
        $region161: #{block_forward.7} parent=155 // pred_check
          %p1047 = pneg %p597
        $region162: #{block_forward.7} parent=155 // pred_check_branch
          %1049 = sbr.rel (%p1047) target = $region164
        $region163: #{block_forward.7} parent=155 // pred_region
          %1051 = dma.done [#allocation6], 16
        $region164: #{block_forward.7} parent=155 // pred_fallthru
          _
        // Predicated region
        $region165: #{block_forward.7} parent=155 // pred_check
          %p1052 = pneg %p639
        $region166: #{block_forward.7} parent=155 // pred_check_branch
          %1054 = sbr.rel (%p1052) target = $region168
        $region167: #{block_forward.7} parent=155 // pred_region
          %1056 = dma.done [#allocation6], 16
        $region168: #{block_forward.7} parent=155 // pred_fallthru
          _
        // Predicated region
        $region169: #{block_forward.7} parent=155 // pred_check
          %p1057 = pneg %p660
        $region170: #{block_forward.7} parent=155 // pred_check_branch
          %1059 = sbr.rel (%p1057) target = $region172
        $region171: #{block_forward.7} parent=155 // pred_region
          %1061 = dma.done [#allocation9], 16
        $region172: #{block_forward.7} parent=155 // pred_fallthru
          _
        // Predicated region
        $region173: #{block_forward.7} parent=155 // pred_check
          %p1062 = pneg %p702
        $region174: #{block_forward.7} parent=155 // pred_check_branch
          %1064 = sbr.rel (%p1062) target = $region176
        $region175: #{block_forward.7} parent=155 // pred_region
          %1066 = dma.done [#allocation9], 16
        $region176: #{block_forward.7} parent=155 // pred_fallthru
          _
        // Predicated region
        $region177: #{block_forward.7} parent=155 // pred_check
          %p1067 = pneg %p744
        $region178: #{block_forward.7} parent=155 // pred_check_branch
          %1069 = sbr.rel (%p1067) target = $region180
        $region179: #{block_forward.7} parent=155 // pred_region
          %1071 = dma.done [#allocation12], 16
        $region180: #{block_forward.7} parent=155 // pred_fallthru
          _
        // Predicated region
        $region181: #{block_forward.7} parent=155 // pred_check
          %p1072 = pneg %p786
        $region182: #{block_forward.7} parent=155 // pred_check_branch
          %1074 = sbr.rel (%p1072) target = $region184
        $region183: #{block_forward.7} parent=155 // pred_region
          %1076 = dma.done [#allocation12], 16
        $region184: #{block_forward.7} parent=155 // pred_fallthru
          _
        // Predicated region
        $region185: #{block_forward.7} parent=155 // pred_check
          %p1077 = pneg %p807
        $region186: #{block_forward.7} parent=155 // pred_check_branch
          %1079 = sbr.rel (%p1077) target = $region188
        $region187: #{block_forward.7} parent=155 // pred_region
          %1081 = dma.done [#allocation15], 16
        $region188: #{block_forward.7} parent=155 // pred_fallthru
          _
        %p1082 = scmp.lt.s32.totalorder %s88, 1
        %s1083 = scalar_select %p1082, %s88, 1
        %s1084 = smul.addr %s1083, 8
        %s1085 = scalar_lea.vmem %s1, %s1084
        %p1086 = pneg %p109
        %p1087 = pneg %p106
        %p1088 = scmp.lt.s32.totalorder %s88, 1
        %s1089 = scalar_select %p1088, %s88, 1
        %s1090 = smul.addr %s1089, 4
        %s1091 = smul.addr %s1090, 8
        %s1092 = scalar_lea.vmem %s3, %s1091
        %p1093 = pneg %p135
        %p1094 = pneg %p132
        %p1095 = pneg %p156
        %p1096 = pneg %p153
        %p1097 = pneg %p177
        %p1098 = pneg %p174
        %p1099 = pneg %p198
        %p1100 = pneg %p195
        %p1101 = pneg %p219
        %p1102 = pneg %p216
        %p1103 = pneg %p240
        %p1104 = pneg %p237
        %p1105 = pneg %p261
        %p1106 = pneg %p258
        %p1107 = pneg %p282
        %p1108 = pneg %p279
        %p1109 = pneg %p303
        %p1110 = pneg %p300
        %p1111 = pneg %p324
        %p1112 = pneg %p321
        %p1113 = pneg %p345
        %p1114 = pneg %p342
        %p1115 = pneg %p366
        %p1116 = pneg %p363
        %p1117 = pneg %p387
        %p1118 = pneg %p384
        %p1119 = pneg %p408
        %p1120 = pneg %p405
        %p1121 = pneg %p429
        %p1122 = pneg %p426
        %p1123 = pneg %p450
        %p1124 = pneg %p447
        %p1125 = pneg %p471
        %p1126 = pneg %p468
        %p1127 = pneg %p492
        %p1128 = pneg %p489
        %p1129 = pneg %p513
        %p1130 = pneg %p510
        %p1131 = pneg %p534
        %p1132 = pneg %p531
        %p1133 = pneg %p555
        %p1134 = pneg %p552
        %p1135 = pneg %p576
        %p1136 = pneg %p573
        %p1137 = pneg %p597
        %p1138 = pneg %p594
        %p1139 = pneg %p618
        %p1140 = pneg %p615
        %p1141 = pneg %p639
        %p1142 = pneg %p636
        %p1143 = pneg %p660
        %p1144 = pneg %p657
        %p1145 = pneg %p681
        %p1146 = pneg %p678
        %p1147 = pneg %p702
        %p1148 = pneg %p699
        %p1149 = pneg %p723
        %p1150 = pneg %p720
        %p1151 = pneg %p744
        %p1152 = pneg %p741
        %p1153 = pneg %p765
        %p1154 = pneg %p762
        %p1155 = pneg %p786
        %p1156 = pneg %p783
        %p1157 = pneg %p807
        %p1158 = pneg %p804
        %p1159 = pneg %p833
        %p1160 = pneg %p830
        %s1161 = sand.u32 %s820, 1
        %s1162 = scalar_lea.sflag [#allocation4], %s1161
        %s1163 = sand.u32 %s820, 1
        %s1164 = smul.addr %s1163, 8
        %s1165 = scalar_lea.vmem [#allocation16], %s1164
        %p1166 = scmp.lt.s32.totalorder %s88, 1
        %s1167 = scalar_select %p1166, %s88, 1
        %s1168 = smul.addr %s1167, 8
        %s1169 = scalar_lea.vmem %s1, %s1168
        %p1170 = scmp.lt.s32.totalorder %s88, 1
        %s1171 = scalar_select %p1170, %s88, 1
        %s1172 = smul.addr %s1171, 4
        %s1173 = smul.addr %s1172, 8
        %s1174 = scalar_lea.vmem %s3, %s1173
        %v1176 = vld [vmem:[%s5] sm:$0xf]
        %v1177 = vld [vmem:[%s5 + $0x4] sm:$0xf]
        %v1178 = vld [vmem:[%s5 + $0x8] sm:$0xf]
        %v1179 = vld [vmem:[%s5 + $0xc] sm:$0xf]
        %v1180 = vld [vmem:[%s7] sm:$0x1]
        %v1181 = vld [vmem:[%s9] sm:$0xf]
        %v1182 = vld [vmem:[%s9 + $0x4] sm:$0xf]
        %v1183 = vld [vmem:[%s9 + $0x8] sm:$0xf]
        %v1184 = vld [vmem:[%s9 + $0xc] sm:$0xf]
        %v1185 = vld [vmem:[%s11] sm:$0x1]
        %v1186 = vld [vmem:[%s13] sm:$0xf]
        %v1187 = vld [vmem:[%s13 + $0x4] sm:$0xf]
        %v1188 = vld [vmem:[%s13 + $0x8] sm:$0xf]
        %v1189 = vld [vmem:[%s13 + $0xc] sm:$0xf]
        %v1190 = vld [vmem:[%s15] sm:$0x1]
        %v1191 = vld [vmem:[%s17] sm:$0xf]
        %v1192 = vld [vmem:[%s17 + $0x4] sm:$0xf]
        %v1193 = vld [vmem:[%s17 + $0x8] sm:$0xf]
        %v1194 = vld [vmem:[%s17 + $0xc] sm:$0xf]
        %v1195 = vld [vmem:[%s19] sm:$0x1]
        %v1196 = vld [vmem:[%s21] sm:$0x1]
        %v1197 = vld [vmem:[%s23] sm:$0xf]
        %v1198 = vld [vmem:[%s23 + $0x4] sm:$0xf]
        %v1199 = vld [vmem:[%s23 + $0x8] sm:$0xf]
        %v1200 = vld [vmem:[%s23 + $0xc] sm:$0xf]
        %v1201 = vld [vmem:[%s25] sm:$0x1]
        %v1202 = vld [vmem:[%s27] sm:$0xf]
        %v1203 = vld [vmem:[%s27 + $0x4] sm:$0xf]
        %v1204 = vld [vmem:[%s27 + $0x8] sm:$0xf]
        %v1205 = vld [vmem:[%s27 + $0xc] sm:$0xf]
        %v1206 = vld [vmem:[%s29] sm:$0x1]
        %v1207 = vld [vmem:[%s31] sm:$0xf]
        %v1208 = vld [vmem:[%s31 + $0x4] sm:$0xf]
        %v1209 = vld [vmem:[%s31 + $0x8] sm:$0xf]
        %v1210 = vld [vmem:[%s31 + $0xc] sm:$0xf]
        %v1211 = vld [vmem:[%s31 + $0x10] sm:$0xf]
        %v1212 = vld [vmem:[%s31 + $0x14] sm:$0xf]
        %v1213 = vld [vmem:[%s31 + $0x18] sm:$0xf]
        %v1214 = vld [vmem:[%s31 + $0x1c] sm:$0xf]
        %v1215 = vld [vmem:[%s33] sm:$0x1]
        %v1216 = vld [vmem:[%s35] sm:$0x1]
        %v1217 = vld [vmem:[%s37] sm:$0xf]
        %v1218 = vld [vmem:[%s37 + $0x4] sm:$0xf]
        %v1219 = vld [vmem:[%s37 + $0x8] sm:$0xf]
        %v1220 = vld [vmem:[%s37 + $0xc] sm:$0xf]
        %v1221 = vld [vmem:[%s39] sm:$0x1]
        %v1222 = vld [vmem:[%s41] sm:$0xf]
        %v1223 = vld [vmem:[%s41 + $0x4] sm:$0xf]
        %v1224 = vld [vmem:[%s41 + $0x8] sm:$0xf]
        %v1225 = vld [vmem:[%s41 + $0xc] sm:$0xf]
        %v1226 = vld [vmem:[#allocation2] sm:$0x1]
        %v1227 = vld [vmem:[%s45] sm:$0xf]
        %v1228 = vld [vmem:[%s45 + $0x4] sm:$0xf]
        %v1229 = vld [vmem:[%s45 + $0x8] sm:$0xf]
        %v1230 = vld [vmem:[%s45 + $0xc] sm:$0xf]
        %v1231 = vld [vmem:[#allocation5] sm:$0x1]
        %v1232 = vld [vmem:[%s49] sm:$0xf]
        %v1233 = vld [vmem:[%s49 + $0x4] sm:$0xf]
        %v1234 = vld [vmem:[%s49 + $0x8] sm:$0xf]
        %v1235 = vld [vmem:[%s49 + $0xc] sm:$0xf]
        %v1236 = vld [vmem:[#allocation7] sm:$0x1]
        %v1237 = vld [vmem:[#allocation8] sm:$0x1]
        %v1238 = vld [vmem:[%s55] sm:$0xf]
        %v1239 = vld [vmem:[%s55 + $0x4] sm:$0xf]
        %v1240 = vld [vmem:[%s55 + $0x8] sm:$0xf]
        %v1241 = vld [vmem:[%s55 + $0xc] sm:$0xf]
        %v1242 = vld [vmem:[#allocation10] sm:$0x1]
        %v1243 = vld [vmem:[%s59] sm:$0xf]
        %v1244 = vld [vmem:[%s59 + $0x4] sm:$0xf]
        %v1245 = vld [vmem:[%s59 + $0x8] sm:$0xf]
        %v1246 = vld [vmem:[%s59 + $0xc] sm:$0xf]
        %v1247 = vld [vmem:[#allocation11] sm:$0x1]
        %v1248 = vld [vmem:[%s63] sm:$0xf]
        %v1249 = vld [vmem:[%s63 + $0x4] sm:$0xf]
        %v1250 = vld [vmem:[%s63 + $0x8] sm:$0xf]
        %v1251 = vld [vmem:[%s63 + $0xc] sm:$0xf]
        %v1252 = vld [vmem:[%s63 + $0x10] sm:$0xf]
        %v1253 = vld [vmem:[%s63 + $0x14] sm:$0xf]
        %v1254 = vld [vmem:[%s63 + $0x18] sm:$0xf]
        %v1255 = vld [vmem:[%s63 + $0x1c] sm:$0xf]
        %v1256 = vld [vmem:[#allocation13] sm:$0x1]
        %v1257 = vld [vmem:[#allocation14] sm:$0x1]
        %v1258 = vld [vmem:[%s1169] sm:$0xff]
        %v1259 = vld [vmem:[%s1174] sm:$0xff]
        %v1260 = vadd.f32 %v1258, %v1259
        %v1261 = vpack.c.bf16 %v1260, %v1260
        %v1263 = vperm.slane %v1180, 0
        %v1269 = vunpack.c.l.b16 %v1176
        %v1270 = vunpack.c.l.b16 %v1177
        %v1271 = vunpack.c.l.b16 %v1178
        %v1272 = vunpack.c.l.b16 %v1179
        %v1273 = vpack.c.b16 %v1270, %v1269
        %v1274 = vpack.c.b16 %v1272, %v1271
        %vm1277 = vcmask 261120
        %v1279 = vsel %vm1277, %v1261, 0
        %1281 = vmatpush.bf16.msra.mxu0 0
        %1282 = vmatpush.bf16.msra.mxu0 0
        %1283 = vmatpush.bf16.msra.mxu0 0
        %1284 = vmatpush.bf16.msra.mxu0 0
        %1285 = vmatpush.bf16.msra.mxu0 0
        %1286 = vmatpush.bf16.msra.mxu0 0
        %1287 = vmatpush.bf16.msra.mxu0 %v1274
        %1288 = vmatpush.bf16.msra.mxu0 %v1273
        %1289 = vmatmul.bf16.gmra.mxu0 %v1279
        %v1290 = vpop.f32.mrf.mxu0
        %v1291 = vadd.f32 %v1263, %v1290
        %v1292 = vpop.f32.mrf.mxu0
        %1293 = vdwg.mxu0
        %v1295 = vperm.slane %v1185, 0
        %v1301 = vunpack.c.l.b16 %v1181
        %v1302 = vunpack.c.l.b16 %v1182
        %v1303 = vunpack.c.l.b16 %v1183
        %v1304 = vunpack.c.l.b16 %v1184
        %v1305 = vpack.c.b16 %v1302, %v1301
        %v1306 = vpack.c.b16 %v1304, %v1303
        %1309 = vmatpush.bf16.msra.mxu0 0
        %1310 = vmatpush.bf16.msra.mxu0 0
        %1311 = vmatpush.bf16.msra.mxu0 0
        %1312 = vmatpush.bf16.msra.mxu0 0
        %1313 = vmatpush.bf16.msra.mxu0 0
        %1314 = vmatpush.bf16.msra.mxu0 0
        %1315 = vmatpush.bf16.msra.mxu0 %v1306
        %1316 = vmatpush.bf16.msra.mxu0 %v1305
        %1317 = vmatmul.bf16.gmra.mxu0 %v1279
        %v1318 = vpop.f32.mrf.mxu0
        %v1319 = vadd.f32 %v1295, %v1318
        %v1320 = vpop.f32.mrf.mxu0
        %1321 = vdwg.mxu0
        %v1323 = vperm.slane %v1190, 0
        %v1329 = vunpack.c.l.b16 %v1186
        %v1330 = vunpack.c.l.b16 %v1187
        %v1331 = vunpack.c.l.b16 %v1188
        %v1332 = vunpack.c.l.b16 %v1189
        %v1333 = vpack.c.b16 %v1330, %v1329
        %v1334 = vpack.c.b16 %v1332, %v1331
        %1337 = vmatpush.bf16.msra.mxu0 0
        %1338 = vmatpush.bf16.msra.mxu0 0
        %1339 = vmatpush.bf16.msra.mxu0 0
        %1340 = vmatpush.bf16.msra.mxu0 0
        %1341 = vmatpush.bf16.msra.mxu0 0
        %1342 = vmatpush.bf16.msra.mxu0 0
        %1343 = vmatpush.bf16.msra.mxu0 %v1334
        %1344 = vmatpush.bf16.msra.mxu0 %v1333
        %1345 = vmatmul.bf16.gmra.mxu0 %v1279
        %v1346 = vpop.f32.mrf.mxu0
        %v1347 = vadd.f32 %v1323, %v1346
        %v1348 = vpop.f32.mrf.mxu0
        %1349 = vdwg.mxu0
        %v1350 = vpack.c.bf16 %v1291, %v1291
        %v1351 = vpack.c.bf16 %v1319, %v1319
        %vm1352 = vcmask 64512
        %v1354 = vsel %vm1352, %v1350, 0
        %v1357 = vsel %vm1352, %v1351, 0
        %1359 = vmatpush.bf16.xpose.msra.mxu0 0
        %1360 = vmatpush.bf16.xpose.msra.mxu0 0
        %1361 = vmatpush.bf16.xpose.msra.mxu0 0
        %1362 = vmatpush.bf16.xpose.msra.mxu0 0
        %1363 = vmatpush.bf16.xpose.msra.mxu0 0
        %1364 = vmatpush.bf16.xpose.msra.mxu0 0
        %1365 = vmatpush.bf16.xpose.msra.mxu0 0
        %1366 = vmatpush.bf16.xpose.msra.mxu0 %v1357
        %1367 = vmatmul.bf16.gmra.mxu0 %v1354
        %v1368 = vpop.f32.mrf.mxu0
        %v1369 = vadd.f32 0.0, %v1368
        %v1370 = vpop.f32.mrf.mxu0
        %1371 = vdwg.mxu0
        %v1372 = vmul.f32 %v1369, 0.35355338
        %v1373 = vsel %vm1352, %v1372, -inf
        %1374 = vmax.xlane.f32.xlu0 %v1373
        %v1375 = vpop.xlane.xlu0 %1374
        %v1376 = vsub.f32 %v1372, %v1375
        %v1377 = vmul.f32 %v1376, 1.442695
        %v1378 = vpow.pop %v1377
        %v1379 = vsel %vm1352, %v1378, 0.0
        %1380 = vadd.xlane.f32.xlu0 %v1379
        %v1381 = vpop.xlane.xlu0 %1380
        %v1382 = vrcp.pop %v1381
        %v1383 = vmul.f32 %v1381, %v1382
        %v1384 = vsub.f32 1.0, %v1383
        %v1385 = vmul.f32 %v1382, %v1384
        %v1386 = vadd.f32 %v1382, %v1385
        %vm1387 = vweird.f32 %v1381
        %vm1388 = vweird.f32 %v1382
        %vm1389 = vmor %vm1387, %vm1388
        %v1390 = vsel %vm1389, %v1382, %v1386
        %v1391 = vand.u32 2147483647, %v1381
        %vm1392 = vcmp.eq.f32.partialorder %v1391, 8.507059e+37
        %v1393 = vand.u32 %v1381, 2147483648
        %v1394 = vor.u32 1.1754944e-38, %v1393
        %v1395 = vsel %vm1392, %v1394, %v1390
        %v1396 = vmul.f32 %v1378, %v1395
        %v1397 = vpack.c.bf16 %v1396, %v1396
        %v1398 = vpack.c.bf16 %v1347, %v1347
        %v1400 = vsel %vm1352, %v1397, 0
        %vm1402 = vcmask 1043456
        %v1404 = vsel %vm1402, %v1398, 0
        %1406 = vmatpush.bf16.msra.mxu0 0
        %1407 = vmatpush.bf16.msra.mxu0 0
        %1408 = vmatpush.bf16.msra.mxu0 0
        %1409 = vmatpush.bf16.msra.mxu0 0
        %1410 = vmatpush.bf16.msra.mxu0 0
        %1411 = vmatpush.bf16.msra.mxu0 0
        %1412 = vmatpush.bf16.msra.mxu0 0
        %1413 = vmatpush.bf16.msra.mxu0 %v1404
        %1414 = vmatmul.bf16.gmra.mxu0 %v1400
        %v1415 = vpop.f32.mrf.mxu0
        %v1416 = vadd.f32 0.0, %v1415
        %v1417 = vpop.f32.mrf.mxu0
        %1418 = vdwg.mxu0
        %v1420 = vunpack.c.l.b16 %v1350
        %v1421 = vpack.c.b16 %v1420, %v1420
        %1422 = vrot.lane.b32.xlu0 %v1421, 120
        %v1423 = vpop.permute.xlu0 %1422
        %v1425 = vunpack.c.l.b16 %v1351
        %v1426 = vpack.c.b16 %v1425, %v1425
        %1427 = vrot.lane.b32.xlu0 %v1426, 120
        %v1428 = vpop.permute.xlu0 %1427
        %v1430 = vsel %vm1352, %v1423, 0
        %v1433 = vsel %vm1352, %v1428, 0
        %1435 = vmatpush.bf16.xpose.msra.mxu0 0
        %1436 = vmatpush.bf16.xpose.msra.mxu0 0
        %1437 = vmatpush.bf16.xpose.msra.mxu0 0
        %1438 = vmatpush.bf16.xpose.msra.mxu0 0
        %1439 = vmatpush.bf16.xpose.msra.mxu0 0
        %1440 = vmatpush.bf16.xpose.msra.mxu0 0
        %1441 = vmatpush.bf16.xpose.msra.mxu0 0
        %1442 = vmatpush.bf16.xpose.msra.mxu0 %v1433
        %1443 = vmatmul.bf16.gmra.mxu0 %v1430
        %v1444 = vpop.f32.mrf.mxu0
        %v1445 = vadd.f32 0.0, %v1444
        %v1446 = vpop.f32.mrf.mxu0
        %1447 = vdwg.mxu0
        %v1448 = vmul.f32 %v1445, 0.35355338
        %v1449 = vsel %vm1352, %v1448, -inf
        %1450 = vmax.xlane.f32.xlu0 %v1449
        %v1451 = vpop.xlane.xlu0 %1450
        %v1452 = vsub.f32 %v1448, %v1451
        %v1453 = vmul.f32 %v1452, 1.442695
        %v1454 = vpow.pop %v1453
        %v1455 = vsel %vm1352, %v1454, 0.0
        %1456 = vadd.xlane.f32.xlu0 %v1455
        %v1457 = vpop.xlane.xlu0 %1456
        %v1458 = vrcp.pop %v1457
        %v1459 = vmul.f32 %v1457, %v1458
        %v1460 = vsub.f32 1.0, %v1459
        %v1461 = vmul.f32 %v1458, %v1460
        %v1462 = vadd.f32 %v1458, %v1461
        %vm1463 = vweird.f32 %v1457
        %vm1464 = vweird.f32 %v1458
        %vm1465 = vmor %vm1463, %vm1464
        %v1466 = vsel %vm1465, %v1458, %v1462
        %v1467 = vand.u32 2147483647, %v1457
        %vm1468 = vcmp.eq.f32.partialorder %v1467, 8.507059e+37
        %v1469 = vand.u32 %v1457, 2147483648
        %v1470 = vor.u32 1.1754944e-38, %v1469
        %v1471 = vsel %vm1468, %v1470, %v1466
        %v1472 = vmul.f32 %v1454, %v1471
        %v1473 = vpack.c.bf16 %v1472, %v1472
        %v1475 = vunpack.c.l.b16 %v1398
        %v1476 = vpack.c.b16 %v1475, %v1475
        %1477 = vrot.lane.b32.xlu0 %v1476, 120
        %v1478 = vpop.permute.xlu0 %1477
        %v1480 = vsel %vm1352, %v1473, 0
        %v1483 = vsel %vm1402, %v1478, 0
        %1485 = vmatpush.bf16.msra.mxu0 0
        %1486 = vmatpush.bf16.msra.mxu0 0
        %1487 = vmatpush.bf16.msra.mxu0 0
        %1488 = vmatpush.bf16.msra.mxu0 0
        %1489 = vmatpush.bf16.msra.mxu0 0
        %1490 = vmatpush.bf16.msra.mxu0 0
        %1491 = vmatpush.bf16.msra.mxu0 0
        %1492 = vmatpush.bf16.msra.mxu0 %v1483
        %1493 = vmatmul.bf16.gmra.mxu0 %v1480
        %v1494 = vpop.f32.mrf.mxu0
        %v1495 = vadd.f32 0.0, %v1494
        %v1496 = vpop.f32.mrf.mxu0
        %1497 = vdwg.mxu0
        %1498 = vrot.lane.b32.xlu0 %v1421, 112
        %v1499 = vpop.permute.xlu0 %1498
        %1500 = vrot.lane.b32.xlu0 %v1426, 112
        %v1501 = vpop.permute.xlu0 %1500
        %v1503 = vsel %vm1352, %v1499, 0
        %v1506 = vsel %vm1352, %v1501, 0
        %1508 = vmatpush.bf16.xpose.msra.mxu0 0
        %1509 = vmatpush.bf16.xpose.msra.mxu0 0
        %1510 = vmatpush.bf16.xpose.msra.mxu0 0
        %1511 = vmatpush.bf16.xpose.msra.mxu0 0
        %1512 = vmatpush.bf16.xpose.msra.mxu0 0
        %1513 = vmatpush.bf16.xpose.msra.mxu0 0
        %1514 = vmatpush.bf16.xpose.msra.mxu0 0
        %1515 = vmatpush.bf16.xpose.msra.mxu0 %v1506
        %1516 = vmatmul.bf16.gmra.mxu0 %v1503
        %v1517 = vpop.f32.mrf.mxu0
        %v1518 = vadd.f32 0.0, %v1517
        %v1519 = vpop.f32.mrf.mxu0
        %1520 = vdwg.mxu0
        %v1521 = vmul.f32 %v1518, 0.35355338
        %v1522 = vsel %vm1352, %v1521, -inf
        %1523 = vmax.xlane.f32.xlu0 %v1522
        %v1524 = vpop.xlane.xlu0 %1523
        %v1525 = vsub.f32 %v1521, %v1524
        %v1526 = vmul.f32 %v1525, 1.442695
        %v1527 = vpow.pop %v1526
        %v1528 = vsel %vm1352, %v1527, 0.0
        %1529 = vadd.xlane.f32.xlu0 %v1528
        %v1530 = vpop.xlane.xlu0 %1529
        %v1531 = vrcp.pop %v1530
        %v1532 = vmul.f32 %v1530, %v1531
        %v1533 = vsub.f32 1.0, %v1532
        %v1534 = vmul.f32 %v1531, %v1533
        %v1535 = vadd.f32 %v1531, %v1534
        %vm1536 = vweird.f32 %v1530
        %vm1537 = vweird.f32 %v1531
        %vm1538 = vmor %vm1536, %vm1537
        %v1539 = vsel %vm1538, %v1531, %v1535
        %v1540 = vand.u32 2147483647, %v1530
        %vm1541 = vcmp.eq.f32.partialorder %v1540, 8.507059e+37
        %v1542 = vand.u32 %v1530, 2147483648
        %v1543 = vor.u32 1.1754944e-38, %v1542
        %v1544 = vsel %vm1541, %v1543, %v1539
        %v1545 = vmul.f32 %v1527, %v1544
        %v1546 = vpack.c.bf16 %v1545, %v1545
        %1547 = vrot.lane.b32.xlu0 %v1476, 112
        %v1548 = vpop.permute.xlu0 %1547
        %v1550 = vsel %vm1352, %v1546, 0
        %v1553 = vsel %vm1402, %v1548, 0
        %1555 = vmatpush.bf16.msra.mxu0 0
        %1556 = vmatpush.bf16.msra.mxu0 0
        %1557 = vmatpush.bf16.msra.mxu0 0
        %1558 = vmatpush.bf16.msra.mxu0 0
        %1559 = vmatpush.bf16.msra.mxu0 0
        %1560 = vmatpush.bf16.msra.mxu0 0
        %1561 = vmatpush.bf16.msra.mxu0 0
        %1562 = vmatpush.bf16.msra.mxu0 %v1553
        %1563 = vmatmul.bf16.gmra.mxu0 %v1550
        %v1564 = vpop.f32.mrf.mxu0
        %v1565 = vadd.f32 0.0, %v1564
        %v1566 = vpop.f32.mrf.mxu0
        %1567 = vdwg.mxu0
        %1568 = vrot.lane.b32.xlu0 %v1421, 104
        %v1569 = vpop.permute.xlu0 %1568
        %1570 = vrot.lane.b32.xlu0 %v1426, 104
        %v1571 = vpop.permute.xlu0 %1570
        %v1573 = vsel %vm1352, %v1569, 0
        %v1576 = vsel %vm1352, %v1571, 0
        %1578 = vmatpush.bf16.xpose.msra.mxu0 0
        %1579 = vmatpush.bf16.xpose.msra.mxu0 0
        %1580 = vmatpush.bf16.xpose.msra.mxu0 0
        %1581 = vmatpush.bf16.xpose.msra.mxu0 0
        %1582 = vmatpush.bf16.xpose.msra.mxu0 0
        %1583 = vmatpush.bf16.xpose.msra.mxu0 0
        %1584 = vmatpush.bf16.xpose.msra.mxu0 0
        %1585 = vmatpush.bf16.xpose.msra.mxu0 %v1576
        %1586 = vmatmul.bf16.gmra.mxu0 %v1573
        %v1587 = vpop.f32.mrf.mxu0
        %v1588 = vadd.f32 0.0, %v1587
        %v1589 = vpop.f32.mrf.mxu0
        %1590 = vdwg.mxu0
        %v1591 = vmul.f32 %v1588, 0.35355338
        %v1592 = vsel %vm1352, %v1591, -inf
        %1593 = vmax.xlane.f32.xlu0 %v1592
        %v1594 = vpop.xlane.xlu0 %1593
        %v1595 = vsub.f32 %v1591, %v1594
        %v1596 = vmul.f32 %v1595, 1.442695
        %v1597 = vpow.pop %v1596
        %v1598 = vsel %vm1352, %v1597, 0.0
        %1599 = vadd.xlane.f32.xlu0 %v1598
        %v1600 = vpop.xlane.xlu0 %1599
        %v1601 = vrcp.pop %v1600
        %v1602 = vmul.f32 %v1600, %v1601
        %v1603 = vsub.f32 1.0, %v1602
        %v1604 = vmul.f32 %v1601, %v1603
        %v1605 = vadd.f32 %v1601, %v1604
        %vm1606 = vweird.f32 %v1600
        %vm1607 = vweird.f32 %v1601
        %vm1608 = vmor %vm1606, %vm1607
        %v1609 = vsel %vm1608, %v1601, %v1605
        %v1610 = vand.u32 2147483647, %v1600
        %vm1611 = vcmp.eq.f32.partialorder %v1610, 8.507059e+37
        %v1612 = vand.u32 %v1600, 2147483648
        %v1613 = vor.u32 1.1754944e-38, %v1612
        %v1614 = vsel %vm1611, %v1613, %v1609
        %v1615 = vmul.f32 %v1597, %v1614
        %v1616 = vpack.c.bf16 %v1615, %v1615
        %1617 = vrot.lane.b32.xlu0 %v1476, 104
        %v1618 = vpop.permute.xlu0 %1617
        %v1620 = vsel %vm1352, %v1616, 0
        %v1623 = vsel %vm1402, %v1618, 0
        %1625 = vmatpush.bf16.msra.mxu0 0
        %1626 = vmatpush.bf16.msra.mxu0 0
        %1627 = vmatpush.bf16.msra.mxu0 0
        %1628 = vmatpush.bf16.msra.mxu0 0
        %1629 = vmatpush.bf16.msra.mxu0 0
        %1630 = vmatpush.bf16.msra.mxu0 0
        %1631 = vmatpush.bf16.msra.mxu0 0
        %1632 = vmatpush.bf16.msra.mxu0 %v1623
        %1633 = vmatmul.bf16.gmra.mxu0 %v1620
        %v1634 = vpop.f32.mrf.mxu0
        %v1635 = vadd.f32 0.0, %v1634
        %v1636 = vpop.f32.mrf.mxu0
        %1637 = vdwg.mxu0
        %1639 = vrot.lane.b32.xlu0 %v1495, 8
        %v1640 = vpop.permute.xlu0 %1639
        %1643 = vrot.lane.b32.xlu0 %v1565, 16
        %v1644 = vpop.permute.xlu0 %1643
        %1647 = vrot.lane.b32.xlu0 %v1635, 24
        %v1648 = vpop.permute.xlu0 %1647
        %v1650 = vsel %vm1352, %v1416, %v1640
        %vm1651 = vcmask 130048
        %v1652 = vsel %vm1651, %v1650, %v1644
        %vm1653 = vcmask 195584
        %v1654 = vsel %vm1653, %v1652, %v1648
        %v1655 = vpack.c.bf16 %v1654, %v1654
        %v1657 = vperm.slane %v1195, 0
        %v1663 = vunpack.c.l.b16 %v1191
        %v1664 = vunpack.c.l.b16 %v1192
        %v1665 = vunpack.c.l.b16 %v1193
        %v1666 = vunpack.c.l.b16 %v1194
        %v1667 = vpack.c.b16 %v1664, %v1663
        %v1668 = vpack.c.b16 %v1666, %v1665
        %v1672 = vsel %vm1277, %v1655, 0
        %1674 = vmatpush.bf16.msra.mxu0 0
        %1675 = vmatpush.bf16.msra.mxu0 0
        %1676 = vmatpush.bf16.msra.mxu0 0
        %1677 = vmatpush.bf16.msra.mxu0 0
        %1678 = vmatpush.bf16.msra.mxu0 0
        %1679 = vmatpush.bf16.msra.mxu0 0
        %1680 = vmatpush.bf16.msra.mxu0 %v1668
        %1681 = vmatpush.bf16.msra.mxu0 %v1667
        %1682 = vmatmul.bf16.gmra.mxu0 %v1672
        %v1683 = vpop.f32.mrf.mxu0
        %v1684 = vadd.f32 %v1657, %v1683
        %v1685 = vpop.f32.mrf.mxu0
        %1686 = vdwg.mxu0
        %v1687 = vadd.f32 %v1260, %v1684
        %v1688 = vmul.f32 %v1687, %v1687
        %v1689 = vsel %vm1277, %v1688, 0.0
        %1690 = vadd.xlane.f32.xlu0 %v1689
        %v1691 = vpop.xlane.xlu0 %1690
        %v1692 = vrcp.pop 32.0
        %v1693 = vmul.f32 32.0, %v1692
        %v1694 = vsub.f32 1.0, %v1693
        %v1695 = vmul.f32 %v1692, %v1694
        %v1696 = vadd.f32 %v1692, %v1695
        %vm1697 = vweird.f32 %v1692
        %v1698 = vsel %vm1697, %v1692, %v1696
        %v1699 = vmul.f32 %v1691, %v1698
        %v1700 = vadd.f32 %v1699, 1e-06
        %v1701 = vrsqrt.pop %v1700
        %v1702 = vmul.f32 %v1701, %v1700
        %v1703 = vmul.f32 %v1702, %v1701
        %v1704 = vmul.f32 0.5, %v1703
        %v1705 = vsub.f32 1.5, %v1704
        %v1706 = vmul.f32 %v1701, %v1705
        %vm1707 = vweird.f32 %v1700
        %vm1708 = vweird.f32 %v1701
        %vm1709 = vmor %vm1707, %vm1708
        %v1710 = vsel %vm1709, %v1701, %v1706
        %v1711 = vmul.f32 %v1687, %v1710
        %v1713 = vperm.slane %v1196, 0
        %v1715 = vmul.f32 %v1711, %v1713
        %v1716 = vpack.c.bf16 %v1715, %v1715
        %v1718 = vperm.slane %v1201, 0
        %v1724 = vunpack.c.l.b16 %v1197
        %v1725 = vunpack.c.l.b16 %v1198
        %v1726 = vunpack.c.l.b16 %v1199
        %v1727 = vunpack.c.l.b16 %v1200
        %v1728 = vpack.c.b16 %v1725, %v1724
        %v1729 = vpack.c.b16 %v1727, %v1726
        %v1733 = vsel %vm1277, %v1716, 0
        %1735 = vmatpush.bf16.msra.mxu0 0
        %1736 = vmatpush.bf16.msra.mxu0 0
        %1737 = vmatpush.bf16.msra.mxu0 0
        %1738 = vmatpush.bf16.msra.mxu0 0
        %1739 = vmatpush.bf16.msra.mxu0 0
        %1740 = vmatpush.bf16.msra.mxu0 0
        %1741 = vmatpush.bf16.msra.mxu0 %v1729
        %1742 = vmatpush.bf16.msra.mxu0 %v1728
        %1743 = vmatmul.bf16.gmra.mxu0 %v1733
        %v1744 = vpop.f32.mrf.mxu0
        %v1745 = vadd.f32 %v1718, %v1744
        %v1746 = vpop.f32.mrf.mxu0
        %1747 = vdwg.mxu0
        %v1749 = vperm.slane %v1206, 0
        %v1755 = vunpack.c.l.b16 %v1202
        %v1756 = vunpack.c.l.b16 %v1203
        %v1757 = vunpack.c.l.b16 %v1204
        %v1758 = vunpack.c.l.b16 %v1205
        %v1759 = vpack.c.b16 %v1756, %v1755
        %v1760 = vpack.c.b16 %v1758, %v1757
        %1763 = vmatpush.bf16.msra.mxu0 0
        %1764 = vmatpush.bf16.msra.mxu0 0
        %1765 = vmatpush.bf16.msra.mxu0 0
        %1766 = vmatpush.bf16.msra.mxu0 0
        %1767 = vmatpush.bf16.msra.mxu0 0
        %1768 = vmatpush.bf16.msra.mxu0 0
        %1769 = vmatpush.bf16.msra.mxu0 %v1760
        %1770 = vmatpush.bf16.msra.mxu0 %v1759
        %1771 = vmatmul.bf16.gmra.mxu0 %v1733
        %v1772 = vpop.f32.mrf.mxu0
        %v1773 = vadd.f32 %v1749, %v1772
        %v1774 = vpop.f32.mrf.mxu0
        %1775 = vdwg.mxu0
        %v1776 = vxor.u32 %v1745, 2147483648
        %v1777 = vmul.f32 %v1776, 1.442695
        %v1778 = vpow.pop %v1777
        %v1779 = vadd.f32 %v1778, 1.0
        %v1780 = vrcp.pop %v1779
        %v1781 = vmul.f32 %v1779, %v1780
        %v1782 = vsub.f32 1.0, %v1781
        %v1783 = vmul.f32 %v1780, %v1782
        %v1784 = vadd.f32 %v1780, %v1783
        %vm1785 = vweird.f32 %v1779
        %vm1786 = vweird.f32 %v1780
        %vm1787 = vmor %vm1785, %vm1786
        %v1788 = vsel %vm1787, %v1780, %v1784
        %v1789 = vand.u32 2147483647, %v1779
        %vm1790 = vcmp.eq.f32.partialorder %v1789, 8.507059e+37
        %v1791 = vand.u32 %v1779, 2147483648
        %v1792 = vor.u32 1.1754944e-38, %v1791
        %v1793 = vsel %vm1790, %v1792, %v1788
        %v1794 = vmul.f32 1.0, %v1793
        %v1795 = vmul.f32 %v1745, %v1794
        %v1796 = vmul.f32 %v1795, %v1773
        %v1797 = vpack.c.bf16 %v1796, %v1796
        %v1799 = vperm.slane %v1215, 0
        %v1809 = vunpack.c.l.b16 %v1207
        %v1810 = vunpack.c.l.b16 %v1208
        %v1811 = vunpack.c.l.b16 %v1209
        %v1812 = vunpack.c.l.b16 %v1210
        %v1813 = vunpack.c.l.b16 %v1211
        %v1814 = vunpack.c.l.b16 %v1212
        %v1815 = vunpack.c.l.b16 %v1213
        %v1816 = vunpack.c.l.b16 %v1214
        %v1817 = vpack.c.b16 %v1810, %v1809
        %v1818 = vpack.c.b16 %v1812, %v1811
        %v1819 = vpack.c.b16 %v1814, %v1813
        %v1820 = vpack.c.b16 %v1816, %v1815
        %vm1825 = vcmask 523264
        %v1827 = vsel %vm1825, %v1797, 0
        %1829 = vmatpush.bf16.msra.mxu0 0
        %1830 = vmatpush.bf16.msra.mxu0 0
        %1831 = vmatpush.bf16.msra.mxu0 0
        %1832 = vmatpush.bf16.msra.mxu0 0
        %1833 = vmatpush.bf16.msra.mxu0 %v1820
        %1834 = vmatpush.bf16.msra.mxu0 %v1819
        %1835 = vmatpush.bf16.msra.mxu0 %v1818
        %1836 = vmatpush.bf16.msra.mxu0 %v1817
        %1837 = vmatmul.bf16.gmra.mxu0 %v1827
        %v1838 = vpop.f32.mrf.mxu0
        %v1839 = vadd.f32 %v1799, %v1838
        %v1840 = vpop.f32.mrf.mxu0
        %1841 = vdwg.mxu0
        %v1842 = vadd.f32 %v1715, %v1839
        %v1843 = vmul.f32 %v1842, %v1842
        %v1844 = vsel %vm1277, %v1843, 0.0
        %1845 = vadd.xlane.f32.xlu0 %v1844
        %v1846 = vpop.xlane.xlu0 %1845
        %v1847 = vmul.f32 %v1846, %v1698
        %v1848 = vadd.f32 %v1847, 1e-06
        %v1849 = vrsqrt.pop %v1848
        %v1850 = vmul.f32 %v1849, %v1848
        %v1851 = vmul.f32 %v1850, %v1849
        %v1852 = vmul.f32 0.5, %v1851
        %v1853 = vsub.f32 1.5, %v1852
        %v1854 = vmul.f32 %v1849, %v1853
        %vm1855 = vweird.f32 %v1848
        %vm1856 = vweird.f32 %v1849
        %vm1857 = vmor %vm1855, %vm1856
        %v1858 = vsel %vm1857, %v1849, %v1854
        %v1859 = vmul.f32 %v1842, %v1858
        %v1861 = vperm.slane %v1216, 0
        %v1863 = vmul.f32 %v1859, %v1861
        %v1864 = vpack.c.bf16 %v1863, %v1863
        %v1866 = vperm.slane %v1221, 0
        %v1872 = vunpack.c.l.b16 %v1217
        %v1873 = vunpack.c.l.b16 %v1218
        %v1874 = vunpack.c.l.b16 %v1219
        %v1875 = vunpack.c.l.b16 %v1220
        %v1876 = vpack.c.b16 %v1873, %v1872
        %v1877 = vpack.c.b16 %v1875, %v1874
        %v1881 = vsel %vm1277, %v1864, 0
        %1883 = vmatpush.bf16.msra.mxu0 0
        %1884 = vmatpush.bf16.msra.mxu0 0
        %1885 = vmatpush.bf16.msra.mxu0 0
        %1886 = vmatpush.bf16.msra.mxu0 0
        %1887 = vmatpush.bf16.msra.mxu0 0
        %1888 = vmatpush.bf16.msra.mxu0 0
        %1889 = vmatpush.bf16.msra.mxu0 %v1877
        %1890 = vmatpush.bf16.msra.mxu0 %v1876
        %1891 = vmatmul.bf16.gmra.mxu0 %v1881
        %v1892 = vpop.f32.mrf.mxu0
        %v1893 = vadd.f32 %v1866, %v1892
        %v1894 = vpop.f32.mrf.mxu0
        %1895 = vdwg.mxu0
        %v1897 = vperm.slane %v1226, 0
        %v1903 = vunpack.c.l.b16 %v1222
        %v1904 = vunpack.c.l.b16 %v1223
        %v1905 = vunpack.c.l.b16 %v1224
        %v1906 = vunpack.c.l.b16 %v1225
        %v1907 = vpack.c.b16 %v1904, %v1903
        %v1908 = vpack.c.b16 %v1906, %v1905
        %1911 = vmatpush.bf16.msra.mxu0 0
        %1912 = vmatpush.bf16.msra.mxu0 0
        %1913 = vmatpush.bf16.msra.mxu0 0
        %1914 = vmatpush.bf16.msra.mxu0 0
        %1915 = vmatpush.bf16.msra.mxu0 0
        %1916 = vmatpush.bf16.msra.mxu0 0
        %1917 = vmatpush.bf16.msra.mxu0 %v1908
        %1918 = vmatpush.bf16.msra.mxu0 %v1907
        %1919 = vmatmul.bf16.gmra.mxu0 %v1881
        %v1920 = vpop.f32.mrf.mxu0
        %v1921 = vadd.f32 %v1897, %v1920
        %v1922 = vpop.f32.mrf.mxu0
        %1923 = vdwg.mxu0
        %v1925 = vperm.slane %v1231, 0
        %v1931 = vunpack.c.l.b16 %v1227
        %v1932 = vunpack.c.l.b16 %v1228
        %v1933 = vunpack.c.l.b16 %v1229
        %v1934 = vunpack.c.l.b16 %v1230
        %v1935 = vpack.c.b16 %v1932, %v1931
        %v1936 = vpack.c.b16 %v1934, %v1933
        %1939 = vmatpush.bf16.msra.mxu0 0
        %1940 = vmatpush.bf16.msra.mxu0 0
        %1941 = vmatpush.bf16.msra.mxu0 0
        %1942 = vmatpush.bf16.msra.mxu0 0
        %1943 = vmatpush.bf16.msra.mxu0 0
        %1944 = vmatpush.bf16.msra.mxu0 0
        %1945 = vmatpush.bf16.msra.mxu0 %v1936
        %1946 = vmatpush.bf16.msra.mxu0 %v1935
        %1947 = vmatmul.bf16.gmra.mxu0 %v1881
        %v1948 = vpop.f32.mrf.mxu0
        %v1949 = vadd.f32 %v1925, %v1948
        %v1950 = vpop.f32.mrf.mxu0
        %1951 = vdwg.mxu0
        %v1952 = vpack.c.bf16 %v1893, %v1893
        %v1953 = vpack.c.bf16 %v1921, %v1921
        %v1955 = vsel %vm1352, %v1952, 0
        %v1958 = vsel %vm1352, %v1953, 0
        %1960 = vmatpush.bf16.xpose.msra.mxu0 0
        %1961 = vmatpush.bf16.xpose.msra.mxu0 0
        %1962 = vmatpush.bf16.xpose.msra.mxu0 0
        %1963 = vmatpush.bf16.xpose.msra.mxu0 0
        %1964 = vmatpush.bf16.xpose.msra.mxu0 0
        %1965 = vmatpush.bf16.xpose.msra.mxu0 0
        %1966 = vmatpush.bf16.xpose.msra.mxu0 0
        %1967 = vmatpush.bf16.xpose.msra.mxu0 %v1958
        %1968 = vmatmul.bf16.gmra.mxu0 %v1955
        %v1969 = vpop.f32.mrf.mxu0
        %v1970 = vadd.f32 0.0, %v1969
        %v1971 = vpop.f32.mrf.mxu0
        %1972 = vdwg.mxu0
        %v1973 = vmul.f32 %v1970, 0.35355338
        %v1974 = vsel %vm1352, %v1973, -inf
        %1975 = vmax.xlane.f32.xlu0 %v1974
        %v1976 = vpop.xlane.xlu0 %1975
        %v1977 = vsub.f32 %v1973, %v1976
        %v1978 = vmul.f32 %v1977, 1.442695
        %v1979 = vpow.pop %v1978
        %v1980 = vsel %vm1352, %v1979, 0.0
        %1981 = vadd.xlane.f32.xlu0 %v1980
        %v1982 = vpop.xlane.xlu0 %1981
        %v1983 = vrcp.pop %v1982
        %v1984 = vmul.f32 %v1982, %v1983
        %v1985 = vsub.f32 1.0, %v1984
        %v1986 = vmul.f32 %v1983, %v1985
        %v1987 = vadd.f32 %v1983, %v1986
        %vm1988 = vweird.f32 %v1982
        %vm1989 = vweird.f32 %v1983
        %vm1990 = vmor %vm1988, %vm1989
        %v1991 = vsel %vm1990, %v1983, %v1987
        %v1992 = vand.u32 2147483647, %v1982
        %vm1993 = vcmp.eq.f32.partialorder %v1992, 8.507059e+37
        %v1994 = vand.u32 %v1982, 2147483648
        %v1995 = vor.u32 1.1754944e-38, %v1994
        %v1996 = vsel %vm1993, %v1995, %v1991
        %v1997 = vmul.f32 %v1979, %v1996
        %v1998 = vpack.c.bf16 %v1997, %v1997
        %v1999 = vpack.c.bf16 %v1949, %v1949
        %v2001 = vsel %vm1352, %v1998, 0
        %v2004 = vsel %vm1402, %v1999, 0
        %2006 = vmatpush.bf16.msra.mxu0 0
        %2007 = vmatpush.bf16.msra.mxu0 0
        %2008 = vmatpush.bf16.msra.mxu0 0
        %2009 = vmatpush.bf16.msra.mxu0 0
        %2010 = vmatpush.bf16.msra.mxu0 0
        %2011 = vmatpush.bf16.msra.mxu0 0
        %2012 = vmatpush.bf16.msra.mxu0 0
        %2013 = vmatpush.bf16.msra.mxu0 %v2004
        %2014 = vmatmul.bf16.gmra.mxu0 %v2001
        %v2015 = vpop.f32.mrf.mxu0
        %v2016 = vadd.f32 0.0, %v2015
        %v2017 = vpop.f32.mrf.mxu0
        %2018 = vdwg.mxu0
        %v2020 = vunpack.c.l.b16 %v1952
        %v2021 = vpack.c.b16 %v2020, %v2020
        %2022 = vrot.lane.b32.xlu0 %v2021, 120
        %v2023 = vpop.permute.xlu0 %2022
        %v2025 = vunpack.c.l.b16 %v1953
        %v2026 = vpack.c.b16 %v2025, %v2025
        %2027 = vrot.lane.b32.xlu0 %v2026, 120
        %v2028 = vpop.permute.xlu0 %2027
        %v2030 = vsel %vm1352, %v2023, 0
        %v2033 = vsel %vm1352, %v2028, 0
        %2035 = vmatpush.bf16.xpose.msra.mxu0 0
        %2036 = vmatpush.bf16.xpose.msra.mxu0 0
        %2037 = vmatpush.bf16.xpose.msra.mxu0 0
        %2038 = vmatpush.bf16.xpose.msra.mxu0 0
        %2039 = vmatpush.bf16.xpose.msra.mxu0 0
        %2040 = vmatpush.bf16.xpose.msra.mxu0 0
        %2041 = vmatpush.bf16.xpose.msra.mxu0 0
        %2042 = vmatpush.bf16.xpose.msra.mxu0 %v2033
        %2043 = vmatmul.bf16.gmra.mxu0 %v2030
        %v2044 = vpop.f32.mrf.mxu0
        %v2045 = vadd.f32 0.0, %v2044
        %v2046 = vpop.f32.mrf.mxu0
        %2047 = vdwg.mxu0
        %v2048 = vmul.f32 %v2045, 0.35355338
        %v2049 = vsel %vm1352, %v2048, -inf
        %2050 = vmax.xlane.f32.xlu0 %v2049
        %v2051 = vpop.xlane.xlu0 %2050
        %v2052 = vsub.f32 %v2048, %v2051
        %v2053 = vmul.f32 %v2052, 1.442695
        %v2054 = vpow.pop %v2053
        %v2055 = vsel %vm1352, %v2054, 0.0
        %2056 = vadd.xlane.f32.xlu0 %v2055
        %v2057 = vpop.xlane.xlu0 %2056
        %v2058 = vrcp.pop %v2057
        %v2059 = vmul.f32 %v2057, %v2058
        %v2060 = vsub.f32 1.0, %v2059
        %v2061 = vmul.f32 %v2058, %v2060
        %v2062 = vadd.f32 %v2058, %v2061
        %vm2063 = vweird.f32 %v2057
        %vm2064 = vweird.f32 %v2058
        %vm2065 = vmor %vm2063, %vm2064
        %v2066 = vsel %vm2065, %v2058, %v2062
        %v2067 = vand.u32 2147483647, %v2057
        %vm2068 = vcmp.eq.f32.partialorder %v2067, 8.507059e+37
        %v2069 = vand.u32 %v2057, 2147483648
        %v2070 = vor.u32 1.1754944e-38, %v2069
        %v2071 = vsel %vm2068, %v2070, %v2066
        %v2072 = vmul.f32 %v2054, %v2071
        %v2073 = vpack.c.bf16 %v2072, %v2072
        %v2075 = vunpack.c.l.b16 %v1999
        %v2076 = vpack.c.b16 %v2075, %v2075
        %2077 = vrot.lane.b32.xlu0 %v2076, 120
        %v2078 = vpop.permute.xlu0 %2077
        %v2080 = vsel %vm1352, %v2073, 0
        %v2083 = vsel %vm1402, %v2078, 0
        %2085 = vmatpush.bf16.msra.mxu0 0
        %2086 = vmatpush.bf16.msra.mxu0 0
        %2087 = vmatpush.bf16.msra.mxu0 0
        %2088 = vmatpush.bf16.msra.mxu0 0
        %2089 = vmatpush.bf16.msra.mxu0 0
        %2090 = vmatpush.bf16.msra.mxu0 0
        %2091 = vmatpush.bf16.msra.mxu0 0
        %2092 = vmatpush.bf16.msra.mxu0 %v2083
        %2093 = vmatmul.bf16.gmra.mxu0 %v2080
        %v2094 = vpop.f32.mrf.mxu0
        %v2095 = vadd.f32 0.0, %v2094
        %v2096 = vpop.f32.mrf.mxu0
        %2097 = vdwg.mxu0
        %2098 = vrot.lane.b32.xlu0 %v2021, 112
        %v2099 = vpop.permute.xlu0 %2098
        %2100 = vrot.lane.b32.xlu0 %v2026, 112
        %v2101 = vpop.permute.xlu0 %2100
        %v2103 = vsel %vm1352, %v2099, 0
        %v2106 = vsel %vm1352, %v2101, 0
        %2108 = vmatpush.bf16.xpose.msra.mxu0 0
        %2109 = vmatpush.bf16.xpose.msra.mxu0 0
        %2110 = vmatpush.bf16.xpose.msra.mxu0 0
        %2111 = vmatpush.bf16.xpose.msra.mxu0 0
        %2112 = vmatpush.bf16.xpose.msra.mxu0 0
        %2113 = vmatpush.bf16.xpose.msra.mxu0 0
        %2114 = vmatpush.bf16.xpose.msra.mxu0 0
        %2115 = vmatpush.bf16.xpose.msra.mxu0 %v2106
        %2116 = vmatmul.bf16.gmra.mxu0 %v2103
        %v2117 = vpop.f32.mrf.mxu0
        %v2118 = vadd.f32 0.0, %v2117
        %v2119 = vpop.f32.mrf.mxu0
        %2120 = vdwg.mxu0
        %v2121 = vmul.f32 %v2118, 0.35355338
        %v2122 = vsel %vm1352, %v2121, -inf
        %2123 = vmax.xlane.f32.xlu0 %v2122
        %v2124 = vpop.xlane.xlu0 %2123
        %v2125 = vsub.f32 %v2121, %v2124
        %v2126 = vmul.f32 %v2125, 1.442695
        %v2127 = vpow.pop %v2126
        %v2128 = vsel %vm1352, %v2127, 0.0
        %2129 = vadd.xlane.f32.xlu0 %v2128
        %v2130 = vpop.xlane.xlu0 %2129
        %v2131 = vrcp.pop %v2130
        %v2132 = vmul.f32 %v2130, %v2131
        %v2133 = vsub.f32 1.0, %v2132
        %v2134 = vmul.f32 %v2131, %v2133
        %v2135 = vadd.f32 %v2131, %v2134
        %vm2136 = vweird.f32 %v2130
        %vm2137 = vweird.f32 %v2131
        %vm2138 = vmor %vm2136, %vm2137
        %v2139 = vsel %vm2138, %v2131, %v2135
        %v2140 = vand.u32 2147483647, %v2130
        %vm2141 = vcmp.eq.f32.partialorder %v2140, 8.507059e+37
        %v2142 = vand.u32 %v2130, 2147483648
        %v2143 = vor.u32 1.1754944e-38, %v2142
        %v2144 = vsel %vm2141, %v2143, %v2139
        %v2145 = vmul.f32 %v2127, %v2144
        %v2146 = vpack.c.bf16 %v2145, %v2145
        %2147 = vrot.lane.b32.xlu0 %v2076, 112
        %v2148 = vpop.permute.xlu0 %2147
        %v2150 = vsel %vm1352, %v2146, 0
        %v2153 = vsel %vm1402, %v2148, 0
        %2155 = vmatpush.bf16.msra.mxu0 0
        %2156 = vmatpush.bf16.msra.mxu0 0
        %2157 = vmatpush.bf16.msra.mxu0 0
        %2158 = vmatpush.bf16.msra.mxu0 0
        %2159 = vmatpush.bf16.msra.mxu0 0
        %2160 = vmatpush.bf16.msra.mxu0 0
        %2161 = vmatpush.bf16.msra.mxu0 0
        %2162 = vmatpush.bf16.msra.mxu0 %v2153
        %2163 = vmatmul.bf16.gmra.mxu0 %v2150
        %v2164 = vpop.f32.mrf.mxu0
        %v2165 = vadd.f32 0.0, %v2164
        %v2166 = vpop.f32.mrf.mxu0
        %2167 = vdwg.mxu0
        %2168 = vrot.lane.b32.xlu0 %v2021, 104
        %v2169 = vpop.permute.xlu0 %2168
        %2170 = vrot.lane.b32.xlu0 %v2026, 104
        %v2171 = vpop.permute.xlu0 %2170
        %v2173 = vsel %vm1352, %v2169, 0
        %v2176 = vsel %vm1352, %v2171, 0
        %2178 = vmatpush.bf16.xpose.msra.mxu0 0
        %2179 = vmatpush.bf16.xpose.msra.mxu0 0
        %2180 = vmatpush.bf16.xpose.msra.mxu0 0
        %2181 = vmatpush.bf16.xpose.msra.mxu0 0
        %2182 = vmatpush.bf16.xpose.msra.mxu0 0
        %2183 = vmatpush.bf16.xpose.msra.mxu0 0
        %2184 = vmatpush.bf16.xpose.msra.mxu0 0
        %2185 = vmatpush.bf16.xpose.msra.mxu0 %v2176
        %2186 = vmatmul.bf16.gmra.mxu0 %v2173
        %v2187 = vpop.f32.mrf.mxu0
        %v2188 = vadd.f32 0.0, %v2187
        %v2189 = vpop.f32.mrf.mxu0
        %2190 = vdwg.mxu0
        %v2191 = vmul.f32 %v2188, 0.35355338
        %v2192 = vsel %vm1352, %v2191, -inf
        %2193 = vmax.xlane.f32.xlu0 %v2192
        %v2194 = vpop.xlane.xlu0 %2193
        %v2195 = vsub.f32 %v2191, %v2194
        %v2196 = vmul.f32 %v2195, 1.442695
        %v2197 = vpow.pop %v2196
        %v2198 = vsel %vm1352, %v2197, 0.0
        %2199 = vadd.xlane.f32.xlu0 %v2198
        %v2200 = vpop.xlane.xlu0 %2199
        %v2201 = vrcp.pop %v2200
        %v2202 = vmul.f32 %v2200, %v2201
        %v2203 = vsub.f32 1.0, %v2202
        %v2204 = vmul.f32 %v2201, %v2203
        %v2205 = vadd.f32 %v2201, %v2204
        %vm2206 = vweird.f32 %v2200
        %vm2207 = vweird.f32 %v2201
        %vm2208 = vmor %vm2206, %vm2207
        %v2209 = vsel %vm2208, %v2201, %v2205
        %v2210 = vand.u32 2147483647, %v2200
        %vm2211 = vcmp.eq.f32.partialorder %v2210, 8.507059e+37
        %v2212 = vand.u32 %v2200, 2147483648
        %v2213 = vor.u32 1.1754944e-38, %v2212
        %v2214 = vsel %vm2211, %v2213, %v2209
        %v2215 = vmul.f32 %v2197, %v2214
        %v2216 = vpack.c.bf16 %v2215, %v2215
        %2217 = vrot.lane.b32.xlu0 %v2076, 104
        %v2218 = vpop.permute.xlu0 %2217
        %v2220 = vsel %vm1352, %v2216, 0
        %v2223 = vsel %vm1402, %v2218, 0
        %2225 = vmatpush.bf16.msra.mxu0 0
        %2226 = vmatpush.bf16.msra.mxu0 0
        %2227 = vmatpush.bf16.msra.mxu0 0
        %2228 = vmatpush.bf16.msra.mxu0 0
        %2229 = vmatpush.bf16.msra.mxu0 0
        %2230 = vmatpush.bf16.msra.mxu0 0
        %2231 = vmatpush.bf16.msra.mxu0 0
        %2232 = vmatpush.bf16.msra.mxu0 %v2223
        %2233 = vmatmul.bf16.gmra.mxu0 %v2220
        %v2234 = vpop.f32.mrf.mxu0
        %v2235 = vadd.f32 0.0, %v2234
        %v2236 = vpop.f32.mrf.mxu0
        %2237 = vdwg.mxu0
        %2239 = vrot.lane.b32.xlu0 %v2095, 8
        %v2240 = vpop.permute.xlu0 %2239
        %2243 = vrot.lane.b32.xlu0 %v2165, 16
        %v2244 = vpop.permute.xlu0 %2243
        %2247 = vrot.lane.b32.xlu0 %v2235, 24
        %v2248 = vpop.permute.xlu0 %2247
        %v2250 = vsel %vm1352, %v2016, %v2240
        %v2251 = vsel %vm1651, %v2250, %v2244
        %v2252 = vsel %vm1653, %v2251, %v2248
        %v2253 = vpack.c.bf16 %v2252, %v2252
        %v2255 = vperm.slane %v1236, 0
        %v2261 = vunpack.c.l.b16 %v1232
        %v2262 = vunpack.c.l.b16 %v1233
        %v2263 = vunpack.c.l.b16 %v1234
        %v2264 = vunpack.c.l.b16 %v1235
        %v2265 = vpack.c.b16 %v2262, %v2261
        %v2266 = vpack.c.b16 %v2264, %v2263
        %v2270 = vsel %vm1277, %v2253, 0
        %2272 = vmatpush.bf16.msra.mxu0 0
        %2273 = vmatpush.bf16.msra.mxu0 0
        %2274 = vmatpush.bf16.msra.mxu0 0
        %2275 = vmatpush.bf16.msra.mxu0 0
        %2276 = vmatpush.bf16.msra.mxu0 0
        %2277 = vmatpush.bf16.msra.mxu0 0
        %2278 = vmatpush.bf16.msra.mxu0 %v2266
        %2279 = vmatpush.bf16.msra.mxu0 %v2265
        %2280 = vmatmul.bf16.gmra.mxu0 %v2270
        %v2281 = vpop.f32.mrf.mxu0
        %v2282 = vadd.f32 %v2255, %v2281
        %v2283 = vpop.f32.mrf.mxu0
        %2284 = vdwg.mxu0
        %v2285 = vadd.f32 %v1863, %v2282
        %v2286 = vmul.f32 %v2285, %v2285
        %v2287 = vsel %vm1277, %v2286, 0.0
        %2288 = vadd.xlane.f32.xlu0 %v2287
        %v2289 = vpop.xlane.xlu0 %2288
        %v2290 = vmul.f32 %v2289, %v1698
        %v2291 = vadd.f32 %v2290, 1e-06
        %v2292 = vrsqrt.pop %v2291
        %v2293 = vmul.f32 %v2292, %v2291
        %v2294 = vmul.f32 %v2293, %v2292
        %v2295 = vmul.f32 0.5, %v2294
        %v2296 = vsub.f32 1.5, %v2295
        %v2297 = vmul.f32 %v2292, %v2296
        %vm2298 = vweird.f32 %v2291
        %vm2299 = vweird.f32 %v2292
        %vm2300 = vmor %vm2298, %vm2299
        %v2301 = vsel %vm2300, %v2292, %v2297
        %v2302 = vmul.f32 %v2285, %v2301
        %v2304 = vperm.slane %v1237, 0
        %v2306 = vmul.f32 %v2302, %v2304
        %v2307 = vpack.c.bf16 %v2306, %v2306
        %v2309 = vperm.slane %v1242, 0
        %v2315 = vunpack.c.l.b16 %v1238
        %v2316 = vunpack.c.l.b16 %v1239
        %v2317 = vunpack.c.l.b16 %v1240
        %v2318 = vunpack.c.l.b16 %v1241
        %v2319 = vpack.c.b16 %v2316, %v2315
        %v2320 = vpack.c.b16 %v2318, %v2317
        %v2324 = vsel %vm1277, %v2307, 0
        %2326 = vmatpush.bf16.msra.mxu0 0
        %2327 = vmatpush.bf16.msra.mxu0 0
        %2328 = vmatpush.bf16.msra.mxu0 0
        %2329 = vmatpush.bf16.msra.mxu0 0
        %2330 = vmatpush.bf16.msra.mxu0 0
        %2331 = vmatpush.bf16.msra.mxu0 0
        %2332 = vmatpush.bf16.msra.mxu0 %v2320
        %2333 = vmatpush.bf16.msra.mxu0 %v2319
        %2334 = vmatmul.bf16.gmra.mxu0 %v2324
        %v2335 = vpop.f32.mrf.mxu0
        %v2336 = vadd.f32 %v2309, %v2335
        %v2337 = vpop.f32.mrf.mxu0
        %2338 = vdwg.mxu0
        %v2340 = vperm.slane %v1247, 0
        %v2346 = vunpack.c.l.b16 %v1243
        %v2347 = vunpack.c.l.b16 %v1244
        %v2348 = vunpack.c.l.b16 %v1245
        %v2349 = vunpack.c.l.b16 %v1246
        %v2350 = vpack.c.b16 %v2347, %v2346
        %v2351 = vpack.c.b16 %v2349, %v2348
        %2354 = vmatpush.bf16.msra.mxu0 0
        %2355 = vmatpush.bf16.msra.mxu0 0
        %2356 = vmatpush.bf16.msra.mxu0 0
        %2357 = vmatpush.bf16.msra.mxu0 0
        %2358 = vmatpush.bf16.msra.mxu0 0
        %2359 = vmatpush.bf16.msra.mxu0 0
        %2360 = vmatpush.bf16.msra.mxu0 %v2351
        %2361 = vmatpush.bf16.msra.mxu0 %v2350
        %2362 = vmatmul.bf16.gmra.mxu0 %v2324
        %v2363 = vpop.f32.mrf.mxu0
        %v2364 = vadd.f32 %v2340, %v2363
        %v2365 = vpop.f32.mrf.mxu0
        %2366 = vdwg.mxu0
        %v2367 = vxor.u32 %v2336, 2147483648
        %v2368 = vmul.f32 %v2367, 1.442695
        %v2369 = vpow.pop %v2368
        %v2370 = vadd.f32 %v2369, 1.0
        %v2371 = vrcp.pop %v2370
        %v2372 = vmul.f32 %v2370, %v2371
        %v2373 = vsub.f32 1.0, %v2372
        %v2374 = vmul.f32 %v2371, %v2373
        %v2375 = vadd.f32 %v2371, %v2374
        %vm2376 = vweird.f32 %v2370
        %vm2377 = vweird.f32 %v2371
        %vm2378 = vmor %vm2376, %vm2377
        %v2379 = vsel %vm2378, %v2371, %v2375
        %v2380 = vand.u32 2147483647, %v2370
        %vm2381 = vcmp.eq.f32.partialorder %v2380, 8.507059e+37
        %v2382 = vand.u32 %v2370, 2147483648
        %v2383 = vor.u32 1.1754944e-38, %v2382
        %v2384 = vsel %vm2381, %v2383, %v2379
        %v2385 = vmul.f32 1.0, %v2384
        %v2386 = vmul.f32 %v2336, %v2385
        %v2387 = vmul.f32 %v2386, %v2364
        %v2388 = vpack.c.bf16 %v2387, %v2387
        %v2390 = vperm.slane %v1256, 0
        %v2400 = vunpack.c.l.b16 %v1248
        %v2401 = vunpack.c.l.b16 %v1249
        %v2402 = vunpack.c.l.b16 %v1250
        %v2403 = vunpack.c.l.b16 %v1251
        %v2404 = vunpack.c.l.b16 %v1252
        %v2405 = vunpack.c.l.b16 %v1253
        %v2406 = vunpack.c.l.b16 %v1254
        %v2407 = vunpack.c.l.b16 %v1255
        %v2408 = vpack.c.b16 %v2401, %v2400
        %v2409 = vpack.c.b16 %v2403, %v2402
        %v2410 = vpack.c.b16 %v2405, %v2404
        %v2411 = vpack.c.b16 %v2407, %v2406
        %v2417 = vsel %vm1825, %v2388, 0
        %2419 = vmatpush.bf16.msra.mxu0 0
        %2420 = vmatpush.bf16.msra.mxu0 0
        %2421 = vmatpush.bf16.msra.mxu0 0
        %2422 = vmatpush.bf16.msra.mxu0 0
        %2423 = vmatpush.bf16.msra.mxu0 %v2411
        %2424 = vmatpush.bf16.msra.mxu0 %v2410
        %2425 = vmatpush.bf16.msra.mxu0 %v2409
        %2426 = vmatpush.bf16.msra.mxu0 %v2408
        %2427 = vmatmul.bf16.gmra.mxu0 %v2417
        %v2428 = vpop.f32.mrf.mxu0
        %v2429 = vadd.f32 %v2390, %v2428
        %v2430 = vpop.f32.mrf.mxu0
        %2431 = vdwg.mxu0
        %v2432 = vadd.f32 %v2306, %v2429
        %v2433 = vmul.f32 %v2432, %v2432
        %v2434 = vsel %vm1277, %v2433, 0.0
        %2435 = vadd.xlane.f32.xlu0 %v2434
        %v2436 = vpop.xlane.xlu0 %2435
        %v2437 = vmul.f32 %v2436, %v1698
        %v2438 = vadd.f32 %v2437, 1e-06
        %v2439 = vrsqrt.pop %v2438
        %v2440 = vmul.f32 %v2439, %v2438
        %v2441 = vmul.f32 %v2440, %v2439
        %v2442 = vmul.f32 0.5, %v2441
        %v2443 = vsub.f32 1.5, %v2442
        %v2444 = vmul.f32 %v2439, %v2443
        %vm2445 = vweird.f32 %v2438
        %vm2446 = vweird.f32 %v2439
        %vm2447 = vmor %vm2445, %vm2446
        %v2448 = vsel %vm2447, %v2439, %v2444
        %v2449 = vmul.f32 %v2432, %v2448
        %v2451 = vperm.slane %v1257, 0
        %v2453 = vmul.f32 %v2449, %v2451
        %2454 = vst.msk [vmem:[%s1165] sm:$0xff] %vm1277, %v2453
        %s2455 = sand.u32 %s820, 1
        %s2456 = scalar_lea.sflag [#allocation4], %s2455
        %s2457 = sand.u32 %s820, 1
        %s2458 = smul.addr %s2457, 8
        %s2459 = scalar_lea.vmem [#allocation16], %s2458
        // Predicated region
        $region189: #{block_forward.7} parent=155 // pred_check
          %p2460 = pneg %p830
        $region190: #{block_forward.7} parent=155 // pred_check_branch
          %2462 = sbr.rel (%p2460) target = $region192
        $region191: #{block_forward.7} parent=155 // pred_region
          %2464 = vsyncadd %s2456, 0
          %s2465 = smul.addr %s88, 8
          %s2466 = scalar_lea.hbm %s69, %s2465
          %s2468 = sshll.u32 %s2459, 4
          %s2469 = int_to_ptr.vmem [resolvable:$true] %s2468
          %s2470 = sshll.u32 %s2466, 4
          %s2471 = int_to_ptr.hbm [resolvable:$true] %s2470
          %2473 = dma.vmem_to_hbm [thread:$0]  %s2469, 128, %s2471, %s2456
        $region192: #{block_forward.7} parent=155 // pred_fallthru
          _
      $region156: #{block_forward.7} parent=5 // pred_fallthru
        _
      %p2474 = scmp.le.s32.totalorder 2, %s83
      // Predicated region
      $region193: #{block_forward.7} parent=5 // pred_check
        %p2475 = pneg %p2474
      $region194: #{block_forward.7} parent=5 // pred_check_branch
        %2477 = sbr.rel (%p2475) target = $region196
      $region195: #{block_forward.7} parent=5 // pred_region
        %s2478 = ssub.s32 %s83, 2
        // Predicated region
        $region197: #{block_forward.7} parent=195 // pred_check
          %p2479 = pneg %p836
        $region198: #{block_forward.7} parent=195 // pred_check_branch
          %2481 = sbr.rel (%p2479) target = $region200
        $region199: #{block_forward.7} parent=195 // pred_region
          %s2482 = sand.u32 %s821, 1
          %s2483 = scalar_lea.sflag [#allocation4], %s2482
          %s2484 = sand.u32 %s821, 1
          %s2485 = smul.addr %s2484, 8
          %s2486 = scalar_lea.vmem [#allocation16], %s2485
          %2488 = dma.done %s2483, 128
        $region200: #{block_forward.7} parent=195 // pred_fallthru
          _
      $region196: #{block_forward.7} parent=5 // pred_fallthru
        _
    $region6: #{block_forward.7} parent=1 // loop_footer
      %s87 = sadd.s32 1, %s83
    $region7: #{block_forward.7} parent=1 // loop_footer_branch
      %82 = sbr.rel target = $region3
    $region8: #{block_forward.7} parent=1 // loop_exit
      _
    %2489 = vsyncpa [#allocation3], 1
    %s2490 = scalar_lea.sflag [#allocation3], 1
    %2491 = vsyncpa %s2490, 1
    %2492 = vsyncpa [#allocation6], 1
    %2493 = vsyncpa [#allocation9], 1
    %2494 = vsyncpa [#allocation12], 1
    %2495 = vsyncpa [#allocation15], 1
    %2496 = vsyncpa [#allocation4], 1
    %s2497 = scalar_lea.sflag [#allocation4], 1
    %2498 = vsyncpa %s2497, 1

// kernel: block_forward.5
$region0: #{block_forward.5}
  #allocation0 [shape = 'u32[]', space=smem, size = 0x4, offset = 0x4, fixed_abs, tag = 'smem constant byte address 0x4 - core index']
  #allocation1 [shape = 'u32[72,128]{1,0:T(1,128)}', space=vmem, size = 0x9000, scoped, tag = 'internal scratch']
  %s0 = inlined_call_operand.vmem [shape: f32[2,4,32], index: 0, kind: input, shape index: {}]
  %s1 = inlined_call_operand.vmem [shape: f32[2,6,4,32], index: 1, kind: input, shape index: {}]
  %s2 = inlined_call_operand.vmem [shape: bf16[32,32], index: 2, kind: input, shape index: {}]
  %s3 = inlined_call_operand.vmem [shape: f32[1,32], index: 3, kind: input, shape index: {}]
  %s4 = inlined_call_operand.hbm [shape: bf16[32,32], index: 4, kind: input, shape index: {}]
  %s5 = inlined_call_operand.vmem [shape: f32[1,32], index: 5, kind: input, shape index: {}]
  %s6 = inlined_call_operand.hbm [shape: bf16[32,32], index: 6, kind: input, shape index: {}]
  %s7 = inlined_call_operand.vmem [shape: f32[1,32], index: 7, kind: input, shape index: {}]
  %s8 = inlined_call_operand.hbm [shape: bf16[32,32], index: 8, kind: input, shape index: {}]
  %s9 = inlined_call_operand.vmem [shape: f32[1,32], index: 9, kind: input, shape index: {}]
  %s10 = inlined_call_operand.vmem [shape: f32[1,32], index: 10, kind: input, shape index: {}]
  %s11 = inlined_call_operand.vmem [shape: f32[2,6,4,32], index: 11, kind: output, shape index: {}]
  %s12 = sld [smem:[#allocation0]]
  $region89: #{block_forward.5} parent=0
    _
  %s14 = ssub.s32 1, %s12
  %s15 = scalar_select 0, %s14, %s12
  $region1: #{block_forward.5} parent=0
    #allocation2 [shape = 'u8[8192]{0}', space=vmem, size = 0x2000, scoped, tag = 'input window, operand 4, single buffered']
    #allocation3 [shape = 's32[2]{0}', space=sflag, size = 0x8, scoped, tag = 'scoped memory for block_forward.5']
    #allocation4 [shape = 'u8[8192]{0}', space=vmem, size = 0x2000, scoped, tag = 'input window, operand 6, single buffered']
    #allocation5 [shape = 's32[1]{0}', space=sflag, size = 0x4, scoped, tag = 'scoped memory for block_forward.5']
    #allocation6 [shape = 'u8[8192]{0}', space=vmem, size = 0x2000, scoped, tag = 'input window, operand 8, single buffered']
    %16 = vsyncpa [#allocation3], 0
    %17 = vsyncpa [#allocation5], 0
    loop: start=0, step=1, limit=4
    $region2: #{block_forward.5} parent=1 // loop_pre_header
      _
    $region3: #{block_forward.5} parent=1 // loop_header
      %s19 = sphi 0, %s23
      %p20 = scmp.ge.s32.totalorder %s19, 4
      %s29 = sphi 0, %s31
      %s32 = sphi 0, %s29
      %s33 = sphi 0, %s32
      %s49 = sphi 0, %s33
      %s55 = sphi 0, %s57
      %s58 = sphi 0, %s55
      %s59 = sphi 0, %s58
      %s75 = sphi 0, %s59
      %s79 = sphi 0, %s79
      %s81 = sphi 0, %s79
      %s82 = sphi 0, %s81
      %s96 = sphi 0, %s82
      %s100 = sphi 0, %s100
      %s102 = sphi 0, %s100
      %s103 = sphi 0, %s102
      %s117 = sphi 0, %s103
      %s121 = sphi 0, %s121
      %s123 = sphi 0, %s121
      %s124 = sphi 0, %s123
      %s138 = sphi 0, %s124
      %s142 = sphi 0, %s142
      %s144 = sphi 0, %s142
      %s145 = sphi 0, %s144
      %s159 = sphi 0, %s145
      %s163 = sphi 0, %s163
      %s165 = sphi 0, %s163
      %s166 = sphi 0, %s165
      %s180 = sphi 0, %s166
      %s184 = sphi 0, %s184
      %s186 = sphi 0, %s184
      %s187 = sphi 0, %s186
      %s201 = sphi 0, %s187
      %s205 = sphi 0, %s205
      %s207 = sphi 0, %s205
      %s208 = sphi 0, %s207
      %s222 = sphi 0, %s208
      %s226 = sphi 0, %s226
      %s228 = sphi 0, %s226
      %s229 = sphi 0, %s228
      %s243 = sphi 0, %s229
      %s247 = sphi 0, %s247
      %s249 = sphi 0, %s247
      %s250 = sphi 0, %s249
      %s264 = sphi 0, %s250
      %s270 = sphi 0, %s272
      %s273 = sphi 0, %s270
      %s274 = sphi 0, %s273
      %s290 = sphi 0, %s274
    $region4: #{block_forward.5} parent=1 // loop_header_branch
      %22 = sbr.rel (%p20) target = $region8
    $region5: #{block_forward.5} parent=1 // loop_body
      %s24 = ssub.s32 %s19, 1
      %s25 = ssub.s32 %s19, 2
      %s26 = sadd.s32 %s19, 1
      %s27 = ssub.s32 %s19, %s26
      %p28 = scmp.eq.s32.totalorder %s27, 0
      %s30 = sadd.s32 %s29, 1
      %s31 = scalar_select %p28, %s29, %s30
      %p34 = pneg %p28
      %p35 = scmp.eq.s32.totalorder %s19, 1
      %p36 = por %p34, %p35
      %p37 = scmp.ne.s32.totalorder %s29, %s32
      %p38 = scmp.eq.s32.totalorder %s19, 0
      %p39 = por %p37, %p38
      %p40 = scmp.ne.s32.totalorder %s29, %s32
      %p41 = scmp.eq.s32.totalorder %s24, 1
      %p42 = por %p40, %p41
      %p43 = scmp.ne.s32.totalorder %s32, %s33
      %p44 = scmp.eq.s32.totalorder %s24, 0
      %p45 = por %p43, %p44
      %p46 = scmp.ne.s32.totalorder %s32, %s33
      %p47 = scmp.eq.s32.totalorder %s25, 1
      %p48 = por %p46, %p47
      %p50 = scmp.ne.s32.totalorder %s33, %s49
      %p51 = scmp.eq.s32.totalorder %s25, 0
      %p52 = por %p50, %p51
      %s53 = ssub.s32 %s19, %s26
      %p54 = scmp.eq.s32.totalorder %s53, 0
      %s56 = sadd.s32 %s55, 1
      %s57 = scalar_select %p54, %s55, %s56
      %p60 = pneg %p54
      %p61 = scmp.eq.s32.totalorder %s19, 1
      %p62 = por %p60, %p61
      %p63 = scmp.ne.s32.totalorder %s55, %s58
      %p64 = scmp.eq.s32.totalorder %s19, 0
      %p65 = por %p63, %p64
      %p66 = scmp.ne.s32.totalorder %s55, %s58
      %p67 = scmp.eq.s32.totalorder %s24, 1
      %p68 = por %p66, %p67
      %p69 = scmp.ne.s32.totalorder %s58, %s59
      %p70 = scmp.eq.s32.totalorder %s24, 0
      %p71 = por %p69, %p70
      %p72 = scmp.ne.s32.totalorder %s58, %s59
      %p73 = scmp.eq.s32.totalorder %s25, 1
      %p74 = por %p72, %p73
      %p76 = scmp.ne.s32.totalorder %s59, %s75
      %p77 = scmp.eq.s32.totalorder %s25, 0
      %p78 = por %p76, %p77
      %s80 = sadd.s32 %s79, 1
      %p83 = scmp.eq.s32.totalorder %s19, 1
      %p84 = scmp.ne.s32.totalorder %s79, %s81
      %p85 = scmp.eq.s32.totalorder %s19, 0
      %p86 = por %p84, %p85
      %p87 = scmp.ne.s32.totalorder %s79, %s81
      %p88 = scmp.eq.s32.totalorder %s24, 1
      %p89 = por %p87, %p88
      %p90 = scmp.ne.s32.totalorder %s81, %s82
      %p91 = scmp.eq.s32.totalorder %s24, 0
      %p92 = por %p90, %p91
      %p93 = scmp.ne.s32.totalorder %s81, %s82
      %p94 = scmp.eq.s32.totalorder %s25, 1
      %p95 = por %p93, %p94
      %p97 = scmp.ne.s32.totalorder %s82, %s96
      %p98 = scmp.eq.s32.totalorder %s25, 0
      %p99 = por %p97, %p98
      %s101 = sadd.s32 %s100, 1
      %p104 = scmp.eq.s32.totalorder %s19, 1
      %p105 = scmp.ne.s32.totalorder %s100, %s102
      %p106 = scmp.eq.s32.totalorder %s19, 0
      %p107 = por %p105, %p106
      %p108 = scmp.ne.s32.totalorder %s100, %s102
      %p109 = scmp.eq.s32.totalorder %s24, 1
      %p110 = por %p108, %p109
      %p111 = scmp.ne.s32.totalorder %s102, %s103
      %p112 = scmp.eq.s32.totalorder %s24, 0
      %p113 = por %p111, %p112
      %p114 = scmp.ne.s32.totalorder %s102, %s103
      %p115 = scmp.eq.s32.totalorder %s25, 1
      %p116 = por %p114, %p115
      %p118 = scmp.ne.s32.totalorder %s103, %s117
      %p119 = scmp.eq.s32.totalorder %s25, 0
      %p120 = por %p118, %p119
      %s122 = sadd.s32 %s121, 1
      %p125 = scmp.eq.s32.totalorder %s19, 1
      %p126 = scmp.ne.s32.totalorder %s121, %s123
      %p127 = scmp.eq.s32.totalorder %s19, 0
      %p128 = por %p126, %p127
      %p129 = scmp.ne.s32.totalorder %s121, %s123
      %p130 = scmp.eq.s32.totalorder %s24, 1
      %p131 = por %p129, %p130
      %p132 = scmp.ne.s32.totalorder %s123, %s124
      %p133 = scmp.eq.s32.totalorder %s24, 0
      %p134 = por %p132, %p133
      %p135 = scmp.ne.s32.totalorder %s123, %s124
      %p136 = scmp.eq.s32.totalorder %s25, 1
      %p137 = por %p135, %p136
      %p139 = scmp.ne.s32.totalorder %s124, %s138
      %p140 = scmp.eq.s32.totalorder %s25, 0
      %p141 = por %p139, %p140
      %s143 = sadd.s32 %s142, 1
      %p146 = scmp.eq.s32.totalorder %s19, 1
      %p147 = scmp.ne.s32.totalorder %s142, %s144
      %p148 = scmp.eq.s32.totalorder %s19, 0
      %p149 = por %p147, %p148
      %p150 = scmp.ne.s32.totalorder %s142, %s144
      %p151 = scmp.eq.s32.totalorder %s24, 1
      %p152 = por %p150, %p151
      %p153 = scmp.ne.s32.totalorder %s144, %s145
      %p154 = scmp.eq.s32.totalorder %s24, 0
      %p155 = por %p153, %p154
      %p156 = scmp.ne.s32.totalorder %s144, %s145
      %p157 = scmp.eq.s32.totalorder %s25, 1
      %p158 = por %p156, %p157
      %p160 = scmp.ne.s32.totalorder %s145, %s159
      %p161 = scmp.eq.s32.totalorder %s25, 0
      %p162 = por %p160, %p161
      %s164 = sadd.s32 %s163, 1
      %p167 = scmp.eq.s32.totalorder %s19, 1
      %p168 = scmp.ne.s32.totalorder %s163, %s165
      %p169 = scmp.eq.s32.totalorder %s19, 0
      %p170 = por %p168, %p169
      %p171 = scmp.ne.s32.totalorder %s163, %s165
      %p172 = scmp.eq.s32.totalorder %s24, 1
      %p173 = por %p171, %p172
      %p174 = scmp.ne.s32.totalorder %s165, %s166
      %p175 = scmp.eq.s32.totalorder %s24, 0
      %p176 = por %p174, %p175
      %p177 = scmp.ne.s32.totalorder %s165, %s166
      %p178 = scmp.eq.s32.totalorder %s25, 1
      %p179 = por %p177, %p178
      %p181 = scmp.ne.s32.totalorder %s166, %s180
      %p182 = scmp.eq.s32.totalorder %s25, 0
      %p183 = por %p181, %p182
      %s185 = sadd.s32 %s184, 1
      %p188 = scmp.eq.s32.totalorder %s19, 1
      %p189 = scmp.ne.s32.totalorder %s184, %s186
      %p190 = scmp.eq.s32.totalorder %s19, 0
      %p191 = por %p189, %p190
      %p192 = scmp.ne.s32.totalorder %s184, %s186
      %p193 = scmp.eq.s32.totalorder %s24, 1
      %p194 = por %p192, %p193
      %p195 = scmp.ne.s32.totalorder %s186, %s187
      %p196 = scmp.eq.s32.totalorder %s24, 0
      %p197 = por %p195, %p196
      %p198 = scmp.ne.s32.totalorder %s186, %s187
      %p199 = scmp.eq.s32.totalorder %s25, 1
      %p200 = por %p198, %p199
      %p202 = scmp.ne.s32.totalorder %s187, %s201
      %p203 = scmp.eq.s32.totalorder %s25, 0
      %p204 = por %p202, %p203
      %s206 = sadd.s32 %s205, 1
      %p209 = scmp.eq.s32.totalorder %s19, 1
      %p210 = scmp.ne.s32.totalorder %s205, %s207
      %p211 = scmp.eq.s32.totalorder %s19, 0
      %p212 = por %p210, %p211
      %p213 = scmp.ne.s32.totalorder %s205, %s207
      %p214 = scmp.eq.s32.totalorder %s24, 1
      %p215 = por %p213, %p214
      %p216 = scmp.ne.s32.totalorder %s207, %s208
      %p217 = scmp.eq.s32.totalorder %s24, 0
      %p218 = por %p216, %p217
      %p219 = scmp.ne.s32.totalorder %s207, %s208
      %p220 = scmp.eq.s32.totalorder %s25, 1
      %p221 = por %p219, %p220
      %p223 = scmp.ne.s32.totalorder %s208, %s222
      %p224 = scmp.eq.s32.totalorder %s25, 0
      %p225 = por %p223, %p224
      %s227 = sadd.s32 %s226, 1
      %p230 = scmp.eq.s32.totalorder %s19, 1
      %p231 = scmp.ne.s32.totalorder %s226, %s228
      %p232 = scmp.eq.s32.totalorder %s19, 0
      %p233 = por %p231, %p232
      %p234 = scmp.ne.s32.totalorder %s226, %s228
      %p235 = scmp.eq.s32.totalorder %s24, 1
      %p236 = por %p234, %p235
      %p237 = scmp.ne.s32.totalorder %s228, %s229
      %p238 = scmp.eq.s32.totalorder %s24, 0
      %p239 = por %p237, %p238
      %p240 = scmp.ne.s32.totalorder %s228, %s229
      %p241 = scmp.eq.s32.totalorder %s25, 1
      %p242 = por %p240, %p241
      %p244 = scmp.ne.s32.totalorder %s229, %s243
      %p245 = scmp.eq.s32.totalorder %s25, 0
      %p246 = por %p244, %p245
      %s248 = sadd.s32 %s247, 1
      %p251 = scmp.eq.s32.totalorder %s19, 1
      %p252 = scmp.ne.s32.totalorder %s247, %s249
      %p253 = scmp.eq.s32.totalorder %s19, 0
      %p254 = por %p252, %p253
      %p255 = scmp.ne.s32.totalorder %s247, %s249
      %p256 = scmp.eq.s32.totalorder %s24, 1
      %p257 = por %p255, %p256
      %p258 = scmp.ne.s32.totalorder %s249, %s250
      %p259 = scmp.eq.s32.totalorder %s24, 0
      %p260 = por %p258, %p259
      %p261 = scmp.ne.s32.totalorder %s249, %s250
      %p262 = scmp.eq.s32.totalorder %s25, 1
      %p263 = por %p261, %p262
      %p265 = scmp.ne.s32.totalorder %s250, %s264
      %p266 = scmp.eq.s32.totalorder %s25, 0
      %p267 = por %p265, %p266
      %s268 = ssub.s32 %s19, %s26
      %p269 = scmp.eq.s32.totalorder %s268, 0
      %s271 = sadd.s32 %s270, 1
      %s272 = scalar_select %p269, %s270, %s271
      %p275 = pneg %p269
      %p276 = scmp.eq.s32.totalorder %s19, 1
      %p277 = por %p275, %p276
      %p278 = scmp.ne.s32.totalorder %s270, %s273
      %p279 = scmp.eq.s32.totalorder %s19, 0
      %p280 = por %p278, %p279
      %p281 = scmp.ne.s32.totalorder %s270, %s273
      %p282 = scmp.eq.s32.totalorder %s24, 1
      %p283 = por %p281, %p282
      %p284 = scmp.ne.s32.totalorder %s273, %s274
      %p285 = scmp.eq.s32.totalorder %s24, 0
      %p286 = por %p284, %p285
      %p287 = scmp.ne.s32.totalorder %s273, %s274
      %p288 = scmp.eq.s32.totalorder %s25, 1
      %p289 = por %p287, %p288
      %p291 = scmp.ne.s32.totalorder %s274, %s290
      %p292 = scmp.eq.s32.totalorder %s25, 0
      %p293 = por %p291, %p292
      %p294 = scmp.le.s32.totalorder 1, %s19
      %p295 = scmp.lt.s32.totalorder %s19, 3
      %p296 = pnand %p294, %p295
      %p297 = pneg %p296
      // Predicated region
      $region9: #{block_forward.5} parent=5 // pred_check
        _
      $region10: #{block_forward.5} parent=5 // pred_check_branch
        %299 = sbr.rel (%p296) target = $region12
      $region11: #{block_forward.5} parent=5 // pred_region
        %s300 = ssub.s32 %s19, 1
        // Predicated region
        $region13: #{block_forward.5} parent=11 // pred_check
          %p301 = pneg %p92
        $region14: #{block_forward.5} parent=11 // pred_check_branch
          %303 = sbr.rel (%p301) target = $region16
        $region15: #{block_forward.5} parent=11 // pred_region
          _
        $region16: #{block_forward.5} parent=11 // pred_fallthru
          _
        // Predicated region
        $region17: #{block_forward.5} parent=11 // pred_check
          %p304 = pneg %p113
        $region18: #{block_forward.5} parent=11 // pred_check_branch
          %306 = sbr.rel (%p304) target = $region20
        $region19: #{block_forward.5} parent=11 // pred_region
          _
        $region20: #{block_forward.5} parent=11 // pred_fallthru
          _
        // Predicated region
        $region21: #{block_forward.5} parent=11 // pred_check
          %p307 = pneg %p134
        $region22: #{block_forward.5} parent=11 // pred_check_branch
          %309 = sbr.rel (%p307) target = $region24
        $region23: #{block_forward.5} parent=11 // pred_region
          %311 = vsyncadd [#allocation3], 0
          %s312 = sshll.u32 %s4, 4
          %s313 = int_to_ptr.hbm [resolvable:$true] %s312
          %s314 = sshll.u32 [#allocation2], 4
          %s315 = int_to_ptr.vmem [resolvable:$true] %s314
          %320 = dma.hbm_to_vmem [thread:$0]  %s313, 256, %s315, [#allocation3], 64, 64, 4
        $region24: #{block_forward.5} parent=11 // pred_fallthru
          _
        // Predicated region
        $region25: #{block_forward.5} parent=11 // pred_check
          %p321 = pneg %p155
        $region26: #{block_forward.5} parent=11 // pred_check_branch
          %323 = sbr.rel (%p321) target = $region28
        $region27: #{block_forward.5} parent=11 // pred_region
          _
        $region28: #{block_forward.5} parent=11 // pred_fallthru
          _
        // Predicated region
        $region29: #{block_forward.5} parent=11 // pred_check
          %p324 = pneg %p176
        $region30: #{block_forward.5} parent=11 // pred_check_branch
          %326 = sbr.rel (%p324) target = $region32
        $region31: #{block_forward.5} parent=11 // pred_region
          %328 = vsyncadd [#allocation5], 0
          %s329 = sshll.u32 %s6, 4
          %s330 = int_to_ptr.hbm [resolvable:$true] %s329
          %s331 = sshll.u32 [#allocation4], 4
          %s332 = int_to_ptr.vmem [resolvable:$true] %s331
          %337 = dma.hbm_to_vmem [thread:$0]  %s330, 256, %s332, [#allocation5], 64, 64, 4
        $region32: #{block_forward.5} parent=11 // pred_fallthru
          _
        // Predicated region
        $region33: #{block_forward.5} parent=11 // pred_check
          %p338 = pneg %p197
        $region34: #{block_forward.5} parent=11 // pred_check_branch
          %340 = sbr.rel (%p338) target = $region36
        $region35: #{block_forward.5} parent=11 // pred_region
          _
        $region36: #{block_forward.5} parent=11 // pred_fallthru
          _
        // Predicated region
        $region37: #{block_forward.5} parent=11 // pred_check
          %p341 = pneg %p218
        $region38: #{block_forward.5} parent=11 // pred_check_branch
          %343 = sbr.rel (%p341) target = $region40
        $region39: #{block_forward.5} parent=11 // pred_region
          %345 = vsyncadd [#allocation5], 0
          %s346 = sshll.u32 %s8, 4
          %s347 = int_to_ptr.hbm [resolvable:$true] %s346
          %s348 = sshll.u32 [#allocation6], 4
          %s349 = int_to_ptr.vmem [resolvable:$true] %s348
          %354 = dma.hbm_to_vmem [thread:$0]  %s347, 256, %s349, [#allocation5], 64, 64, 4
        $region40: #{block_forward.5} parent=11 // pred_fallthru
          _
        // Predicated region
        $region41: #{block_forward.5} parent=11 // pred_check
          %p355 = pneg %p239
        $region42: #{block_forward.5} parent=11 // pred_check_branch
          %357 = sbr.rel (%p355) target = $region44
        $region43: #{block_forward.5} parent=11 // pred_region
          _
        $region44: #{block_forward.5} parent=11 // pred_fallthru
          _
        // Predicated region
        $region45: #{block_forward.5} parent=11 // pred_check
          %p358 = pneg %p260
        $region46: #{block_forward.5} parent=11 // pred_check_branch
          %360 = sbr.rel (%p358) target = $region48
        $region47: #{block_forward.5} parent=11 // pred_region
          _
        $region48: #{block_forward.5} parent=11 // pred_fallthru
          _
      $region12: #{block_forward.5} parent=5 // pred_fallthru
        _
      %p361 = scmp.lt.s32.totalorder %s19, 2
      // Predicated region
      $region49: #{block_forward.5} parent=5 // pred_check
        %p362 = pneg %p361
      $region50: #{block_forward.5} parent=5 // pred_check_branch
        %364 = sbr.rel (%p362) target = $region52
      $region51: #{block_forward.5} parent=5 // pred_region
        // Predicated region
        $region53: #{block_forward.5} parent=51 // pred_check
          %p365 = pneg %p39
        $region54: #{block_forward.5} parent=51 // pred_check_branch
          %367 = sbr.rel (%p365) target = $region56
        $region55: #{block_forward.5} parent=51 // pred_region
          %p368 = scmp.lt.s32.totalorder %s19, 1
          %s369 = scalar_select %p368, %s19, 1
          %s370 = smul.addr %s369, 4
          %s371 = scalar_lea.vmem %s0, %s370
        $region56: #{block_forward.5} parent=51 // pred_fallthru
          _
        // Predicated region
        $region57: #{block_forward.5} parent=51 // pred_check
          %p372 = pneg %p65
        $region58: #{block_forward.5} parent=51 // pred_check_branch
          %374 = sbr.rel (%p372) target = $region60
        $region59: #{block_forward.5} parent=51 // pred_region
          %p375 = scmp.lt.s32.totalorder %s19, 1
          %s376 = scalar_select %p375, %s19, 1
          %s377 = smul.addr %s376, 6
          %s378 = smul.addr %s377, 4
          %s379 = scalar_lea.vmem %s1, %s378
        $region60: #{block_forward.5} parent=51 // pred_fallthru
          _
      $region52: #{block_forward.5} parent=5 // pred_fallthru
        _
      %p380 = scmp.le.s32.totalorder 1, %s19
      %p381 = scmp.lt.s32.totalorder %s19, 3
      %p382 = pnand %p380, %p381
      %p383 = pneg %p382
      // Predicated region
      $region61: #{block_forward.5} parent=5 // pred_check
        _
      $region62: #{block_forward.5} parent=5 // pred_check_branch
        %385 = sbr.rel (%p382) target = $region64
      $region63: #{block_forward.5} parent=5 // pred_region
        %s386 = ssub.s32 %s19, 1
        // Predicated region
        $region65: #{block_forward.5} parent=63 // pred_check
          %p387 = pneg %p134
        $region66: #{block_forward.5} parent=63 // pred_check_branch
          %389 = sbr.rel (%p387) target = $region68
        $region67: #{block_forward.5} parent=63 // pred_region
          %391 = dma.done [#allocation3], 256
        $region68: #{block_forward.5} parent=63 // pred_fallthru
          _
        // Predicated region
        $region69: #{block_forward.5} parent=63 // pred_check
          %p392 = pneg %p176
        $region70: #{block_forward.5} parent=63 // pred_check_branch
          %394 = sbr.rel (%p392) target = $region72
        $region71: #{block_forward.5} parent=63 // pred_region
          %396 = dma.done [#allocation5], 256
        $region72: #{block_forward.5} parent=63 // pred_fallthru
          _
        // Predicated region
        $region73: #{block_forward.5} parent=63 // pred_check
          %p397 = pneg %p218
        $region74: #{block_forward.5} parent=63 // pred_check_branch
          %399 = sbr.rel (%p397) target = $region76
        $region75: #{block_forward.5} parent=63 // pred_region
          %401 = dma.done [#allocation5], 256
        $region76: #{block_forward.5} parent=63 // pred_fallthru
          _
        %p402 = scmp.lt.s32.totalorder %s24, 1
        %s403 = scalar_select %p402, %s24, 1
        %s404 = smul.addr %s403, 4
        %s405 = scalar_lea.vmem %s0, %s404
        %p406 = pneg %p45
        %p407 = pneg %p42
        %p408 = scmp.lt.s32.totalorder %s24, 1
        %s409 = scalar_select %p408, %s24, 1
        %s410 = smul.addr %s409, 6
        %s411 = smul.addr %s410, 4
        %s412 = scalar_lea.vmem %s1, %s411
        %p413 = pneg %p71
        %p414 = pneg %p68
        %p415 = pneg %p92
        %p416 = pneg %p89
        %p417 = pneg %p113
        %p418 = pneg %p110
        %p419 = pneg %p134
        %p420 = pneg %p131
        %p421 = pneg %p155
        %p422 = pneg %p152
        %p423 = pneg %p176
        %p424 = pneg %p173
        %p425 = pneg %p197
        %p426 = pneg %p194
        %p427 = pneg %p218
        %p428 = pneg %p215
        %p429 = pneg %p239
        %p430 = pneg %p236
        %p431 = pneg %p260
        %p432 = pneg %p257
        %p433 = pneg %p286
        %p434 = pneg %p283
        %p435 = scmp.lt.s32.totalorder %s24, 1
        %s436 = scalar_select %p435, %s24, 1
        %s437 = smul.addr %s436, 6
        %s438 = smul.addr %s437, 4
        %s439 = scalar_lea.vmem %s11, %s438
        %p440 = scmp.lt.s32.totalorder %s24, 1
        %s441 = scalar_select %p440, %s24, 1
        %s442 = smul.addr %s441, 4
        %s443 = scalar_lea.vmem %s0, %s442
        %p444 = scmp.lt.s32.totalorder %s24, 1
        %s445 = scalar_select %p444, %s24, 1
        %s446 = smul.addr %s445, 6
        %s447 = smul.addr %s446, 4
        %s448 = scalar_lea.vmem %s1, %s447
        %p449 = scmp.lt.s32.totalorder %s24, 1
        %s450 = scalar_select %p449, %s24, 1
        %s451 = smul.addr %s450, 6
        %s452 = smul.addr %s451, 4
        %s453 = scalar_lea.vmem %s11, %s452
        %v455 = vld [vmem:[%s2] sm:$0xf]
        %v456 = vld [vmem:[%s2 + $0x4] sm:$0xf]
        %v457 = vld [vmem:[%s2 + $0x8] sm:$0xf]
        %v458 = vld [vmem:[%s2 + $0xc] sm:$0xf]
        %v459 = vld [vmem:[%s3] sm:$0x1]
        %v460 = vld [vmem:[#allocation2] sm:$0xf]
        %v461 = vld [vmem:[#allocation2 + $0x4] sm:$0xf]
        %v462 = vld [vmem:[#allocation2 + $0x8] sm:$0xf]
        %v463 = vld [vmem:[#allocation2 + $0xc] sm:$0xf]
        %v464 = vld [vmem:[%s5] sm:$0x1]
        %v465 = vld [vmem:[#allocation4] sm:$0xf]
        %v466 = vld [vmem:[#allocation4 + $0x4] sm:$0xf]
        %v467 = vld [vmem:[#allocation4 + $0x8] sm:$0xf]
        %v468 = vld [vmem:[#allocation4 + $0xc] sm:$0xf]
        %v469 = vld [vmem:[%s7] sm:$0x1]
        %v470 = vld [vmem:[#allocation6] sm:$0xf]
        %v471 = vld [vmem:[#allocation6 + $0x4] sm:$0xf]
        %v472 = vld [vmem:[#allocation6 + $0x8] sm:$0xf]
        %v473 = vld [vmem:[#allocation6 + $0xc] sm:$0xf]
        %v474 = vld [vmem:[%s9] sm:$0x1]
        %v475 = vld [vmem:[%s10] sm:$0x1]
        %v476 = vld [vmem:[%s443] sm:$0xf]
        %v477 = vld [vmem:[%s448] sm:$0xf]
        %v478 = vld [vmem:[%s448 + $0x4] sm:$0xf]
        %v479 = vld [vmem:[%s448 + $0x8] sm:$0xf]
        %v480 = vld [vmem:[%s448 + $0xc] sm:$0xf]
        %v481 = vld [vmem:[%s448 + $0x10] sm:$0xf]
        %v482 = vld [vmem:[%s448 + $0x14] sm:$0xf]
        %v483 = vpack.c.bf16 %v476, %v476
        %v485 = vperm.slane %v459, 0
        %v491 = vunpack.c.l.b16 %v455
        %v492 = vunpack.c.l.b16 %v456
        %v493 = vunpack.c.l.b16 %v457
        %v494 = vunpack.c.l.b16 %v458
        %v495 = vpack.c.b16 %v492, %v491
        %v496 = vpack.c.b16 %v494, %v493
        %vm499 = vcmask 261120
        %v501 = vsel %vm499, %v483, 0
        %503 = vmatpush.bf16.msra.mxu0 0
        %504 = vmatpush.bf16.msra.mxu0 0
        %505 = vmatpush.bf16.msra.mxu0 0
        %506 = vmatpush.bf16.msra.mxu0 0
        %507 = vmatpush.bf16.msra.mxu0 0
        %508 = vmatpush.bf16.msra.mxu0 0
        %509 = vmatpush.bf16.msra.mxu0 %v496
        %510 = vmatpush.bf16.msra.mxu0 %v495
        %511 = vmatmul.bf16.gmra.mxu0 %v501
        %v512 = vpop.f32.mrf.mxu0
        %v513 = vadd.f32 %v485, %v512
        %v514 = vpop.f32.mrf.mxu0
        %515 = vdwg.mxu0
        %v516 = vpack.c.bf16 %v477, %v477
        %v517 = vpack.c.bf16 %v478, %v478
        %v518 = vpack.c.bf16 %v479, %v479
        %v519 = vpack.c.bf16 %v480, %v480
        %v520 = vpack.c.bf16 %v481, %v481
        %v521 = vpack.c.bf16 %v482, %v482
        %v523 = vperm.slane %v464, 0
        %v529 = vunpack.c.l.b16 %v460
        %v530 = vunpack.c.l.b16 %v461
        %v531 = vunpack.c.l.b16 %v462
        %v532 = vunpack.c.l.b16 %v463
        %v533 = vpack.c.b16 %v530, %v529
        %v534 = vpack.c.b16 %v532, %v531
        %v538 = vsel %vm499, %v516, 0
        %540 = vmatpush.bf16.msra.mxu0 0
        %541 = vmatpush.bf16.msra.mxu0 0
        %542 = vmatpush.bf16.msra.mxu0 0
        %543 = vmatpush.bf16.msra.mxu0 0
        %544 = vmatpush.bf16.msra.mxu0 0
        %545 = vmatpush.bf16.msra.mxu0 0
        %546 = vmatpush.bf16.msra.mxu0 %v534
        %547 = vmatpush.bf16.msra.mxu0 %v533
        %548 = vmatmul.bf16.gmra.mxu0 %v538
        %v549 = vpop.f32.mrf.mxu0
        %v550 = vadd.f32 %v523, %v549
        %v551 = vpop.f32.mrf.mxu0
        %552 = vdwg.mxu0
        %v554 = vsel %vm499, %v517, 0
        %556 = vmatpush.bf16.msra.mxu0 0
        %557 = vmatpush.bf16.msra.mxu0 0
        %558 = vmatpush.bf16.msra.mxu0 0
        %559 = vmatpush.bf16.msra.mxu0 0
        %560 = vmatpush.bf16.msra.mxu0 0
        %561 = vmatpush.bf16.msra.mxu0 0
        %562 = vmatpush.bf16.msra.mxu0 %v534
        %563 = vmatpush.bf16.msra.mxu0 %v533
        %564 = vmatmul.bf16.gmra.mxu0 %v554
        %v565 = vpop.f32.mrf.mxu0
        %v566 = vadd.f32 %v523, %v565
        %v567 = vpop.f32.mrf.mxu0
        %568 = vdwg.mxu0
        %v570 = vsel %vm499, %v518, 0
        %572 = vmatpush.bf16.msra.mxu0 0
        %573 = vmatpush.bf16.msra.mxu0 0
        %574 = vmatpush.bf16.msra.mxu0 0
        %575 = vmatpush.bf16.msra.mxu0 0
        %576 = vmatpush.bf16.msra.mxu0 0
        %577 = vmatpush.bf16.msra.mxu0 0
        %578 = vmatpush.bf16.msra.mxu0 %v534
        %579 = vmatpush.bf16.msra.mxu0 %v533
        %580 = vmatmul.bf16.gmra.mxu0 %v570
        %v581 = vpop.f32.mrf.mxu0
        %v582 = vadd.f32 %v523, %v581
        %v583 = vpop.f32.mrf.mxu0
        %584 = vdwg.mxu0
        %v586 = vsel %vm499, %v519, 0
        %588 = vmatpush.bf16.msra.mxu0 0
        %589 = vmatpush.bf16.msra.mxu0 0
        %590 = vmatpush.bf16.msra.mxu0 0
        %591 = vmatpush.bf16.msra.mxu0 0
        %592 = vmatpush.bf16.msra.mxu0 0
        %593 = vmatpush.bf16.msra.mxu0 0
        %594 = vmatpush.bf16.msra.mxu0 %v534
        %595 = vmatpush.bf16.msra.mxu0 %v533
        %596 = vmatmul.bf16.gmra.mxu0 %v586
        %v597 = vpop.f32.mrf.mxu0
        %v598 = vadd.f32 %v523, %v597
        %v599 = vpop.f32.mrf.mxu0
        %600 = vdwg.mxu0
        %v602 = vsel %vm499, %v520, 0
        %604 = vmatpush.bf16.msra.mxu0 0
        %605 = vmatpush.bf16.msra.mxu0 0
        %606 = vmatpush.bf16.msra.mxu0 0
        %607 = vmatpush.bf16.msra.mxu0 0
        %608 = vmatpush.bf16.msra.mxu0 0
        %609 = vmatpush.bf16.msra.mxu0 0
        %610 = vmatpush.bf16.msra.mxu0 %v534
        %611 = vmatpush.bf16.msra.mxu0 %v533
        %612 = vmatmul.bf16.gmra.mxu0 %v602
        %v613 = vpop.f32.mrf.mxu0
        %v614 = vadd.f32 %v523, %v613
        %v615 = vpop.f32.mrf.mxu0
        %616 = vdwg.mxu0
        %v618 = vsel %vm499, %v521, 0
        %620 = vmatpush.bf16.msra.mxu0 0
        %621 = vmatpush.bf16.msra.mxu0 0
        %622 = vmatpush.bf16.msra.mxu0 0
        %623 = vmatpush.bf16.msra.mxu0 0
        %624 = vmatpush.bf16.msra.mxu0 0
        %625 = vmatpush.bf16.msra.mxu0 0
        %626 = vmatpush.bf16.msra.mxu0 %v534
        %627 = vmatpush.bf16.msra.mxu0 %v533
        %628 = vmatmul.bf16.gmra.mxu0 %v618
        %v629 = vpop.f32.mrf.mxu0
        %v630 = vadd.f32 %v523, %v629
        %v631 = vpop.f32.mrf.mxu0
        %632 = vdwg.mxu0
        %v634 = vperm.slane %v469, 0
        %v640 = vunpack.c.l.b16 %v465
        %v641 = vunpack.c.l.b16 %v466
        %v642 = vunpack.c.l.b16 %v467
        %v643 = vunpack.c.l.b16 %v468
        %v644 = vpack.c.b16 %v641, %v640
        %v645 = vpack.c.b16 %v643, %v642
        %648 = vmatpush.bf16.msra.mxu0 0
        %649 = vmatpush.bf16.msra.mxu0 0
        %650 = vmatpush.bf16.msra.mxu0 0
        %651 = vmatpush.bf16.msra.mxu0 0
        %652 = vmatpush.bf16.msra.mxu0 0
        %653 = vmatpush.bf16.msra.mxu0 0
        %654 = vmatpush.bf16.msra.mxu0 %v645
        %655 = vmatpush.bf16.msra.mxu0 %v644
        %656 = vmatmul.bf16.gmra.mxu0 %v538
        %v657 = vpop.f32.mrf.mxu0
        %v658 = vadd.f32 %v634, %v657
        %v659 = vpop.f32.mrf.mxu0
        %660 = vdwg.mxu0
        %661 = vmatpush.bf16.msra.mxu0 0
        %662 = vmatpush.bf16.msra.mxu0 0
        %663 = vmatpush.bf16.msra.mxu0 0
        %664 = vmatpush.bf16.msra.mxu0 0
        %665 = vmatpush.bf16.msra.mxu0 0
        %666 = vmatpush.bf16.msra.mxu0 0
        %667 = vmatpush.bf16.msra.mxu0 %v645
        %668 = vmatpush.bf16.msra.mxu0 %v644
        %669 = vmatmul.bf16.gmra.mxu0 %v554
        %v670 = vpop.f32.mrf.mxu0
        %v671 = vadd.f32 %v634, %v670
        %v672 = vpop.f32.mrf.mxu0
        %673 = vdwg.mxu0
        %674 = vmatpush.bf16.msra.mxu0 0
        %675 = vmatpush.bf16.msra.mxu0 0
        %676 = vmatpush.bf16.msra.mxu0 0
        %677 = vmatpush.bf16.msra.mxu0 0
        %678 = vmatpush.bf16.msra.mxu0 0
        %679 = vmatpush.bf16.msra.mxu0 0
        %680 = vmatpush.bf16.msra.mxu0 %v645
        %681 = vmatpush.bf16.msra.mxu0 %v644
        %682 = vmatmul.bf16.gmra.mxu0 %v570
        %v683 = vpop.f32.mrf.mxu0
        %v684 = vadd.f32 %v634, %v683
        %v685 = vpop.f32.mrf.mxu0
        %686 = vdwg.mxu0
        %687 = vmatpush.bf16.msra.mxu0 0
        %688 = vmatpush.bf16.msra.mxu0 0
        %689 = vmatpush.bf16.msra.mxu0 0
        %690 = vmatpush.bf16.msra.mxu0 0
        %691 = vmatpush.bf16.msra.mxu0 0
        %692 = vmatpush.bf16.msra.mxu0 0
        %693 = vmatpush.bf16.msra.mxu0 %v645
        %694 = vmatpush.bf16.msra.mxu0 %v644
        %695 = vmatmul.bf16.gmra.mxu0 %v586
        %v696 = vpop.f32.mrf.mxu0
        %v697 = vadd.f32 %v634, %v696
        %v698 = vpop.f32.mrf.mxu0
        %699 = vdwg.mxu0
        %700 = vmatpush.bf16.msra.mxu0 0
        %701 = vmatpush.bf16.msra.mxu0 0
        %702 = vmatpush.bf16.msra.mxu0 0
        %703 = vmatpush.bf16.msra.mxu0 0
        %704 = vmatpush.bf16.msra.mxu0 0
        %705 = vmatpush.bf16.msra.mxu0 0
        %706 = vmatpush.bf16.msra.mxu0 %v645
        %707 = vmatpush.bf16.msra.mxu0 %v644
        %708 = vmatmul.bf16.gmra.mxu0 %v602
        %v709 = vpop.f32.mrf.mxu0
        %v710 = vadd.f32 %v634, %v709
        %v711 = vpop.f32.mrf.mxu0
        %712 = vdwg.mxu0
        %713 = vmatpush.bf16.msra.mxu0 0
        %714 = vmatpush.bf16.msra.mxu0 0
        %715 = vmatpush.bf16.msra.mxu0 0
        %716 = vmatpush.bf16.msra.mxu0 0
        %717 = vmatpush.bf16.msra.mxu0 0
        %718 = vmatpush.bf16.msra.mxu0 0
        %719 = vmatpush.bf16.msra.mxu0 %v645
        %720 = vmatpush.bf16.msra.mxu0 %v644
        %721 = vmatmul.bf16.gmra.mxu0 %v618
        %v722 = vpop.f32.mrf.mxu0
        %v723 = vadd.f32 %v634, %v722
        %v724 = vpop.f32.mrf.mxu0
        %725 = vdwg.mxu0
        %v726 = vpack.c.bf16 %v513, %v513
        %v727 = vpack.c.bf16 %v550, %v550
        %v728 = vpack.c.bf16 %v566, %v566
        %v729 = vpack.c.bf16 %v582, %v582
        %v730 = vpack.c.bf16 %v598, %v598
        %v731 = vpack.c.bf16 %v614, %v614
        %v732 = vpack.c.bf16 %v630, %v630
        %vm733 = vcmask 64512
        %v735 = vsel %vm733, %v726, 0
        %v738 = vsel %vm733, %v727, 0
        %740 = vmatpush.bf16.xpose.msra.mxu0 0
        %741 = vmatpush.bf16.xpose.msra.mxu0 0
        %742 = vmatpush.bf16.xpose.msra.mxu0 0
        %743 = vmatpush.bf16.xpose.msra.mxu0 0
        %744 = vmatpush.bf16.xpose.msra.mxu0 0
        %745 = vmatpush.bf16.xpose.msra.mxu0 0
        %746 = vmatpush.bf16.xpose.msra.mxu0 0
        %747 = vmatpush.bf16.xpose.msra.mxu0 %v738
        %748 = vmatmul.bf16.gmra.mxu0 %v735
        %v749 = vpop.f32.mrf.mxu0
        %v750 = vadd.f32 0.0, %v749
        %v751 = vpop.f32.mrf.mxu0
        %752 = vdwg.mxu0
        %v754 = vsel %vm733, %v728, 0
        %756 = vmatpush.bf16.xpose.msra.mxu0 0
        %757 = vmatpush.bf16.xpose.msra.mxu0 0
        %758 = vmatpush.bf16.xpose.msra.mxu0 0
        %759 = vmatpush.bf16.xpose.msra.mxu0 0
        %760 = vmatpush.bf16.xpose.msra.mxu0 0
        %761 = vmatpush.bf16.xpose.msra.mxu0 0
        %762 = vmatpush.bf16.xpose.msra.mxu0 0
        %763 = vmatpush.bf16.xpose.msra.mxu0 %v754
        %764 = vmatmul.bf16.gmra.mxu0 %v735
        %v765 = vpop.f32.mrf.mxu0
        %v766 = vadd.f32 0.0, %v765
        %v767 = vpop.f32.mrf.mxu0
        %768 = vdwg.mxu0
        %v770 = vsel %vm733, %v729, 0
        %772 = vmatpush.bf16.xpose.msra.mxu0 0
        %773 = vmatpush.bf16.xpose.msra.mxu0 0
        %774 = vmatpush.bf16.xpose.msra.mxu0 0
        %775 = vmatpush.bf16.xpose.msra.mxu0 0
        %776 = vmatpush.bf16.xpose.msra.mxu0 0
        %777 = vmatpush.bf16.xpose.msra.mxu0 0
        %778 = vmatpush.bf16.xpose.msra.mxu0 0
        %779 = vmatpush.bf16.xpose.msra.mxu0 %v770
        %780 = vmatmul.bf16.gmra.mxu0 %v735
        %v781 = vpop.f32.mrf.mxu0
        %v782 = vadd.f32 0.0, %v781
        %v783 = vpop.f32.mrf.mxu0
        %784 = vdwg.mxu0
        %v786 = vsel %vm733, %v730, 0
        %788 = vmatpush.bf16.xpose.msra.mxu0 0
        %789 = vmatpush.bf16.xpose.msra.mxu0 0
        %790 = vmatpush.bf16.xpose.msra.mxu0 0
        %791 = vmatpush.bf16.xpose.msra.mxu0 0
        %792 = vmatpush.bf16.xpose.msra.mxu0 0
        %793 = vmatpush.bf16.xpose.msra.mxu0 0
        %794 = vmatpush.bf16.xpose.msra.mxu0 0
        %795 = vmatpush.bf16.xpose.msra.mxu0 %v786
        %796 = vmatmul.bf16.gmra.mxu0 %v735
        %v797 = vpop.f32.mrf.mxu0
        %v798 = vadd.f32 0.0, %v797
        %v799 = vpop.f32.mrf.mxu0
        %800 = vdwg.mxu0
        %v802 = vsel %vm733, %v731, 0
        %804 = vmatpush.bf16.xpose.msra.mxu0 0
        %805 = vmatpush.bf16.xpose.msra.mxu0 0
        %806 = vmatpush.bf16.xpose.msra.mxu0 0
        %807 = vmatpush.bf16.xpose.msra.mxu0 0
        %808 = vmatpush.bf16.xpose.msra.mxu0 0
        %809 = vmatpush.bf16.xpose.msra.mxu0 0
        %810 = vmatpush.bf16.xpose.msra.mxu0 0
        %811 = vmatpush.bf16.xpose.msra.mxu0 %v802
        %812 = vmatmul.bf16.gmra.mxu0 %v735
        %v813 = vpop.f32.mrf.mxu0
        %v814 = vadd.f32 0.0, %v813
        %v815 = vpop.f32.mrf.mxu0
        %816 = vdwg.mxu0
        %v818 = vsel %vm733, %v732, 0
        %820 = vmatpush.bf16.xpose.msra.mxu0 0
        %821 = vmatpush.bf16.xpose.msra.mxu0 0
        %822 = vmatpush.bf16.xpose.msra.mxu0 0
        %823 = vmatpush.bf16.xpose.msra.mxu0 0
        %824 = vmatpush.bf16.xpose.msra.mxu0 0
        %825 = vmatpush.bf16.xpose.msra.mxu0 0
        %826 = vmatpush.bf16.xpose.msra.mxu0 0
        %827 = vmatpush.bf16.xpose.msra.mxu0 %v818
        %828 = vmatmul.bf16.gmra.mxu0 %v735
        %v829 = vpop.f32.mrf.mxu0
        %v830 = vadd.f32 0.0, %v829
        %v831 = vpop.f32.mrf.mxu0
        %832 = vdwg.mxu0
        %v833 = vmul.f32 %v750, 0.35355338
        %v834 = vmul.f32 %v766, 0.35355338
        %v835 = vmul.f32 %v782, 0.35355338
        %v836 = vmul.f32 %v798, 0.35355338
        %v837 = vmul.f32 %v814, 0.35355338
        %v838 = vmul.f32 %v830, 0.35355338
        %vm839 = vcmask 27648
        %v840 = vsel %vm839, %v833, -inf
        %841 = vmax.xlane.f32.xlu0 %v840
        %v842 = vpop.xlane.xlu0 %841
        %v843 = vsel %vm839, %v834, -inf
        %844 = vmax.xlane.f32.xlu0 %v843
        %v845 = vpop.xlane.xlu0 %844
        %v846 = vsel %vm839, %v835, -inf
        %847 = vmax.xlane.f32.xlu0 %v846
        %v848 = vpop.xlane.xlu0 %847
        %v849 = vsel %vm839, %v836, -inf
        %850 = vmax.xlane.f32.xlu0 %v849
        %v851 = vpop.xlane.xlu0 %850
        %v852 = vsel %vm839, %v837, -inf
        %853 = vmax.xlane.f32.xlu0 %v852
        %v854 = vpop.xlane.xlu0 %853
        %v855 = vsel %vm839, %v838, -inf
        %856 = vmax.xlane.f32.xlu0 %v855
        %v857 = vpop.xlane.xlu0 %856
        %v858 = vsub.f32 %v833, %v842
        %v859 = vsub.f32 %v834, %v845
        %v860 = vsub.f32 %v835, %v848
        %v861 = vsub.f32 %v836, %v851
        %v862 = vsub.f32 %v837, %v854
        %v863 = vsub.f32 %v838, %v857
        %v864 = vmul.f32 %v858, 1.442695
        %v865 = vpow.pop %v864
        %v866 = vmul.f32 %v859, 1.442695
        %v867 = vpow.pop %v866
        %v868 = vmul.f32 %v860, 1.442695
        %v869 = vpow.pop %v868
        %v870 = vmul.f32 %v861, 1.442695
        %v871 = vpow.pop %v870
        %v872 = vmul.f32 %v862, 1.442695
        %v873 = vpow.pop %v872
        %v874 = vmul.f32 %v863, 1.442695
        %v875 = vpow.pop %v874
        %v876 = vsel %vm839, %v865, 0.0
        %877 = vadd.xlane.f32.xlu0 %v876
        %v878 = vpop.xlane.xlu0 %877
        %v879 = vsel %vm839, %v867, 0.0
        %880 = vadd.xlane.f32.xlu0 %v879
        %v881 = vpop.xlane.xlu0 %880
        %v882 = vsel %vm839, %v869, 0.0
        %883 = vadd.xlane.f32.xlu0 %v882
        %v884 = vpop.xlane.xlu0 %883
        %v885 = vsel %vm839, %v871, 0.0
        %886 = vadd.xlane.f32.xlu0 %v885
        %v887 = vpop.xlane.xlu0 %886
        %v888 = vsel %vm839, %v873, 0.0
        %889 = vadd.xlane.f32.xlu0 %v888
        %v890 = vpop.xlane.xlu0 %889
        %v891 = vsel %vm839, %v875, 0.0
        %892 = vadd.xlane.f32.xlu0 %v891
        %v893 = vpop.xlane.xlu0 %892
        %v894 = vrcp.pop %v878
        %v895 = vmul.f32 %v878, %v894
        %v896 = vsub.f32 1.0, %v895
        %v897 = vmul.f32 %v894, %v896
        %v898 = vadd.f32 %v894, %v897
        %vm899 = vweird.f32 %v878
        %vm900 = vweird.f32 %v894
        %vm901 = vmor %vm899, %vm900
        %v902 = vsel %vm901, %v894, %v898
        %v903 = vand.u32 2147483647, %v878
        %vm904 = vcmp.eq.f32.partialorder %v903, 8.507059e+37
        %v905 = vand.u32 %v878, 2147483648
        %v906 = vor.u32 1.1754944e-38, %v905
        %v907 = vsel %vm904, %v906, %v902
        %v908 = vmul.f32 %v865, %v907
        %v909 = vrcp.pop %v881
        %v910 = vmul.f32 %v881, %v909
        %v911 = vsub.f32 1.0, %v910
        %v912 = vmul.f32 %v909, %v911
        %v913 = vadd.f32 %v909, %v912
        %vm914 = vweird.f32 %v881
        %vm915 = vweird.f32 %v909
        %vm916 = vmor %vm914, %vm915
        %v917 = vsel %vm916, %v909, %v913
        %v918 = vand.u32 2147483647, %v881
        %vm919 = vcmp.eq.f32.partialorder %v918, 8.507059e+37
        %v920 = vand.u32 %v881, 2147483648
        %v921 = vor.u32 1.1754944e-38, %v920
        %v922 = vsel %vm919, %v921, %v917
        %v923 = vmul.f32 %v867, %v922
        %v924 = vrcp.pop %v884
        %v925 = vmul.f32 %v884, %v924
        %v926 = vsub.f32 1.0, %v925
        %v927 = vmul.f32 %v924, %v926
        %v928 = vadd.f32 %v924, %v927
        %vm929 = vweird.f32 %v884
        %vm930 = vweird.f32 %v924
        %vm931 = vmor %vm929, %vm930
        %v932 = vsel %vm931, %v924, %v928
        %v933 = vand.u32 2147483647, %v884
        %vm934 = vcmp.eq.f32.partialorder %v933, 8.507059e+37
        %v935 = vand.u32 %v884, 2147483648
        %v936 = vor.u32 1.1754944e-38, %v935
        %v937 = vsel %vm934, %v936, %v932
        %v938 = vmul.f32 %v869, %v937
        %v939 = vrcp.pop %v887
        %v940 = vmul.f32 %v887, %v939
        %v941 = vsub.f32 1.0, %v940
        %v942 = vmul.f32 %v939, %v941
        %v943 = vadd.f32 %v939, %v942
        %vm944 = vweird.f32 %v887
        %vm945 = vweird.f32 %v939
        %vm946 = vmor %vm944, %vm945
        %v947 = vsel %vm946, %v939, %v943
        %v948 = vand.u32 2147483647, %v887
        %vm949 = vcmp.eq.f32.partialorder %v948, 8.507059e+37
        %v950 = vand.u32 %v887, 2147483648
        %v951 = vor.u32 1.1754944e-38, %v950
        %v952 = vsel %vm949, %v951, %v947
        %v953 = vmul.f32 %v871, %v952
        %v954 = vrcp.pop %v890
        %v955 = vmul.f32 %v890, %v954
        %v956 = vsub.f32 1.0, %v955
        %v957 = vmul.f32 %v954, %v956
        %v958 = vadd.f32 %v954, %v957
        %vm959 = vweird.f32 %v890
        %vm960 = vweird.f32 %v954
        %vm961 = vmor %vm959, %vm960
        %v962 = vsel %vm961, %v954, %v958
        %v963 = vand.u32 2147483647, %v890
        %vm964 = vcmp.eq.f32.partialorder %v963, 8.507059e+37
        %v965 = vand.u32 %v890, 2147483648
        %v966 = vor.u32 1.1754944e-38, %v965
        %v967 = vsel %vm964, %v966, %v962
        %v968 = vmul.f32 %v873, %v967
        %v969 = vrcp.pop %v893
        %v970 = vmul.f32 %v893, %v969
        %v971 = vsub.f32 1.0, %v970
        %v972 = vmul.f32 %v969, %v971
        %v973 = vadd.f32 %v969, %v972
        %vm974 = vweird.f32 %v893
        %vm975 = vweird.f32 %v969
        %vm976 = vmor %vm974, %vm975
        %v977 = vsel %vm976, %v969, %v973
        %v978 = vand.u32 2147483647, %v893
        %vm979 = vcmp.eq.f32.partialorder %v978, 8.507059e+37
        %v980 = vand.u32 %v893, 2147483648
        %v981 = vor.u32 1.1754944e-38, %v980
        %v982 = vsel %vm979, %v981, %v977
        %v983 = vmul.f32 %v875, %v982
        %v984 = vpack.c.bf16 %v908, %v908
        %v985 = vpack.c.bf16 %v923, %v923
        %v986 = vpack.c.bf16 %v938, %v938
        %v987 = vpack.c.bf16 %v953, %v953
        %v988 = vpack.c.bf16 %v968, %v968
        %v989 = vpack.c.bf16 %v983, %v983
        %v990 = vpack.c.bf16 %v658, %v658
        %v991 = vpack.c.bf16 %v671, %v671
        %v992 = vpack.c.bf16 %v684, %v684
        %v993 = vpack.c.bf16 %v697, %v697
        %v994 = vpack.c.bf16 %v710, %v710
        %v995 = vpack.c.bf16 %v723, %v723
        %vm996 = vcmask 31744
        %v998 = vsel %vm996, %v984, 0
        %vm1000 = vcmask 1041408
        %v1002 = vsel %vm1000, %v990, 0
        %1004 = vmatpush.bf16.msra.mxu0 0
        %1005 = vmatpush.bf16.msra.mxu0 0
        %1006 = vmatpush.bf16.msra.mxu0 0
        %1007 = vmatpush.bf16.msra.mxu0 0
        %1008 = vmatpush.bf16.msra.mxu0 0
        %1009 = vmatpush.bf16.msra.mxu0 0
        %1010 = vmatpush.bf16.msra.mxu0 0
        %1011 = vmatpush.bf16.msra.mxu0 %v1002
        %1012 = vmatmul.bf16.gmra.mxu0 %v998
        %v1013 = vpop.f32.mrf.mxu0
        %v1014 = vadd.f32 0.0, %v1013
        %v1015 = vpop.f32.mrf.mxu0
        %1016 = vdwg.mxu0
        %v1018 = vsel %vm996, %v985, 0
        %v1021 = vsel %vm1000, %v991, 0
        %1023 = vmatpush.bf16.msra.mxu0 0
        %1024 = vmatpush.bf16.msra.mxu0 0
        %1025 = vmatpush.bf16.msra.mxu0 0
        %1026 = vmatpush.bf16.msra.mxu0 0
        %1027 = vmatpush.bf16.msra.mxu0 0
        %1028 = vmatpush.bf16.msra.mxu0 0
        %1029 = vmatpush.bf16.msra.mxu0 0
        %1030 = vmatpush.bf16.msra.mxu0 %v1021
        %1031 = vmatmul.bf16.gmra.mxu0 %v1018
        %v1032 = vpop.f32.mrf.mxu0
        %v1033 = vadd.f32 0.0, %v1032
        %v1034 = vpop.f32.mrf.mxu0
        %1035 = vdwg.mxu0
        %v1037 = vsel %vm996, %v986, 0
        %v1040 = vsel %vm1000, %v992, 0
        %1042 = vmatpush.bf16.msra.mxu0 0
        %1043 = vmatpush.bf16.msra.mxu0 0
        %1044 = vmatpush.bf16.msra.mxu0 0
        %1045 = vmatpush.bf16.msra.mxu0 0
        %1046 = vmatpush.bf16.msra.mxu0 0
        %1047 = vmatpush.bf16.msra.mxu0 0
        %1048 = vmatpush.bf16.msra.mxu0 0
        %1049 = vmatpush.bf16.msra.mxu0 %v1040
        %1050 = vmatmul.bf16.gmra.mxu0 %v1037
        %v1051 = vpop.f32.mrf.mxu0
        %v1052 = vadd.f32 0.0, %v1051
        %v1053 = vpop.f32.mrf.mxu0
        %1054 = vdwg.mxu0
        %v1056 = vsel %vm996, %v987, 0
        %v1059 = vsel %vm1000, %v993, 0
        %1061 = vmatpush.bf16.msra.mxu0 0
        %1062 = vmatpush.bf16.msra.mxu0 0
        %1063 = vmatpush.bf16.msra.mxu0 0
        %1064 = vmatpush.bf16.msra.mxu0 0
        %1065 = vmatpush.bf16.msra.mxu0 0
        %1066 = vmatpush.bf16.msra.mxu0 0
        %1067 = vmatpush.bf16.msra.mxu0 0
        %1068 = vmatpush.bf16.msra.mxu0 %v1059
        %1069 = vmatmul.bf16.gmra.mxu0 %v1056
        %v1070 = vpop.f32.mrf.mxu0
        %v1071 = vadd.f32 0.0, %v1070
        %v1072 = vpop.f32.mrf.mxu0
        %1073 = vdwg.mxu0
        %v1075 = vsel %vm996, %v988, 0
        %v1078 = vsel %vm1000, %v994, 0
        %1080 = vmatpush.bf16.msra.mxu0 0
        %1081 = vmatpush.bf16.msra.mxu0 0
        %1082 = vmatpush.bf16.msra.mxu0 0
        %1083 = vmatpush.bf16.msra.mxu0 0
        %1084 = vmatpush.bf16.msra.mxu0 0
        %1085 = vmatpush.bf16.msra.mxu0 0
        %1086 = vmatpush.bf16.msra.mxu0 0
        %1087 = vmatpush.bf16.msra.mxu0 %v1078
        %1088 = vmatmul.bf16.gmra.mxu0 %v1075
        %v1089 = vpop.f32.mrf.mxu0
        %v1090 = vadd.f32 0.0, %v1089
        %v1091 = vpop.f32.mrf.mxu0
        %1092 = vdwg.mxu0
        %v1094 = vsel %vm996, %v989, 0
        %v1097 = vsel %vm1000, %v995, 0
        %1099 = vmatpush.bf16.msra.mxu0 0
        %1100 = vmatpush.bf16.msra.mxu0 0
        %1101 = vmatpush.bf16.msra.mxu0 0
        %1102 = vmatpush.bf16.msra.mxu0 0
        %1103 = vmatpush.bf16.msra.mxu0 0
        %1104 = vmatpush.bf16.msra.mxu0 0
        %1105 = vmatpush.bf16.msra.mxu0 0
        %1106 = vmatpush.bf16.msra.mxu0 %v1097
        %1107 = vmatmul.bf16.gmra.mxu0 %v1094
        %v1108 = vpop.f32.mrf.mxu0
        %v1109 = vadd.f32 0.0, %v1108
        %v1110 = vpop.f32.mrf.mxu0
        %1111 = vdwg.mxu0
        %v1113 = vunpack.c.l.b16 %v726
        %v1114 = vpack.c.b16 %v1113, %v1113
        %1115 = vrot.lane.b32.xlu0 %v1114, 120
        %v1116 = vpop.permute.xlu0 %1115
        %v1118 = vunpack.c.l.b16 %v727
        %v1119 = vpack.c.b16 %v1118, %v1118
        %1120 = vrot.lane.b32.xlu0 %v1119, 120
        %v1121 = vpop.permute.xlu0 %1120
        %v1123 = vsel %vm733, %v1116, 0
        %v1126 = vsel %vm733, %v1121, 0
        %1128 = vmatpush.bf16.xpose.msra.mxu0 0
        %1129 = vmatpush.bf16.xpose.msra.mxu0 0
        %1130 = vmatpush.bf16.xpose.msra.mxu0 0
        %1131 = vmatpush.bf16.xpose.msra.mxu0 0
        %1132 = vmatpush.bf16.xpose.msra.mxu0 0
        %1133 = vmatpush.bf16.xpose.msra.mxu0 0
        %1134 = vmatpush.bf16.xpose.msra.mxu0 0
        %1135 = vmatpush.bf16.xpose.msra.mxu0 %v1126
        %1136 = vmatmul.bf16.gmra.mxu0 %v1123
        %v1137 = vpop.f32.mrf.mxu0
        %v1138 = vadd.f32 0.0, %v1137
        %v1139 = vpop.f32.mrf.mxu0
        %1140 = vdwg.mxu0
        %v1142 = vunpack.c.l.b16 %v728
        %v1143 = vpack.c.b16 %v1142, %v1142
        %1144 = vrot.lane.b32.xlu0 %v1143, 120
        %v1145 = vpop.permute.xlu0 %1144
        %v1147 = vsel %vm733, %v1145, 0
        %1149 = vmatpush.bf16.xpose.msra.mxu0 0
        %1150 = vmatpush.bf16.xpose.msra.mxu0 0
        %1151 = vmatpush.bf16.xpose.msra.mxu0 0
        %1152 = vmatpush.bf16.xpose.msra.mxu0 0
        %1153 = vmatpush.bf16.xpose.msra.mxu0 0
        %1154 = vmatpush.bf16.xpose.msra.mxu0 0
        %1155 = vmatpush.bf16.xpose.msra.mxu0 0
        %1156 = vmatpush.bf16.xpose.msra.mxu0 %v1147
        %1157 = vmatmul.bf16.gmra.mxu0 %v1123
        %v1158 = vpop.f32.mrf.mxu0
        %v1159 = vadd.f32 0.0, %v1158
        %v1160 = vpop.f32.mrf.mxu0
        %1161 = vdwg.mxu0
        %v1163 = vunpack.c.l.b16 %v729
        %v1164 = vpack.c.b16 %v1163, %v1163
        %1165 = vrot.lane.b32.xlu0 %v1164, 120
        %v1166 = vpop.permute.xlu0 %1165
        %v1168 = vsel %vm733, %v1166, 0
        %1170 = vmatpush.bf16.xpose.msra.mxu0 0
        %1171 = vmatpush.bf16.xpose.msra.mxu0 0
        %1172 = vmatpush.bf16.xpose.msra.mxu0 0
        %1173 = vmatpush.bf16.xpose.msra.mxu0 0
        %1174 = vmatpush.bf16.xpose.msra.mxu0 0
        %1175 = vmatpush.bf16.xpose.msra.mxu0 0
        %1176 = vmatpush.bf16.xpose.msra.mxu0 0
        %1177 = vmatpush.bf16.xpose.msra.mxu0 %v1168
        %1178 = vmatmul.bf16.gmra.mxu0 %v1123
        %v1179 = vpop.f32.mrf.mxu0
        %v1180 = vadd.f32 0.0, %v1179
        %v1181 = vpop.f32.mrf.mxu0
        %1182 = vdwg.mxu0
        %v1184 = vunpack.c.l.b16 %v730
        %v1185 = vpack.c.b16 %v1184, %v1184
        %1186 = vrot.lane.b32.xlu0 %v1185, 120
        %v1187 = vpop.permute.xlu0 %1186
        %v1189 = vsel %vm733, %v1187, 0
        %1191 = vmatpush.bf16.xpose.msra.mxu0 0
        %1192 = vmatpush.bf16.xpose.msra.mxu0 0
        %1193 = vmatpush.bf16.xpose.msra.mxu0 0
        %1194 = vmatpush.bf16.xpose.msra.mxu0 0
        %1195 = vmatpush.bf16.xpose.msra.mxu0 0
        %1196 = vmatpush.bf16.xpose.msra.mxu0 0
        %1197 = vmatpush.bf16.xpose.msra.mxu0 0
        %1198 = vmatpush.bf16.xpose.msra.mxu0 %v1189
        %1199 = vmatmul.bf16.gmra.mxu0 %v1123
        %v1200 = vpop.f32.mrf.mxu0
        %v1201 = vadd.f32 0.0, %v1200
        %v1202 = vpop.f32.mrf.mxu0
        %1203 = vdwg.mxu0
        %v1205 = vunpack.c.l.b16 %v731
        %v1206 = vpack.c.b16 %v1205, %v1205
        %1207 = vrot.lane.b32.xlu0 %v1206, 120
        %v1208 = vpop.permute.xlu0 %1207
        %v1210 = vsel %vm733, %v1208, 0
        %1212 = vmatpush.bf16.xpose.msra.mxu0 0
        %1213 = vmatpush.bf16.xpose.msra.mxu0 0
        %1214 = vmatpush.bf16.xpose.msra.mxu0 0
        %1215 = vmatpush.bf16.xpose.msra.mxu0 0
        %1216 = vmatpush.bf16.xpose.msra.mxu0 0
        %1217 = vmatpush.bf16.xpose.msra.mxu0 0
        %1218 = vmatpush.bf16.xpose.msra.mxu0 0
        %1219 = vmatpush.bf16.xpose.msra.mxu0 %v1210
        %1220 = vmatmul.bf16.gmra.mxu0 %v1123
        %v1221 = vpop.f32.mrf.mxu0
        %v1222 = vadd.f32 0.0, %v1221
        %v1223 = vpop.f32.mrf.mxu0
        %1224 = vdwg.mxu0
        %v1226 = vunpack.c.l.b16 %v732
        %v1227 = vpack.c.b16 %v1226, %v1226
        %1228 = vrot.lane.b32.xlu0 %v1227, 120
        %v1229 = vpop.permute.xlu0 %1228
        %v1231 = vsel %vm733, %v1229, 0
        %1233 = vmatpush.bf16.xpose.msra.mxu0 0
        %1234 = vmatpush.bf16.xpose.msra.mxu0 0
        %1235 = vmatpush.bf16.xpose.msra.mxu0 0
        %1236 = vmatpush.bf16.xpose.msra.mxu0 0
        %1237 = vmatpush.bf16.xpose.msra.mxu0 0
        %1238 = vmatpush.bf16.xpose.msra.mxu0 0
        %1239 = vmatpush.bf16.xpose.msra.mxu0 0
        %1240 = vmatpush.bf16.xpose.msra.mxu0 %v1231
        %1241 = vmatmul.bf16.gmra.mxu0 %v1123
        %v1242 = vpop.f32.mrf.mxu0
        %v1243 = vadd.f32 0.0, %v1242
        %v1244 = vpop.f32.mrf.mxu0
        %1245 = vdwg.mxu0
        %v1246 = vmul.f32 %v1138, 0.35355338
        %v1247 = vmul.f32 %v1159, 0.35355338
        %v1248 = vmul.f32 %v1180, 0.35355338
        %v1249 = vmul.f32 %v1201, 0.35355338
        %v1250 = vmul.f32 %v1222, 0.35355338
        %v1251 = vmul.f32 %v1243, 0.35355338
        %v1252 = vsel %vm839, %v1246, -inf
        %1253 = vmax.xlane.f32.xlu0 %v1252
        %v1254 = vpop.xlane.xlu0 %1253
        %v1255 = vsel %vm839, %v1247, -inf
        %1256 = vmax.xlane.f32.xlu0 %v1255
        %v1257 = vpop.xlane.xlu0 %1256
        %v1258 = vsel %vm839, %v1248, -inf
        %1259 = vmax.xlane.f32.xlu0 %v1258
        %v1260 = vpop.xlane.xlu0 %1259
        %v1261 = vsel %vm839, %v1249, -inf
        %1262 = vmax.xlane.f32.xlu0 %v1261
        %v1263 = vpop.xlane.xlu0 %1262
        %v1264 = vsel %vm839, %v1250, -inf
        %1265 = vmax.xlane.f32.xlu0 %v1264
        %v1266 = vpop.xlane.xlu0 %1265
        %v1267 = vsel %vm839, %v1251, -inf
        %1268 = vmax.xlane.f32.xlu0 %v1267
        %v1269 = vpop.xlane.xlu0 %1268
        %v1270 = vsub.f32 %v1246, %v1254
        %v1271 = vsub.f32 %v1247, %v1257
        %v1272 = vsub.f32 %v1248, %v1260
        %v1273 = vsub.f32 %v1249, %v1263
        %v1274 = vsub.f32 %v1250, %v1266
        %v1275 = vsub.f32 %v1251, %v1269
        %v1276 = vmul.f32 %v1270, 1.442695
        %v1277 = vpow.pop %v1276
        %v1278 = vmul.f32 %v1271, 1.442695
        %v1279 = vpow.pop %v1278
        %v1280 = vmul.f32 %v1272, 1.442695
        %v1281 = vpow.pop %v1280
        %v1282 = vmul.f32 %v1273, 1.442695
        %v1283 = vpow.pop %v1282
        %v1284 = vmul.f32 %v1274, 1.442695
        %v1285 = vpow.pop %v1284
        %v1286 = vmul.f32 %v1275, 1.442695
        %v1287 = vpow.pop %v1286
        %v1288 = vsel %vm839, %v1277, 0.0
        %1289 = vadd.xlane.f32.xlu0 %v1288
        %v1290 = vpop.xlane.xlu0 %1289
        %v1291 = vsel %vm839, %v1279, 0.0
        %1292 = vadd.xlane.f32.xlu0 %v1291
        %v1293 = vpop.xlane.xlu0 %1292
        %v1294 = vsel %vm839, %v1281, 0.0
        %1295 = vadd.xlane.f32.xlu0 %v1294
        %v1296 = vpop.xlane.xlu0 %1295
        %v1297 = vsel %vm839, %v1283, 0.0
        %1298 = vadd.xlane.f32.xlu0 %v1297
        %v1299 = vpop.xlane.xlu0 %1298
        %v1300 = vsel %vm839, %v1285, 0.0
        %1301 = vadd.xlane.f32.xlu0 %v1300
        %v1302 = vpop.xlane.xlu0 %1301
        %v1303 = vsel %vm839, %v1287, 0.0
        %1304 = vadd.xlane.f32.xlu0 %v1303
        %v1305 = vpop.xlane.xlu0 %1304
        %v1306 = vrcp.pop %v1290
        %v1307 = vmul.f32 %v1290, %v1306
        %v1308 = vsub.f32 1.0, %v1307
        %v1309 = vmul.f32 %v1306, %v1308
        %v1310 = vadd.f32 %v1306, %v1309
        %vm1311 = vweird.f32 %v1290
        %vm1312 = vweird.f32 %v1306
        %vm1313 = vmor %vm1311, %vm1312
        %v1314 = vsel %vm1313, %v1306, %v1310
        %v1315 = vand.u32 2147483647, %v1290
        %vm1316 = vcmp.eq.f32.partialorder %v1315, 8.507059e+37
        %v1317 = vand.u32 %v1290, 2147483648
        %v1318 = vor.u32 1.1754944e-38, %v1317
        %v1319 = vsel %vm1316, %v1318, %v1314
        %v1320 = vmul.f32 %v1277, %v1319
        %v1321 = vrcp.pop %v1293
        %v1322 = vmul.f32 %v1293, %v1321
        %v1323 = vsub.f32 1.0, %v1322
        %v1324 = vmul.f32 %v1321, %v1323
        %v1325 = vadd.f32 %v1321, %v1324
        %vm1326 = vweird.f32 %v1293
        %vm1327 = vweird.f32 %v1321
        %vm1328 = vmor %vm1326, %vm1327
        %v1329 = vsel %vm1328, %v1321, %v1325
        %v1330 = vand.u32 2147483647, %v1293
        %vm1331 = vcmp.eq.f32.partialorder %v1330, 8.507059e+37
        %v1332 = vand.u32 %v1293, 2147483648
        %v1333 = vor.u32 1.1754944e-38, %v1332
        %v1334 = vsel %vm1331, %v1333, %v1329
        %v1335 = vmul.f32 %v1279, %v1334
        %v1336 = vrcp.pop %v1296
        %v1337 = vmul.f32 %v1296, %v1336
        %v1338 = vsub.f32 1.0, %v1337
        %v1339 = vmul.f32 %v1336, %v1338
        %v1340 = vadd.f32 %v1336, %v1339
        %vm1341 = vweird.f32 %v1296
        %vm1342 = vweird.f32 %v1336
        %vm1343 = vmor %vm1341, %vm1342
        %v1344 = vsel %vm1343, %v1336, %v1340
        %v1345 = vand.u32 2147483647, %v1296
        %vm1346 = vcmp.eq.f32.partialorder %v1345, 8.507059e+37
        %v1347 = vand.u32 %v1296, 2147483648
        %v1348 = vor.u32 1.1754944e-38, %v1347
        %v1349 = vsel %vm1346, %v1348, %v1344
        %v1350 = vmul.f32 %v1281, %v1349
        %v1351 = vrcp.pop %v1299
        %v1352 = vmul.f32 %v1299, %v1351
        %v1353 = vsub.f32 1.0, %v1352
        %v1354 = vmul.f32 %v1351, %v1353
        %v1355 = vadd.f32 %v1351, %v1354
        %vm1356 = vweird.f32 %v1299
        %vm1357 = vweird.f32 %v1351
        %vm1358 = vmor %vm1356, %vm1357
        %v1359 = vsel %vm1358, %v1351, %v1355
        %v1360 = vand.u32 2147483647, %v1299
        %vm1361 = vcmp.eq.f32.partialorder %v1360, 8.507059e+37
        %v1362 = vand.u32 %v1299, 2147483648
        %v1363 = vor.u32 1.1754944e-38, %v1362
        %v1364 = vsel %vm1361, %v1363, %v1359
        %v1365 = vmul.f32 %v1283, %v1364
        %v1366 = vrcp.pop %v1302
        %v1367 = vmul.f32 %v1302, %v1366
        %v1368 = vsub.f32 1.0, %v1367
        %v1369 = vmul.f32 %v1366, %v1368
        %v1370 = vadd.f32 %v1366, %v1369
        %vm1371 = vweird.f32 %v1302
        %vm1372 = vweird.f32 %v1366
        %vm1373 = vmor %vm1371, %vm1372
        %v1374 = vsel %vm1373, %v1366, %v1370
        %v1375 = vand.u32 2147483647, %v1302
        %vm1376 = vcmp.eq.f32.partialorder %v1375, 8.507059e+37
        %v1377 = vand.u32 %v1302, 2147483648
        %v1378 = vor.u32 1.1754944e-38, %v1377
        %v1379 = vsel %vm1376, %v1378, %v1374
        %v1380 = vmul.f32 %v1285, %v1379
        %v1381 = vrcp.pop %v1305
        %v1382 = vmul.f32 %v1305, %v1381
        %v1383 = vsub.f32 1.0, %v1382
        %v1384 = vmul.f32 %v1381, %v1383
        %v1385 = vadd.f32 %v1381, %v1384
        %vm1386 = vweird.f32 %v1305
        %vm1387 = vweird.f32 %v1381
        %vm1388 = vmor %vm1386, %vm1387
        %v1389 = vsel %vm1388, %v1381, %v1385
        %v1390 = vand.u32 2147483647, %v1305
        %vm1391 = vcmp.eq.f32.partialorder %v1390, 8.507059e+37
        %v1392 = vand.u32 %v1305, 2147483648
        %v1393 = vor.u32 1.1754944e-38, %v1392
        %v1394 = vsel %vm1391, %v1393, %v1389
        %v1395 = vmul.f32 %v1287, %v1394
        %v1396 = vpack.c.bf16 %v1320, %v1320
        %v1397 = vpack.c.bf16 %v1335, %v1335
        %v1398 = vpack.c.bf16 %v1350, %v1350
        %v1399 = vpack.c.bf16 %v1365, %v1365
        %v1400 = vpack.c.bf16 %v1380, %v1380
        %v1401 = vpack.c.bf16 %v1395, %v1395
        %v1403 = vunpack.c.l.b16 %v990
        %v1404 = vpack.c.b16 %v1403, %v1403
        %1405 = vrot.lane.b32.xlu0 %v1404, 120
        %v1406 = vpop.permute.xlu0 %1405
        %v1408 = vsel %vm996, %v1396, 0
        %v1411 = vsel %vm1000, %v1406, 0
        %1413 = vmatpush.bf16.msra.mxu0 0
        %1414 = vmatpush.bf16.msra.mxu0 0
        %1415 = vmatpush.bf16.msra.mxu0 0
        %1416 = vmatpush.bf16.msra.mxu0 0
        %1417 = vmatpush.bf16.msra.mxu0 0
        %1418 = vmatpush.bf16.msra.mxu0 0
        %1419 = vmatpush.bf16.msra.mxu0 0
        %1420 = vmatpush.bf16.msra.mxu0 %v1411
        %1421 = vmatmul.bf16.gmra.mxu0 %v1408
        %v1422 = vpop.f32.mrf.mxu0
        %v1423 = vadd.f32 0.0, %v1422
        %v1424 = vpop.f32.mrf.mxu0
        %1425 = vdwg.mxu0
        %v1427 = vunpack.c.l.b16 %v991
        %v1428 = vpack.c.b16 %v1427, %v1427
        %1429 = vrot.lane.b32.xlu0 %v1428, 120
        %v1430 = vpop.permute.xlu0 %1429
        %v1432 = vsel %vm996, %v1397, 0
        %v1435 = vsel %vm1000, %v1430, 0
        %1437 = vmatpush.bf16.msra.mxu0 0
        %1438 = vmatpush.bf16.msra.mxu0 0
        %1439 = vmatpush.bf16.msra.mxu0 0
        %1440 = vmatpush.bf16.msra.mxu0 0
        %1441 = vmatpush.bf16.msra.mxu0 0
        %1442 = vmatpush.bf16.msra.mxu0 0
        %1443 = vmatpush.bf16.msra.mxu0 0
        %1444 = vmatpush.bf16.msra.mxu0 %v1435
        %1445 = vmatmul.bf16.gmra.mxu0 %v1432
        %v1446 = vpop.f32.mrf.mxu0
        %v1447 = vadd.f32 0.0, %v1446
        %v1448 = vpop.f32.mrf.mxu0
        %1449 = vdwg.mxu0
        %v1451 = vunpack.c.l.b16 %v992
        %v1452 = vpack.c.b16 %v1451, %v1451
        %1453 = vrot.lane.b32.xlu0 %v1452, 120
        %v1454 = vpop.permute.xlu0 %1453
        %v1456 = vsel %vm996, %v1398, 0
        %v1459 = vsel %vm1000, %v1454, 0
        %1461 = vmatpush.bf16.msra.mxu0 0
        %1462 = vmatpush.bf16.msra.mxu0 0
        %1463 = vmatpush.bf16.msra.mxu0 0
        %1464 = vmatpush.bf16.msra.mxu0 0
        %1465 = vmatpush.bf16.msra.mxu0 0
        %1466 = vmatpush.bf16.msra.mxu0 0
        %1467 = vmatpush.bf16.msra.mxu0 0
        %1468 = vmatpush.bf16.msra.mxu0 %v1459
        %1469 = vmatmul.bf16.gmra.mxu0 %v1456
        %v1470 = vpop.f32.mrf.mxu0
        %v1471 = vadd.f32 0.0, %v1470
        %v1472 = vpop.f32.mrf.mxu0
        %1473 = vdwg.mxu0
        %v1475 = vunpack.c.l.b16 %v993
        %v1476 = vpack.c.b16 %v1475, %v1475
        %1477 = vrot.lane.b32.xlu0 %v1476, 120
        %v1478 = vpop.permute.xlu0 %1477
        %v1480 = vsel %vm996, %v1399, 0
        %v1483 = vsel %vm1000, %v1478, 0
        %1485 = vmatpush.bf16.msra.mxu0 0
        %1486 = vmatpush.bf16.msra.mxu0 0
        %1487 = vmatpush.bf16.msra.mxu0 0
        %1488 = vmatpush.bf16.msra.mxu0 0
        %1489 = vmatpush.bf16.msra.mxu0 0
        %1490 = vmatpush.bf16.msra.mxu0 0
        %1491 = vmatpush.bf16.msra.mxu0 0
        %1492 = vmatpush.bf16.msra.mxu0 %v1483
        %1493 = vmatmul.bf16.gmra.mxu0 %v1480
        %v1494 = vpop.f32.mrf.mxu0
        %v1495 = vadd.f32 0.0, %v1494
        %v1496 = vpop.f32.mrf.mxu0
        %1497 = vdwg.mxu0
        %v1499 = vunpack.c.l.b16 %v994
        %v1500 = vpack.c.b16 %v1499, %v1499
        %1501 = vrot.lane.b32.xlu0 %v1500, 120
        %v1502 = vpop.permute.xlu0 %1501
        %v1504 = vsel %vm996, %v1400, 0
        %v1507 = vsel %vm1000, %v1502, 0
        %1509 = vmatpush.bf16.msra.mxu0 0
        %1510 = vmatpush.bf16.msra.mxu0 0
        %1511 = vmatpush.bf16.msra.mxu0 0
        %1512 = vmatpush.bf16.msra.mxu0 0
        %1513 = vmatpush.bf16.msra.mxu0 0
        %1514 = vmatpush.bf16.msra.mxu0 0
        %1515 = vmatpush.bf16.msra.mxu0 0
        %1516 = vmatpush.bf16.msra.mxu0 %v1507
        %1517 = vmatmul.bf16.gmra.mxu0 %v1504
        %v1518 = vpop.f32.mrf.mxu0
        %v1519 = vadd.f32 0.0, %v1518
        %v1520 = vpop.f32.mrf.mxu0
        %1521 = vdwg.mxu0
        %v1523 = vunpack.c.l.b16 %v995
        %v1524 = vpack.c.b16 %v1523, %v1523
        %1525 = vrot.lane.b32.xlu0 %v1524, 120
        %v1526 = vpop.permute.xlu0 %1525
        %v1528 = vsel %vm996, %v1401, 0
        %v1531 = vsel %vm1000, %v1526, 0
        %1533 = vmatpush.bf16.msra.mxu0 0
        %1534 = vmatpush.bf16.msra.mxu0 0
        %1535 = vmatpush.bf16.msra.mxu0 0
        %1536 = vmatpush.bf16.msra.mxu0 0
        %1537 = vmatpush.bf16.msra.mxu0 0
        %1538 = vmatpush.bf16.msra.mxu0 0
        %1539 = vmatpush.bf16.msra.mxu0 0
        %1540 = vmatpush.bf16.msra.mxu0 %v1531
        %1541 = vmatmul.bf16.gmra.mxu0 %v1528
        %v1542 = vpop.f32.mrf.mxu0
        %v1543 = vadd.f32 0.0, %v1542
        %v1544 = vpop.f32.mrf.mxu0
        %1545 = vdwg.mxu0
        %1546 = vrot.lane.b32.xlu0 %v1114, 112
        %v1547 = vpop.permute.xlu0 %1546
        %1548 = vrot.lane.b32.xlu0 %v1119, 112
        %v1549 = vpop.permute.xlu0 %1548
        %v1551 = vsel %vm733, %v1547, 0
        %v1554 = vsel %vm733, %v1549, 0
        %1556 = vmatpush.bf16.xpose.msra.mxu0 0
        %1557 = vmatpush.bf16.xpose.msra.mxu0 0
        %1558 = vmatpush.bf16.xpose.msra.mxu0 0
        %1559 = vmatpush.bf16.xpose.msra.mxu0 0
        %1560 = vmatpush.bf16.xpose.msra.mxu0 0
        %1561 = vmatpush.bf16.xpose.msra.mxu0 0
        %1562 = vmatpush.bf16.xpose.msra.mxu0 0
        %1563 = vmatpush.bf16.xpose.msra.mxu0 %v1554
        %1564 = vmatmul.bf16.gmra.mxu0 %v1551
        %v1565 = vpop.f32.mrf.mxu0
        %v1566 = vadd.f32 0.0, %v1565
        %v1567 = vpop.f32.mrf.mxu0
        %1568 = vdwg.mxu0
        %1569 = vrot.lane.b32.xlu0 %v1143, 112
        %v1570 = vpop.permute.xlu0 %1569
        %v1572 = vsel %vm733, %v1570, 0
        %1574 = vmatpush.bf16.xpose.msra.mxu0 0
        %1575 = vmatpush.bf16.xpose.msra.mxu0 0
        %1576 = vmatpush.bf16.xpose.msra.mxu0 0
        %1577 = vmatpush.bf16.xpose.msra.mxu0 0
        %1578 = vmatpush.bf16.xpose.msra.mxu0 0
        %1579 = vmatpush.bf16.xpose.msra.mxu0 0
        %1580 = vmatpush.bf16.xpose.msra.mxu0 0
        %1581 = vmatpush.bf16.xpose.msra.mxu0 %v1572
        %1582 = vmatmul.bf16.gmra.mxu0 %v1551
        %v1583 = vpop.f32.mrf.mxu0
        %v1584 = vadd.f32 0.0, %v1583
        %v1585 = vpop.f32.mrf.mxu0
        %1586 = vdwg.mxu0
        %1587 = vrot.lane.b32.xlu0 %v1164, 112
        %v1588 = vpop.permute.xlu0 %1587
        %v1590 = vsel %vm733, %v1588, 0
        %1592 = vmatpush.bf16.xpose.msra.mxu0 0
        %1593 = vmatpush.bf16.xpose.msra.mxu0 0
        %1594 = vmatpush.bf16.xpose.msra.mxu0 0
        %1595 = vmatpush.bf16.xpose.msra.mxu0 0
        %1596 = vmatpush.bf16.xpose.msra.mxu0 0
        %1597 = vmatpush.bf16.xpose.msra.mxu0 0
        %1598 = vmatpush.bf16.xpose.msra.mxu0 0
        %1599 = vmatpush.bf16.xpose.msra.mxu0 %v1590
        %1600 = vmatmul.bf16.gmra.mxu0 %v1551
        %v1601 = vpop.f32.mrf.mxu0
        %v1602 = vadd.f32 0.0, %v1601
        %v1603 = vpop.f32.mrf.mxu0
        %1604 = vdwg.mxu0
        %1605 = vrot.lane.b32.xlu0 %v1185, 112
        %v1606 = vpop.permute.xlu0 %1605
        %v1608 = vsel %vm733, %v1606, 0
        %1610 = vmatpush.bf16.xpose.msra.mxu0 0
        %1611 = vmatpush.bf16.xpose.msra.mxu0 0
        %1612 = vmatpush.bf16.xpose.msra.mxu0 0
        %1613 = vmatpush.bf16.xpose.msra.mxu0 0
        %1614 = vmatpush.bf16.xpose.msra.mxu0 0
        %1615 = vmatpush.bf16.xpose.msra.mxu0 0
        %1616 = vmatpush.bf16.xpose.msra.mxu0 0
        %1617 = vmatpush.bf16.xpose.msra.mxu0 %v1608
        %1618 = vmatmul.bf16.gmra.mxu0 %v1551
        %v1619 = vpop.f32.mrf.mxu0
        %v1620 = vadd.f32 0.0, %v1619
        %v1621 = vpop.f32.mrf.mxu0
        %1622 = vdwg.mxu0
        %1623 = vrot.lane.b32.xlu0 %v1206, 112
        %v1624 = vpop.permute.xlu0 %1623
        %v1626 = vsel %vm733, %v1624, 0
        %1628 = vmatpush.bf16.xpose.msra.mxu0 0
        %1629 = vmatpush.bf16.xpose.msra.mxu0 0
        %1630 = vmatpush.bf16.xpose.msra.mxu0 0
        %1631 = vmatpush.bf16.xpose.msra.mxu0 0
        %1632 = vmatpush.bf16.xpose.msra.mxu0 0
        %1633 = vmatpush.bf16.xpose.msra.mxu0 0
        %1634 = vmatpush.bf16.xpose.msra.mxu0 0
        %1635 = vmatpush.bf16.xpose.msra.mxu0 %v1626
        %1636 = vmatmul.bf16.gmra.mxu0 %v1551
        %v1637 = vpop.f32.mrf.mxu0
        %v1638 = vadd.f32 0.0, %v1637
        %v1639 = vpop.f32.mrf.mxu0
        %1640 = vdwg.mxu0
        %1641 = vrot.lane.b32.xlu0 %v1227, 112
        %v1642 = vpop.permute.xlu0 %1641
        %v1644 = vsel %vm733, %v1642, 0
        %1646 = vmatpush.bf16.xpose.msra.mxu0 0
        %1647 = vmatpush.bf16.xpose.msra.mxu0 0
        %1648 = vmatpush.bf16.xpose.msra.mxu0 0
        %1649 = vmatpush.bf16.xpose.msra.mxu0 0
        %1650 = vmatpush.bf16.xpose.msra.mxu0 0
        %1651 = vmatpush.bf16.xpose.msra.mxu0 0
        %1652 = vmatpush.bf16.xpose.msra.mxu0 0
        %1653 = vmatpush.bf16.xpose.msra.mxu0 %v1644
        %1654 = vmatmul.bf16.gmra.mxu0 %v1551
        %v1655 = vpop.f32.mrf.mxu0
        %v1656 = vadd.f32 0.0, %v1655
        %v1657 = vpop.f32.mrf.mxu0
        %1658 = vdwg.mxu0
        %v1659 = vmul.f32 %v1566, 0.35355338
        %v1660 = vmul.f32 %v1584, 0.35355338
        %v1661 = vmul.f32 %v1602, 0.35355338
        %v1662 = vmul.f32 %v1620, 0.35355338
        %v1663 = vmul.f32 %v1638, 0.35355338
        %v1664 = vmul.f32 %v1656, 0.35355338
        %v1665 = vsel %vm839, %v1659, -inf
        %1666 = vmax.xlane.f32.xlu0 %v1665
        %v1667 = vpop.xlane.xlu0 %1666
        %v1668 = vsel %vm839, %v1660, -inf
        %1669 = vmax.xlane.f32.xlu0 %v1668
        %v1670 = vpop.xlane.xlu0 %1669
        %v1671 = vsel %vm839, %v1661, -inf
        %1672 = vmax.xlane.f32.xlu0 %v1671
        %v1673 = vpop.xlane.xlu0 %1672
        %v1674 = vsel %vm839, %v1662, -inf
        %1675 = vmax.xlane.f32.xlu0 %v1674
        %v1676 = vpop.xlane.xlu0 %1675
        %v1677 = vsel %vm839, %v1663, -inf
        %1678 = vmax.xlane.f32.xlu0 %v1677
        %v1679 = vpop.xlane.xlu0 %1678
        %v1680 = vsel %vm839, %v1664, -inf
        %1681 = vmax.xlane.f32.xlu0 %v1680
        %v1682 = vpop.xlane.xlu0 %1681
        %v1683 = vsub.f32 %v1659, %v1667
        %v1684 = vsub.f32 %v1660, %v1670
        %v1685 = vsub.f32 %v1661, %v1673
        %v1686 = vsub.f32 %v1662, %v1676
        %v1687 = vsub.f32 %v1663, %v1679
        %v1688 = vsub.f32 %v1664, %v1682
        %v1689 = vmul.f32 %v1683, 1.442695
        %v1690 = vpow.pop %v1689
        %v1691 = vmul.f32 %v1684, 1.442695
        %v1692 = vpow.pop %v1691
        %v1693 = vmul.f32 %v1685, 1.442695
        %v1694 = vpow.pop %v1693
        %v1695 = vmul.f32 %v1686, 1.442695
        %v1696 = vpow.pop %v1695
        %v1697 = vmul.f32 %v1687, 1.442695
        %v1698 = vpow.pop %v1697
        %v1699 = vmul.f32 %v1688, 1.442695
        %v1700 = vpow.pop %v1699
        %v1701 = vsel %vm839, %v1690, 0.0
        %1702 = vadd.xlane.f32.xlu0 %v1701
        %v1703 = vpop.xlane.xlu0 %1702
        %v1704 = vsel %vm839, %v1692, 0.0
        %1705 = vadd.xlane.f32.xlu0 %v1704
        %v1706 = vpop.xlane.xlu0 %1705
        %v1707 = vsel %vm839, %v1694, 0.0
        %1708 = vadd.xlane.f32.xlu0 %v1707
        %v1709 = vpop.xlane.xlu0 %1708
        %v1710 = vsel %vm839, %v1696, 0.0
        %1711 = vadd.xlane.f32.xlu0 %v1710
        %v1712 = vpop.xlane.xlu0 %1711
        %v1713 = vsel %vm839, %v1698, 0.0
        %1714 = vadd.xlane.f32.xlu0 %v1713
        %v1715 = vpop.xlane.xlu0 %1714
        %v1716 = vsel %vm839, %v1700, 0.0
        %1717 = vadd.xlane.f32.xlu0 %v1716
        %v1718 = vpop.xlane.xlu0 %1717
        %v1719 = vrcp.pop %v1703
        %v1720 = vmul.f32 %v1703, %v1719
        %v1721 = vsub.f32 1.0, %v1720
        %v1722 = vmul.f32 %v1719, %v1721
        %v1723 = vadd.f32 %v1719, %v1722
        %vm1724 = vweird.f32 %v1703
        %vm1725 = vweird.f32 %v1719
        %vm1726 = vmor %vm1724, %vm1725
        %v1727 = vsel %vm1726, %v1719, %v1723
        %v1728 = vand.u32 2147483647, %v1703
        %vm1729 = vcmp.eq.f32.partialorder %v1728, 8.507059e+37
        %v1730 = vand.u32 %v1703, 2147483648
        %v1731 = vor.u32 1.1754944e-38, %v1730
        %v1732 = vsel %vm1729, %v1731, %v1727
        %v1733 = vmul.f32 %v1690, %v1732
        %v1734 = vrcp.pop %v1706
        %v1735 = vmul.f32 %v1706, %v1734
        %v1736 = vsub.f32 1.0, %v1735
        %v1737 = vmul.f32 %v1734, %v1736
        %v1738 = vadd.f32 %v1734, %v1737
        %vm1739 = vweird.f32 %v1706
        %vm1740 = vweird.f32 %v1734
        %vm1741 = vmor %vm1739, %vm1740
        %v1742 = vsel %vm1741, %v1734, %v1738
        %v1743 = vand.u32 2147483647, %v1706
        %vm1744 = vcmp.eq.f32.partialorder %v1743, 8.507059e+37
        %v1745 = vand.u32 %v1706, 2147483648
        %v1746 = vor.u32 1.1754944e-38, %v1745
        %v1747 = vsel %vm1744, %v1746, %v1742
        %v1748 = vmul.f32 %v1692, %v1747
        %v1749 = vrcp.pop %v1709
        %v1750 = vmul.f32 %v1709, %v1749
        %v1751 = vsub.f32 1.0, %v1750
        %v1752 = vmul.f32 %v1749, %v1751
        %v1753 = vadd.f32 %v1749, %v1752
        %vm1754 = vweird.f32 %v1709
        %vm1755 = vweird.f32 %v1749
        %vm1756 = vmor %vm1754, %vm1755
        %v1757 = vsel %vm1756, %v1749, %v1753
        %v1758 = vand.u32 2147483647, %v1709
        %vm1759 = vcmp.eq.f32.partialorder %v1758, 8.507059e+37
        %v1760 = vand.u32 %v1709, 2147483648
        %v1761 = vor.u32 1.1754944e-38, %v1760
        %v1762 = vsel %vm1759, %v1761, %v1757
        %v1763 = vmul.f32 %v1694, %v1762
        %v1764 = vrcp.pop %v1712
        %v1765 = vmul.f32 %v1712, %v1764
        %v1766 = vsub.f32 1.0, %v1765
        %v1767 = vmul.f32 %v1764, %v1766
        %v1768 = vadd.f32 %v1764, %v1767
        %vm1769 = vweird.f32 %v1712
        %vm1770 = vweird.f32 %v1764
        %vm1771 = vmor %vm1769, %vm1770
        %v1772 = vsel %vm1771, %v1764, %v1768
        %v1773 = vand.u32 2147483647, %v1712
        %vm1774 = vcmp.eq.f32.partialorder %v1773, 8.507059e+37
        %v1775 = vand.u32 %v1712, 2147483648
        %v1776 = vor.u32 1.1754944e-38, %v1775
        %v1777 = vsel %vm1774, %v1776, %v1772
        %v1778 = vmul.f32 %v1696, %v1777
        %v1779 = vrcp.pop %v1715
        %v1780 = vmul.f32 %v1715, %v1779
        %v1781 = vsub.f32 1.0, %v1780
        %v1782 = vmul.f32 %v1779, %v1781
        %v1783 = vadd.f32 %v1779, %v1782
        %vm1784 = vweird.f32 %v1715
        %vm1785 = vweird.f32 %v1779
        %vm1786 = vmor %vm1784, %vm1785
        %v1787 = vsel %vm1786, %v1779, %v1783
        %v1788 = vand.u32 2147483647, %v1715
        %vm1789 = vcmp.eq.f32.partialorder %v1788, 8.507059e+37
        %v1790 = vand.u32 %v1715, 2147483648
        %v1791 = vor.u32 1.1754944e-38, %v1790
        %v1792 = vsel %vm1789, %v1791, %v1787
        %v1793 = vmul.f32 %v1698, %v1792
        %v1794 = vrcp.pop %v1718
        %v1795 = vmul.f32 %v1718, %v1794
        %v1796 = vsub.f32 1.0, %v1795
        %v1797 = vmul.f32 %v1794, %v1796
        %v1798 = vadd.f32 %v1794, %v1797
        %vm1799 = vweird.f32 %v1718
        %vm1800 = vweird.f32 %v1794
        %vm1801 = vmor %vm1799, %vm1800
        %v1802 = vsel %vm1801, %v1794, %v1798
        %v1803 = vand.u32 2147483647, %v1718
        %vm1804 = vcmp.eq.f32.partialorder %v1803, 8.507059e+37
        %v1805 = vand.u32 %v1718, 2147483648
        %v1806 = vor.u32 1.1754944e-38, %v1805
        %v1807 = vsel %vm1804, %v1806, %v1802
        %v1808 = vmul.f32 %v1700, %v1807
        %v1809 = vpack.c.bf16 %v1733, %v1733
        %v1810 = vpack.c.bf16 %v1748, %v1748
        %v1811 = vpack.c.bf16 %v1763, %v1763
        %v1812 = vpack.c.bf16 %v1778, %v1778
        %v1813 = vpack.c.bf16 %v1793, %v1793
        %v1814 = vpack.c.bf16 %v1808, %v1808
        %1815 = vrot.lane.b32.xlu0 %v1404, 112
        %v1816 = vpop.permute.xlu0 %1815
        %v1818 = vsel %vm996, %v1809, 0
        %v1821 = vsel %vm1000, %v1816, 0
        %1823 = vmatpush.bf16.msra.mxu0 0
        %1824 = vmatpush.bf16.msra.mxu0 0
        %1825 = vmatpush.bf16.msra.mxu0 0
        %1826 = vmatpush.bf16.msra.mxu0 0
        %1827 = vmatpush.bf16.msra.mxu0 0
        %1828 = vmatpush.bf16.msra.mxu0 0
        %1829 = vmatpush.bf16.msra.mxu0 0
        %1830 = vmatpush.bf16.msra.mxu0 %v1821
        %1831 = vmatmul.bf16.gmra.mxu0 %v1818
        %v1832 = vpop.f32.mrf.mxu0
        %v1833 = vadd.f32 0.0, %v1832
        %v1834 = vpop.f32.mrf.mxu0
        %1835 = vdwg.mxu0
        %1836 = vrot.lane.b32.xlu0 %v1428, 112
        %v1837 = vpop.permute.xlu0 %1836
        %v1839 = vsel %vm996, %v1810, 0
        %v1842 = vsel %vm1000, %v1837, 0
        %1844 = vmatpush.bf16.msra.mxu0 0
        %1845 = vmatpush.bf16.msra.mxu0 0
        %1846 = vmatpush.bf16.msra.mxu0 0
        %1847 = vmatpush.bf16.msra.mxu0 0
        %1848 = vmatpush.bf16.msra.mxu0 0
        %1849 = vmatpush.bf16.msra.mxu0 0
        %1850 = vmatpush.bf16.msra.mxu0 0
        %1851 = vmatpush.bf16.msra.mxu0 %v1842
        %1852 = vmatmul.bf16.gmra.mxu0 %v1839
        %v1853 = vpop.f32.mrf.mxu0
        %v1854 = vadd.f32 0.0, %v1853
        %v1855 = vpop.f32.mrf.mxu0
        %1856 = vdwg.mxu0
        %1857 = vrot.lane.b32.xlu0 %v1452, 112
        %v1858 = vpop.permute.xlu0 %1857
        %v1860 = vsel %vm996, %v1811, 0
        %v1863 = vsel %vm1000, %v1858, 0
        %1865 = vmatpush.bf16.msra.mxu0 0
        %1866 = vmatpush.bf16.msra.mxu0 0
        %1867 = vmatpush.bf16.msra.mxu0 0
        %1868 = vmatpush.bf16.msra.mxu0 0
        %1869 = vmatpush.bf16.msra.mxu0 0
        %1870 = vmatpush.bf16.msra.mxu0 0
        %1871 = vmatpush.bf16.msra.mxu0 0
        %1872 = vmatpush.bf16.msra.mxu0 %v1863
        %1873 = vmatmul.bf16.gmra.mxu0 %v1860
        %v1874 = vpop.f32.mrf.mxu0
        %v1875 = vadd.f32 0.0, %v1874
        %v1876 = vpop.f32.mrf.mxu0
        %1877 = vdwg.mxu0
        %1878 = vrot.lane.b32.xlu0 %v1476, 112
        %v1879 = vpop.permute.xlu0 %1878
        %v1881 = vsel %vm996, %v1812, 0
        %v1884 = vsel %vm1000, %v1879, 0
        %1886 = vmatpush.bf16.msra.mxu0 0
        %1887 = vmatpush.bf16.msra.mxu0 0
        %1888 = vmatpush.bf16.msra.mxu0 0
        %1889 = vmatpush.bf16.msra.mxu0 0
        %1890 = vmatpush.bf16.msra.mxu0 0
        %1891 = vmatpush.bf16.msra.mxu0 0
        %1892 = vmatpush.bf16.msra.mxu0 0
        %1893 = vmatpush.bf16.msra.mxu0 %v1884
        %1894 = vmatmul.bf16.gmra.mxu0 %v1881
        %v1895 = vpop.f32.mrf.mxu0
        %v1896 = vadd.f32 0.0, %v1895
        %v1897 = vpop.f32.mrf.mxu0
        %1898 = vdwg.mxu0
        %1899 = vrot.lane.b32.xlu0 %v1500, 112
        %v1900 = vpop.permute.xlu0 %1899
        %v1902 = vsel %vm996, %v1813, 0
        %v1905 = vsel %vm1000, %v1900, 0
        %1907 = vmatpush.bf16.msra.mxu0 0
        %1908 = vmatpush.bf16.msra.mxu0 0
        %1909 = vmatpush.bf16.msra.mxu0 0
        %1910 = vmatpush.bf16.msra.mxu0 0
        %1911 = vmatpush.bf16.msra.mxu0 0
        %1912 = vmatpush.bf16.msra.mxu0 0
        %1913 = vmatpush.bf16.msra.mxu0 0
        %1914 = vmatpush.bf16.msra.mxu0 %v1905
        %1915 = vmatmul.bf16.gmra.mxu0 %v1902
        %v1916 = vpop.f32.mrf.mxu0
        %v1917 = vadd.f32 0.0, %v1916
        %v1918 = vpop.f32.mrf.mxu0
        %1919 = vdwg.mxu0
        %1920 = vrot.lane.b32.xlu0 %v1524, 112
        %v1921 = vpop.permute.xlu0 %1920
        %v1923 = vsel %vm996, %v1814, 0
        %v1926 = vsel %vm1000, %v1921, 0
        %1928 = vmatpush.bf16.msra.mxu0 0
        %1929 = vmatpush.bf16.msra.mxu0 0
        %1930 = vmatpush.bf16.msra.mxu0 0
        %1931 = vmatpush.bf16.msra.mxu0 0
        %1932 = vmatpush.bf16.msra.mxu0 0
        %1933 = vmatpush.bf16.msra.mxu0 0
        %1934 = vmatpush.bf16.msra.mxu0 0
        %1935 = vmatpush.bf16.msra.mxu0 %v1926
        %1936 = vmatmul.bf16.gmra.mxu0 %v1923
        %v1937 = vpop.f32.mrf.mxu0
        %v1938 = vadd.f32 0.0, %v1937
        %v1939 = vpop.f32.mrf.mxu0
        %1940 = vdwg.mxu0
        %1941 = vrot.lane.b32.xlu0 %v1114, 104
        %v1942 = vpop.permute.xlu0 %1941
        %1943 = vrot.lane.b32.xlu0 %v1119, 104
        %v1944 = vpop.permute.xlu0 %1943
        %v1946 = vsel %vm733, %v1942, 0
        %v1949 = vsel %vm733, %v1944, 0
        %1951 = vmatpush.bf16.xpose.msra.mxu0 0
        %1952 = vmatpush.bf16.xpose.msra.mxu0 0
        %1953 = vmatpush.bf16.xpose.msra.mxu0 0
        %1954 = vmatpush.bf16.xpose.msra.mxu0 0
        %1955 = vmatpush.bf16.xpose.msra.mxu0 0
        %1956 = vmatpush.bf16.xpose.msra.mxu0 0
        %1957 = vmatpush.bf16.xpose.msra.mxu0 0
        %1958 = vmatpush.bf16.xpose.msra.mxu0 %v1949
        %1959 = vmatmul.bf16.gmra.mxu0 %v1946
        %v1960 = vpop.f32.mrf.mxu0
        %v1961 = vadd.f32 0.0, %v1960
        %v1962 = vpop.f32.mrf.mxu0
        %1963 = vdwg.mxu0
        %1964 = vrot.lane.b32.xlu0 %v1143, 104
        %v1965 = vpop.permute.xlu0 %1964
        %v1967 = vsel %vm733, %v1965, 0
        %1969 = vmatpush.bf16.xpose.msra.mxu0 0
        %1970 = vmatpush.bf16.xpose.msra.mxu0 0
        %1971 = vmatpush.bf16.xpose.msra.mxu0 0
        %1972 = vmatpush.bf16.xpose.msra.mxu0 0
        %1973 = vmatpush.bf16.xpose.msra.mxu0 0
        %1974 = vmatpush.bf16.xpose.msra.mxu0 0
        %1975 = vmatpush.bf16.xpose.msra.mxu0 0
        %1976 = vmatpush.bf16.xpose.msra.mxu0 %v1967
        %1977 = vmatmul.bf16.gmra.mxu0 %v1946
        %v1978 = vpop.f32.mrf.mxu0
        %v1979 = vadd.f32 0.0, %v1978
        %v1980 = vpop.f32.mrf.mxu0
        %1981 = vdwg.mxu0
        %1982 = vrot.lane.b32.xlu0 %v1164, 104
        %v1983 = vpop.permute.xlu0 %1982
        %v1985 = vsel %vm733, %v1983, 0
        %1987 = vmatpush.bf16.xpose.msra.mxu0 0
        %1988 = vmatpush.bf16.xpose.msra.mxu0 0
        %1989 = vmatpush.bf16.xpose.msra.mxu0 0
        %1990 = vmatpush.bf16.xpose.msra.mxu0 0
        %1991 = vmatpush.bf16.xpose.msra.mxu0 0
        %1992 = vmatpush.bf16.xpose.msra.mxu0 0
        %1993 = vmatpush.bf16.xpose.msra.mxu0 0
        %1994 = vmatpush.bf16.xpose.msra.mxu0 %v1985
        %1995 = vmatmul.bf16.gmra.mxu0 %v1946
        %v1996 = vpop.f32.mrf.mxu0
        %v1997 = vadd.f32 0.0, %v1996
        %v1998 = vpop.f32.mrf.mxu0
        %1999 = vdwg.mxu0
        %2000 = vrot.lane.b32.xlu0 %v1185, 104
        %v2001 = vpop.permute.xlu0 %2000
        %v2003 = vsel %vm733, %v2001, 0
        %2005 = vmatpush.bf16.xpose.msra.mxu0 0
        %2006 = vmatpush.bf16.xpose.msra.mxu0 0
        %2007 = vmatpush.bf16.xpose.msra.mxu0 0
        %2008 = vmatpush.bf16.xpose.msra.mxu0 0
        %2009 = vmatpush.bf16.xpose.msra.mxu0 0
        %2010 = vmatpush.bf16.xpose.msra.mxu0 0
        %2011 = vmatpush.bf16.xpose.msra.mxu0 0
        %2012 = vmatpush.bf16.xpose.msra.mxu0 %v2003
        %2013 = vmatmul.bf16.gmra.mxu0 %v1946
        %v2014 = vpop.f32.mrf.mxu0
        %v2015 = vadd.f32 0.0, %v2014
        %v2016 = vpop.f32.mrf.mxu0
        %2017 = vdwg.mxu0
        %2018 = vrot.lane.b32.xlu0 %v1206, 104
        %v2019 = vpop.permute.xlu0 %2018
        %v2021 = vsel %vm733, %v2019, 0
        %2023 = vmatpush.bf16.xpose.msra.mxu0 0
        %2024 = vmatpush.bf16.xpose.msra.mxu0 0
        %2025 = vmatpush.bf16.xpose.msra.mxu0 0
        %2026 = vmatpush.bf16.xpose.msra.mxu0 0
        %2027 = vmatpush.bf16.xpose.msra.mxu0 0
        %2028 = vmatpush.bf16.xpose.msra.mxu0 0
        %2029 = vmatpush.bf16.xpose.msra.mxu0 0
        %2030 = vmatpush.bf16.xpose.msra.mxu0 %v2021
        %2031 = vmatmul.bf16.gmra.mxu0 %v1946
        %v2032 = vpop.f32.mrf.mxu0
        %v2033 = vadd.f32 0.0, %v2032
        %v2034 = vpop.f32.mrf.mxu0
        %2035 = vdwg.mxu0
        %2036 = vrot.lane.b32.xlu0 %v1227, 104
        %v2037 = vpop.permute.xlu0 %2036
        %v2039 = vsel %vm733, %v2037, 0
        %2041 = vmatpush.bf16.xpose.msra.mxu0 0
        %2042 = vmatpush.bf16.xpose.msra.mxu0 0
        %2043 = vmatpush.bf16.xpose.msra.mxu0 0
        %2044 = vmatpush.bf16.xpose.msra.mxu0 0
        %2045 = vmatpush.bf16.xpose.msra.mxu0 0
        %2046 = vmatpush.bf16.xpose.msra.mxu0 0
        %2047 = vmatpush.bf16.xpose.msra.mxu0 0
        %2048 = vmatpush.bf16.xpose.msra.mxu0 %v2039
        %2049 = vmatmul.bf16.gmra.mxu0 %v1946
        %v2050 = vpop.f32.mrf.mxu0
        %v2051 = vadd.f32 0.0, %v2050
        %v2052 = vpop.f32.mrf.mxu0
        %2053 = vdwg.mxu0
        %v2054 = vmul.f32 %v1961, 0.35355338
        %v2055 = vmul.f32 %v1979, 0.35355338
        %v2056 = vmul.f32 %v1997, 0.35355338
        %v2057 = vmul.f32 %v2015, 0.35355338
        %v2058 = vmul.f32 %v2033, 0.35355338
        %v2059 = vmul.f32 %v2051, 0.35355338
        %v2060 = vsel %vm839, %v2054, -inf
        %2061 = vmax.xlane.f32.xlu0 %v2060
        %v2062 = vpop.xlane.xlu0 %2061
        %v2063 = vsel %vm839, %v2055, -inf
        %2064 = vmax.xlane.f32.xlu0 %v2063
        %v2065 = vpop.xlane.xlu0 %2064
        %v2066 = vsel %vm839, %v2056, -inf
        %2067 = vmax.xlane.f32.xlu0 %v2066
        %v2068 = vpop.xlane.xlu0 %2067
        %v2069 = vsel %vm839, %v2057, -inf
        %2070 = vmax.xlane.f32.xlu0 %v2069
        %v2071 = vpop.xlane.xlu0 %2070
        %v2072 = vsel %vm839, %v2058, -inf
        %2073 = vmax.xlane.f32.xlu0 %v2072
        %v2074 = vpop.xlane.xlu0 %2073
        %v2075 = vsel %vm839, %v2059, -inf
        %2076 = vmax.xlane.f32.xlu0 %v2075
        %v2077 = vpop.xlane.xlu0 %2076
        %v2078 = vsub.f32 %v2054, %v2062
        %v2079 = vsub.f32 %v2055, %v2065
        %v2080 = vsub.f32 %v2056, %v2068
        %v2081 = vsub.f32 %v2057, %v2071
        %v2082 = vsub.f32 %v2058, %v2074
        %v2083 = vsub.f32 %v2059, %v2077
        %v2084 = vmul.f32 %v2078, 1.442695
        %v2085 = vpow.pop %v2084
        %v2086 = vmul.f32 %v2079, 1.442695
        %v2087 = vpow.pop %v2086
        %v2088 = vmul.f32 %v2080, 1.442695
        %v2089 = vpow.pop %v2088
        %v2090 = vmul.f32 %v2081, 1.442695
        %v2091 = vpow.pop %v2090
        %v2092 = vmul.f32 %v2082, 1.442695
        %v2093 = vpow.pop %v2092
        %v2094 = vmul.f32 %v2083, 1.442695
        %v2095 = vpow.pop %v2094
        %v2096 = vsel %vm839, %v2085, 0.0
        %2097 = vadd.xlane.f32.xlu0 %v2096
        %v2098 = vpop.xlane.xlu0 %2097
        %v2099 = vsel %vm839, %v2087, 0.0
        %2100 = vadd.xlane.f32.xlu0 %v2099
        %v2101 = vpop.xlane.xlu0 %2100
        %v2102 = vsel %vm839, %v2089, 0.0
        %2103 = vadd.xlane.f32.xlu0 %v2102
        %v2104 = vpop.xlane.xlu0 %2103
        %v2105 = vsel %vm839, %v2091, 0.0
        %2106 = vadd.xlane.f32.xlu0 %v2105
        %v2107 = vpop.xlane.xlu0 %2106
        %v2108 = vsel %vm839, %v2093, 0.0
        %2109 = vadd.xlane.f32.xlu0 %v2108
        %v2110 = vpop.xlane.xlu0 %2109
        %v2111 = vsel %vm839, %v2095, 0.0
        %2112 = vadd.xlane.f32.xlu0 %v2111
        %v2113 = vpop.xlane.xlu0 %2112
        %v2114 = vrcp.pop %v2098
        %v2115 = vmul.f32 %v2098, %v2114
        %v2116 = vsub.f32 1.0, %v2115
        %v2117 = vmul.f32 %v2114, %v2116
        %v2118 = vadd.f32 %v2114, %v2117
        %vm2119 = vweird.f32 %v2098
        %vm2120 = vweird.f32 %v2114
        %vm2121 = vmor %vm2119, %vm2120
        %v2122 = vsel %vm2121, %v2114, %v2118
        %v2123 = vand.u32 2147483647, %v2098
        %vm2124 = vcmp.eq.f32.partialorder %v2123, 8.507059e+37
        %v2125 = vand.u32 %v2098, 2147483648
        %v2126 = vor.u32 1.1754944e-38, %v2125
        %v2127 = vsel %vm2124, %v2126, %v2122
        %v2128 = vmul.f32 %v2085, %v2127
        %v2129 = vrcp.pop %v2101
        %v2130 = vmul.f32 %v2101, %v2129
        %v2131 = vsub.f32 1.0, %v2130
        %v2132 = vmul.f32 %v2129, %v2131
        %v2133 = vadd.f32 %v2129, %v2132
        %vm2134 = vweird.f32 %v2101
        %vm2135 = vweird.f32 %v2129
        %vm2136 = vmor %vm2134, %vm2135
        %v2137 = vsel %vm2136, %v2129, %v2133
        %v2138 = vand.u32 2147483647, %v2101
        %vm2139 = vcmp.eq.f32.partialorder %v2138, 8.507059e+37
        %v2140 = vand.u32 %v2101, 2147483648
        %v2141 = vor.u32 1.1754944e-38, %v2140
        %v2142 = vsel %vm2139, %v2141, %v2137
        %v2143 = vmul.f32 %v2087, %v2142
        %v2144 = vrcp.pop %v2104
        %v2145 = vmul.f32 %v2104, %v2144
        %v2146 = vsub.f32 1.0, %v2145
        %v2147 = vmul.f32 %v2144, %v2146
        %v2148 = vadd.f32 %v2144, %v2147
        %vm2149 = vweird.f32 %v2104
        %vm2150 = vweird.f32 %v2144
        %vm2151 = vmor %vm2149, %vm2150
        %v2152 = vsel %vm2151, %v2144, %v2148
        %v2153 = vand.u32 2147483647, %v2104
        %vm2154 = vcmp.eq.f32.partialorder %v2153, 8.507059e+37
        %v2155 = vand.u32 %v2104, 2147483648
        %v2156 = vor.u32 1.1754944e-38, %v2155
        %v2157 = vsel %vm2154, %v2156, %v2152
        %v2158 = vmul.f32 %v2089, %v2157
        %v2159 = vrcp.pop %v2107
        %v2160 = vmul.f32 %v2107, %v2159
        %v2161 = vsub.f32 1.0, %v2160
        %v2162 = vmul.f32 %v2159, %v2161
        %v2163 = vadd.f32 %v2159, %v2162
        %vm2164 = vweird.f32 %v2107
        %vm2165 = vweird.f32 %v2159
        %vm2166 = vmor %vm2164, %vm2165
        %v2167 = vsel %vm2166, %v2159, %v2163
        %v2168 = vand.u32 2147483647, %v2107
        %vm2169 = vcmp.eq.f32.partialorder %v2168, 8.507059e+37
        %v2170 = vand.u32 %v2107, 2147483648
        %v2171 = vor.u32 1.1754944e-38, %v2170
        %v2172 = vsel %vm2169, %v2171, %v2167
        %v2173 = vmul.f32 %v2091, %v2172
        %v2174 = vrcp.pop %v2110
        %v2175 = vmul.f32 %v2110, %v2174
        %v2176 = vsub.f32 1.0, %v2175
        %v2177 = vmul.f32 %v2174, %v2176
        %v2178 = vadd.f32 %v2174, %v2177
        %vm2179 = vweird.f32 %v2110
        %vm2180 = vweird.f32 %v2174
        %vm2181 = vmor %vm2179, %vm2180
        %v2182 = vsel %vm2181, %v2174, %v2178
        %v2183 = vand.u32 2147483647, %v2110
        %vm2184 = vcmp.eq.f32.partialorder %v2183, 8.507059e+37
        %v2185 = vand.u32 %v2110, 2147483648
        %v2186 = vor.u32 1.1754944e-38, %v2185
        %v2187 = vsel %vm2184, %v2186, %v2182
        %v2188 = vmul.f32 %v2093, %v2187
        %v2189 = vrcp.pop %v2113
        %v2190 = vmul.f32 %v2113, %v2189
        %v2191 = vsub.f32 1.0, %v2190
        %v2192 = vmul.f32 %v2189, %v2191
        %v2193 = vadd.f32 %v2189, %v2192
        %vm2194 = vweird.f32 %v2113
        %vm2195 = vweird.f32 %v2189
        %vm2196 = vmor %vm2194, %vm2195
        %v2197 = vsel %vm2196, %v2189, %v2193
        %v2198 = vand.u32 2147483647, %v2113
        %vm2199 = vcmp.eq.f32.partialorder %v2198, 8.507059e+37
        %v2200 = vand.u32 %v2113, 2147483648
        %v2201 = vor.u32 1.1754944e-38, %v2200
        %v2202 = vsel %vm2199, %v2201, %v2197
        %v2203 = vmul.f32 %v2095, %v2202
        %v2204 = vpack.c.bf16 %v2128, %v2128
        %v2205 = vpack.c.bf16 %v2143, %v2143
        %v2206 = vpack.c.bf16 %v2158, %v2158
        %v2207 = vpack.c.bf16 %v2173, %v2173
        %v2208 = vpack.c.bf16 %v2188, %v2188
        %v2209 = vpack.c.bf16 %v2203, %v2203
        %2210 = vrot.lane.b32.xlu0 %v1404, 104
        %v2211 = vpop.permute.xlu0 %2210
        %v2213 = vsel %vm996, %v2204, 0
        %v2216 = vsel %vm1000, %v2211, 0
        %2218 = vmatpush.bf16.msra.mxu0 0
        %2219 = vmatpush.bf16.msra.mxu0 0
        %2220 = vmatpush.bf16.msra.mxu0 0
        %2221 = vmatpush.bf16.msra.mxu0 0
        %2222 = vmatpush.bf16.msra.mxu0 0
        %2223 = vmatpush.bf16.msra.mxu0 0
        %2224 = vmatpush.bf16.msra.mxu0 0
        %2225 = vmatpush.bf16.msra.mxu0 %v2216
        %2226 = vmatmul.bf16.gmra.mxu0 %v2213
        %v2227 = vpop.f32.mrf.mxu0
        %v2228 = vadd.f32 0.0, %v2227
        %v2229 = vpop.f32.mrf.mxu0
        %2230 = vdwg.mxu0
        %2231 = vrot.lane.b32.xlu0 %v1428, 104
        %v2232 = vpop.permute.xlu0 %2231
        %v2234 = vsel %vm996, %v2205, 0
        %v2237 = vsel %vm1000, %v2232, 0
        %2239 = vmatpush.bf16.msra.mxu0 0
        %2240 = vmatpush.bf16.msra.mxu0 0
        %2241 = vmatpush.bf16.msra.mxu0 0
        %2242 = vmatpush.bf16.msra.mxu0 0
        %2243 = vmatpush.bf16.msra.mxu0 0
        %2244 = vmatpush.bf16.msra.mxu0 0
        %2245 = vmatpush.bf16.msra.mxu0 0
        %2246 = vmatpush.bf16.msra.mxu0 %v2237
        %2247 = vmatmul.bf16.gmra.mxu0 %v2234
        %v2248 = vpop.f32.mrf.mxu0
        %v2249 = vadd.f32 0.0, %v2248
        %v2250 = vpop.f32.mrf.mxu0
        %2251 = vdwg.mxu0
        %2252 = vrot.lane.b32.xlu0 %v1452, 104
        %v2253 = vpop.permute.xlu0 %2252
        %v2255 = vsel %vm996, %v2206, 0
        %v2258 = vsel %vm1000, %v2253, 0
        %2260 = vmatpush.bf16.msra.mxu0 0
        %2261 = vmatpush.bf16.msra.mxu0 0
        %2262 = vmatpush.bf16.msra.mxu0 0
        %2263 = vmatpush.bf16.msra.mxu0 0
        %2264 = vmatpush.bf16.msra.mxu0 0
        %2265 = vmatpush.bf16.msra.mxu0 0
        %2266 = vmatpush.bf16.msra.mxu0 0
        %2267 = vmatpush.bf16.msra.mxu0 %v2258
        %2268 = vmatmul.bf16.gmra.mxu0 %v2255
        %v2269 = vpop.f32.mrf.mxu0
        %v2270 = vadd.f32 0.0, %v2269
        %v2271 = vpop.f32.mrf.mxu0
        %2272 = vdwg.mxu0
        %2273 = vrot.lane.b32.xlu0 %v1476, 104
        %v2274 = vpop.permute.xlu0 %2273
        %v2276 = vsel %vm996, %v2207, 0
        %v2279 = vsel %vm1000, %v2274, 0
        %2281 = vmatpush.bf16.msra.mxu0 0
        %2282 = vmatpush.bf16.msra.mxu0 0
        %2283 = vmatpush.bf16.msra.mxu0 0
        %2284 = vmatpush.bf16.msra.mxu0 0
        %2285 = vmatpush.bf16.msra.mxu0 0
        %2286 = vmatpush.bf16.msra.mxu0 0
        %2287 = vmatpush.bf16.msra.mxu0 0
        %2288 = vmatpush.bf16.msra.mxu0 %v2279
        %2289 = vmatmul.bf16.gmra.mxu0 %v2276
        %v2290 = vpop.f32.mrf.mxu0
        %v2291 = vadd.f32 0.0, %v2290
        %v2292 = vpop.f32.mrf.mxu0
        %2293 = vdwg.mxu0
        %2294 = vrot.lane.b32.xlu0 %v1500, 104
        %v2295 = vpop.permute.xlu0 %2294
        %v2297 = vsel %vm996, %v2208, 0
        %v2300 = vsel %vm1000, %v2295, 0
        %2302 = vmatpush.bf16.msra.mxu0 0
        %2303 = vmatpush.bf16.msra.mxu0 0
        %2304 = vmatpush.bf16.msra.mxu0 0
        %2305 = vmatpush.bf16.msra.mxu0 0
        %2306 = vmatpush.bf16.msra.mxu0 0
        %2307 = vmatpush.bf16.msra.mxu0 0
        %2308 = vmatpush.bf16.msra.mxu0 0
        %2309 = vmatpush.bf16.msra.mxu0 %v2300
        %2310 = vmatmul.bf16.gmra.mxu0 %v2297
        %v2311 = vpop.f32.mrf.mxu0
        %v2312 = vadd.f32 0.0, %v2311
        %v2313 = vpop.f32.mrf.mxu0
        %2314 = vdwg.mxu0
        %2315 = vrot.lane.b32.xlu0 %v1524, 104
        %v2316 = vpop.permute.xlu0 %2315
        %v2318 = vsel %vm996, %v2209, 0
        %v2321 = vsel %vm1000, %v2316, 0
        %2323 = vmatpush.bf16.msra.mxu0 0
        %2324 = vmatpush.bf16.msra.mxu0 0
        %2325 = vmatpush.bf16.msra.mxu0 0
        %2326 = vmatpush.bf16.msra.mxu0 0
        %2327 = vmatpush.bf16.msra.mxu0 0
        %2328 = vmatpush.bf16.msra.mxu0 0
        %2329 = vmatpush.bf16.msra.mxu0 0
        %2330 = vmatpush.bf16.msra.mxu0 %v2321
        %2331 = vmatmul.bf16.gmra.mxu0 %v2318
        %v2332 = vpop.f32.mrf.mxu0
        %v2333 = vadd.f32 0.0, %v2332
        %v2334 = vpop.f32.mrf.mxu0
        %2335 = vdwg.mxu0
        %2342 = vrot.lane.b32.xlu0 %v1423, 8
        %v2343 = vpop.permute.xlu0 %2342
        %2344 = vrot.lane.b32.xlu0 %v1447, 8
        %v2345 = vpop.permute.xlu0 %2344
        %2346 = vrot.lane.b32.xlu0 %v1471, 8
        %v2347 = vpop.permute.xlu0 %2346
        %2348 = vrot.lane.b32.xlu0 %v1495, 8
        %v2349 = vpop.permute.xlu0 %2348
        %2350 = vrot.lane.b32.xlu0 %v1519, 8
        %v2351 = vpop.permute.xlu0 %2350
        %2352 = vrot.lane.b32.xlu0 %v1543, 8
        %v2353 = vpop.permute.xlu0 %2352
        %2366 = vrot.lane.b32.xlu0 %v1833, 16
        %v2367 = vpop.permute.xlu0 %2366
        %2368 = vrot.lane.b32.xlu0 %v1854, 16
        %v2369 = vpop.permute.xlu0 %2368
        %2370 = vrot.lane.b32.xlu0 %v1875, 16
        %v2371 = vpop.permute.xlu0 %2370
        %2372 = vrot.lane.b32.xlu0 %v1896, 16
        %v2373 = vpop.permute.xlu0 %2372
        %2374 = vrot.lane.b32.xlu0 %v1917, 16
        %v2375 = vpop.permute.xlu0 %2374
        %2376 = vrot.lane.b32.xlu0 %v1938, 16
        %v2377 = vpop.permute.xlu0 %2376
        %2390 = vrot.lane.b32.xlu0 %v2228, 24
        %v2391 = vpop.permute.xlu0 %2390
        %2392 = vrot.lane.b32.xlu0 %v2249, 24
        %v2393 = vpop.permute.xlu0 %2392
        %2394 = vrot.lane.b32.xlu0 %v2270, 24
        %v2395 = vpop.permute.xlu0 %2394
        %2396 = vrot.lane.b32.xlu0 %v2291, 24
        %v2397 = vpop.permute.xlu0 %2396
        %2398 = vrot.lane.b32.xlu0 %v2312, 24
        %v2399 = vpop.permute.xlu0 %2398
        %2400 = vrot.lane.b32.xlu0 %v2333, 24
        %v2401 = vpop.permute.xlu0 %2400
        %v2408 = vsel %vm733, %v1014, %v2343
        %v2409 = vsel %vm733, %v1033, %v2345
        %v2410 = vsel %vm733, %v1052, %v2347
        %v2411 = vsel %vm733, %v1071, %v2349
        %v2412 = vsel %vm733, %v1090, %v2351
        %v2413 = vsel %vm733, %v1109, %v2353
        %vm2414 = vcmask 130048
        %v2415 = vsel %vm2414, %v2408, %v2367
        %v2416 = vsel %vm2414, %v2409, %v2369
        %v2417 = vsel %vm2414, %v2410, %v2371
        %v2418 = vsel %vm2414, %v2411, %v2373
        %v2419 = vsel %vm2414, %v2412, %v2375
        %v2420 = vsel %vm2414, %v2413, %v2377
        %vm2421 = vcmask 195584
        %v2422 = vsel %vm2421, %v2415, %v2391
        %v2423 = vsel %vm2421, %v2416, %v2393
        %v2424 = vsel %vm2421, %v2417, %v2395
        %v2425 = vsel %vm2421, %v2418, %v2397
        %v2426 = vsel %vm2421, %v2419, %v2399
        %v2427 = vsel %vm2421, %v2420, %v2401
        %v2428 = vpack.c.bf16 %v2422, %v2422
        %v2429 = vpack.c.bf16 %v2423, %v2423
        %v2430 = vpack.c.bf16 %v2424, %v2424
        %v2431 = vpack.c.bf16 %v2425, %v2425
        %v2432 = vpack.c.bf16 %v2426, %v2426
        %v2433 = vpack.c.bf16 %v2427, %v2427
        %v2435 = vperm.slane %v474, 0
        %v2441 = vunpack.c.l.b16 %v470
        %v2442 = vunpack.c.l.b16 %v471
        %v2443 = vunpack.c.l.b16 %v472
        %v2444 = vunpack.c.l.b16 %v473
        %v2445 = vpack.c.b16 %v2442, %v2441
        %v2446 = vpack.c.b16 %v2444, %v2443
        %v2450 = vsel %vm499, %v2428, 0
        %2452 = vmatpush.bf16.msra.mxu0 0
        %2453 = vmatpush.bf16.msra.mxu0 0
        %2454 = vmatpush.bf16.msra.mxu0 0
        %2455 = vmatpush.bf16.msra.mxu0 0
        %2456 = vmatpush.bf16.msra.mxu0 0
        %2457 = vmatpush.bf16.msra.mxu0 0
        %2458 = vmatpush.bf16.msra.mxu0 %v2446
        %2459 = vmatpush.bf16.msra.mxu0 %v2445
        %2460 = vmatmul.bf16.gmra.mxu0 %v2450
        %v2461 = vpop.f32.mrf.mxu0
        %v2462 = vadd.f32 %v2435, %v2461
        %v2463 = vpop.f32.mrf.mxu0
        %2464 = vdwg.mxu0
        %v2466 = vsel %vm499, %v2429, 0
        %2468 = vmatpush.bf16.msra.mxu0 0
        %2469 = vmatpush.bf16.msra.mxu0 0
        %2470 = vmatpush.bf16.msra.mxu0 0
        %2471 = vmatpush.bf16.msra.mxu0 0
        %2472 = vmatpush.bf16.msra.mxu0 0
        %2473 = vmatpush.bf16.msra.mxu0 0
        %2474 = vmatpush.bf16.msra.mxu0 %v2446
        %2475 = vmatpush.bf16.msra.mxu0 %v2445
        %2476 = vmatmul.bf16.gmra.mxu0 %v2466
        %v2477 = vpop.f32.mrf.mxu0
        %v2478 = vadd.f32 %v2435, %v2477
        %v2479 = vpop.f32.mrf.mxu0
        %2480 = vdwg.mxu0
        %v2482 = vsel %vm499, %v2430, 0
        %2484 = vmatpush.bf16.msra.mxu0 0
        %2485 = vmatpush.bf16.msra.mxu0 0
        %2486 = vmatpush.bf16.msra.mxu0 0
        %2487 = vmatpush.bf16.msra.mxu0 0
        %2488 = vmatpush.bf16.msra.mxu0 0
        %2489 = vmatpush.bf16.msra.mxu0 0
        %2490 = vmatpush.bf16.msra.mxu0 %v2446
        %2491 = vmatpush.bf16.msra.mxu0 %v2445
        %2492 = vmatmul.bf16.gmra.mxu0 %v2482
        %v2493 = vpop.f32.mrf.mxu0
        %v2494 = vadd.f32 %v2435, %v2493
        %v2495 = vpop.f32.mrf.mxu0
        %2496 = vdwg.mxu0
        %v2498 = vsel %vm499, %v2431, 0
        %2500 = vmatpush.bf16.msra.mxu0 0
        %2501 = vmatpush.bf16.msra.mxu0 0
        %2502 = vmatpush.bf16.msra.mxu0 0
        %2503 = vmatpush.bf16.msra.mxu0 0
        %2504 = vmatpush.bf16.msra.mxu0 0
        %2505 = vmatpush.bf16.msra.mxu0 0
        %2506 = vmatpush.bf16.msra.mxu0 %v2446
        %2507 = vmatpush.bf16.msra.mxu0 %v2445
        %2508 = vmatmul.bf16.gmra.mxu0 %v2498
        %v2509 = vpop.f32.mrf.mxu0
        %v2510 = vadd.f32 %v2435, %v2509
        %v2511 = vpop.f32.mrf.mxu0
        %2512 = vdwg.mxu0
        %v2514 = vsel %vm499, %v2432, 0
        %2516 = vmatpush.bf16.msra.mxu0 0
        %2517 = vmatpush.bf16.msra.mxu0 0
        %2518 = vmatpush.bf16.msra.mxu0 0
        %2519 = vmatpush.bf16.msra.mxu0 0
        %2520 = vmatpush.bf16.msra.mxu0 0
        %2521 = vmatpush.bf16.msra.mxu0 0
        %2522 = vmatpush.bf16.msra.mxu0 %v2446
        %2523 = vmatpush.bf16.msra.mxu0 %v2445
        %2524 = vmatmul.bf16.gmra.mxu0 %v2514
        %v2525 = vpop.f32.mrf.mxu0
        %v2526 = vadd.f32 %v2435, %v2525
        %v2527 = vpop.f32.mrf.mxu0
        %2528 = vdwg.mxu0
        %v2530 = vsel %vm499, %v2433, 0
        %2532 = vmatpush.bf16.msra.mxu0 0
        %2533 = vmatpush.bf16.msra.mxu0 0
        %2534 = vmatpush.bf16.msra.mxu0 0
        %2535 = vmatpush.bf16.msra.mxu0 0
        %2536 = vmatpush.bf16.msra.mxu0 0
        %2537 = vmatpush.bf16.msra.mxu0 0
        %2538 = vmatpush.bf16.msra.mxu0 %v2446
        %2539 = vmatpush.bf16.msra.mxu0 %v2445
        %2540 = vmatmul.bf16.gmra.mxu0 %v2530
        %v2541 = vpop.f32.mrf.mxu0
        %v2542 = vadd.f32 %v2435, %v2541
        %v2543 = vpop.f32.mrf.mxu0
        %2544 = vdwg.mxu0
        %v2545 = vadd.f32 %v477, %v2462
        %v2546 = vadd.f32 %v478, %v2478
        %v2547 = vadd.f32 %v479, %v2494
        %v2548 = vadd.f32 %v480, %v2510
        %v2549 = vadd.f32 %v481, %v2526
        %v2550 = vadd.f32 %v482, %v2542
        %v2551 = vmul.f32 %v2545, %v2545
        %v2552 = vmul.f32 %v2546, %v2546
        %v2553 = vmul.f32 %v2547, %v2547
        %v2554 = vmul.f32 %v2548, %v2548
        %v2555 = vmul.f32 %v2549, %v2549
        %v2556 = vmul.f32 %v2550, %v2550
        %vm2557 = vcmask 257024
        %v2558 = vsel %vm2557, %v2551, 0.0
        %2559 = vadd.xlane.f32.xlu0 %v2558
        %v2560 = vpop.xlane.xlu0 %2559
        %v2561 = vsel %vm2557, %v2552, 0.0
        %2562 = vadd.xlane.f32.xlu0 %v2561
        %v2563 = vpop.xlane.xlu0 %2562
        %v2564 = vsel %vm2557, %v2553, 0.0
        %2565 = vadd.xlane.f32.xlu0 %v2564
        %v2566 = vpop.xlane.xlu0 %2565
        %v2567 = vsel %vm2557, %v2554, 0.0
        %2568 = vadd.xlane.f32.xlu0 %v2567
        %v2569 = vpop.xlane.xlu0 %2568
        %v2570 = vsel %vm2557, %v2555, 0.0
        %2571 = vadd.xlane.f32.xlu0 %v2570
        %v2572 = vpop.xlane.xlu0 %2571
        %v2573 = vsel %vm2557, %v2556, 0.0
        %2574 = vadd.xlane.f32.xlu0 %v2573
        %v2575 = vpop.xlane.xlu0 %2574
        %v2576 = vrcp.pop 32.0
        %v2577 = vmul.f32 32.0, %v2576
        %v2578 = vsub.f32 1.0, %v2577
        %v2579 = vmul.f32 %v2576, %v2578
        %v2580 = vadd.f32 %v2576, %v2579
        %vm2581 = vweird.f32 %v2576
        %v2582 = vsel %vm2581, %v2576, %v2580
        %v2583 = vmul.f32 %v2560, %v2582
        %v2584 = vmul.f32 %v2563, %v2582
        %v2585 = vmul.f32 %v2566, %v2582
        %v2586 = vmul.f32 %v2569, %v2582
        %v2587 = vmul.f32 %v2572, %v2582
        %v2588 = vmul.f32 %v2575, %v2582
        %v2589 = vadd.f32 %v2583, 1e-06
        %v2590 = vadd.f32 %v2584, 1e-06
        %v2591 = vadd.f32 %v2585, 1e-06
        %v2592 = vadd.f32 %v2586, 1e-06
        %v2593 = vadd.f32 %v2587, 1e-06
        %v2594 = vadd.f32 %v2588, 1e-06
        %v2595 = vrsqrt.pop %v2589
        %v2596 = vmul.f32 %v2595, %v2589
        %v2597 = vmul.f32 %v2596, %v2595
        %v2598 = vmul.f32 0.5, %v2597
        %v2599 = vsub.f32 1.5, %v2598
        %v2600 = vmul.f32 %v2595, %v2599
        %vm2601 = vweird.f32 %v2589
        %vm2602 = vweird.f32 %v2595
        %vm2603 = vmor %vm2601, %vm2602
        %v2604 = vsel %vm2603, %v2595, %v2600
        %v2605 = vrsqrt.pop %v2590
        %v2606 = vmul.f32 %v2605, %v2590
        %v2607 = vmul.f32 %v2606, %v2605
        %v2608 = vmul.f32 0.5, %v2607
        %v2609 = vsub.f32 1.5, %v2608
        %v2610 = vmul.f32 %v2605, %v2609
        %vm2611 = vweird.f32 %v2590
        %vm2612 = vweird.f32 %v2605
        %vm2613 = vmor %vm2611, %vm2612
        %v2614 = vsel %vm2613, %v2605, %v2610
        %v2615 = vrsqrt.pop %v2591
        %v2616 = vmul.f32 %v2615, %v2591
        %v2617 = vmul.f32 %v2616, %v2615
        %v2618 = vmul.f32 0.5, %v2617
        %v2619 = vsub.f32 1.5, %v2618
        %v2620 = vmul.f32 %v2615, %v2619
        %vm2621 = vweird.f32 %v2591
        %vm2622 = vweird.f32 %v2615
        %vm2623 = vmor %vm2621, %vm2622
        %v2624 = vsel %vm2623, %v2615, %v2620
        %v2625 = vrsqrt.pop %v2592
        %v2626 = vmul.f32 %v2625, %v2592
        %v2627 = vmul.f32 %v2626, %v2625
        %v2628 = vmul.f32 0.5, %v2627
        %v2629 = vsub.f32 1.5, %v2628
        %v2630 = vmul.f32 %v2625, %v2629
        %vm2631 = vweird.f32 %v2592
        %vm2632 = vweird.f32 %v2625
        %vm2633 = vmor %vm2631, %vm2632
        %v2634 = vsel %vm2633, %v2625, %v2630
        %v2635 = vrsqrt.pop %v2593
        %v2636 = vmul.f32 %v2635, %v2593
        %v2637 = vmul.f32 %v2636, %v2635
        %v2638 = vmul.f32 0.5, %v2637
        %v2639 = vsub.f32 1.5, %v2638
        %v2640 = vmul.f32 %v2635, %v2639
        %vm2641 = vweird.f32 %v2593
        %vm2642 = vweird.f32 %v2635
        %vm2643 = vmor %vm2641, %vm2642
        %v2644 = vsel %vm2643, %v2635, %v2640
        %v2645 = vrsqrt.pop %v2594
        %v2646 = vmul.f32 %v2645, %v2594
        %v2647 = vmul.f32 %v2646, %v2645
        %v2648 = vmul.f32 0.5, %v2647
        %v2649 = vsub.f32 1.5, %v2648
        %v2650 = vmul.f32 %v2645, %v2649
        %vm2651 = vweird.f32 %v2594
        %vm2652 = vweird.f32 %v2645
        %vm2653 = vmor %vm2651, %vm2652
        %v2654 = vsel %vm2653, %v2645, %v2650
        %v2655 = vmul.f32 %v2545, %v2604
        %v2656 = vmul.f32 %v2546, %v2614
        %v2657 = vmul.f32 %v2547, %v2624
        %v2658 = vmul.f32 %v2548, %v2634
        %v2659 = vmul.f32 %v2549, %v2644
        %v2660 = vmul.f32 %v2550, %v2654
        %v2662 = vperm.slane %v475, 0
        %v2664 = vmul.f32 %v2655, %v2662
        %v2665 = vmul.f32 %v2656, %v2662
        %v2666 = vmul.f32 %v2657, %v2662
        %v2667 = vmul.f32 %v2658, %v2662
        %v2668 = vmul.f32 %v2659, %v2662
        %v2669 = vmul.f32 %v2660, %v2662
        %2670 = vst.msk [vmem:[%s453] sm:$0xf] %vm2557, %v2664
        %2671 = vst.msk [vmem:[%s453 + $0x4] sm:$0xf] %vm2557, %v2665
        %2672 = vst.msk [vmem:[%s453 + $0x8] sm:$0xf] %vm2557, %v2666
        %2673 = vst.msk [vmem:[%s453 + $0xc] sm:$0xf] %vm2557, %v2667
        %2674 = vst.msk [vmem:[%s453 + $0x10] sm:$0xf] %vm2557, %v2668
        %2675 = vst.msk [vmem:[%s453 + $0x14] sm:$0xf] %vm2557, %v2669
        %p2676 = scmp.lt.s32.totalorder %s24, 1
        %s2677 = scalar_select %p2676, %s24, 1
        %s2678 = smul.addr %s2677, 6
        %s2679 = smul.addr %s2678, 4
        %s2680 = scalar_lea.vmem %s11, %s2679
        // Predicated region
        $region77: #{block_forward.5} parent=63 // pred_check
          %p2681 = pneg %p283
        $region78: #{block_forward.5} parent=63 // pred_check_branch
          %2683 = sbr.rel (%p2681) target = $region80
        $region79: #{block_forward.5} parent=63 // pred_region
          _
        $region80: #{block_forward.5} parent=63 // pred_fallthru
          _
      $region64: #{block_forward.5} parent=5 // pred_fallthru
        _
      %p2684 = scmp.le.s32.totalorder 2, %s19
      // Predicated region
      $region81: #{block_forward.5} parent=5 // pred_check
        %p2685 = pneg %p2684
      $region82: #{block_forward.5} parent=5 // pred_check_branch
        %2687 = sbr.rel (%p2685) target = $region84
      $region83: #{block_forward.5} parent=5 // pred_region
        %s2688 = ssub.s32 %s19, 2
        // Predicated region
        $region85: #{block_forward.5} parent=83 // pred_check
          %p2689 = pneg %p289
        $region86: #{block_forward.5} parent=83 // pred_check_branch
          %2691 = sbr.rel (%p2689) target = $region88
        $region87: #{block_forward.5} parent=83 // pred_region
          %p2692 = scmp.lt.s32.totalorder %s25, 1
          %s2693 = scalar_select %p2692, %s25, 1
          %s2694 = smul.addr %s2693, 6
          %s2695 = smul.addr %s2694, 4
          %s2696 = scalar_lea.vmem %s11, %s2695
        $region88: #{block_forward.5} parent=83 // pred_fallthru
          _
      $region84: #{block_forward.5} parent=5 // pred_fallthru
        _
    $region6: #{block_forward.5} parent=1 // loop_footer
      %s23 = sadd.s32 1, %s19
    $region7: #{block_forward.5} parent=1 // loop_footer_branch
      %18 = sbr.rel target = $region3
    $region8: #{block_forward.5} parent=1 // loop_exit
      _
    %2697 = vsyncpa [#allocation3], 1
    %s2698 = scalar_lea.sflag [#allocation3], 1
    %2699 = vsyncpa %s2698, 1
    %2700 = vsyncpa [#allocation5], 1

</llo_original>
